<compile_context>
chip_gen: v5e
topology: v5e:2x2
jax: 0.10.0
libtpu: 0.0.40
codegen_flags: <defaults>
</compile_context>

<pallas_src>
import functools

import jax
import jax.numpy as jnp
from jax import lax
from jax.experimental import pallas as pl
from jax.experimental.pallas import tpu as pltpu

_VMEM = pl.BlockSpec(memory_space=pltpu.MemorySpace.VMEM)


def _round_up(x, m):
    return ((x + m - 1) // m) * m


# --------------------------------------------------------------------------
# Kernel 1: conv1..conv4 (k=(3,2), stride 1, pad (1,0)) + ReLU + MaxPool2d((2,1),(2,1))
#
# Activations live flattened as rows (b, h_padded, w) of shape (n, C).  Two scratch
# buffers carry the activations in "paired" form: lanes [0:64] = activation, lanes
# [64:128] = activation shifted up by one row (the kj=1 tap), so each conv layer is
# three aligned K=128 matmuls over row shifts of +/-win.  H-pad rows and the `pad`
# slack rows are zeroed once and never written, implementing the conv zero padding.
# --------------------------------------------------------------------------
def _conv_stack_kernel(xcol_ref, w1_ref, b1_ref, w2_ref, b2_ref, w3_ref, b3_ref,
                       w4_ref, b4_ref, out_ref, buf_a, buf_b,
                       *, bsz, hin, win, pad):
    hp = hin + 2                       # height after the conv's (1,1) zero padding
    n = bsz * hp * win                 # flattened (b, hpad, w) rows
    nb = hin * win                     # interior (non-pad) rows per image

    buf_a[...] = jnp.zeros(buf_a.shape, buf_a.dtype)
    buf_b[...] = jnp.zeros(buf_b.shape, buf_b.dtype)

    def write_paired(dst, act):
        # act: (n, 64) in flat (b, hpad, w) order; store interior rows only.
        for b in range(bsz):
            lo = (b * hp + 1) * win
            blk = act[lo:lo + nb, :]
            dst[pad + lo:pad + lo + nb, 0:64] = blk                 # kj = 0 view (aligned)
            dst[pad + lo - 1:pad + lo - 1 + nb, 64:128] = blk       # kj = 1 view (+1 row)

    # ---- conv1 (Cin = 1): wrapper-built im2col -> a single small matmul ----
    a1 = jnp.maximum(
        jnp.dot(xcol_ref[...], w1_ref[...], preferred_element_type=jnp.float32)
        + b1_ref[...], 0.0)
    write_paired(buf_a, a1)

    # ---- conv2..conv4: three aligned K=128 matmuls per layer ----
    def conv_layer(src, w_ref, b_ref):
        acc = None
        for di in range(3):
            off = pad + (di - 1) * win          # static, multiple of 8
            t = jnp.dot(src[off:off + n, :], w_ref[di],
                        preferred_element_type=jnp.float32)
            acc = t if acc is None else acc + t
        return jnp.maximum(acc + b_ref[...], 0.0)

    a2 = conv_layer(buf_a, w2_ref, b2_ref)
    write_paired(buf_b, a2)
    a3 = conv_layer(buf_b, w3_ref, b3_ref)
    write_paired(buf_a, a3)
    a4 = conv_layer(buf_a, w4_ref, b4_ref)      # (n, 64); pad rows / junk cols dropped later

    # ---- MaxPool2d((2,1),(2,1)) as a row-pair max; one dense store per image ----
    # Row h of the stored block = max over conv rows (hpad=h+1, hpad=h+2); the wrapper
    # keeps only even h (the real pool outputs) and the first win-4 valid columns.
    for b in range(bsz):
        lo = (b * hp + 1) * win
        out_ref[b * nb:(b + 1) * nb, :] = jnp.maximum(
            a4[lo:lo + nb, :], a4[lo + win:lo + win + nb, :])


# --------------------------------------------------------------------------
# Kernel 2: 2-layer LSTM (batch_first, last step of layer 2) + fc1/fc2/fc3 + output head.
# Layer-1 input projection hoisted as one (T*Bp, 64) @ (64, 4H) matmul; layer-2 input and
# hidden matmuls merged via weight concat; recurrence chunk-unrolled (16 steps visible).
# --------------------------------------------------------------------------
def _lstm_head_kernel(seq_ref, wih1_ref, whh1_ref, b1_ref, w2cat_ref, b2_ref,
                      fc1w_ref, fc1b_ref, fc2w_ref, fc2b_ref, fc3w_ref, fc3b_ref,
                      hw_ref, hb_ref, o_ref, g1_scr,
                      *, t_steps, bp, hid, chunk, head):

    def sigmoid(v):                                  # exact; feeds the 96-step recurrence
        return 1.0 / (1.0 + jnp.exp(-v))

    def gates(g):                                    # PyTorch gate order: i, f, g, o
        s = sigmoid(g)
        th = jnp.tanh(g)
        return (s[:, 0:hid], s[:, hid:2 * hid],
                th[:, 2 * hid:3 * hid], s[:, 3 * hid:4 * hid])

    # hoisted layer-1 input projection for all time steps at once
    g1_scr[...] = (jnp.dot(seq_ref[...], wih1_ref[...],
                           preferred_element_type=jnp.float32) + b1_ref[...])

    whh1 = whh1_ref[...]
    w2cat = w2cat_ref[...]
    b2 = b2_ref[...]

    def chunk_body(ci, carry):
        h1, c1, h2, c2 = carry
        for j in range(chunk):                       # unrolled inner steps
            row = pl.multiple_of((ci * chunk + j) * bp, bp)
            g1 = g1_scr[pl.ds(row, bp), :] + jnp.dot(
                h1, whh1, preferred_element_type=jnp.float32)
            i1, f1, gg1, o1 = gates(g1)
            c1 = f1 * c1 + i1 * gg1
            h1 = o1 * jnp.tanh(c1)
            g2 = jnp.dot(jnp.concatenate([h1, h2], axis=1), w2cat,
                         preferred_element_type=jnp.float32) + b2
            i2, f2, gg2, o2 = gates(g2)
            c2 = f2 * c2 + i2 * gg2
            h2 = o2 * jnp.tanh(c2)
        return h1, c1, h2, c2

    z = jnp.zeros((bp, hid), jnp.float32)
    _, _, h2, _ = lax.fori_loop(0, t_steps // chunk, chunk_body, (z, z, z, z))

    # ---- fused FC head ----
    h = jnp.maximum(jnp.dot(h2, fc1w_ref[...], preferred_element_type=jnp.float32)
                    + fc1b_ref[...], 0.0)
    h = jnp.maximum(jnp.dot(h, fc2w_ref[...], preferred_element_type=jnp.float32)
                    + fc2b_ref[...], 0.0)
    h = jnp.maximum(jnp.dot(h, fc3w_ref[...], preferred_element_type=jnp.float32)
                    + fc3b_ref[...], 0.0)
    y = jnp.dot(h, hw_ref[...], preferred_element_type=jnp.float32) + hb_ref[...]
    if head == "softmax":                            # softmax over features (dim=1)
        m = jnp.max(y, axis=1, keepdims=True)
        e = jnp.exp(y - m)
        y = e / jnp.sum(e, axis=1, keepdims=True)
    else:                                            # "sigmoid" (attribute heads)
        y = sigmoid(y)
    o_ref[...] = y.astype(o_ref.dtype)


# --------------------------------------------------------------------------
# Full forward pass (mirrors CNNLSTM.forward), jitted end-to-end.
# --------------------------------------------------------------------------
@functools.partial(jax.jit, static_argnames=("output_type",))
def cnn_lstm_forward(x_nchw, params, output_type):
    x = x_nchw.astype(jnp.float32)
    bsz, cin, hin, win = x.shape                     # NCHW with C = 1
    hp, h2, w4 = hin + 2, hin // 2, win - 4
    n = bsz * hp * win
    nb = hin * win
    pad = _round_up(win + 2, 8)
    hid = params["lstm_whh1"].shape[0]

    # ---------- conv1 im2col (Cin = 1), built once by XLA; column k = ki*2 + kj ----------
    xp = jnp.pad(x[:, 0], ((0, 0), (2, 2), (0, 1)))              # (B, hin+4, win+1)
    cols = [xp[:, di:di + hp, dj:dj + win] for di in range(3) for dj in range(2)]
    xcol = jnp.stack(cols, axis=-1).reshape(n, 6)
    xcol = jnp.pad(xcol, ((0, 0), (0, 2)))                       # K padded to 8

    w1 = jnp.pad(params["conv1_w"].reshape(6, 64), ((0, 2), (0, 0)))
    w2 = params["conv2_w"].reshape(3, 2 * 64, 64)                # rows ordered (kj, cin)
    w3 = params["conv3_w"].reshape(3, 2 * 64, 64)
    w4c = params["conv4_w"].reshape(3, 2 * 64, 64)

    # ---------- kernel 1: fused conv stack + maxpool ----------
    conv_out = pl.pallas_call(
        functools.partial(_conv_stack_kernel, bsz=bsz, hin=hin, win=win, pad=pad),
        out_shape=jax.ShapeDtypeStruct((bsz * nb, 64), jnp.float32),
        in_specs=[_VMEM] * 9,
        out_specs=_VMEM,
        scratch_shapes=[pltpu.VMEM((n + 2 * pad, 128), jnp.float32),
                        pltpu.VMEM((n + 2 * pad, 128), jnp.float32)],
        compiler_params=pltpu.CompilerParams(vmem_limit_bytes=32 * 1024 * 1024),
    )(xcol, w1, params["conv1_b"], w2, params["conv2_b"],
      w3, params["conv3_b"], w4c, params["conv4_b"])

    # ---------- pool crop + relayout to the LSTM sequence (tiny, fused by XLA) ----------
    pooled = conv_out.reshape(bsz, hin, win, 64)[:, 0::2, :w4, :]   # (B, H2, W4, 64) NHWC
    t_steps = h2 * w4
    # faithful to the reference: x.permute(0, 2, 1, 3).reshape(B, H2*W4, -1) on NCHW
    seq = jnp.transpose(pooled, (0, 1, 3, 2)).reshape(bsz, t_steps, 64)
    bp = _round_up(bsz, 8)                                       # pad batch to a sublane tile
    seq_tb = jnp.pad(jnp.transpose(seq, (1, 0, 2)), ((0, 0), (0, bp - bsz), (0, 0)))
    seq_flat = seq_tb.reshape(t_steps * bp, 64)                  # (T*Bp, 64), t-major

    # ---------- kernel 2: fused 2-layer LSTM + FC head ----------
    if output_type == "softmax":
        head = "softmax"
        head_w, head_b = params["fc_person_id_w"], params["fc_person_id_b"]
    elif output_type == "attribute":
        head = "sigmoid"
        head_w = jnp.concatenate([params["fc_age_w"], params["fc_height_w"],
                                  params["fc_weight_w"], params["fc_gender_w"]], axis=1)
        head_b = jnp.concatenate([params["fc_age_b"], params["fc_height_b"],
                                  params["fc_weight_b"], params["fc_gender_b"]], axis=1)
    else:
        raise ValueError(output_type)
    n_head = head_w.shape[1]

    w2cat = jnp.concatenate([params["lstm_wih2"], params["lstm_whh2"]], axis=0)
    chunk = next(c for c in (16, 12, 8, 6, 4, 3, 2, 1) if t_steps % c == 0)

    out = pl.pallas_call(
        functools.partial(_lstm_head_kernel, t_steps=t_steps, bp=bp, hid=hid,
                          chunk=chunk, head=head),
        out_shape=jax.ShapeDtypeStruct((bp, n_head), jnp.float32),
        in_specs=[_VMEM] * 14,
        out_specs=_VMEM,
        scratch_shapes=[pltpu.VMEM((t_steps * bp, 4 * hid), jnp.float32)],
        compiler_params=pltpu.CompilerParams(vmem_limit_bytes=32 * 1024 * 1024),
    )(seq_flat, params["lstm_wih1"], params["lstm_whh1"], params["lstm_b1"],
      w2cat, params["lstm_b2"],
      params["fc1_w"], params["fc1_b"], params["fc2_w"], params["fc2_b"],
      params["fc3_w"], params["fc3_b"], head_w, head_b)

    out = out[:bsz]
    if output_type == "softmax":
        return out
    return (out[:, 0:2], out[:, 2:4], out[:, 4:6], out[:, 6:9])


# --------------------------------------------------------------------------
# Deterministic parameter init (shapes from CNNLSTM.__init__)
# --------------------------------------------------------------------------
def init_params(key, hidden, num_classes):
    keys = iter(jax.random.split(key, 48))

    def rnd(shape, scale=0.1):
        return scale * jax.random.normal(next(keys), shape, jnp.float32)

    p = {}
    cin = 1
    for i in range(1, 5):                                   # conv1..conv4: 64ch, k=(3,2)
        p[f"conv{i}_w"] = rnd((3, 2, cin, 64))
        p[f"conv{i}_b"] = rnd((1, 64))
        cin = 64
    p["lstm_wih1"] = rnd((64, 4 * hidden))                  # gate order: i, f, g, o
    p["lstm_whh1"] = rnd((hidden, 4 * hidden))
    p["lstm_b1"] = rnd((1, 4 * hidden))                     # b_ih + b_hh folded together
    p["lstm_wih2"] = rnd((hidden, 4 * hidden))
    p["lstm_whh2"] = rnd((hidden, 4 * hidden))
    p["lstm_b2"] = rnd((1, 4 * hidden))
    for name, nout in [("fc1", hidden), ("fc2", hidden), ("fc3", hidden),
                       ("fc_person_id", num_classes), ("fc_age", 2),
                       ("fc_height", 2), ("fc_weight", 2), ("fc_gender", 3)]:
        p[f"{name}_w"] = rnd((hidden, nout))
        p[f"{name}_b"] = rnd((1, nout))
    return p


if __name__ == "__main__":
    B, H, W = 2, 16, 16
    hidden_size, num_classes = 32, 10

    key = jax.random.PRNGKey(0)
    k_in, k_par = jax.random.split(key)
    x = jax.random.normal(k_in, (B, 1, H, W), jnp.float32)  # NCHW like the PyTorch module
    params = init_params(k_par, hidden_size, num_classes)

    out_softmax = cnn_lstm_forward(x, params, output_type="softmax")
    jax.block_until_ready(out_softmax)
    assert out_softmax.shape == (B, num_classes)
    assert bool(jnp.all(jnp.isfinite(out_softmax)))
    assert bool(jnp.all(jnp.abs(jnp.sum(out_softmax, axis=1) - 1.0) < 1e-3))

    out_attr = cnn_lstm_forward(x, params, output_type="attribute")
    jax.block_until_ready(out_attr)
    assert out_attr[0].shape == (B, 2) and out_attr[3].shape == (B, 3)
    assert bool(jnp.all(jnp.isfinite(out_attr[3])))

    print("KERNEL_OK")
</pallas_src>

<mosaic_0001>
module attributes {stable_mosaic.version = 11 : i64} {
  func.func @_conv_stack_kernel(%arg0: memref<576x8xf32, #tpu.memory_space<vmem>>, %arg1: memref<8x64xf32, #tpu.memory_space<vmem>>, %arg2: memref<1x64xf32, #tpu.memory_space<vmem>>, %arg3: memref<3x128x64xf32, #tpu.memory_space<vmem>>, %arg4: memref<1x64xf32, #tpu.memory_space<vmem>>, %arg5: memref<3x128x64xf32, #tpu.memory_space<vmem>>, %arg6: memref<1x64xf32, #tpu.memory_space<vmem>>, %arg7: memref<3x128x64xf32, #tpu.memory_space<vmem>>, %arg8: memref<1x64xf32, #tpu.memory_space<vmem>>, %arg9: memref<512x64xf32, #tpu.memory_space<vmem>>, %arg10: memref<624x128xf32, #tpu.memory_space<vmem>>, %arg11: memref<624x128xf32, #tpu.memory_space<vmem>>) attributes {dimension_semantics = [], scalar_prefetch = 0 : i64, scratch_operands = 2 : i64, tpu.core_type = #tpu.core_type<tc>} {
    %cst = arith.constant 0.000000e+00 : f32
    %0 = vector.broadcast %cst : f32 to vector<624x128xf32>
    %c0 = arith.constant 0 : index
    %c0_0 = arith.constant 0 : index
    %1 = vector.load %arg10[%c0, %c0_0] : memref<624x128xf32, #tpu.memory_space<vmem>>, vector<624x128xf32>
    tpu.vector_store %arg10[%c0, %c0_0], %0 {strides = array<i32>} : memref<624x128xf32, #tpu.memory_space<vmem>>, vector<624x128xf32>,
    %cst_1 = arith.constant 0.000000e+00 : f32
    %2 = vector.broadcast %cst_1 : f32 to vector<624x128xf32>
    %c0_2 = arith.constant 0 : index
    %c0_3 = arith.constant 0 : index
    %3 = vector.load %arg11[%c0_2, %c0_3] : memref<624x128xf32, #tpu.memory_space<vmem>>, vector<624x128xf32>
    tpu.vector_store %arg11[%c0_2, %c0_3], %2 {strides = array<i32>} : memref<624x128xf32, #tpu.memory_space<vmem>>, vector<624x128xf32>,
    %c0_4 = arith.constant 0 : index
    %c0_5 = arith.constant 0 : index
    %4 = vector.load %arg0[%c0_4, %c0_5] : memref<576x8xf32, #tpu.memory_space<vmem>>, vector<576x8xf32>
    %c0_6 = arith.constant 0 : index
    %c0_7 = arith.constant 0 : index
    %5 = vector.load %arg1[%c0_6, %c0_7] : memref<8x64xf32, #tpu.memory_space<vmem>>, vector<8x64xf32>
    %cst_8 = arith.constant dense<0.000000e+00> : vector<576x64xf32>
    %6 = tpu.matmul %4, %5, %cst_8 {dimension_numbers = #tpu.dot_dimension_numbers<[1], [0], [0], [1], [0, 0, 1, 1], [], []>} : vector<576x8xf32>, vector<8x64xf32>, vector<576x64xf32> -> vector<576x64xf32>
    %c0_9 = arith.constant 0 : index
    %c0_10 = arith.constant 0 : index
    %7 = vector.load %arg2[%c0_9, %c0_10] : memref<1x64xf32, #tpu.memory_space<vmem>>, vector<1x64xf32>
    %8 = vector.broadcast %7 : vector<1x64xf32> to vector<576x64xf32>
    %9 = arith.addf %6, %8 : vector<576x64xf32>
    %cst_11 = arith.constant 0.000000e+00 : f32
    %10 = vector.broadcast %cst_11 : f32 to vector<576x64xf32>
    %11 = arith.maximumf %9, %10 : vector<576x64xf32>
    %12 = vector.extract_strided_slice %11 {offsets = [16, 0], sizes = [256, 64], strides = [1, 1]} : vector<576x64xf32> to vector<256x64xf32>
    %c40 = arith.constant 40 : index
    %c0_12 = arith.constant 0 : index
    %13 = vector.load %arg10[%c40, %c0_12] : memref<624x128xf32, #tpu.memory_space<vmem>>, vector<256x64xf32>
    tpu.vector_store %arg10[%c40, %c0_12], %12 {strides = array<i32>} : memref<624x128xf32, #tpu.memory_space<vmem>>, vector<256x64xf32>,
    %c39 = arith.constant 39 : index
    %c64 = arith.constant 64 : index
    %14 = vector.load %arg10[%c39, %c64] : memref<624x128xf32, #tpu.memory_space<vmem>>, vector<256x64xf32>
    tpu.vector_store %arg10[%c39, %c64], %12 {strides = array<i32>} : memref<624x128xf32, #tpu.memory_space<vmem>>, vector<256x64xf32>,
    %15 = vector.extract_strided_slice %11 {offsets = [304, 0], sizes = [256, 64], strides = [1, 1]} : vector<576x64xf32> to vector<256x64xf32>
    %c328 = arith.constant 328 : index
    %c0_13 = arith.constant 0 : index
    %16 = vector.load %arg10[%c328, %c0_13] : memref<624x128xf32, #tpu.memory_space<vmem>>, vector<256x64xf32>
    tpu.vector_store %arg10[%c328, %c0_13], %15 {strides = array<i32>} : memref<624x128xf32, #tpu.memory_space<vmem>>, vector<256x64xf32>,
    %c327 = arith.constant 327 : index
    %c64_14 = arith.constant 64 : index
    %17 = vector.load %arg10[%c327, %c64_14] : memref<624x128xf32, #tpu.memory_space<vmem>>, vector<256x64xf32>
    tpu.vector_store %arg10[%c327, %c64_14], %15 {strides = array<i32>} : memref<624x128xf32, #tpu.memory_space<vmem>>, vector<256x64xf32>,
    %c8 = arith.constant 8 : index
    %c0_15 = arith.constant 0 : index
    %18 = vector.load %arg10[%c8, %c0_15] : memref<624x128xf32, #tpu.memory_space<vmem>>, vector<576x128xf32>
    %c0_16 = arith.constant 0 : index
    %c0_17 = arith.constant 0 : index
    %c0_18 = arith.constant 0 : index
    %19 = vector.load %arg3[%c0_16, %c0_17, %c0_18] : memref<3x128x64xf32, #tpu.memory_space<vmem>>, vector<1x128x64xf32>
    %20 = vector.shape_cast %19 : vector<1x128x64xf32> to vector<128x64xf32>
    %cst_19 = arith.constant dense<0.000000e+00> : vector<576x64xf32>
    %21 = tpu.matmul %18, %20, %cst_19 {dimension_numbers = #tpu.dot_dimension_numbers<[1], [0], [0], [1], [0, 0, 1, 1], [], []>} : vector<576x128xf32>, vector<128x64xf32>, vector<576x64xf32> -> vector<576x64xf32>
    %c24 = arith.constant 24 : index
    %c0_20 = arith.constant 0 : index
    %22 = vector.load %arg10[%c24, %c0_20] : memref<624x128xf32, #tpu.memory_space<vmem>>, vector<576x128xf32>
    %c1 = arith.constant 1 : index
    %c0_21 = arith.constant 0 : index
    %c0_22 = arith.constant 0 : index
    %23 = vector.load %arg3[%c1, %c0_21, %c0_22] : memref<3x128x64xf32, #tpu.memory_space<vmem>>, vector<1x128x64xf32>
    %24 = vector.shape_cast %23 : vector<1x128x64xf32> to vector<128x64xf32>
    %cst_23 = arith.constant dense<0.000000e+00> : vector<576x64xf32>
    %25 = tpu.matmul %22, %24, %cst_23 {dimension_numbers = #tpu.dot_dimension_numbers<[1], [0], [0], [1], [0, 0, 1, 1], [], []>} : vector<576x128xf32>, vector<128x64xf32>, vector<576x64xf32> -> vector<576x64xf32>
    %26 = arith.addf %21, %25 : vector<576x64xf32>
    %c40_24 = arith.constant 40 : index
    %c0_25 = arith.constant 0 : index
    %27 = vector.load %arg10[%c40_24, %c0_25] : memref<624x128xf32, #tpu.memory_space<vmem>>, vector<576x128xf32>
    %c2 = arith.constant 2 : index
    %c0_26 = arith.constant 0 : index
    %c0_27 = arith.constant 0 : index
    %28 = vector.load %arg3[%c2, %c0_26, %c0_27] : memref<3x128x64xf32, #tpu.memory_space<vmem>>, vector<1x128x64xf32>
    %29 = vector.shape_cast %28 : vector<1x128x64xf32> to vector<128x64xf32>
    %cst_28 = arith.constant dense<0.000000e+00> : vector<576x64xf32>
    %30 = tpu.matmul %27, %29, %cst_28 {dimension_numbers = #tpu.dot_dimension_numbers<[1], [0], [0], [1], [0, 0, 1, 1], [], []>} : vector<576x128xf32>, vector<128x64xf32>, vector<576x64xf32> -> vector<576x64xf32>
    %31 = arith.addf %26, %30 : vector<576x64xf32>
    %c0_29 = arith.constant 0 : index
    %c0_30 = arith.constant 0 : index
    %32 = vector.load %arg4[%c0_29, %c0_30] : memref<1x64xf32, #tpu.memory_space<vmem>>, vector<1x64xf32>
    %33 = vector.broadcast %32 : vector<1x64xf32> to vector<576x64xf32>
    %34 = arith.addf %31, %33 : vector<576x64xf32>
    %cst_31 = arith.constant 0.000000e+00 : f32
    %35 = vector.broadcast %cst_31 : f32 to vector<576x64xf32>
    %36 = arith.maximumf %34, %35 : vector<576x64xf32>
    %37 = vector.extract_strided_slice %36 {offsets = [16, 0], sizes = [256, 64], strides = [1, 1]} : vector<576x64xf32> to vector<256x64xf32>
    %c40_32 = arith.constant 40 : index
    %c0_33 = arith.constant 0 : index
    %38 = vector.load %arg11[%c40_32, %c0_33] : memref<624x128xf32, #tpu.memory_space<vmem>>, vector<256x64xf32>
    tpu.vector_store %arg11[%c40_32, %c0_33], %37 {strides = array<i32>} : memref<624x128xf32, #tpu.memory_space<vmem>>, vector<256x64xf32>,
    %c39_34 = arith.constant 39 : index
    %c64_35 = arith.constant 64 : index
    %39 = vector.load %arg11[%c39_34, %c64_35] : memref<624x128xf32, #tpu.memory_space<vmem>>, vector<256x64xf32>
    tpu.vector_store %arg11[%c39_34, %c64_35], %37 {strides = array<i32>} : memref<624x128xf32, #tpu.memory_space<vmem>>, vector<256x64xf32>,
    %40 = vector.extract_strided_slice %36 {offsets = [304, 0], sizes = [256, 64], strides = [1, 1]} : vector<576x64xf32> to vector<256x64xf32>
    %c328_36 = arith.constant 328 : index
    %c0_37 = arith.constant 0 : index
    %41 = vector.load %arg11[%c328_36, %c0_37] : memref<624x128xf32, #tpu.memory_space<vmem>>, vector<256x64xf32>
    tpu.vector_store %arg11[%c328_36, %c0_37], %40 {strides = array<i32>} : memref<624x128xf32, #tpu.memory_space<vmem>>, vector<256x64xf32>,
    %c327_38 = arith.constant 327 : index
    %c64_39 = arith.constant 64 : index
    %42 = vector.load %arg11[%c327_38, %c64_39] : memref<624x128xf32, #tpu.memory_space<vmem>>, vector<256x64xf32>
    tpu.vector_store %arg11[%c327_38, %c64_39], %40 {strides = array<i32>} : memref<624x128xf32, #tpu.memory_space<vmem>>, vector<256x64xf32>,
    %c8_40 = arith.constant 8 : index
    %c0_41 = arith.constant 0 : index
    %43 = vector.load %arg11[%c8_40, %c0_41] : memref<624x128xf32, #tpu.memory_space<vmem>>, vector<576x128xf32>
    %c0_42 = arith.constant 0 : index
    %c0_43 = arith.constant 0 : index
    %c0_44 = arith.constant 0 : index
    %44 = vector.load %arg5[%c0_42, %c0_43, %c0_44] : memref<3x128x64xf32, #tpu.memory_space<vmem>>, vector<1x128x64xf32>
    %45 = vector.shape_cast %44 : vector<1x128x64xf32> to vector<128x64xf32>
    %cst_45 = arith.constant dense<0.000000e+00> : vector<576x64xf32>
    %46 = tpu.matmul %43, %45, %cst_45 {dimension_numbers = #tpu.dot_dimension_numbers<[1], [0], [0], [1], [0, 0, 1, 1], [], []>} : vector<576x128xf32>, vector<128x64xf32>, vector<576x64xf32> -> vector<576x64xf32>
    %c24_46 = arith.constant 24 : index
    %c0_47 = arith.constant 0 : index
    %47 = vector.load %arg11[%c24_46, %c0_47] : memref<624x128xf32, #tpu.memory_space<vmem>>, vector<576x128xf32>
    %c1_48 = arith.constant 1 : index
    %c0_49 = arith.constant 0 : index
    %c0_50 = arith.constant 0 : index
    %48 = vector.load %arg5[%c1_48, %c0_49, %c0_50] : memref<3x128x64xf32, #tpu.memory_space<vmem>>, vector<1x128x64xf32>
    %49 = vector.shape_cast %48 : vector<1x128x64xf32> to vector<128x64xf32>
    %cst_51 = arith.constant dense<0.000000e+00> : vector<576x64xf32>
    %50 = tpu.matmul %47, %49, %cst_51 {dimension_numbers = #tpu.dot_dimension_numbers<[1], [0], [0], [1], [0, 0, 1, 1], [], []>} : vector<576x128xf32>, vector<128x64xf32>, vector<576x64xf32> -> vector<576x64xf32>
    %51 = arith.addf %46, %50 : vector<576x64xf32>
    %c40_52 = arith.constant 40 : index
    %c0_53 = arith.constant 0 : index
    %52 = vector.load %arg11[%c40_52, %c0_53] : memref<624x128xf32, #tpu.memory_space<vmem>>, vector<576x128xf32>
    %c2_54 = arith.constant 2 : index
    %c0_55 = arith.constant 0 : index
    %c0_56 = arith.constant 0 : index
    %53 = vector.load %arg5[%c2_54, %c0_55, %c0_56] : memref<3x128x64xf32, #tpu.memory_space<vmem>>, vector<1x128x64xf32>
    %54 = vector.shape_cast %53 : vector<1x128x64xf32> to vector<128x64xf32>
    %cst_57 = arith.constant dense<0.000000e+00> : vector<576x64xf32>
    %55 = tpu.matmul %52, %54, %cst_57 {dimension_numbers = #tpu.dot_dimension_numbers<[1], [0], [0], [1], [0, 0, 1, 1], [], []>} : vector<576x128xf32>, vector<128x64xf32>, vector<576x64xf32> -> vector<576x64xf32>
    %56 = arith.addf %51, %55 : vector<576x64xf32>
    %c0_58 = arith.constant 0 : index
    %c0_59 = arith.constant 0 : index
    %57 = vector.load %arg6[%c0_58, %c0_59] : memref<1x64xf32, #tpu.memory_space<vmem>>, vector<1x64xf32>
    %58 = vector.broadcast %57 : vector<1x64xf32> to vector<576x64xf32>
    %59 = arith.addf %56, %58 : vector<576x64xf32>
    %cst_60 = arith.constant 0.000000e+00 : f32
    %60 = vector.broadcast %cst_60 : f32 to vector<576x64xf32>
    %61 = arith.maximumf %59, %60 : vector<576x64xf32>
    %62 = vector.extract_strided_slice %61 {offsets = [16, 0], sizes = [256, 64], strides = [1, 1]} : vector<576x64xf32> to vector<256x64xf32>
    %c40_61 = arith.constant 40 : index
    %c0_62 = arith.constant 0 : index
    %63 = vector.load %arg10[%c40_61, %c0_62] : memref<624x128xf32, #tpu.memory_space<vmem>>, vector<256x64xf32>
    tpu.vector_store %arg10[%c40_61, %c0_62], %62 {strides = array<i32>} : memref<624x128xf32, #tpu.memory_space<vmem>>, vector<256x64xf32>,
    %c39_63 = arith.constant 39 : index
    %c64_64 = arith.constant 64 : index
    %64 = vector.load %arg10[%c39_63, %c64_64] : memref<624x128xf32, #tpu.memory_space<vmem>>, vector<256x64xf32>
    tpu.vector_store %arg10[%c39_63, %c64_64], %62 {strides = array<i32>} : memref<624x128xf32, #tpu.memory_space<vmem>>, vector<256x64xf32>,
    %65 = vector.extract_strided_slice %61 {offsets = [304, 0], sizes = [256, 64], strides = [1, 1]} : vector<576x64xf32> to vector<256x64xf32>
    %c328_65 = arith.constant 328 : index
    %c0_66 = arith.constant 0 : index
    %66 = vector.load %arg10[%c328_65, %c0_66] : memref<624x128xf32, #tpu.memory_space<vmem>>, vector<256x64xf32>
    tpu.vector_store %arg10[%c328_65, %c0_66], %65 {strides = array<i32>} : memref<624x128xf32, #tpu.memory_space<vmem>>, vector<256x64xf32>,
    %c327_67 = arith.constant 327 : index
    %c64_68 = arith.constant 64 : index
    %67 = vector.load %arg10[%c327_67, %c64_68] : memref<624x128xf32, #tpu.memory_space<vmem>>, vector<256x64xf32>
    tpu.vector_store %arg10[%c327_67, %c64_68], %65 {strides = array<i32>} : memref<624x128xf32, #tpu.memory_space<vmem>>, vector<256x64xf32>,
    %c8_69 = arith.constant 8 : index
    %c0_70 = arith.constant 0 : index
    %68 = vector.load %arg10[%c8_69, %c0_70] : memref<624x128xf32, #tpu.memory_space<vmem>>, vector<576x128xf32>
    %c0_71 = arith.constant 0 : index
    %c0_72 = arith.constant 0 : index
    %c0_73 = arith.constant 0 : index
    %69 = vector.load %arg7[%c0_71, %c0_72, %c0_73] : memref<3x128x64xf32, #tpu.memory_space<vmem>>, vector<1x128x64xf32>
    %70 = vector.shape_cast %69 : vector<1x128x64xf32> to vector<128x64xf32>
    %cst_74 = arith.constant dense<0.000000e+00> : vector<576x64xf32>
    %71 = tpu.matmul %68, %70, %cst_74 {dimension_numbers = #tpu.dot_dimension_numbers<[1], [0], [0], [1], [0, 0, 1, 1], [], []>} : vector<576x128xf32>, vector<128x64xf32>, vector<576x64xf32> -> vector<576x64xf32>
    %c24_75 = arith.constant 24 : index
    %c0_76 = arith.constant 0 : index
    %72 = vector.load %arg10[%c24_75, %c0_76] : memref<624x128xf32, #tpu.memory_space<vmem>>, vector<576x128xf32>
    %c1_77 = arith.constant 1 : index
    %c0_78 = arith.constant 0 : index
    %c0_79 = arith.constant 0 : index
    %73 = vector.load %arg7[%c1_77, %c0_78, %c0_79] : memref<3x128x64xf32, #tpu.memory_space<vmem>>, vector<1x128x64xf32>
    %74 = vector.shape_cast %73 : vector<1x128x64xf32> to vector<128x64xf32>
    %cst_80 = arith.constant dense<0.000000e+00> : vector<576x64xf32>
    %75 = tpu.matmul %72, %74, %cst_80 {dimension_numbers = #tpu.dot_dimension_numbers<[1], [0], [0], [1], [0, 0, 1, 1], [], []>} : vector<576x128xf32>, vector<128x64xf32>, vector<576x64xf32> -> vector<576x64xf32>
    %76 = arith.addf %71, %75 : vector<576x64xf32>
    %c40_81 = arith.constant 40 : index
    %c0_82 = arith.constant 0 : index
    %77 = vector.load %arg10[%c40_81, %c0_82] : memref<624x128xf32, #tpu.memory_space<vmem>>, vector<576x128xf32>
    %c2_83 = arith.constant 2 : index
    %c0_84 = arith.constant 0 : index
    %c0_85 = arith.constant 0 : index
    %78 = vector.load %arg7[%c2_83, %c0_84, %c0_85] : memref<3x128x64xf32, #tpu.memory_space<vmem>>, vector<1x128x64xf32>
    %79 = vector.shape_cast %78 : vector<1x128x64xf32> to vector<128x64xf32>
    %cst_86 = arith.constant dense<0.000000e+00> : vector<576x64xf32>
    %80 = tpu.matmul %77, %79, %cst_86 {dimension_numbers = #tpu.dot_dimension_numbers<[1], [0], [0], [1], [0, 0, 1, 1], [], []>} : vector<576x128xf32>, vector<128x64xf32>, vector<576x64xf32> -> vector<576x64xf32>
    %81 = arith.addf %76, %80 : vector<576x64xf32>
    %c0_87 = arith.constant 0 : index
    %c0_88 = arith.constant 0 : index
    %82 = vector.load %arg8[%c0_87, %c0_88] : memref<1x64xf32, #tpu.memory_space<vmem>>, vector<1x64xf32>
    %83 = vector.broadcast %82 : vector<1x64xf32> to vector<576x64xf32>
    %84 = arith.addf %81, %83 : vector<576x64xf32>
    %cst_89 = arith.constant 0.000000e+00 : f32
    %85 = vector.broadcast %cst_89 : f32 to vector<576x64xf32>
    %86 = arith.maximumf %84, %85 : vector<576x64xf32>
    %87 = vector.extract_strided_slice %86 {offsets = [16, 0], sizes = [256, 64], strides = [1, 1]} : vector<576x64xf32> to vector<256x64xf32>
    %88 = vector.extract_strided_slice %86 {offsets = [32, 0], sizes = [256, 64], strides = [1, 1]} : vector<576x64xf32> to vector<256x64xf32>
    %89 = arith.maximumf %87, %88 : vector<256x64xf32>
    %c0_90 = arith.constant 0 : index
    %c0_91 = arith.constant 0 : index
    %90 = vector.load %arg9[%c0_90, %c0_91] : memref<512x64xf32, #tpu.memory_space<vmem>>, vector<256x64xf32>
    tpu.vector_store %arg9[%c0_90, %c0_91], %89 {strides = array<i32>} : memref<512x64xf32, #tpu.memory_space<vmem>>, vector<256x64xf32>,
    %91 = vector.extract_strided_slice %86 {offsets = [304, 0], sizes = [256, 64], strides = [1, 1]} : vector<576x64xf32> to vector<256x64xf32>
    %92 = vector.extract_strided_slice %86 {offsets = [320, 0], sizes = [256, 64], strides = [1, 1]} : vector<576x64xf32> to vector<256x64xf32>
    %93 = arith.maximumf %91, %92 : vector<256x64xf32>
    %c256 = arith.constant 256 : index
    %c0_92 = arith.constant 0 : index
    %94 = vector.load %arg9[%c256, %c0_92] : memref<512x64xf32, #tpu.memory_space<vmem>>, vector<256x64xf32>
    tpu.vector_store %arg9[%c256, %c0_92], %93 {strides = array<i32>} : memref<512x64xf32, #tpu.memory_space<vmem>>, vector<256x64xf32>,
    return
  }
}

module attributes {stable_mosaic.version = 11 : i64} {
  func.func @_lstm_head_kernel(%arg0: memref<768x64xf32, #tpu.memory_space<vmem>>, %arg1: memref<64x128xf32, #tpu.memory_space<vmem>>, %arg2: memref<32x128xf32, #tpu.memory_space<vmem>>, %arg3: memref<1x128xf32, #tpu.memory_space<vmem>>, %arg4: memref<64x128xf32, #tpu.memory_space<vmem>>, %arg5: memref<1x128xf32, #tpu.memory_space<vmem>>, %arg6: memref<32x32xf32, #tpu.memory_space<vmem>>, %arg7: memref<1x32xf32, #tpu.memory_space<vmem>>, %arg8: memref<32x32xf32, #tpu.memory_space<vmem>>, %arg9: memref<1x32xf32, #tpu.memory_space<vmem>>, %arg10: memref<32x32xf32, #tpu.memory_space<vmem>>, %arg11: memref<1x32xf32, #tpu.memory_space<vmem>>, %arg12: memref<32x10xf32, #tpu.memory_space<vmem>>, %arg13: memref<1x10xf32, #tpu.memory_space<vmem>>, %arg14: memref<8x10xf32, #tpu.memory_space<vmem>>, %arg15: memref<768x128xf32, #tpu.memory_space<vmem>>) attributes {dimension_semantics = [], scalar_prefetch = 0 : i64, scratch_operands = 1 : i64, tpu.core_type = #tpu.core_type<tc>} {
    %c0 = arith.constant 0 : index
    %c0_0 = arith.constant 0 : index
    %0 = vector.load %arg0[%c0, %c0_0] : memref<768x64xf32, #tpu.memory_space<vmem>>, vector<768x64xf32>
    %c0_1 = arith.constant 0 : index
    %c0_2 = arith.constant 0 : index
    %1 = vector.load %arg1[%c0_1, %c0_2] : memref<64x128xf32, #tpu.memory_space<vmem>>, vector<64x128xf32>
    %cst = arith.constant dense<0.000000e+00> : vector<768x128xf32>
    %2 = tpu.matmul %0, %1, %cst {dimension_numbers = #tpu.dot_dimension_numbers<[1], [0], [0], [1], [0, 0, 1, 1], [], []>} : vector<768x64xf32>, vector<64x128xf32>, vector<768x128xf32> -> vector<768x128xf32>
    %c0_3 = arith.constant 0 : index
    %c0_4 = arith.constant 0 : index
    %3 = vector.load %arg3[%c0_3, %c0_4] : memref<1x128xf32, #tpu.memory_space<vmem>>, vector<1x128xf32>
    %4 = vector.broadcast %3 : vector<1x128xf32> to vector<768x128xf32>
    %5 = arith.addf %2, %4 : vector<768x128xf32>
    %c0_5 = arith.constant 0 : index
    %c0_6 = arith.constant 0 : index
    %6 = vector.load %arg15[%c0_5, %c0_6] : memref<768x128xf32, #tpu.memory_space<vmem>>, vector<768x128xf32>
    tpu.vector_store %arg15[%c0_5, %c0_6], %5 {strides = array<i32>} : memref<768x128xf32, #tpu.memory_space<vmem>>, vector<768x128xf32>,
    %c0_7 = arith.constant 0 : index
    %c0_8 = arith.constant 0 : index
    %7 = vector.load %arg2[%c0_7, %c0_8] : memref<32x128xf32, #tpu.memory_space<vmem>>, vector<32x128xf32>
    %c0_9 = arith.constant 0 : index
    %c0_10 = arith.constant 0 : index
    %8 = vector.load %arg4[%c0_9, %c0_10] : memref<64x128xf32, #tpu.memory_space<vmem>>, vector<64x128xf32>
    %c0_11 = arith.constant 0 : index
    %c0_12 = arith.constant 0 : index
    %9 = vector.load %arg5[%c0_11, %c0_12] : memref<1x128xf32, #tpu.memory_space<vmem>>, vector<1x128xf32>
    %cst_13 = arith.constant 0.000000e+00 : f32
    %10 = vector.broadcast %cst_13 : f32 to vector<8x32xf32>
    %c0_i32 = arith.constant 0 : i32
    %c6_i32 = arith.constant 6 : i32
    %11 = arith.addi %c0_i32, %c6_i32 : i32
    %c1_i32 = arith.constant 1 : i32
    %12:4 = scf.for %arg16 = %c0_i32 to %11 step %c1_i32 iter_args(%arg17 = %10, %arg18 = %10, %arg19 = %10, %arg20 = %10) -> (vector<8x32xf32>, vector<8x32xf32>, vector<8x32xf32>, vector<8x32xf32>)  : i32 {
      %c16_i32 = arith.constant 16 : i32
      %49 = arith.muli %arg16, %c16_i32 : i32
      %c0_i32_42 = arith.constant 0 : i32
      %50 = arith.addi %49, %c0_i32_42 : i32
      %c8_i32 = arith.constant 8 : i32
      %51 = arith.muli %50, %c8_i32 : i32
      %52 = tpu.assume_multiple %51, 8 : i32
      %53 = arith.index_cast %52 : i32 to index
      %c0_43 = arith.constant 0 : index
      %54 = vector.load %arg15[%53, %c0_43] : memref<768x128xf32, #tpu.memory_space<vmem>>, vector<8x128xf32>
      %cst_44 = arith.constant dense<0.000000e+00> : vector<8x128xf32>
      %55 = tpu.matmul %arg17, %7, %cst_44 {dimension_numbers = #tpu.dot_dimension_numbers<[1], [0], [0], [1], [0, 0, 1, 1], [], []>} : vector<8x32xf32>, vector<32x128xf32>, vector<8x128xf32> -> vector<8x128xf32>
      %56 = arith.addf %54, %55 : vector<8x128xf32>
      %cst_45 = arith.constant 0.000000e+00 : f32
      %57 = vector.broadcast %cst_45 : f32 to vector<8x128xf32>
      %58 = arith.subf %57, %56 : vector<8x128xf32>
      %59 = math.exp %58 : vector<8x128xf32>
      %cst_46 = arith.constant 1.000000e+00 : f32
      %60 = vector.broadcast %cst_46 : f32 to vector<8x128xf32>
      %61 = arith.addf %60, %59 : vector<8x128xf32>
      %cst_47 = arith.constant 1.000000e+00 : f32
      %62 = vector.broadcast %cst_47 : f32 to vector<8x128xf32>
      %63 = arith.divf %62, %61 : vector<8x128xf32>
      %64 = math.tanh %56 : vector<8x128xf32>
      %65 = vector.extract_strided_slice %63 {offsets = [0, 0], sizes = [8, 32], strides = [1, 1]} : vector<8x128xf32> to vector<8x32xf32>
      %66 = vector.extract_strided_slice %63 {offsets = [0, 32], sizes = [8, 32], strides = [1, 1]} : vector<8x128xf32> to vector<8x32xf32>
      %67 = vector.extract_strided_slice %64 {offsets = [0, 64], sizes = [8, 32], strides = [1, 1]} : vector<8x128xf32> to vector<8x32xf32>
      %68 = vector.extract_strided_slice %63 {offsets = [0, 96], sizes = [8, 32], strides = [1, 1]} : vector<8x128xf32> to vector<8x32xf32>
      %69 = arith.mulf %66, %arg18 : vector<8x32xf32>
      %70 = arith.mulf %65, %67 : vector<8x32xf32>
      %71 = arith.addf %69, %70 : vector<8x32xf32>
      %72 = math.tanh %71 : vector<8x32xf32>
      %73 = arith.mulf %68, %72 : vector<8x32xf32>
      %74 = tpu.concatenate %73, %arg19 in 1 : vector<8x32xf32>, vector<8x32xf32> -> vector<8x64xf32>
      %cst_48 = arith.constant dense<0.000000e+00> : vector<8x128xf32>
      %75 = tpu.matmul %74, %8, %cst_48 {dimension_numbers = #tpu.dot_dimension_numbers<[1], [0], [0], [1], [0, 0, 1, 1], [], []>} : vector<8x64xf32>, vector<64x128xf32>, vector<8x128xf32> -> vector<8x128xf32>
      %76 = vector.broadcast %9 : vector<1x128xf32> to vector<8x128xf32>
      %77 = arith.addf %75, %76 : vector<8x128xf32>
      %cst_49 = arith.constant 0.000000e+00 : f32
      %78 = vector.broadcast %cst_49 : f32 to vector<8x128xf32>
      %79 = arith.subf %78, %77 : vector<8x128xf32>
      %80 = math.exp %79 : vector<8x128xf32>
      %cst_50 = arith.constant 1.000000e+00 : f32
      %81 = vector.broadcast %cst_50 : f32 to vector<8x128xf32>
      %82 = arith.addf %81, %80 : vector<8x128xf32>
      %cst_51 = arith.constant 1.000000e+00 : f32
      %83 = vector.broadcast %cst_51 : f32 to vector<8x128xf32>
      %84 = arith.divf %83, %82 : vector<8x128xf32>
      %85 = math.tanh %77 : vector<8x128xf32>
      %86 = vector.extract_strided_slice %84 {offsets = [0, 0], sizes = [8, 32], strides = [1, 1]} : vector<8x128xf32> to vector<8x32xf32>
      %87 = vector.extract_strided_slice %84 {offsets = [0, 32], sizes = [8, 32], strides = [1, 1]} : vector<8x128xf32> to vector<8x32xf32>
      %88 = vector.extract_strided_slice %85 {offsets = [0, 64], sizes = [8, 32], strides = [1, 1]} : vector<8x128xf32> to vector<8x32xf32>
      %89 = vector.extract_strided_slice %84 {offsets = [0, 96], sizes = [8, 32], strides = [1, 1]} : vector<8x128xf32> to vector<8x32xf32>
      %90 = arith.mulf %87, %arg20 : vector<8x32xf32>
      %91 = arith.mulf %86, %88 : vector<8x32xf32>
      %92 = arith.addf %90, %91 : vector<8x32xf32>
      %93 = math.tanh %92 : vector<8x32xf32>
      %94 = arith.mulf %89, %93 : vector<8x32xf32>
      %c16_i32_52 = arith.constant 16 : i32
      %95 = arith.muli %arg16, %c16_i32_52 : i32
      %c1_i32_53 = arith.constant 1 : i32
      %96 = arith.addi %95, %c1_i32_53 : i32
      %c8_i32_54 = arith.constant 8 : i32
      %97 = arith.muli %96, %c8_i32_54 : i32
      %98 = tpu.assume_multiple %97, 8 : i32
      %99 = arith.index_cast %98 : i32 to index
      %c0_55 = arith.constant 0 : index
      %100 = vector.load %arg15[%99, %c0_55] : memref<768x128xf32, #tpu.memory_space<vmem>>, vector<8x128xf32>
      %cst_56 = arith.constant dense<0.000000e+00> : vector<8x128xf32>
      %101 = tpu.matmul %73, %7, %cst_56 {dimension_numbers = #tpu.dot_dimension_numbers<[1], [0], [0], [1], [0, 0, 1, 1], [], []>} : vector<8x32xf32>, vector<32x128xf32>, vector<8x128xf32> -> vector<8x128xf32>
      %102 = arith.addf %100, %101 : vector<8x128xf32>
      %cst_57 = arith.constant 0.000000e+00 : f32
      %103 = vector.broadcast %cst_57 : f32 to vector<8x128xf32>
      %104 = arith.subf %103, %102 : vector<8x128xf32>
      %105 = math.exp %104 : vector<8x128xf32>
      %cst_58 = arith.constant 1.000000e+00 : f32
      %106 = vector.broadcast %cst_58 : f32 to vector<8x128xf32>
      %107 = arith.addf %106, %105 : vector<8x128xf32>
      %cst_59 = arith.constant 1.000000e+00 : f32
      %108 = vector.broadcast %cst_59 : f32 to vector<8x128xf32>
      %109 = arith.divf %108, %107 : vector<8x128xf32>
      %110 = math.tanh %102 : vector<8x128xf32>
      %111 = vector.extract_strided_slice %109 {offsets = [0, 0], sizes = [8, 32], strides = [1, 1]} : vector<8x128xf32> to vector<8x32xf32>
      %112 = vector.extract_strided_slice %109 {offsets = [0, 32], sizes = [8, 32], strides = [1, 1]} : vector<8x128xf32> to vector<8x32xf32>
      %113 = vector.extract_strided_slice %110 {offsets = [0, 64], sizes = [8, 32], strides = [1, 1]} : vector<8x128xf32> to vector<8x32xf32>
      %114 = vector.extract_strided_slice %109 {offsets = [0, 96], sizes = [8, 32], strides = [1, 1]} : vector<8x128xf32> to vector<8x32xf32>
      %115 = arith.mulf %112, %71 : vector<8x32xf32>
      %116 = arith.mulf %111, %113 : vector<8x32xf32>
      %117 = arith.addf %115, %116 : vector<8x32xf32>
      %118 = math.tanh %117 : vector<8x32xf32>
      %119 = arith.mulf %114, %118 : vector<8x32xf32>
      %120 = tpu.concatenate %119, %94 in 1 : vector<8x32xf32>, vector<8x32xf32> -> vector<8x64xf32>
      %cst_60 = arith.constant dense<0.000000e+00> : vector<8x128xf32>
      %121 = tpu.matmul %120, %8, %cst_60 {dimension_numbers = #tpu.dot_dimension_numbers<[1], [0], [0], [1], [0, 0, 1, 1], [], []>} : vector<8x64xf32>, vector<64x128xf32>, vector<8x128xf32> -> vector<8x128xf32>
      %122 = vector.broadcast %9 : vector<1x128xf32> to vector<8x128xf32>
      %123 = arith.addf %121, %122 : vector<8x128xf32>
      %cst_61 = arith.constant 0.000000e+00 : f32
      %124 = vector.broadcast %cst_61 : f32 to vector<8x128xf32>
      %125 = arith.subf %124, %123 : vector<8x128xf32>
      %126 = math.exp %125 : vector<8x128xf32>
      %cst_62 = arith.constant 1.000000e+00 : f32
      %127 = vector.broadcast %cst_62 : f32 to vector<8x128xf32>
      %128 = arith.addf %127, %126 : vector<8x128xf32>
      %cst_63 = arith.constant 1.000000e+00 : f32
      %129 = vector.broadcast %cst_63 : f32 to vector<8x128xf32>
      %130 = arith.divf %129, %128 : vector<8x128xf32>
      %131 = math.tanh %123 : vector<8x128xf32>
      %132 = vector.extract_strided_slice %130 {offsets = [0, 0], sizes = [8, 32], strides = [1, 1]} : vector<8x128xf32> to vector<8x32xf32>
      %133 = vector.extract_strided_slice %130 {offsets = [0, 32], sizes = [8, 32], strides = [1, 1]} : vector<8x128xf32> to vector<8x32xf32>
      %134 = vector.extract_strided_slice %131 {offsets = [0, 64], sizes = [8, 32], strides = [1, 1]} : vector<8x128xf32> to vector<8x32xf32>
      %135 = vector.extract_strided_slice %130 {offsets = [0, 96], sizes = [8, 32], strides = [1, 1]} : vector<8x128xf32> to vector<8x32xf32>
      %136 = arith.mulf %133, %92 : vector<8x32xf32>
      %137 = arith.mulf %132, %134 : vector<8x32xf32>
      %138 = arith.addf %136, %137 : vector<8x32xf32>
      %139 = math.tanh %138 : vector<8x32xf32>
      %140 = arith.mulf %135, %139 : vector<8x32xf32>
      %c16_i32_64 = arith.constant 16 : i32
      %141 = arith.muli %arg16, %c16_i32_64 : i32
      %c2_i32 = arith.constant 2 : i32
      %142 = arith.addi %141, %c2_i32 : i32
      %c8_i32_65 = arith.constant 8 : i32
      %143 = arith.muli %142, %c8_i32_65 : i32
      %144 = tpu.assume_multiple %143, 8 : i32
      %145 = arith.index_cast %144 : i32 to index
      %c0_66 = arith.constant 0 : index
      %146 = vector.load %arg15[%145, %c0_66] : memref<768x128xf32, #tpu.memory_space<vmem>>, vector<8x128xf32>
      %cst_67 = arith.constant dense<0.000000e+00> : vector<8x128xf32>
      %147 = tpu.matmul %119, %7, %cst_67 {dimension_numbers = #tpu.dot_dimension_numbers<[1], [0], [0], [1], [0, 0, 1, 1], [], []>} : vector<8x32xf32>, vector<32x128xf32>, vector<8x128xf32> -> vector<8x128xf32>
      %148 = arith.addf %146, %147 : vector<8x128xf32>
      %cst_68 = arith.constant 0.000000e+00 : f32
      %149 = vector.broadcast %cst_68 : f32 to vector<8x128xf32>
      %150 = arith.subf %149, %148 : vector<8x128xf32>
      %151 = math.exp %150 : vector<8x128xf32>
      %cst_69 = arith.constant 1.000000e+00 : f32
      %152 = vector.broadcast %cst_69 : f32 to vector<8x128xf32>
      %153 = arith.addf %152, %151 : vector<8x128xf32>
      %cst_70 = arith.constant 1.000000e+00 : f32
      %154 = vector.broadcast %cst_70 : f32 to vector<8x128xf32>
      %155 = arith.divf %154, %153 : vector<8x128xf32>
      %156 = math.tanh %148 : vector<8x128xf32>
      %157 = vector.extract_strided_slice %155 {offsets = [0, 0], sizes = [8, 32], strides = [1, 1]} : vector<8x128xf32> to vector<8x32xf32>
      %158 = vector.extract_strided_slice %155 {offsets = [0, 32], sizes = [8, 32], strides = [1, 1]} : vector<8x128xf32> to vector<8x32xf32>
      %159 = vector.extract_strided_slice %156 {offsets = [0, 64], sizes = [8, 32], strides = [1, 1]} : vector<8x128xf32> to vector<8x32xf32>
      %160 = vector.extract_strided_slice %155 {offsets = [0, 96], sizes = [8, 32], strides = [1, 1]} : vector<8x128xf32> to vector<8x32xf32>
      %161 = arith.mulf %158, %117 : vector<8x32xf32>
      %162 = arith.mulf %157, %159 : vector<8x32xf32>
      %163 = arith.addf %161, %162 : vector<8x32xf32>
      %164 = math.tanh %163 : vector<8x32xf32>
      %165 = arith.mulf %160, %164 : vector<8x32xf32>
      %166 = tpu.concatenate %165, %140 in 1 : vector<8x32xf32>, vector<8x32xf32> -> vector<8x64xf32>
      %cst_71 = arith.constant dense<0.000000e+00> : vector<8x128xf32>
      %167 = tpu.matmul %166, %8, %cst_71 {dimension_numbers = #tpu.dot_dimension_numbers<[1], [0], [0], [1], [0, 0, 1, 1], [], []>} : vector<8x64xf32>, vector<64x128xf32>, vector<8x128xf32> -> vector<8x128xf32>
      %168 = vector.broadcast %9 : vector<1x128xf32> to vector<8x128xf32>
      %169 = arith.addf %167, %168 : vector<8x128xf32>
      %cst_72 = arith.constant 0.000000e+00 : f32
      %170 = vector.broadcast %cst_72 : f32 to vector<8x128xf32>
      %171 = arith.subf %170, %169 : vector<8x128xf32>
      %172 = math.exp %171 : vector<8x128xf32>
      %cst_73 = arith.constant 1.000000e+00 : f32
      %173 = vector.broadcast %cst_73 : f32 to vector<8x128xf32>
      %174 = arith.addf %173, %172 : vector<8x128xf32>
      %cst_74 = arith.constant 1.000000e+00 : f32
      %175 = vector.broadcast %cst_74 : f32 to vector<8x128xf32>
      %176 = arith.divf %175, %174 : vector<8x128xf32>
      %177 = math.tanh %169 : vector<8x128xf32>
      %178 = vector.extract_strided_slice %176 {offsets = [0, 0], sizes = [8, 32], strides = [1, 1]} : vector<8x128xf32> to vector<8x32xf32>
      %179 = vector.extract_strided_slice %176 {offsets = [0, 32], sizes = [8, 32], strides = [1, 1]} : vector<8x128xf32> to vector<8x32xf32>
      %180 = vector.extract_strided_slice %177 {offsets = [0, 64], sizes = [8, 32], strides = [1, 1]} : vector<8x128xf32> to vector<8x32xf32>
      %181 = vector.extract_strided_slice %176 {offsets = [0, 96], sizes = [8, 32], strides = [1, 1]} : vector<8x128xf32> to vector<8x32xf32>
      %182 = arith.mulf %179, %138 : vector<8x32xf32>
      %183 = arith.mulf %178, %180 : vector<8x32xf32>
      %184 = arith.addf %182, %183 : vector<8x32xf32>
      %185 = math.tanh %184 : vector<8x32xf32>
      %186 = arith.mulf %181, %185 : vector<8x32xf32>
      %c16_i32_75 = arith.constant 16 : i32
      %187 = arith.muli %arg16, %c16_i32_75 : i32
      %c3_i32 = arith.constant 3 : i32
      %188 = arith.addi %187, %c3_i32 : i32
      %c8_i32_76 = arith.constant 8 : i32
      %189 = arith.muli %188, %c8_i32_76 : i32
      %190 = tpu.assume_multiple %189, 8 : i32
      %191 = arith.index_cast %190 : i32 to index
      %c0_77 = arith.constant 0 : index
      %192 = vector.load %arg15[%191, %c0_77] : memref<768x128xf32, #tpu.memory_space<vmem>>, vector<8x128xf32>
      %cst_78 = arith.constant dense<0.000000e+00> : vector<8x128xf32>
      %193 = tpu.matmul %165, %7, %cst_78 {dimension_numbers = #tpu.dot_dimension_numbers<[1], [0], [0], [1], [0, 0, 1, 1], [], []>} : vector<8x32xf32>, vector<32x128xf32>, vector<8x128xf32> -> vector<8x128xf32>
      %194 = arith.addf %192, %193 : vector<8x128xf32>
      %cst_79 = arith.constant 0.000000e+00 : f32
      %195 = vector.broadcast %cst_79 : f32 to vector<8x128xf32>
      %196 = arith.subf %195, %194 : vector<8x128xf32>
      %197 = math.exp %196 : vector<8x128xf32>
      %cst_80 = arith.constant 1.000000e+00 : f32
      %198 = vector.broadcast %cst_80 : f32 to vector<8x128xf32>
      %199 = arith.addf %198, %197 : vector<8x128xf32>
      %cst_81 = arith.constant 1.000000e+00 : f32
      %200 = vector.broadcast %cst_81 : f32 to vector<8x128xf32>
      %201 = arith.divf %200, %199 : vector<8x128xf32>
      %202 = math.tanh %194 : vector<8x128xf32>
      %203 = vector.extract_strided_slice %201 {offsets = [0, 0], sizes = [8, 32], strides = [1, 1]} : vector<8x128xf32> to vector<8x32xf32>
      %204 = vector.extract_strided_slice %201 {offsets = [0, 32], sizes = [8, 32], strides = [1, 1]} : vector<8x128xf32> to vector<8x32xf32>
      %205 = vector.extract_strided_slice %202 {offsets = [0, 64], sizes = [8, 32], strides = [1, 1]} : vector<8x128xf32> to vector<8x32xf32>
      %206 = vector.extract_strided_slice %201 {offsets = [0, 96], sizes = [8, 32], strides = [1, 1]} : vector<8x128xf32> to vector<8x32xf32>
      %207 = arith.mulf %204, %163 : vector<8x32xf32>
      %208 = arith.mulf %203, %205 : vector<8x32xf32>
      %209 = arith.addf %207, %208 : vector<8x32xf32>
      %210 = math.tanh %209 : vector<8x32xf32>
      %211 = arith.mulf %206, %210 : vector<8x32xf32>
      %212 = tpu.concatenate %211, %186 in 1 : vector<8x32xf32>, vector<8x32xf32> -> vector<8x64xf32>
      %cst_82 = arith.constant dense<0.000000e+00> : vector<8x128xf32>
      %213 = tpu.matmul %212, %8, %cst_82 {dimension_numbers = #tpu.dot_dimension_numbers<[1], [0], [0], [1], [0, 0, 1, 1], [], []>} : vector<8x64xf32>, vector<64x128xf32>, vector<8x128xf32> -> vector<8x128xf32>
      %214 = vector.broadcast %9 : vector<1x128xf32> to vector<8x128xf32>
      %215 = arith.addf %213, %214 : vector<8x128xf32>
      %cst_83 = arith.constant 0.000000e+00 : f32
      %216 = vector.broadcast %cst_83 : f32 to vector<8x128xf32>
      %217 = arith.subf %216, %215 : vector<8x128xf32>
      %218 = math.exp %217 : vector<8x128xf32>
      %cst_84 = arith.constant 1.000000e+00 : f32
      %219 = vector.broadcast %cst_84 : f32 to vector<8x128xf32>
      %220 = arith.addf %219, %218 : vector<8x128xf32>
      %cst_85 = arith.constant 1.000000e+00 : f32
      %221 = vector.broadcast %cst_85 : f32 to vector<8x128xf32>
      %222 = arith.divf %221, %220 : vector<8x128xf32>
      %223 = math.tanh %215 : vector<8x128xf32>
      %224 = vector.extract_strided_slice %222 {offsets = [0, 0], sizes = [8, 32], strides = [1, 1]} : vector<8x128xf32> to vector<8x32xf32>
      %225 = vector.extract_strided_slice %222 {offsets = [0, 32], sizes = [8, 32], strides = [1, 1]} : vector<8x128xf32> to vector<8x32xf32>
      %226 = vector.extract_strided_slice %223 {offsets = [0, 64], sizes = [8, 32], strides = [1, 1]} : vector<8x128xf32> to vector<8x32xf32>
      %227 = vector.extract_strided_slice %222 {offsets = [0, 96], sizes = [8, 32], strides = [1, 1]} : vector<8x128xf32> to vector<8x32xf32>
      %228 = arith.mulf %225, %184 : vector<8x32xf32>
      %229 = arith.mulf %224, %226 : vector<8x32xf32>
      %230 = arith.addf %228, %229 : vector<8x32xf32>
      %231 = math.tanh %230 : vector<8x32xf32>
      %232 = arith.mulf %227, %231 : vector<8x32xf32>
      %c16_i32_86 = arith.constant 16 : i32
      %233 = arith.muli %arg16, %c16_i32_86 : i32
      %c4_i32 = arith.constant 4 : i32
      %234 = arith.addi %233, %c4_i32 : i32
      %c8_i32_87 = arith.constant 8 : i32
      %235 = arith.muli %234, %c8_i32_87 : i32
      %236 = tpu.assume_multiple %235, 8 : i32
      %237 = arith.index_cast %236 : i32 to index
      %c0_88 = arith.constant 0 : index
      %238 = vector.load %arg15[%237, %c0_88] : memref<768x128xf32, #tpu.memory_space<vmem>>, vector<8x128xf32>
      %cst_89 = arith.constant dense<0.000000e+00> : vector<8x128xf32>
      %239 = tpu.matmul %211, %7, %cst_89 {dimension_numbers = #tpu.dot_dimension_numbers<[1], [0], [0], [1], [0, 0, 1, 1], [], []>} : vector<8x32xf32>, vector<32x128xf32>, vector<8x128xf32> -> vector<8x128xf32>
      %240 = arith.addf %238, %239 : vector<8x128xf32>
      %cst_90 = arith.constant 0.000000e+00 : f32
      %241 = vector.broadcast %cst_90 : f32 to vector<8x128xf32>
      %242 = arith.subf %241, %240 : vector<8x128xf32>
      %243 = math.exp %242 : vector<8x128xf32>
      %cst_91 = arith.constant 1.000000e+00 : f32
      %244 = vector.broadcast %cst_91 : f32 to vector<8x128xf32>
      %245 = arith.addf %244, %243 : vector<8x128xf32>
      %cst_92 = arith.constant 1.000000e+00 : f32
      %246 = vector.broadcast %cst_92 : f32 to vector<8x128xf32>
      %247 = arith.divf %246, %245 : vector<8x128xf32>
      %248 = math.tanh %240 : vector<8x128xf32>
      %249 = vector.extract_strided_slice %247 {offsets = [0, 0], sizes = [8, 32], strides = [1, 1]} : vector<8x128xf32> to vector<8x32xf32>
      %250 = vector.extract_strided_slice %247 {offsets = [0, 32], sizes = [8, 32], strides = [1, 1]} : vector<8x128xf32> to vector<8x32xf32>
      %251 = vector.extract_strided_slice %248 {offsets = [0, 64], sizes = [8, 32], strides = [1, 1]} : vector<8x128xf32> to vector<8x32xf32>
      %252 = vector.extract_strided_slice %247 {offsets = [0, 96], sizes = [8, 32], strides = [1, 1]} : vector<8x128xf32> to vector<8x32xf32>
      %253 = arith.mulf %250, %209 : vector<8x32xf32>
      %254 = arith.mulf %249, %251 : vector<8x32xf32>
      %255 = arith.addf %253, %254 : vector<8x32xf32>
      %256 = math.tanh %255 : vector<8x32xf32>
      %257 = arith.mulf %252, %256 : vector<8x32xf32>
      %258 = tpu.concatenate %257, %232 in 1 : vector<8x32xf32>, vector<8x32xf32> -> vector<8x64xf32>
      %cst_93 = arith.constant dense<0.000000e+00> : vector<8x128xf32>
      %259 = tpu.matmul %258, %8, %cst_93 {dimension_numbers = #tpu.dot_dimension_numbers<[1], [0], [0], [1], [0, 0, 1, 1], [], []>} : vector<8x64xf32>, vector<64x128xf32>, vector<8x128xf32> -> vector<8x128xf32>
      %260 = vector.broadcast %9 : vector<1x128xf32> to vector<8x128xf32>
      %261 = arith.addf %259, %260 : vector<8x128xf32>
      %cst_94 = arith.constant 0.000000e+00 : f32
      %262 = vector.broadcast %cst_94 : f32 to vector<8x128xf32>
      %263 = arith.subf %262, %261 : vector<8x128xf32>
      %264 = math.exp %263 : vector<8x128xf32>
      %cst_95 = arith.constant 1.000000e+00 : f32
      %265 = vector.broadcast %cst_95 : f32 to vector<8x128xf32>
      %266 = arith.addf %265, %264 : vector<8x128xf32>
      %cst_96 = arith.constant 1.000000e+00 : f32
      %267 = vector.broadcast %cst_96 : f32 to vector<8x128xf32>
      %268 = arith.divf %267, %266 : vector<8x128xf32>
      %269 = math.tanh %261 : vector<8x128xf32>
      %270 = vector.extract_strided_slice %268 {offsets = [0, 0], sizes = [8, 32], strides = [1, 1]} : vector<8x128xf32> to vector<8x32xf32>
      %271 = vector.extract_strided_slice %268 {offsets = [0, 32], sizes = [8, 32], strides = [1, 1]} : vector<8x128xf32> to vector<8x32xf32>
      %272 = vector.extract_strided_slice %269 {offsets = [0, 64], sizes = [8, 32], strides = [1, 1]} : vector<8x128xf32> to vector<8x32xf32>
      %273 = vector.extract_strided_slice %268 {offsets = [0, 96], sizes = [8, 32], strides = [1, 1]} : vector<8x128xf32> to vector<8x32xf32>
      %274 = arith.mulf %271, %230 : vector<8x32xf32>
      %275 = arith.mulf %270, %272 : vector<8x32xf32>
      %276 = arith.addf %274, %275 : vector<8x32xf32>
      %277 = math.tanh %276 : vector<8x32xf32>
      %278 = arith.mulf %273, %277 : vector<8x32xf32>
      %c16_i32_97 = arith.constant 16 : i32
      %279 = arith.muli %arg16, %c16_i32_97 : i32
      %c5_i32 = arith.constant 5 : i32
      %280 = arith.addi %279, %c5_i32 : i32
      %c8_i32_98 = arith.constant 8 : i32
      %281 = arith.muli %280, %c8_i32_98 : i32
      %282 = tpu.assume_multiple %281, 8 : i32
      %283 = arith.index_cast %282 : i32 to index
      %c0_99 = arith.constant 0 : index
      %284 = vector.load %arg15[%283, %c0_99] : memref<768x128xf32, #tpu.memory_space<vmem>>, vector<8x128xf32>
      %cst_100 = arith.constant dense<0.000000e+00> : vector<8x128xf32>
      %285 = tpu.matmul %257, %7, %cst_100 {dimension_numbers = #tpu.dot_dimension_numbers<[1], [0], [0], [1], [0, 0, 1, 1], [], []>} : vector<8x32xf32>, vector<32x128xf32>, vector<8x128xf32> -> vector<8x128xf32>
      %286 = arith.addf %284, %285 : vector<8x128xf32>
      %cst_101 = arith.constant 0.000000e+00 : f32
      %287 = vector.broadcast %cst_101 : f32 to vector<8x128xf32>
      %288 = arith.subf %287, %286 : vector<8x128xf32>
      %289 = math.exp %288 : vector<8x128xf32>
      %cst_102 = arith.constant 1.000000e+00 : f32
      %290 = vector.broadcast %cst_102 : f32 to vector<8x128xf32>
      %291 = arith.addf %290, %289 : vector<8x128xf32>
      %cst_103 = arith.constant 1.000000e+00 : f32
      %292 = vector.broadcast %cst_103 : f32 to vector<8x128xf32>
      %293 = arith.divf %292, %291 : vector<8x128xf32>
      %294 = math.tanh %286 : vector<8x128xf32>
      %295 = vector.extract_strided_slice %293 {offsets = [0, 0], sizes = [8, 32], strides = [1, 1]} : vector<8x128xf32> to vector<8x32xf32>
      %296 = vector.extract_strided_slice %293 {offsets = [0, 32], sizes = [8, 32], strides = [1, 1]} : vector<8x128xf32> to vector<8x32xf32>
      %297 = vector.extract_strided_slice %294 {offsets = [0, 64], sizes = [8, 32], strides = [1, 1]} : vector<8x128xf32> to vector<8x32xf32>
      %298 = vector.extract_strided_slice %293 {offsets = [0, 96], sizes = [8, 32], strides = [1, 1]} : vector<8x128xf32> to vector<8x32xf32>
      %299 = arith.mulf %296, %255 : vector<8x32xf32>
      %300 = arith.mulf %295, %297 : vector<8x32xf32>
      %301 = arith.addf %299, %300 : vector<8x32xf32>
      %302 = math.tanh %301 : vector<8x32xf32>
      %303 = arith.mulf %298, %302 : vector<8x32xf32>
      %304 = tpu.concatenate %303, %278 in 1 : vector<8x32xf32>, vector<8x32xf32> -> vector<8x64xf32>
      %cst_104 = arith.constant dense<0.000000e+00> : vector<8x128xf32>
      %305 = tpu.matmul %304, %8, %cst_104 {dimension_numbers = #tpu.dot_dimension_numbers<[1], [0], [0], [1], [0, 0, 1, 1], [], []>} : vector<8x64xf32>, vector<64x128xf32>, vector<8x128xf32> -> vector<8x128xf32>
      %306 = vector.broadcast %9 : vector<1x128xf32> to vector<8x128xf32>
      %307 = arith.addf %305, %306 : vector<8x128xf32>
      %cst_105 = arith.constant 0.000000e+00 : f32
      %308 = vector.broadcast %cst_105 : f32 to vector<8x128xf32>
      %309 = arith.subf %308, %307 : vector<8x128xf32>
      %310 = math.exp %309 : vector<8x128xf32>
      %cst_106 = arith.constant 1.000000e+00 : f32
      %311 = vector.broadcast %cst_106 : f32 to vector<8x128xf32>
      %312 = arith.addf %311, %310 : vector<8x128xf32>
      %cst_107 = arith.constant 1.000000e+00 : f32
      %313 = vector.broadcast %cst_107 : f32 to vector<8x128xf32>
      %314 = arith.divf %313, %312 : vector<8x128xf32>
      %315 = math.tanh %307 : vector<8x128xf32>
      %316 = vector.extract_strided_slice %314 {offsets = [0, 0], sizes = [8, 32], strides = [1, 1]} : vector<8x128xf32> to vector<8x32xf32>
      %317 = vector.extract_strided_slice %314 {offsets = [0, 32], sizes = [8, 32], strides = [1, 1]} : vector<8x128xf32> to vector<8x32xf32>
      %318 = vector.extract_strided_slice %315 {offsets = [0, 64], sizes = [8, 32], strides = [1, 1]} : vector<8x128xf32> to vector<8x32xf32>
      %319 = vector.extract_strided_slice %314 {offsets = [0, 96], sizes = [8, 32], strides = [1, 1]} : vector<8x128xf32> to vector<8x32xf32>
      %320 = arith.mulf %317, %276 : vector<8x32xf32>
      %321 = arith.mulf %316, %318 : vector<8x32xf32>
      %322 = arith.addf %320, %321 : vector<8x32xf32>
      %323 = math.tanh %322 : vector<8x32xf32>
      %324 = arith.mulf %319, %323 : vector<8x32xf32>
      %c16_i32_108 = arith.constant 16 : i32
      %325 = arith.muli %arg16, %c16_i32_108 : i32
      %c6_i32_109 = arith.constant 6 : i32
      %326 = arith.addi %325, %c6_i32_109 : i32
      %c8_i32_110 = arith.constant 8 : i32
      %327 = arith.muli %326, %c8_i32_110 : i32
      %328 = tpu.assume_multiple %327, 8 : i32
      %329 = arith.index_cast %328 : i32 to index
      %c0_111 = arith.constant 0 : index
      %330 = vector.load %arg15[%329, %c0_111] : memref<768x128xf32, #tpu.memory_space<vmem>>, vector<8x128xf32>
      %cst_112 = arith.constant dense<0.000000e+00> : vector<8x128xf32>
      %331 = tpu.matmul %303, %7, %cst_112 {dimension_numbers = #tpu.dot_dimension_numbers<[1], [0], [0], [1], [0, 0, 1, 1], [], []>} : vector<8x32xf32>, vector<32x128xf32>, vector<8x128xf32> -> vector<8x128xf32>
      %332 = arith.addf %330, %331 : vector<8x128xf32>
      %cst_113 = arith.constant 0.000000e+00 : f32
      %333 = vector.broadcast %cst_113 : f32 to vector<8x128xf32>
      %334 = arith.subf %333, %332 : vector<8x128xf32>
      %335 = math.exp %334 : vector<8x128xf32>
      %cst_114 = arith.constant 1.000000e+00 : f32
      %336 = vector.broadcast %cst_114 : f32 to vector<8x128xf32>
      %337 = arith.addf %336, %335 : vector<8x128xf32>
      %cst_115 = arith.constant 1.000000e+00 : f32
      %338 = vector.broadcast %cst_115 : f32 to vector<8x128xf32>
      %339 = arith.divf %338, %337 : vector<8x128xf32>
      %340 = math.tanh %332 : vector<8x128xf32>
      %341 = vector.extract_strided_slice %339 {offsets = [0, 0], sizes = [8, 32], strides = [1, 1]} : vector<8x128xf32> to vector<8x32xf32>
      %342 = vector.extract_strided_slice %339 {offsets = [0, 32], sizes = [8, 32], strides = [1, 1]} : vector<8x128xf32> to vector<8x32xf32>
      %343 = vector.extract_strided_slice %340 {offsets = [0, 64], sizes = [8, 32], strides = [1, 1]} : vector<8x128xf32> to vector<8x32xf32>
      %344 = vector.extract_strided_slice %339 {offsets = [0, 96], sizes = [8, 32], strides = [1, 1]} : vector<8x128xf32> to vector<8x32xf32>
      %345 = arith.mulf %342, %301 : vector<8x32xf32>
      %346 = arith.mulf %341, %343 : vector<8x32xf32>
      %347 = arith.addf %345, %346 : vector<8x32xf32>
      %348 = math.tanh %347 : vector<8x32xf32>
      %349 = arith.mulf %344, %348 : vector<8x32xf32>
      %350 = tpu.concatenate %349, %324 in 1 : vector<8x32xf32>, vector<8x32xf32> -> vector<8x64xf32>
      %cst_116 = arith.constant dense<0.000000e+00> : vector<8x128xf32>
      %351 = tpu.matmul %350, %8, %cst_116 {dimension_numbers = #tpu.dot_dimension_numbers<[1], [0], [0], [1], [0, 0, 1, 1], [], []>} : vector<8x64xf32>, vector<64x128xf32>, vector<8x128xf32> -> vector<8x128xf32>
      %352 = vector.broadcast %9 : vector<1x128xf32> to vector<8x128xf32>
      %353 = arith.addf %351, %352 : vector<8x128xf32>
      %cst_117 = arith.constant 0.000000e+00 : f32
      %354 = vector.broadcast %cst_117 : f32 to vector<8x128xf32>
      %355 = arith.subf %354, %353 : vector<8x128xf32>
      %356 = math.exp %355 : vector<8x128xf32>
      %cst_118 = arith.constant 1.000000e+00 : f32
      %357 = vector.broadcast %cst_118 : f32 to vector<8x128xf32>
      %358 = arith.addf %357, %356 : vector<8x128xf32>
      %cst_119 = arith.constant 1.000000e+00 : f32
      %359 = vector.broadcast %cst_119 : f32 to vector<8x128xf32>
      %360 = arith.divf %359, %358 : vector<8x128xf32>
      %361 = math.tanh %353 : vector<8x128xf32>
      %362 = vector.extract_strided_slice %360 {offsets = [0, 0], sizes = [8, 32], strides = [1, 1]} : vector<8x128xf32> to vector<8x32xf32>
      %363 = vector.extract_strided_slice %360 {offsets = [0, 32], sizes = [8, 32], strides = [1, 1]} : vector<8x128xf32> to vector<8x32xf32>
      %364 = vector.extract_strided_slice %361 {offsets = [0, 64], sizes = [8, 32], strides = [1, 1]} : vector<8x128xf32> to vector<8x32xf32>
      %365 = vector.extract_strided_slice %360 {offsets = [0, 96], sizes = [8, 32], strides = [1, 1]} : vector<8x128xf32> to vector<8x32xf32>
      %366 = arith.mulf %363, %322 : vector<8x32xf32>
      %367 = arith.mulf %362, %364 : vector<8x32xf32>
      %368 = arith.addf %366, %367 : vector<8x32xf32>
      %369 = math.tanh %368 : vector<8x32xf32>
      %370 = arith.mulf %365, %369 : vector<8x32xf32>
      %c16_i32_120 = arith.constant 16 : i32
      %371 = arith.muli %arg16, %c16_i32_120 : i32
      %c7_i32 = arith.constant 7 : i32
      %372 = arith.addi %371, %c7_i32 : i32
      %c8_i32_121 = arith.constant 8 : i32
      %373 = arith.muli %372, %c8_i32_121 : i32
      %374 = tpu.assume_multiple %373, 8 : i32
      %375 = arith.index_cast %374 : i32 to index
      %c0_122 = arith.constant 0 : index
      %376 = vector.load %arg15[%375, %c0_122] : memref<768x128xf32, #tpu.memory_space<vmem>>, vector<8x128xf32>
      %cst_123 = arith.constant dense<0.000000e+00> : vector<8x128xf32>
      %377 = tpu.matmul %349, %7, %cst_123 {dimension_numbers = #tpu.dot_dimension_numbers<[1], [0], [0], [1], [0, 0, 1, 1], [], []>} : vector<8x32xf32>, vector<32x128xf32>, vector<8x128xf32> -> vector<8x128xf32>
      %378 = arith.addf %376, %377 : vector<8x128xf32>
      %cst_124 = arith.constant 0.000000e+00 : f32
      %379 = vector.broadcast %cst_124 : f32 to vector<8x128xf32>
      %380 = arith.subf %379, %378 : vector<8x128xf32>
      %381 = math.exp %380 : vector<8x128xf32>
      %cst_125 = arith.constant 1.000000e+00 : f32
      %382 = vector.broadcast %cst_125 : f32 to vector<8x128xf32>
      %383 = arith.addf %382, %381 : vector<8x128xf32>
      %cst_126 = arith.constant 1.000000e+00 : f32
      %384 = vector.broadcast %cst_126 : f32 to vector<8x128xf32>
      %385 = arith.divf %384, %383 : vector<8x128xf32>
      %386 = math.tanh %378 : vector<8x128xf32>
      %387 = vector.extract_strided_slice %385 {offsets = [0, 0], sizes = [8, 32], strides = [1, 1]} : vector<8x128xf32> to vector<8x32xf32>
      %388 = vector.extract_strided_slice %385 {offsets = [0, 32], sizes = [8, 32], strides = [1, 1]} : vector<8x128xf32> to vector<8x32xf32>
      %389 = vector.extract_strided_slice %386 {offsets = [0, 64], sizes = [8, 32], strides = [1, 1]} : vector<8x128xf32> to vector<8x32xf32>
      %390 = vector.extract_strided_slice %385 {offsets = [0, 96], sizes = [8, 32], strides = [1, 1]} : vector<8x128xf32> to vector<8x32xf32>
      %391 = arith.mulf %388, %347 : vector<8x32xf32>
      %392 = arith.mulf %387, %389 : vector<8x32xf32>
      %393 = arith.addf %391, %392 : vector<8x32xf32>
      %394 = math.tanh %393 : vector<8x32xf32>
      %395 = arith.mulf %390, %394 : vector<8x32xf32>
      %396 = tpu.concatenate %395, %370 in 1 : vector<8x32xf32>, vector<8x32xf32> -> vector<8x64xf32>
      %cst_127 = arith.constant dense<0.000000e+00> : vector<8x128xf32>
      %397 = tpu.matmul %396, %8, %cst_127 {dimension_numbers = #tpu.dot_dimension_numbers<[1], [0], [0], [1], [0, 0, 1, 1], [], []>} : vector<8x64xf32>, vector<64x128xf32>, vector<8x128xf32> -> vector<8x128xf32>
      %398 = vector.broadcast %9 : vector<1x128xf32> to vector<8x128xf32>
      %399 = arith.addf %397, %398 : vector<8x128xf32>
      %cst_128 = arith.constant 0.000000e+00 : f32
      %400 = vector.broadcast %cst_128 : f32 to vector<8x128xf32>
      %401 = arith.subf %400, %399 : vector<8x128xf32>
      %402 = math.exp %401 : vector<8x128xf32>
      %cst_129 = arith.constant 1.000000e+00 : f32
      %403 = vector.broadcast %cst_129 : f32 to vector<8x128xf32>
      %404 = arith.addf %403, %402 : vector<8x128xf32>
      %cst_130 = arith.constant 1.000000e+00 : f32
      %405 = vector.broadcast %cst_130 : f32 to vector<8x128xf32>
      %406 = arith.divf %405, %404 : vector<8x128xf32>
      %407 = math.tanh %399 : vector<8x128xf32>
      %408 = vector.extract_strided_slice %406 {offsets = [0, 0], sizes = [8, 32], strides = [1, 1]} : vector<8x128xf32> to vector<8x32xf32>
      %409 = vector.extract_strided_slice %406 {offsets = [0, 32], sizes = [8, 32], strides = [1, 1]} : vector<8x128xf32> to vector<8x32xf32>
      %410 = vector.extract_strided_slice %407 {offsets = [0, 64], sizes = [8, 32], strides = [1, 1]} : vector<8x128xf32> to vector<8x32xf32>
      %411 = vector.extract_strided_slice %406 {offsets = [0, 96], sizes = [8, 32], strides = [1, 1]} : vector<8x128xf32> to vector<8x32xf32>
      %412 = arith.mulf %409, %368 : vector<8x32xf32>
      %413 = arith.mulf %408, %410 : vector<8x32xf32>
      %414 = arith.addf %412, %413 : vector<8x32xf32>
      %415 = math.tanh %414 : vector<8x32xf32>
      %416 = arith.mulf %411, %415 : vector<8x32xf32>
      %c16_i32_131 = arith.constant 16 : i32
      %417 = arith.muli %arg16, %c16_i32_131 : i32
      %c8_i32_132 = arith.constant 8 : i32
      %418 = arith.addi %417, %c8_i32_132 : i32
      %c8_i32_133 = arith.constant 8 : i32
      %419 = arith.muli %418, %c8_i32_133 : i32
      %420 = tpu.assume_multiple %419, 8 : i32
      %421 = arith.index_cast %420 : i32 to index
      %c0_134 = arith.constant 0 : index
      %422 = vector.load %arg15[%421, %c0_134] : memref<768x128xf32, #tpu.memory_space<vmem>>, vector<8x128xf32>
      %cst_135 = arith.constant dense<0.000000e+00> : vector<8x128xf32>
      %423 = tpu.matmul %395, %7, %cst_135 {dimension_numbers = #tpu.dot_dimension_numbers<[1], [0], [0], [1], [0, 0, 1, 1], [], []>} : vector<8x32xf32>, vector<32x128xf32>, vector<8x128xf32> -> vector<8x128xf32>
      %424 = arith.addf %422, %423 : vector<8x128xf32>
      %cst_136 = arith.constant 0.000000e+00 : f32
      %425 = vector.broadcast %cst_136 : f32 to vector<8x128xf32>
      %426 = arith.subf %425, %424 : vector<8x128xf32>
      %427 = math.exp %426 : vector<8x128xf32>
      %cst_137 = arith.constant 1.000000e+00 : f32
      %428 = vector.broadcast %cst_137 : f32 to vector<8x128xf32>
      %429 = arith.addf %428, %427 : vector<8x128xf32>
      %cst_138 = arith.constant 1.000000e+00 : f32
      %430 = vector.broadcast %cst_138 : f32 to vector<8x128xf32>
      %431 = arith.divf %430, %429 : vector<8x128xf32>
      %432 = math.tanh %424 : vector<8x128xf32>
      %433 = vector.extract_strided_slice %431 {offsets = [0, 0], sizes = [8, 32], strides = [1, 1]} : vector<8x128xf32> to vector<8x32xf32>
      %434 = vector.extract_strided_slice %431 {offsets = [0, 32], sizes = [8, 32], strides = [1, 1]} : vector<8x128xf32> to vector<8x32xf32>
      %435 = vector.extract_strided_slice %432 {offsets = [0, 64], sizes = [8, 32], strides = [1, 1]} : vector<8x128xf32> to vector<8x32xf32>
      %436 = vector.extract_strided_slice %431 {offsets = [0, 96], sizes = [8, 32], strides = [1, 1]} : vector<8x128xf32> to vector<8x32xf32>
      %437 = arith.mulf %434, %393 : vector<8x32xf32>
      %438 = arith.mulf %433, %435 : vector<8x32xf32>
      %439 = arith.addf %437, %438 : vector<8x32xf32>
      %440 = math.tanh %439 : vector<8x32xf32>
      %441 = arith.mulf %436, %440 : vector<8x32xf32>
      %442 = tpu.concatenate %441, %416 in 1 : vector<8x32xf32>, vector<8x32xf32> -> vector<8x64xf32>
      %cst_139 = arith.constant dense<0.000000e+00> : vector<8x128xf32>
      %443 = tpu.matmul %442, %8, %cst_139 {dimension_numbers = #tpu.dot_dimension_numbers<[1], [0], [0], [1], [0, 0, 1, 1], [], []>} : vector<8x64xf32>, vector<64x128xf32>, vector<8x128xf32> -> vector<8x128xf32>
      %444 = vector.broadcast %9 : vector<1x128xf32> to vector<8x128xf32>
      %445 = arith.addf %443, %444 : vector<8x128xf32>
      %cst_140 = arith.constant 0.000000e+00 : f32
      %446 = vector.broadcast %cst_140 : f32 to vector<8x128xf32>
      %447 = arith.subf %446, %445 : vector<8x128xf32>
      %448 = math.exp %447 : vector<8x128xf32>
      %cst_141 = arith.constant 1.000000e+00 : f32
      %449 = vector.broadcast %cst_141 : f32 to vector<8x128xf32>
      %450 = arith.addf %449, %448 : vector<8x128xf32>
      %cst_142 = arith.constant 1.000000e+00 : f32
      %451 = vector.broadcast %cst_142 : f32 to vector<8x128xf32>
      %452 = arith.divf %451, %450 : vector<8x128xf32>
      %453 = math.tanh %445 : vector<8x128xf32>
      %454 = vector.extract_strided_slice %452 {offsets = [0, 0], sizes = [8, 32], strides = [1, 1]} : vector<8x128xf32> to vector<8x32xf32>
      %455 = vector.extract_strided_slice %452 {offsets = [0, 32], sizes = [8, 32], strides = [1, 1]} : vector<8x128xf32> to vector<8x32xf32>
      %456 = vector.extract_strided_slice %453 {offsets = [0, 64], sizes = [8, 32], strides = [1, 1]} : vector<8x128xf32> to vector<8x32xf32>
      %457 = vector.extract_strided_slice %452 {offsets = [0, 96], sizes = [8, 32], strides = [1, 1]} : vector<8x128xf32> to vector<8x32xf32>
      %458 = arith.mulf %455, %414 : vector<8x32xf32>
      %459 = arith.mulf %454, %456 : vector<8x32xf32>
      %460 = arith.addf %458, %459 : vector<8x32xf32>
      %461 = math.tanh %460 : vector<8x32xf32>
      %462 = arith.mulf %457, %461 : vector<8x32xf32>
      %c16_i32_143 = arith.constant 16 : i32
      %463 = arith.muli %arg16, %c16_i32_143 : i32
      %c9_i32 = arith.constant 9 : i32
      %464 = arith.addi %463, %c9_i32 : i32
      %c8_i32_144 = arith.constant 8 : i32
      %465 = arith.muli %464, %c8_i32_144 : i32
      %466 = tpu.assume_multiple %465, 8 : i32
      %467 = arith.index_cast %466 : i32 to index
      %c0_145 = arith.constant 0 : index
      %468 = vector.load %arg15[%467, %c0_145] : memref<768x128xf32, #tpu.memory_space<vmem>>, vector<8x128xf32>
      %cst_146 = arith.constant dense<0.000000e+00> : vector<8x128xf32>
      %469 = tpu.matmul %441, %7, %cst_146 {dimension_numbers = #tpu.dot_dimension_numbers<[1], [0], [0], [1], [0, 0, 1, 1], [], []>} : vector<8x32xf32>, vector<32x128xf32>, vector<8x128xf32> -> vector<8x128xf32>
      %470 = arith.addf %468, %469 : vector<8x128xf32>
      %cst_147 = arith.constant 0.000000e+00 : f32
      %471 = vector.broadcast %cst_147 : f32 to vector<8x128xf32>
      %472 = arith.subf %471, %470 : vector<8x128xf32>
      %473 = math.exp %472 : vector<8x128xf32>
      %cst_148 = arith.constant 1.000000e+00 : f32
      %474 = vector.broadcast %cst_148 : f32 to vector<8x128xf32>
      %475 = arith.addf %474, %473 : vector<8x128xf32>
      %cst_149 = arith.constant 1.000000e+00 : f32
      %476 = vector.broadcast %cst_149 : f32 to vector<8x128xf32>
      %477 = arith.divf %476, %475 : vector<8x128xf32>
      %478 = math.tanh %470 : vector<8x128xf32>
      %479 = vector.extract_strided_slice %477 {offsets = [0, 0], sizes = [8, 32], strides = [1, 1]} : vector<8x128xf32> to vector<8x32xf32>
      %480 = vector.extract_strided_slice %477 {offsets = [0, 32], sizes = [8, 32], strides = [1, 1]} : vector<8x128xf32> to vector<8x32xf32>
      %481 = vector.extract_strided_slice %478 {offsets = [0, 64], sizes = [8, 32], strides = [1, 1]} : vector<8x128xf32> to vector<8x32xf32>
      %482 = vector.extract_strided_slice %477 {offsets = [0, 96], sizes = [8, 32], strides = [1, 1]} : vector<8x128xf32> to vector<8x32xf32>
      %483 = arith.mulf %480, %439 : vector<8x32xf32>
      %484 = arith.mulf %479, %481 : vector<8x32xf32>
      %485 = arith.addf %483, %484 : vector<8x32xf32>
      %486 = math.tanh %485 : vector<8x32xf32>
      %487 = arith.mulf %482, %486 : vector<8x32xf32>
      %488 = tpu.concatenate %487, %462 in 1 : vector<8x32xf32>, vector<8x32xf32> -> vector<8x64xf32>
      %cst_150 = arith.constant dense<0.000000e+00> : vector<8x128xf32>
      %489 = tpu.matmul %488, %8, %cst_150 {dimension_numbers = #tpu.dot_dimension_numbers<[1], [0], [0], [1], [0, 0, 1, 1], [], []>} : vector<8x64xf32>, vector<64x128xf32>, vector<8x128xf32> -> vector<8x128xf32>
      %490 = vector.broadcast %9 : vector<1x128xf32> to vector<8x128xf32>
      %491 = arith.addf %489, %490 : vector<8x128xf32>
      %cst_151 = arith.constant 0.000000e+00 : f32
      %492 = vector.broadcast %cst_151 : f32 to vector<8x128xf32>
      %493 = arith.subf %492, %491 : vector<8x128xf32>
      %494 = math.exp %493 : vector<8x128xf32>
      %cst_152 = arith.constant 1.000000e+00 : f32
      %495 = vector.broadcast %cst_152 : f32 to vector<8x128xf32>
      %496 = arith.addf %495, %494 : vector<8x128xf32>
      %cst_153 = arith.constant 1.000000e+00 : f32
      %497 = vector.broadcast %cst_153 : f32 to vector<8x128xf32>
      %498 = arith.divf %497, %496 : vector<8x128xf32>
      %499 = math.tanh %491 : vector<8x128xf32>
      %500 = vector.extract_strided_slice %498 {offsets = [0, 0], sizes = [8, 32], strides = [1, 1]} : vector<8x128xf32> to vector<8x32xf32>
      %501 = vector.extract_strided_slice %498 {offsets = [0, 32], sizes = [8, 32], strides = [1, 1]} : vector<8x128xf32> to vector<8x32xf32>
      %502 = vector.extract_strided_slice %499 {offsets = [0, 64], sizes = [8, 32], strides = [1, 1]} : vector<8x128xf32> to vector<8x32xf32>
      %503 = vector.extract_strided_slice %498 {offsets = [0, 96], sizes = [8, 32], strides = [1, 1]} : vector<8x128xf32> to vector<8x32xf32>
      %504 = arith.mulf %501, %460 : vector<8x32xf32>
      %505 = arith.mulf %500, %502 : vector<8x32xf32>
      %506 = arith.addf %504, %505 : vector<8x32xf32>
      %507 = math.tanh %506 : vector<8x32xf32>
      %508 = arith.mulf %503, %507 : vector<8x32xf32>
      %c16_i32_154 = arith.constant 16 : i32
      %509 = arith.muli %arg16, %c16_i32_154 : i32
      %c10_i32 = arith.constant 10 : i32
      %510 = arith.addi %509, %c10_i32 : i32
      %c8_i32_155 = arith.constant 8 : i32
      %511 = arith.muli %510, %c8_i32_155 : i32
      %512 = tpu.assume_multiple %511, 8 : i32
      %513 = arith.index_cast %512 : i32 to index
      %c0_156 = arith.constant 0 : index
      %514 = vector.load %arg15[%513, %c0_156] : memref<768x128xf32, #tpu.memory_space<vmem>>, vector<8x128xf32>
      %cst_157 = arith.constant dense<0.000000e+00> : vector<8x128xf32>
      %515 = tpu.matmul %487, %7, %cst_157 {dimension_numbers = #tpu.dot_dimension_numbers<[1], [0], [0], [1], [0, 0, 1, 1], [], []>} : vector<8x32xf32>, vector<32x128xf32>, vector<8x128xf32> -> vector<8x128xf32>
      %516 = arith.addf %514, %515 : vector<8x128xf32>
      %cst_158 = arith.constant 0.000000e+00 : f32
      %517 = vector.broadcast %cst_158 : f32 to vector<8x128xf32>
      %518 = arith.subf %517, %516 : vector<8x128xf32>
      %519 = math.exp %518 : vector<8x128xf32>
      %cst_159 = arith.constant 1.000000e+00 : f32
      %520 = vector.broadcast %cst_159 : f32 to vector<8x128xf32>
      %521 = arith.addf %520, %519 : vector<8x128xf32>
      %cst_160 = arith.constant 1.000000e+00 : f32
      %522 = vector.broadcast %cst_160 : f32 to vector<8x128xf32>
      %523 = arith.divf %522, %521 : vector<8x128xf32>
      %524 = math.tanh %516 : vector<8x128xf32>
      %525 = vector.extract_strided_slice %523 {offsets = [0, 0], sizes = [8, 32], strides = [1, 1]} : vector<8x128xf32> to vector<8x32xf32>
      %526 = vector.extract_strided_slice %523 {offsets = [0, 32], sizes = [8, 32], strides = [1, 1]} : vector<8x128xf32> to vector<8x32xf32>
      %527 = vector.extract_strided_slice %524 {offsets = [0, 64], sizes = [8, 32], strides = [1, 1]} : vector<8x128xf32> to vector<8x32xf32>
      %528 = vector.extract_strided_slice %523 {offsets = [0, 96], sizes = [8, 32], strides = [1, 1]} : vector<8x128xf32> to vector<8x32xf32>
      %529 = arith.mulf %526, %485 : vector<8x32xf32>
      %530 = arith.mulf %525, %527 : vector<8x32xf32>
      %531 = arith.addf %529, %530 : vector<8x32xf32>
      %532 = math.tanh %531 : vector<8x32xf32>
      %533 = arith.mulf %528, %532 : vector<8x32xf32>
      %534 = tpu.concatenate %533, %508 in 1 : vector<8x32xf32>, vector<8x32xf32> -> vector<8x64xf32>
      %cst_161 = arith.constant dense<0.000000e+00> : vector<8x128xf32>
      %535 = tpu.matmul %534, %8, %cst_161 {dimension_numbers = #tpu.dot_dimension_numbers<[1], [0], [0], [1], [0, 0, 1, 1], [], []>} : vector<8x64xf32>, vector<64x128xf32>, vector<8x128xf32> -> vector<8x128xf32>
      %536 = vector.broadcast %9 : vector<1x128xf32> to vector<8x128xf32>
      %537 = arith.addf %535, %536 : vector<8x128xf32>
      %cst_162 = arith.constant 0.000000e+00 : f32
      %538 = vector.broadcast %cst_162 : f32 to vector<8x128xf32>
      %539 = arith.subf %538, %537 : vector<8x128xf32>
      %540 = math.exp %539 : vector<8x128xf32>
      %cst_163 = arith.constant 1.000000e+00 : f32
      %541 = vector.broadcast %cst_163 : f32 to vector<8x128xf32>
      %542 = arith.addf %541, %540 : vector<8x128xf32>
      %cst_164 = arith.constant 1.000000e+00 : f32
      %543 = vector.broadcast %cst_164 : f32 to vector<8x128xf32>
      %544 = arith.divf %543, %542 : vector<8x128xf32>
      %545 = math.tanh %537 : vector<8x128xf32>
      %546 = vector.extract_strided_slice %544 {offsets = [0, 0], sizes = [8, 32], strides = [1, 1]} : vector<8x128xf32> to vector<8x32xf32>
      %547 = vector.extract_strided_slice %544 {offsets = [0, 32], sizes = [8, 32], strides = [1, 1]} : vector<8x128xf32> to vector<8x32xf32>
      %548 = vector.extract_strided_slice %545 {offsets = [0, 64], sizes = [8, 32], strides = [1, 1]} : vector<8x128xf32> to vector<8x32xf32>
      %549 = vector.extract_strided_slice %544 {offsets = [0, 96], sizes = [8, 32], strides = [1, 1]} : vector<8x128xf32> to vector<8x32xf32>
      %550 = arith.mulf %547, %506 : vector<8x32xf32>
      %551 = arith.mulf %546, %548 : vector<8x32xf32>
      %552 = arith.addf %550, %551 : vector<8x32xf32>
      %553 = math.tanh %552 : vector<8x32xf32>
      %554 = arith.mulf %549, %553 : vector<8x32xf32>
      %c16_i32_165 = arith.constant 16 : i32
      %555 = arith.muli %arg16, %c16_i32_165 : i32
      %c11_i32 = arith.constant 11 : i32
      %556 = arith.addi %555, %c11_i32 : i32
      %c8_i32_166 = arith.constant 8 : i32
      %557 = arith.muli %556, %c8_i32_166 : i32
      %558 = tpu.assume_multiple %557, 8 : i32
      %559 = arith.index_cast %558 : i32 to index
      %c0_167 = arith.constant 0 : index
      %560 = vector.load %arg15[%559, %c0_167] : memref<768x128xf32, #tpu.memory_space<vmem>>, vector<8x128xf32>
      %cst_168 = arith.constant dense<0.000000e+00> : vector<8x128xf32>
      %561 = tpu.matmul %533, %7, %cst_168 {dimension_numbers = #tpu.dot_dimension_numbers<[1], [0], [0], [1], [0, 0, 1, 1], [], []>} : vector<8x32xf32>, vector<32x128xf32>, vector<8x128xf32> -> vector<8x128xf32>
      %562 = arith.addf %560, %561 : vector<8x128xf32>
      %cst_169 = arith.constant 0.000000e+00 : f32
      %563 = vector.broadcast %cst_169 : f32 to vector<8x128xf32>
      %564 = arith.subf %563, %562 : vector<8x128xf32>
      %565 = math.exp %564 : vector<8x128xf32>
      %cst_170 = arith.constant 1.000000e+00 : f32
      %566 = vector.broadcast %cst_170 : f32 to vector<8x128xf32>
      %567 = arith.addf %566, %565 : vector<8x128xf32>
      %cst_171 = arith.constant 1.000000e+00 : f32
      %568 = vector.broadcast %cst_171 : f32 to vector<8x128xf32>
      %569 = arith.divf %568, %567 : vector<8x128xf32>
      %570 = math.tanh %562 : vector<8x128xf32>
      %571 = vector.extract_strided_slice %569 {offsets = [0, 0], sizes = [8, 32], strides = [1, 1]} : vector<8x128xf32> to vector<8x32xf32>
      %572 = vector.extract_strided_slice %569 {offsets = [0, 32], sizes = [8, 32], strides = [1, 1]} : vector<8x128xf32> to vector<8x32xf32>
      %573 = vector.extract_strided_slice %570 {offsets = [0, 64], sizes = [8, 32], strides = [1, 1]} : vector<8x128xf32> to vector<8x32xf32>
      %574 = vector.extract_strided_slice %569 {offsets = [0, 96], sizes = [8, 32], strides = [1, 1]} : vector<8x128xf32> to vector<8x32xf32>
      %575 = arith.mulf %572, %531 : vector<8x32xf32>
      %576 = arith.mulf %571, %573 : vector<8x32xf32>
      %577 = arith.addf %575, %576 : vector<8x32xf32>
      %578 = math.tanh %577 : vector<8x32xf32>
      %579 = arith.mulf %574, %578 : vector<8x32xf32>
      %580 = tpu.concatenate %579, %554 in 1 : vector<8x32xf32>, vector<8x32xf32> -> vector<8x64xf32>
      %cst_172 = arith.constant dense<0.000000e+00> : vector<8x128xf32>
      %581 = tpu.matmul %580, %8, %cst_172 {dimension_numbers = #tpu.dot_dimension_numbers<[1], [0], [0], [1], [0, 0, 1, 1], [], []>} : vector<8x64xf32>, vector<64x128xf32>, vector<8x128xf32> -> vector<8x128xf32>
      %582 = vector.broadcast %9 : vector<1x128xf32> to vector<8x128xf32>
      %583 = arith.addf %581, %582 : vector<8x128xf32>
      %cst_173 = arith.constant 0.000000e+00 : f32
      %584 = vector.broadcast %cst_173 : f32 to vector<8x128xf32>
      %585 = arith.subf %584, %583 : vector<8x128xf32>
      %586 = math.exp %585 : vector<8x128xf32>
      %cst_174 = arith.constant 1.000000e+00 : f32
      %587 = vector.broadcast %cst_174 : f32 to vector<8x128xf32>
      %588 = arith.addf %587, %586 : vector<8x128xf32>
      %cst_175 = arith.constant 1.000000e+00 : f32
      %589 = vector.broadcast %cst_175 : f32 to vector<8x128xf32>
      %590 = arith.divf %589, %588 : vector<8x128xf32>
      %591 = math.tanh %583 : vector<8x128xf32>
      %592 = vector.extract_strided_slice %590 {offsets = [0, 0], sizes = [8, 32], strides = [1, 1]} : vector<8x128xf32> to vector<8x32xf32>
      %593 = vector.extract_strided_slice %590 {offsets = [0, 32], sizes = [8, 32], strides = [1, 1]} : vector<8x128xf32> to vector<8x32xf32>
      %594 = vector.extract_strided_slice %591 {offsets = [0, 64], sizes = [8, 32], strides = [1, 1]} : vector<8x128xf32> to vector<8x32xf32>
      %595 = vector.extract_strided_slice %590 {offsets = [0, 96], sizes = [8, 32], strides = [1, 1]} : vector<8x128xf32> to vector<8x32xf32>
      %596 = arith.mulf %593, %552 : vector<8x32xf32>
      %597 = arith.mulf %592, %594 : vector<8x32xf32>
      %598 = arith.addf %596, %597 : vector<8x32xf32>
      %599 = math.tanh %598 : vector<8x32xf32>
      %600 = arith.mulf %595, %599 : vector<8x32xf32>
      %c16_i32_176 = arith.constant 16 : i32
      %601 = arith.muli %arg16, %c16_i32_176 : i32
      %c12_i32 = arith.constant 12 : i32
      %602 = arith.addi %601, %c12_i32 : i32
      %c8_i32_177 = arith.constant 8 : i32
      %603 = arith.muli %602, %c8_i32_177 : i32
      %604 = tpu.assume_multiple %603, 8 : i32
      %605 = arith.index_cast %604 : i32 to index
      %c0_178 = arith.constant 0 : index
      %606 = vector.load %arg15[%605, %c0_178] : memref<768x128xf32, #tpu.memory_space<vmem>>, vector<8x128xf32>
      %cst_179 = arith.constant dense<0.000000e+00> : vector<8x128xf32>
      %607 = tpu.matmul %579, %7, %cst_179 {dimension_numbers = #tpu.dot_dimension_numbers<[1], [0], [0], [1], [0, 0, 1, 1], [], []>} : vector<8x32xf32>, vector<32x128xf32>, vector<8x128xf32> -> vector<8x128xf32>
      %608 = arith.addf %606, %607 : vector<8x128xf32>
      %cst_180 = arith.constant 0.000000e+00 : f32
      %609 = vector.broadcast %cst_180 : f32 to vector<8x128xf32>
      %610 = arith.subf %609, %608 : vector<8x128xf32>
      %611 = math.exp %610 : vector<8x128xf32>
      %cst_181 = arith.constant 1.000000e+00 : f32
      %612 = vector.broadcast %cst_181 : f32 to vector<8x128xf32>
      %613 = arith.addf %612, %611 : vector<8x128xf32>
      %cst_182 = arith.constant 1.000000e+00 : f32
      %614 = vector.broadcast %cst_182 : f32 to vector<8x128xf32>
      %615 = arith.divf %614, %613 : vector<8x128xf32>
      %616 = math.tanh %608 : vector<8x128xf32>
      %617 = vector.extract_strided_slice %615 {offsets = [0, 0], sizes = [8, 32], strides = [1, 1]} : vector<8x128xf32> to vector<8x32xf32>
      %618 = vector.extract_strided_slice %615 {offsets = [0, 32], sizes = [8, 32], strides = [1, 1]} : vector<8x128xf32> to vector<8x32xf32>
      %619 = vector.extract_strided_slice %616 {offsets = [0, 64], sizes = [8, 32], strides = [1, 1]} : vector<8x128xf32> to vector<8x32xf32>
      %620 = vector.extract_strided_slice %615 {offsets = [0, 96], sizes = [8, 32], strides = [1, 1]} : vector<8x128xf32> to vector<8x32xf32>
      %621 = arith.mulf %618, %577 : vector<8x32xf32>
      %622 = arith.mulf %617, %619 : vector<8x32xf32>
      %623 = arith.addf %621, %622 : vector<8x32xf32>
      %624 = math.tanh %623 : vector<8x32xf32>
      %625 = arith.mulf %620, %624 : vector<8x32xf32>
      %626 = tpu.concatenate %625, %600 in 1 : vector<8x32xf32>, vector<8x32xf32> -> vector<8x64xf32>
      %cst_183 = arith.constant dense<0.000000e+00> : vector<8x128xf32>
      %627 = tpu.matmul %626, %8, %cst_183 {dimension_numbers = #tpu.dot_dimension_numbers<[1], [0], [0], [1], [0, 0, 1, 1], [], []>} : vector<8x64xf32>, vector<64x128xf32>, vector<8x128xf32> -> vector<8x128xf32>
      %628 = vector.broadcast %9 : vector<1x128xf32> to vector<8x128xf32>
      %629 = arith.addf %627, %628 : vector<8x128xf32>
      %cst_184 = arith.constant 0.000000e+00 : f32
      %630 = vector.broadcast %cst_184 : f32 to vector<8x128xf32>
      %631 = arith.subf %630, %629 : vector<8x128xf32>
      %632 = math.exp %631 : vector<8x128xf32>
      %cst_185 = arith.constant 1.000000e+00 : f32
      %633 = vector.broadcast %cst_185 : f32 to vector<8x128xf32>
      %634 = arith.addf %633, %632 : vector<8x128xf32>
      %cst_186 = arith.constant 1.000000e+00 : f32
      %635 = vector.broadcast %cst_186 : f32 to vector<8x128xf32>
      %636 = arith.divf %635, %634 : vector<8x128xf32>
      %637 = math.tanh %629 : vector<8x128xf32>
      %638 = vector.extract_strided_slice %636 {offsets = [0, 0], sizes = [8, 32], strides = [1, 1]} : vector<8x128xf32> to vector<8x32xf32>
      %639 = vector.extract_strided_slice %636 {offsets = [0, 32], sizes = [8, 32], strides = [1, 1]} : vector<8x128xf32> to vector<8x32xf32>
      %640 = vector.extract_strided_slice %637 {offsets = [0, 64], sizes = [8, 32], strides = [1, 1]} : vector<8x128xf32> to vector<8x32xf32>
      %641 = vector.extract_strided_slice %636 {offsets = [0, 96], sizes = [8, 32], strides = [1, 1]} : vector<8x128xf32> to vector<8x32xf32>
      %642 = arith.mulf %639, %598 : vector<8x32xf32>
      %643 = arith.mulf %638, %640 : vector<8x32xf32>
      %644 = arith.addf %642, %643 : vector<8x32xf32>
      %645 = math.tanh %644 : vector<8x32xf32>
      %646 = arith.mulf %641, %645 : vector<8x32xf32>
      %c16_i32_187 = arith.constant 16 : i32
      %647 = arith.muli %arg16, %c16_i32_187 : i32
      %c13_i32 = arith.constant 13 : i32
      %648 = arith.addi %647, %c13_i32 : i32
      %c8_i32_188 = arith.constant 8 : i32
      %649 = arith.muli %648, %c8_i32_188 : i32
      %650 = tpu.assume_multiple %649, 8 : i32
      %651 = arith.index_cast %650 : i32 to index
      %c0_189 = arith.constant 0 : index
      %652 = vector.load %arg15[%651, %c0_189] : memref<768x128xf32, #tpu.memory_space<vmem>>, vector<8x128xf32>
      %cst_190 = arith.constant dense<0.000000e+00> : vector<8x128xf32>
      %653 = tpu.matmul %625, %7, %cst_190 {dimension_numbers = #tpu.dot_dimension_numbers<[1], [0], [0], [1], [0, 0, 1, 1], [], []>} : vector<8x32xf32>, vector<32x128xf32>, vector<8x128xf32> -> vector<8x128xf32>
      %654 = arith.addf %652, %653 : vector<8x128xf32>
      %cst_191 = arith.constant 0.000000e+00 : f32
      %655 = vector.broadcast %cst_191 : f32 to vector<8x128xf32>
      %656 = arith.subf %655, %654 : vector<8x128xf32>
      %657 = math.exp %656 : vector<8x128xf32>
      %cst_192 = arith.constant 1.000000e+00 : f32
      %658 = vector.broadcast %cst_192 : f32 to vector<8x128xf32>
      %659 = arith.addf %658, %657 : vector<8x128xf32>
      %cst_193 = arith.constant 1.000000e+00 : f32
      %660 = vector.broadcast %cst_193 : f32 to vector<8x128xf32>
      %661 = arith.divf %660, %659 : vector<8x128xf32>
      %662 = math.tanh %654 : vector<8x128xf32>
      %663 = vector.extract_strided_slice %661 {offsets = [0, 0], sizes = [8, 32], strides = [1, 1]} : vector<8x128xf32> to vector<8x32xf32>
      %664 = vector.extract_strided_slice %661 {offsets = [0, 32], sizes = [8, 32], strides = [1, 1]} : vector<8x128xf32> to vector<8x32xf32>
      %665 = vector.extract_strided_slice %662 {offsets = [0, 64], sizes = [8, 32], strides = [1, 1]} : vector<8x128xf32> to vector<8x32xf32>
      %666 = vector.extract_strided_slice %661 {offsets = [0, 96], sizes = [8, 32], strides = [1, 1]} : vector<8x128xf32> to vector<8x32xf32>
      %667 = arith.mulf %664, %623 : vector<8x32xf32>
      %668 = arith.mulf %663, %665 : vector<8x32xf32>
      %669 = arith.addf %667, %668 : vector<8x32xf32>
      %670 = math.tanh %669 : vector<8x32xf32>
      %671 = arith.mulf %666, %670 : vector<8x32xf32>
      %672 = tpu.concatenate %671, %646 in 1 : vector<8x32xf32>, vector<8x32xf32> -> vector<8x64xf32>
      %cst_194 = arith.constant dense<0.000000e+00> : vector<8x128xf32>
      %673 = tpu.matmul %672, %8, %cst_194 {dimension_numbers = #tpu.dot_dimension_numbers<[1], [0], [0], [1], [0, 0, 1, 1], [], []>} : vector<8x64xf32>, vector<64x128xf32>, vector<8x128xf32> -> vector<8x128xf32>
      %674 = vector.broadcast %9 : vector<1x128xf32> to vector<8x128xf32>
      %675 = arith.addf %673, %674 : vector<8x128xf32>
      %cst_195 = arith.constant 0.000000e+00 : f32
      %676 = vector.broadcast %cst_195 : f32 to vector<8x128xf32>
      %677 = arith.subf %676, %675 : vector<8x128xf32>
      %678 = math.exp %677 : vector<8x128xf32>
      %cst_196 = arith.constant 1.000000e+00 : f32
      %679 = vector.broadcast %cst_196 : f32 to vector<8x128xf32>
      %680 = arith.addf %679, %678 : vector<8x128xf32>
      %cst_197 = arith.constant 1.000000e+00 : f32
      %681 = vector.broadcast %cst_197 : f32 to vector<8x128xf32>
      %682 = arith.divf %681, %680 : vector<8x128xf32>
      %683 = math.tanh %675 : vector<8x128xf32>
      %684 = vector.extract_strided_slice %682 {offsets = [0, 0], sizes = [8, 32], strides = [1, 1]} : vector<8x128xf32> to vector<8x32xf32>
      %685 = vector.extract_strided_slice %682 {offsets = [0, 32], sizes = [8, 32], strides = [1, 1]} : vector<8x128xf32> to vector<8x32xf32>
      %686 = vector.extract_strided_slice %683 {offsets = [0, 64], sizes = [8, 32], strides = [1, 1]} : vector<8x128xf32> to vector<8x32xf32>
      %687 = vector.extract_strided_slice %682 {offsets = [0, 96], sizes = [8, 32], strides = [1, 1]} : vector<8x128xf32> to vector<8x32xf32>
      %688 = arith.mulf %685, %644 : vector<8x32xf32>
      %689 = arith.mulf %684, %686 : vector<8x32xf32>
      %690 = arith.addf %688, %689 : vector<8x32xf32>
      %691 = math.tanh %690 : vector<8x32xf32>
      %692 = arith.mulf %687, %691 : vector<8x32xf32>
      %c16_i32_198 = arith.constant 16 : i32
      %693 = arith.muli %arg16, %c16_i32_198 : i32
      %c14_i32 = arith.constant 14 : i32
      %694 = arith.addi %693, %c14_i32 : i32
      %c8_i32_199 = arith.constant 8 : i32
      %695 = arith.muli %694, %c8_i32_199 : i32
      %696 = tpu.assume_multiple %695, 8 : i32
      %697 = arith.index_cast %696 : i32 to index
      %c0_200 = arith.constant 0 : index
      %698 = vector.load %arg15[%697, %c0_200] : memref<768x128xf32, #tpu.memory_space<vmem>>, vector<8x128xf32>
      %cst_201 = arith.constant dense<0.000000e+00> : vector<8x128xf32>
      %699 = tpu.matmul %671, %7, %cst_201 {dimension_numbers = #tpu.dot_dimension_numbers<[1], [0], [0], [1], [0, 0, 1, 1], [], []>} : vector<8x32xf32>, vector<32x128xf32>, vector<8x128xf32> -> vector<8x128xf32>
      %700 = arith.addf %698, %699 : vector<8x128xf32>
      %cst_202 = arith.constant 0.000000e+00 : f32
      %701 = vector.broadcast %cst_202 : f32 to vector<8x128xf32>
      %702 = arith.subf %701, %700 : vector<8x128xf32>
      %703 = math.exp %702 : vector<8x128xf32>
      %cst_203 = arith.constant 1.000000e+00 : f32
      %704 = vector.broadcast %cst_203 : f32 to vector<8x128xf32>
      %705 = arith.addf %704, %703 : vector<8x128xf32>
      %cst_204 = arith.constant 1.000000e+00 : f32
      %706 = vector.broadcast %cst_204 : f32 to vector<8x128xf32>
      %707 = arith.divf %706, %705 : vector<8x128xf32>
      %708 = math.tanh %700 : vector<8x128xf32>
      %709 = vector.extract_strided_slice %707 {offsets = [0, 0], sizes = [8, 32], strides = [1, 1]} : vector<8x128xf32> to vector<8x32xf32>
      %710 = vector.extract_strided_slice %707 {offsets = [0, 32], sizes = [8, 32], strides = [1, 1]} : vector<8x128xf32> to vector<8x32xf32>
      %711 = vector.extract_strided_slice %708 {offsets = [0, 64], sizes = [8, 32], strides = [1, 1]} : vector<8x128xf32> to vector<8x32xf32>
      %712 = vector.extract_strided_slice %707 {offsets = [0, 96], sizes = [8, 32], strides = [1, 1]} : vector<8x128xf32> to vector<8x32xf32>
      %713 = arith.mulf %710, %669 : vector<8x32xf32>
      %714 = arith.mulf %709, %711 : vector<8x32xf32>
      %715 = arith.addf %713, %714 : vector<8x32xf32>
      %716 = math.tanh %715 : vector<8x32xf32>
      %717 = arith.mulf %712, %716 : vector<8x32xf32>
      %718 = tpu.concatenate %717, %692 in 1 : vector<8x32xf32>, vector<8x32xf32> -> vector<8x64xf32>
      %cst_205 = arith.constant dense<0.000000e+00> : vector<8x128xf32>
      %719 = tpu.matmul %718, %8, %cst_205 {dimension_numbers = #tpu.dot_dimension_numbers<[1], [0], [0], [1], [0, 0, 1, 1], [], []>} : vector<8x64xf32>, vector<64x128xf32>, vector<8x128xf32> -> vector<8x128xf32>
      %720 = vector.broadcast %9 : vector<1x128xf32> to vector<8x128xf32>
      %721 = arith.addf %719, %720 : vector<8x128xf32>
      %cst_206 = arith.constant 0.000000e+00 : f32
      %722 = vector.broadcast %cst_206 : f32 to vector<8x128xf32>
      %723 = arith.subf %722, %721 : vector<8x128xf32>
      %724 = math.exp %723 : vector<8x128xf32>
      %cst_207 = arith.constant 1.000000e+00 : f32
      %725 = vector.broadcast %cst_207 : f32 to vector<8x128xf32>
      %726 = arith.addf %725, %724 : vector<8x128xf32>
      %cst_208 = arith.constant 1.000000e+00 : f32
      %727 = vector.broadcast %cst_208 : f32 to vector<8x128xf32>
      %728 = arith.divf %727, %726 : vector<8x128xf32>
      %729 = math.tanh %721 : vector<8x128xf32>
      %730 = vector.extract_strided_slice %728 {offsets = [0, 0], sizes = [8, 32], strides = [1, 1]} : vector<8x128xf32> to vector<8x32xf32>
      %731 = vector.extract_strided_slice %728 {offsets = [0, 32], sizes = [8, 32], strides = [1, 1]} : vector<8x128xf32> to vector<8x32xf32>
      %732 = vector.extract_strided_slice %729 {offsets = [0, 64], sizes = [8, 32], strides = [1, 1]} : vector<8x128xf32> to vector<8x32xf32>
      %733 = vector.extract_strided_slice %728 {offsets = [0, 96], sizes = [8, 32], strides = [1, 1]} : vector<8x128xf32> to vector<8x32xf32>
      %734 = arith.mulf %731, %690 : vector<8x32xf32>
      %735 = arith.mulf %730, %732 : vector<8x32xf32>
      %736 = arith.addf %734, %735 : vector<8x32xf32>
      %737 = math.tanh %736 : vector<8x32xf32>
      %738 = arith.mulf %733, %737 : vector<8x32xf32>
      %c16_i32_209 = arith.constant 16 : i32
      %739 = arith.muli %arg16, %c16_i32_209 : i32
      %c15_i32 = arith.constant 15 : i32
      %740 = arith.addi %739, %c15_i32 : i32
      %c8_i32_210 = arith.constant 8 : i32
      %741 = arith.muli %740, %c8_i32_210 : i32
      %742 = tpu.assume_multiple %741, 8 : i32
      %743 = arith.index_cast %742 : i32 to index
      %c0_211 = arith.constant 0 : index
      %744 = vector.load %arg15[%743, %c0_211] : memref<768x128xf32, #tpu.memory_space<vmem>>, vector<8x128xf32>
      %cst_212 = arith.constant dense<0.000000e+00> : vector<8x128xf32>
      %745 = tpu.matmul %717, %7, %cst_212 {dimension_numbers = #tpu.dot_dimension_numbers<[1], [0], [0], [1], [0, 0, 1, 1], [], []>} : vector<8x32xf32>, vector<32x128xf32>, vector<8x128xf32> -> vector<8x128xf32>
      %746 = arith.addf %744, %745 : vector<8x128xf32>
      %cst_213 = arith.constant 0.000000e+00 : f32
      %747 = vector.broadcast %cst_213 : f32 to vector<8x128xf32>
      %748 = arith.subf %747, %746 : vector<8x128xf32>
      %749 = math.exp %748 : vector<8x128xf32>
      %cst_214 = arith.constant 1.000000e+00 : f32
      %750 = vector.broadcast %cst_214 : f32 to vector<8x128xf32>
      %751 = arith.addf %750, %749 : vector<8x128xf32>
      %cst_215 = arith.constant 1.000000e+00 : f32
      %752 = vector.broadcast %cst_215 : f32 to vector<8x128xf32>
      %753 = arith.divf %752, %751 : vector<8x128xf32>
      %754 = math.tanh %746 : vector<8x128xf32>
      %755 = vector.extract_strided_slice %753 {offsets = [0, 0], sizes = [8, 32], strides = [1, 1]} : vector<8x128xf32> to vector<8x32xf32>
      %756 = vector.extract_strided_slice %753 {offsets = [0, 32], sizes = [8, 32], strides = [1, 1]} : vector<8x128xf32> to vector<8x32xf32>
      %757 = vector.extract_strided_slice %754 {offsets = [0, 64], sizes = [8, 32], strides = [1, 1]} : vector<8x128xf32> to vector<8x32xf32>
      %758 = vector.extract_strided_slice %753 {offsets = [0, 96], sizes = [8, 32], strides = [1, 1]} : vector<8x128xf32> to vector<8x32xf32>
      %759 = arith.mulf %756, %715 : vector<8x32xf32>
      %760 = arith.mulf %755, %757 : vector<8x32xf32>
      %761 = arith.addf %759, %760 : vector<8x32xf32>
      %762 = math.tanh %761 : vector<8x32xf32>
      %763 = arith.mulf %758, %762 : vector<8x32xf32>
      %764 = tpu.concatenate %763, %738 in 1 : vector<8x32xf32>, vector<8x32xf32> -> vector<8x64xf32>
      %cst_216 = arith.constant dense<0.000000e+00> : vector<8x128xf32>
      %765 = tpu.matmul %764, %8, %cst_216 {dimension_numbers = #tpu.dot_dimension_numbers<[1], [0], [0], [1], [0, 0, 1, 1], [], []>} : vector<8x64xf32>, vector<64x128xf32>, vector<8x128xf32> -> vector<8x128xf32>
      %766 = vector.broadcast %9 : vector<1x128xf32> to vector<8x128xf32>
      %767 = arith.addf %765, %766 : vector<8x128xf32>
      %cst_217 = arith.constant 0.000000e+00 : f32
      %768 = vector.broadcast %cst_217 : f32 to vector<8x128xf32>
      %769 = arith.subf %768, %767 : vector<8x128xf32>
      %770 = math.exp %769 : vector<8x128xf32>
      %cst_218 = arith.constant 1.000000e+00 : f32
      %771 = vector.broadcast %cst_218 : f32 to vector<8x128xf32>
      %772 = arith.addf %771, %770 : vector<8x128xf32>
      %cst_219 = arith.constant 1.000000e+00 : f32
      %773 = vector.broadcast %cst_219 : f32 to vector<8x128xf32>
      %774 = arith.divf %773, %772 : vector<8x128xf32>
      %775 = math.tanh %767 : vector<8x128xf32>
      %776 = vector.extract_strided_slice %774 {offsets = [0, 0], sizes = [8, 32], strides = [1, 1]} : vector<8x128xf32> to vector<8x32xf32>
      %777 = vector.extract_strided_slice %774 {offsets = [0, 32], sizes = [8, 32], strides = [1, 1]} : vector<8x128xf32> to vector<8x32xf32>
      %778 = vector.extract_strided_slice %775 {offsets = [0, 64], sizes = [8, 32], strides = [1, 1]} : vector<8x128xf32> to vector<8x32xf32>
      %779 = vector.extract_strided_slice %774 {offsets = [0, 96], sizes = [8, 32], strides = [1, 1]} : vector<8x128xf32> to vector<8x32xf32>
      %780 = arith.mulf %777, %736 : vector<8x32xf32>
      %781 = arith.mulf %776, %778 : vector<8x32xf32>
      %782 = arith.addf %780, %781 : vector<8x32xf32>
      %783 = math.tanh %782 : vector<8x32xf32>
      %784 = arith.mulf %779, %783 : vector<8x32xf32>
      scf.yield %763, %761, %784, %782 : vector<8x32xf32>, vector<8x32xf32>, vector<8x32xf32>, vector<8x32xf32>
    }
    %c6_i32_14 = arith.constant 6 : i32
    %c0_15 = arith.constant 0 : index
    %c0_16 = arith.constant 0 : index
    %13 = vector.load %arg6[%c0_15, %c0_16] : memref<32x32xf32, #tpu.memory_space<vmem>>, vector<32x32xf32>
    %cst_17 = arith.constant dense<0.000000e+00> : vector<8x32xf32>
    %14 = tpu.matmul %12#2, %13, %cst_17 {dimension_numbers = #tpu.dot_dimension_numbers<[1], [0], [0], [1], [0, 0, 1, 1], [], []>} : vector<8x32xf32>, vector<32x32xf32>, vector<8x32xf32> -> vector<8x32xf32>
    %c0_18 = arith.constant 0 : index
    %c0_19 = arith.constant 0 : index
    %15 = vector.load %arg7[%c0_18, %c0_19] : memref<1x32xf32, #tpu.memory_space<vmem>>, vector<1x32xf32>
    %16 = vector.broadcast %15 : vector<1x32xf32> to vector<8x32xf32>
    %17 = arith.addf %14, %16 : vector<8x32xf32>
    %cst_20 = arith.constant 0.000000e+00 : f32
    %18 = vector.broadcast %cst_20 : f32 to vector<8x32xf32>
    %19 = arith.maximumf %17, %18 : vector<8x32xf32>
    %c0_21 = arith.constant 0 : index
    %c0_22 = arith.constant 0 : index
    %20 = vector.load %arg8[%c0_21, %c0_22] : memref<32x32xf32, #tpu.memory_space<vmem>>, vector<32x32xf32>
    %cst_23 = arith.constant dense<0.000000e+00> : vector<8x32xf32>
    %21 = tpu.matmul %19, %20, %cst_23 {dimension_numbers = #tpu.dot_dimension_numbers<[1], [0], [0], [1], [0, 0, 1, 1], [], []>} : vector<8x32xf32>, vector<32x32xf32>, vector<8x32xf32> -> vector<8x32xf32>
    %c0_24 = arith.constant 0 : index
    %c0_25 = arith.constant 0 : index
    %22 = vector.load %arg9[%c0_24, %c0_25] : memref<1x32xf32, #tpu.memory_space<vmem>>, vector<1x32xf32>
    %23 = vector.broadcast %22 : vector<1x32xf32> to vector<8x32xf32>
    %24 = arith.addf %21, %23 : vector<8x32xf32>
    %cst_26 = arith.constant 0.000000e+00 : f32
    %25 = vector.broadcast %cst_26 : f32 to vector<8x32xf32>
    %26 = arith.maximumf %24, %25 : vector<8x32xf32>
    %c0_27 = arith.constant 0 : index
    %c0_28 = arith.constant 0 : index
    %27 = vector.load %arg10[%c0_27, %c0_28] : memref<32x32xf32, #tpu.memory_space<vmem>>, vector<32x32xf32>
    %cst_29 = arith.constant dense<0.000000e+00> : vector<8x32xf32>
    %28 = tpu.matmul %26, %27, %cst_29 {dimension_numbers = #tpu.dot_dimension_numbers<[1], [0], [0], [1], [0, 0, 1, 1], [], []>} : vector<8x32xf32>, vector<32x32xf32>, vector<8x32xf32> -> vector<8x32xf32>
    %c0_30 = arith.constant 0 : index
    %c0_31 = arith.constant 0 : index
    %29 = vector.load %arg11[%c0_30, %c0_31] : memref<1x32xf32, #tpu.memory_space<vmem>>, vector<1x32xf32>
    %30 = vector.broadcast %29 : vector<1x32xf32> to vector<8x32xf32>
    %31 = arith.addf %28, %30 : vector<8x32xf32>
    %cst_32 = arith.constant 0.000000e+00 : f32
    %32 = vector.broadcast %cst_32 : f32 to vector<8x32xf32>
    %33 = arith.maximumf %31, %32 : vector<8x32xf32>
    %c0_33 = arith.constant 0 : index
    %c0_34 = arith.constant 0 : index
    %34 = vector.load %arg12[%c0_33, %c0_34] : memref<32x10xf32, #tpu.memory_space<vmem>>, vector<32x10xf32>
    %cst_35 = arith.constant dense<0.000000e+00> : vector<8x10xf32>
    %35 = tpu.matmul %33, %34, %cst_35 {dimension_numbers = #tpu.dot_dimension_numbers<[1], [0], [0], [1], [0, 0, 1, 1], [], []>} : vector<8x32xf32>, vector<32x10xf32>, vector<8x10xf32> -> vector<8x10xf32>
    %c0_36 = arith.constant 0 : index
    %c0_37 = arith.constant 0 : index
    %36 = vector.load %arg13[%c0_36, %c0_37] : memref<1x10xf32, #tpu.memory_space<vmem>>, vector<1x10xf32>
    %37 = vector.broadcast %36 : vector<1x10xf32> to vector<8x10xf32>
    %38 = arith.addf %35, %37 : vector<8x10xf32>
    %cst_38 = arith.constant dense<0xFF800000> : vector<8xf32>
    %39 = vector.multi_reduction <maximumf>, %38, %cst_38 [1] : vector<8x10xf32> to vector<8xf32>
    %40 = vector.shape_cast %39 : vector<8xf32> to vector<8x1xf32>
    %41 = vector.broadcast %40 : vector<8x1xf32> to vector<8x10xf32>
    %42 = arith.subf %38, %41 : vector<8x10xf32>
    %43 = math.exp %42 : vector<8x10xf32>
    %cst_39 = arith.constant dense<0.000000e+00> : vector<8xf32>
    %44 = vector.multi_reduction <add>, %43, %cst_39 [1] : vector<8x10xf32> to vector<8xf32>
    %45 = vector.shape_cast %44 : vector<8xf32> to vector<8x1xf32>
    %46 = vector.broadcast %45 : vector<8x1xf32> to vector<8x10xf32>
    %47 = arith.divf %43, %46 : vector<8x10xf32>
    %c0_40 = arith.constant 0 : index
    %c0_41 = arith.constant 0 : index
    %48 = vector.load %arg14[%c0_40, %c0_41] : memref<8x10xf32, #tpu.memory_space<vmem>>, vector<8x10xf32>
    tpu.vector_store %arg14[%c0_40, %c0_41], %47 {strides = array<i32>} : memref<8x10xf32, #tpu.memory_space<vmem>>, vector<8x10xf32>,
    return
  }
}

</mosaic_0001>

<llo_original>
// kernel: cnn_lstm_forward.3
$region0: #{cnn_lstm_forward.3}
  #allocation0 [shape = 'u32[]', space=smem, size = 0x4, offset = 0x4, fixed_abs, tag = 'smem constant byte address 0x4 - core index']
  #allocation1 [shape = 'u32[72,128]{1,0:T(1,128)}', space=vmem, size = 0x9000, scoped, tag = 'internal scratch']
  #allocation2 [shape = 'f32[768,128]{1,0:T(8,128)}', space=vmem, size = 0x60000, scoped, tag = 'scratch operand']
  %s0 = inlined_call_operand.vmem [shape: f32[768,64], index: 0, kind: input, shape index: {}]
  %s1 = inlined_call_operand.vmem [shape: f32[64,128], index: 1, kind: input, shape index: {}]
  %s2 = inlined_call_operand.vmem [shape: f32[32,128], index: 2, kind: input, shape index: {}]
  %s3 = inlined_call_operand.vmem [shape: f32[1,128], index: 3, kind: input, shape index: {}]
  %s4 = inlined_call_operand.vmem [shape: f32[64,128], index: 4, kind: input, shape index: {}]
  %s5 = inlined_call_operand.vmem [shape: f32[1,128], index: 5, kind: input, shape index: {}]
  %s6 = inlined_call_operand.vmem [shape: f32[32,32], index: 6, kind: input, shape index: {}]
  %s7 = inlined_call_operand.vmem [shape: f32[1,32], index: 7, kind: input, shape index: {}]
  %s8 = inlined_call_operand.vmem [shape: f32[32,32], index: 8, kind: input, shape index: {}]
  %s9 = inlined_call_operand.vmem [shape: f32[1,32], index: 9, kind: input, shape index: {}]
  %s10 = inlined_call_operand.vmem [shape: f32[32,32], index: 10, kind: input, shape index: {}]
  %s11 = inlined_call_operand.vmem [shape: f32[1,32], index: 11, kind: input, shape index: {}]
  %s12 = inlined_call_operand.vmem [shape: f32[32,10], index: 12, kind: input, shape index: {}]
  %s13 = inlined_call_operand.vmem [shape: f32[1,10], index: 13, kind: input, shape index: {}]
  %s14 = inlined_call_operand.vmem [shape: f32[8,10], index: 14, kind: output, shape index: {}]
  %s15 = sld [smem:[#allocation0]]
  $region73: #{cnn_lstm_forward.3} parent=0
    _
  %s17 = ssub.s32 1, %s15
  %s18 = scalar_select 0, %s17, %s15
  // Predicated region
  $region2: #{cnn_lstm_forward.3} parent=0 // pred_check
    _
  $region3: #{cnn_lstm_forward.3} parent=0 // pred_check_branch
    %20 = sbr.rel (0) target = $region5
  $region4: #{cnn_lstm_forward.3} parent=0 // pred_region
    _
  $region5: #{cnn_lstm_forward.3} parent=0 // pred_fallthru
    _
  // Predicated region
  $region6: #{cnn_lstm_forward.3} parent=0 // pred_check
    _
  $region7: #{cnn_lstm_forward.3} parent=0 // pred_check_branch
    %22 = sbr.rel (0) target = $region9
  $region8: #{cnn_lstm_forward.3} parent=0 // pred_region
    _
  $region9: #{cnn_lstm_forward.3} parent=0 // pred_fallthru
    _
  // Predicated region
  $region10: #{cnn_lstm_forward.3} parent=0 // pred_check
    _
  $region11: #{cnn_lstm_forward.3} parent=0 // pred_check_branch
    %24 = sbr.rel (0) target = $region13
  $region12: #{cnn_lstm_forward.3} parent=0 // pred_region
    _
  $region13: #{cnn_lstm_forward.3} parent=0 // pred_fallthru
    _
  // Predicated region
  $region14: #{cnn_lstm_forward.3} parent=0 // pred_check
    _
  $region15: #{cnn_lstm_forward.3} parent=0 // pred_check_branch
    %26 = sbr.rel (0) target = $region17
  $region16: #{cnn_lstm_forward.3} parent=0 // pred_region
    _
  $region17: #{cnn_lstm_forward.3} parent=0 // pred_fallthru
    _
  // Predicated region
  $region18: #{cnn_lstm_forward.3} parent=0 // pred_check
    _
  $region19: #{cnn_lstm_forward.3} parent=0 // pred_check_branch
    %28 = sbr.rel (0) target = $region21
  $region20: #{cnn_lstm_forward.3} parent=0 // pred_region
    _
  $region21: #{cnn_lstm_forward.3} parent=0 // pred_fallthru
    _
  // Predicated region
  $region22: #{cnn_lstm_forward.3} parent=0 // pred_check
    _
  $region23: #{cnn_lstm_forward.3} parent=0 // pred_check_branch
    %30 = sbr.rel (0) target = $region25
  $region24: #{cnn_lstm_forward.3} parent=0 // pred_region
    _
  $region25: #{cnn_lstm_forward.3} parent=0 // pred_fallthru
    _
  // Predicated region
  $region26: #{cnn_lstm_forward.3} parent=0 // pred_check
    _
  $region27: #{cnn_lstm_forward.3} parent=0 // pred_check_branch
    %32 = sbr.rel (0) target = $region29
  $region28: #{cnn_lstm_forward.3} parent=0 // pred_region
    _
  $region29: #{cnn_lstm_forward.3} parent=0 // pred_fallthru
    _
  // Predicated region
  $region30: #{cnn_lstm_forward.3} parent=0 // pred_check
    _
  $region31: #{cnn_lstm_forward.3} parent=0 // pred_check_branch
    %34 = sbr.rel (0) target = $region33
  $region32: #{cnn_lstm_forward.3} parent=0 // pred_region
    _
  $region33: #{cnn_lstm_forward.3} parent=0 // pred_fallthru
    _
  // Predicated region
  $region34: #{cnn_lstm_forward.3} parent=0 // pred_check
    _
  $region35: #{cnn_lstm_forward.3} parent=0 // pred_check_branch
    %36 = sbr.rel (0) target = $region37
  $region36: #{cnn_lstm_forward.3} parent=0 // pred_region
    _
  $region37: #{cnn_lstm_forward.3} parent=0 // pred_fallthru
    _
  // Predicated region
  $region38: #{cnn_lstm_forward.3} parent=0 // pred_check
    _
  $region39: #{cnn_lstm_forward.3} parent=0 // pred_check_branch
    %38 = sbr.rel (0) target = $region41
  $region40: #{cnn_lstm_forward.3} parent=0 // pred_region
    _
  $region41: #{cnn_lstm_forward.3} parent=0 // pred_fallthru
    _
  // Predicated region
  $region42: #{cnn_lstm_forward.3} parent=0 // pred_check
    _
  $region43: #{cnn_lstm_forward.3} parent=0 // pred_check_branch
    %40 = sbr.rel (0) target = $region45
  $region44: #{cnn_lstm_forward.3} parent=0 // pred_region
    _
  $region45: #{cnn_lstm_forward.3} parent=0 // pred_fallthru
    _
  // Predicated region
  $region46: #{cnn_lstm_forward.3} parent=0 // pred_check
    _
  $region47: #{cnn_lstm_forward.3} parent=0 // pred_check_branch
    %42 = sbr.rel (0) target = $region49
  $region48: #{cnn_lstm_forward.3} parent=0 // pred_region
    _
  $region49: #{cnn_lstm_forward.3} parent=0 // pred_fallthru
    _
  // Predicated region
  $region50: #{cnn_lstm_forward.3} parent=0 // pred_check
    _
  $region51: #{cnn_lstm_forward.3} parent=0 // pred_check_branch
    %44 = sbr.rel (0) target = $region53
  $region52: #{cnn_lstm_forward.3} parent=0 // pred_region
    _
  $region53: #{cnn_lstm_forward.3} parent=0 // pred_fallthru
    _
  // Predicated region
  $region54: #{cnn_lstm_forward.3} parent=0 // pred_check
    _
  $region55: #{cnn_lstm_forward.3} parent=0 // pred_check_branch
    %46 = sbr.rel (0) target = $region57
  $region56: #{cnn_lstm_forward.3} parent=0 // pred_region
    _
  $region57: #{cnn_lstm_forward.3} parent=0 // pred_fallthru
    _
  %v47 = vld [vmem:[%s0] sm:$0xff]
  %v48 = vld [vmem:[%s0 + $0x8] sm:$0xff]
  %v49 = vld [vmem:[%s0 + $0x10] sm:$0xff]
  %v50 = vld [vmem:[%s0 + $0x18] sm:$0xff]
  %v51 = vld [vmem:[%s0 + $0x20] sm:$0xff]
  %v52 = vld [vmem:[%s0 + $0x28] sm:$0xff]
  %v53 = vld [vmem:[%s0 + $0x30] sm:$0xff]
  %v54 = vld [vmem:[%s0 + $0x38] sm:$0xff]
  %v55 = vld [vmem:[%s0 + $0x40] sm:$0xff]
  %v56 = vld [vmem:[%s0 + $0x48] sm:$0xff]
  %v57 = vld [vmem:[%s0 + $0x50] sm:$0xff]
  %v58 = vld [vmem:[%s0 + $0x58] sm:$0xff]
  %v59 = vld [vmem:[%s0 + $0x60] sm:$0xff]
  %v60 = vld [vmem:[%s0 + $0x68] sm:$0xff]
  %v61 = vld [vmem:[%s0 + $0x70] sm:$0xff]
  %v62 = vld [vmem:[%s0 + $0x78] sm:$0xff]
  %v63 = vld [vmem:[%s0 + $0x80] sm:$0xff]
  %v64 = vld [vmem:[%s0 + $0x88] sm:$0xff]
  %v65 = vld [vmem:[%s0 + $0x90] sm:$0xff]
  %v66 = vld [vmem:[%s0 + $0x98] sm:$0xff]
  %v67 = vld [vmem:[%s0 + $0xa0] sm:$0xff]
  %v68 = vld [vmem:[%s0 + $0xa8] sm:$0xff]
  %v69 = vld [vmem:[%s0 + $0xb0] sm:$0xff]
  %v70 = vld [vmem:[%s0 + $0xb8] sm:$0xff]
  %v71 = vld [vmem:[%s0 + $0xc0] sm:$0xff]
  %v72 = vld [vmem:[%s0 + $0xc8] sm:$0xff]
  %v73 = vld [vmem:[%s0 + $0xd0] sm:$0xff]
  %v74 = vld [vmem:[%s0 + $0xd8] sm:$0xff]
  %v75 = vld [vmem:[%s0 + $0xe0] sm:$0xff]
  %v76 = vld [vmem:[%s0 + $0xe8] sm:$0xff]
  %v77 = vld [vmem:[%s0 + $0xf0] sm:$0xff]
  %v78 = vld [vmem:[%s0 + $0xf8] sm:$0xff]
  %v79 = vld [vmem:[%s0 + $0x100] sm:$0xff]
  %v80 = vld [vmem:[%s0 + $0x108] sm:$0xff]
  %v81 = vld [vmem:[%s0 + $0x110] sm:$0xff]
  %v82 = vld [vmem:[%s0 + $0x118] sm:$0xff]
  %v83 = vld [vmem:[%s0 + $0x120] sm:$0xff]
  %v84 = vld [vmem:[%s0 + $0x128] sm:$0xff]
  %v85 = vld [vmem:[%s0 + $0x130] sm:$0xff]
  %v86 = vld [vmem:[%s0 + $0x138] sm:$0xff]
  %v87 = vld [vmem:[%s0 + $0x140] sm:$0xff]
  %v88 = vld [vmem:[%s0 + $0x148] sm:$0xff]
  %v89 = vld [vmem:[%s0 + $0x150] sm:$0xff]
  %v90 = vld [vmem:[%s0 + $0x158] sm:$0xff]
  %v91 = vld [vmem:[%s0 + $0x160] sm:$0xff]
  %v92 = vld [vmem:[%s0 + $0x168] sm:$0xff]
  %v93 = vld [vmem:[%s0 + $0x170] sm:$0xff]
  %v94 = vld [vmem:[%s0 + $0x178] sm:$0xff]
  %v95 = vld [vmem:[%s0 + $0x180] sm:$0xff]
  %v96 = vld [vmem:[%s0 + $0x188] sm:$0xff]
  %v97 = vld [vmem:[%s0 + $0x190] sm:$0xff]
  %v98 = vld [vmem:[%s0 + $0x198] sm:$0xff]
  %v99 = vld [vmem:[%s0 + $0x1a0] sm:$0xff]
  %v100 = vld [vmem:[%s0 + $0x1a8] sm:$0xff]
  %v101 = vld [vmem:[%s0 + $0x1b0] sm:$0xff]
  %v102 = vld [vmem:[%s0 + $0x1b8] sm:$0xff]
  %v103 = vld [vmem:[%s0 + $0x1c0] sm:$0xff]
  %v104 = vld [vmem:[%s0 + $0x1c8] sm:$0xff]
  %v105 = vld [vmem:[%s0 + $0x1d0] sm:$0xff]
  %v106 = vld [vmem:[%s0 + $0x1d8] sm:$0xff]
  %v107 = vld [vmem:[%s0 + $0x1e0] sm:$0xff]
  %v108 = vld [vmem:[%s0 + $0x1e8] sm:$0xff]
  %v109 = vld [vmem:[%s0 + $0x1f0] sm:$0xff]
  %v110 = vld [vmem:[%s0 + $0x1f8] sm:$0xff]
  %v111 = vld [vmem:[%s0 + $0x200] sm:$0xff]
  %v112 = vld [vmem:[%s0 + $0x208] sm:$0xff]
  %v113 = vld [vmem:[%s0 + $0x210] sm:$0xff]
  %v114 = vld [vmem:[%s0 + $0x218] sm:$0xff]
  %v115 = vld [vmem:[%s0 + $0x220] sm:$0xff]
  %v116 = vld [vmem:[%s0 + $0x228] sm:$0xff]
  %v117 = vld [vmem:[%s0 + $0x230] sm:$0xff]
  %v118 = vld [vmem:[%s0 + $0x238] sm:$0xff]
  %v119 = vld [vmem:[%s0 + $0x240] sm:$0xff]
  %v120 = vld [vmem:[%s0 + $0x248] sm:$0xff]
  %v121 = vld [vmem:[%s0 + $0x250] sm:$0xff]
  %v122 = vld [vmem:[%s0 + $0x258] sm:$0xff]
  %v123 = vld [vmem:[%s0 + $0x260] sm:$0xff]
  %v124 = vld [vmem:[%s0 + $0x268] sm:$0xff]
  %v125 = vld [vmem:[%s0 + $0x270] sm:$0xff]
  %v126 = vld [vmem:[%s0 + $0x278] sm:$0xff]
  %v127 = vld [vmem:[%s0 + $0x280] sm:$0xff]
  %v128 = vld [vmem:[%s0 + $0x288] sm:$0xff]
  %v129 = vld [vmem:[%s0 + $0x290] sm:$0xff]
  %v130 = vld [vmem:[%s0 + $0x298] sm:$0xff]
  %v131 = vld [vmem:[%s0 + $0x2a0] sm:$0xff]
  %v132 = vld [vmem:[%s0 + $0x2a8] sm:$0xff]
  %v133 = vld [vmem:[%s0 + $0x2b0] sm:$0xff]
  %v134 = vld [vmem:[%s0 + $0x2b8] sm:$0xff]
  %v135 = vld [vmem:[%s0 + $0x2c0] sm:$0xff]
  %v136 = vld [vmem:[%s0 + $0x2c8] sm:$0xff]
  %v137 = vld [vmem:[%s0 + $0x2d0] sm:$0xff]
  %v138 = vld [vmem:[%s0 + $0x2d8] sm:$0xff]
  %v139 = vld [vmem:[%s0 + $0x2e0] sm:$0xff]
  %v140 = vld [vmem:[%s0 + $0x2e8] sm:$0xff]
  %v141 = vld [vmem:[%s0 + $0x2f0] sm:$0xff]
  %v142 = vld [vmem:[%s0 + $0x2f8] sm:$0xff]
  %v143 = vld [vmem:[%s1] sm:$0xff]
  %v144 = vld [vmem:[%s1 + $0x8] sm:$0xff]
  %v145 = vld [vmem:[%s1 + $0x10] sm:$0xff]
  %v146 = vld [vmem:[%s1 + $0x18] sm:$0xff]
  %v147 = vld [vmem:[%s1 + $0x20] sm:$0xff]
  %v148 = vld [vmem:[%s1 + $0x28] sm:$0xff]
  %v149 = vld [vmem:[%s1 + $0x30] sm:$0xff]
  %v150 = vld [vmem:[%s1 + $0x38] sm:$0xff]
  %v151 = vld [vmem:[%s3] sm:$0x1]
  %v153 = vperm.slane %v151, 0
  %vm155 = vcmask 523264
  %v157 = vsel %vm155, %v47, 0
  %v160 = vsel %vm155, %v48, 0
  %v163 = vsel %vm155, %v49, 0
  %v166 = vsel %vm155, %v50, 0
  %v169 = vsel %vm155, %v51, 0
  %v172 = vsel %vm155, %v52, 0
  %v175 = vsel %vm155, %v53, 0
  %v178 = vsel %vm155, %v54, 0
  %v181 = vsel %vm155, %v55, 0
  %v184 = vsel %vm155, %v56, 0
  %v187 = vsel %vm155, %v57, 0
  %v190 = vsel %vm155, %v58, 0
  %v193 = vsel %vm155, %v59, 0
  %v196 = vsel %vm155, %v60, 0
  %v199 = vsel %vm155, %v61, 0
  %v202 = vsel %vm155, %v62, 0
  %v205 = vsel %vm155, %v63, 0
  %v208 = vsel %vm155, %v64, 0
  %v211 = vsel %vm155, %v65, 0
  %v214 = vsel %vm155, %v66, 0
  %v217 = vsel %vm155, %v67, 0
  %v220 = vsel %vm155, %v68, 0
  %v223 = vsel %vm155, %v69, 0
  %v226 = vsel %vm155, %v70, 0
  %v229 = vsel %vm155, %v71, 0
  %v232 = vsel %vm155, %v72, 0
  %v235 = vsel %vm155, %v73, 0
  %v238 = vsel %vm155, %v74, 0
  %v241 = vsel %vm155, %v75, 0
  %v244 = vsel %vm155, %v76, 0
  %v247 = vsel %vm155, %v77, 0
  %v250 = vsel %vm155, %v78, 0
  %v253 = vsel %vm155, %v79, 0
  %v256 = vsel %vm155, %v80, 0
  %v259 = vsel %vm155, %v81, 0
  %v262 = vsel %vm155, %v82, 0
  %v265 = vsel %vm155, %v83, 0
  %v268 = vsel %vm155, %v84, 0
  %v271 = vsel %vm155, %v85, 0
  %v274 = vsel %vm155, %v86, 0
  %v277 = vsel %vm155, %v87, 0
  %v280 = vsel %vm155, %v88, 0
  %v283 = vsel %vm155, %v89, 0
  %v286 = vsel %vm155, %v90, 0
  %v289 = vsel %vm155, %v91, 0
  %v292 = vsel %vm155, %v92, 0
  %v295 = vsel %vm155, %v93, 0
  %v298 = vsel %vm155, %v94, 0
  %v301 = vsel %vm155, %v95, 0
  %v304 = vsel %vm155, %v96, 0
  %v307 = vsel %vm155, %v97, 0
  %v310 = vsel %vm155, %v98, 0
  %v313 = vsel %vm155, %v99, 0
  %v316 = vsel %vm155, %v100, 0
  %v319 = vsel %vm155, %v101, 0
  %v322 = vsel %vm155, %v102, 0
  %v325 = vsel %vm155, %v103, 0
  %v328 = vsel %vm155, %v104, 0
  %v331 = vsel %vm155, %v105, 0
  %v334 = vsel %vm155, %v106, 0
  %v337 = vsel %vm155, %v107, 0
  %v340 = vsel %vm155, %v108, 0
  %v343 = vsel %vm155, %v109, 0
  %v346 = vsel %vm155, %v110, 0
  %v349 = vsel %vm155, %v111, 0
  %v352 = vsel %vm155, %v112, 0
  %v355 = vsel %vm155, %v113, 0
  %v358 = vsel %vm155, %v114, 0
  %v361 = vsel %vm155, %v115, 0
  %v364 = vsel %vm155, %v116, 0
  %v367 = vsel %vm155, %v117, 0
  %v370 = vsel %vm155, %v118, 0
  %v373 = vsel %vm155, %v119, 0
  %v376 = vsel %vm155, %v120, 0
  %v379 = vsel %vm155, %v121, 0
  %v382 = vsel %vm155, %v122, 0
  %v385 = vsel %vm155, %v123, 0
  %v388 = vsel %vm155, %v124, 0
  %v391 = vsel %vm155, %v125, 0
  %v394 = vsel %vm155, %v126, 0
  %v397 = vsel %vm155, %v127, 0
  %v400 = vsel %vm155, %v128, 0
  %v403 = vsel %vm155, %v129, 0
  %v406 = vsel %vm155, %v130, 0
  %v409 = vsel %vm155, %v131, 0
  %v412 = vsel %vm155, %v132, 0
  %v415 = vsel %vm155, %v133, 0
  %v418 = vsel %vm155, %v134, 0
  %v421 = vsel %vm155, %v135, 0
  %v424 = vsel %vm155, %v136, 0
  %v427 = vsel %vm155, %v137, 0
  %v430 = vsel %vm155, %v138, 0
  %v433 = vsel %vm155, %v139, 0
  %v436 = vsel %vm155, %v140, 0
  %v439 = vsel %vm155, %v141, 0
  %v442 = vsel %vm155, %v142, 0
  %444 = vmatpush.msra.mxu0 0.0
  %445 = vmatpush.msra.mxu0 0.0
  %446 = vmatpush.msra.mxu0 0.0
  %447 = vmatpush.msra.mxu0 0.0
  %448 = vmatpush.msra.mxu0 0.0
  %449 = vmatpush.msra.mxu0 0.0
  %450 = vmatpush.msra.mxu0 0.0
  %451 = vmatpush.msra.mxu0 0.0
  %452 = vmatpush.msra.mxu0 %v150
  %453 = vmatpush.msra.mxu0 %v149
  %454 = vmatpush.msra.mxu0 %v148
  %455 = vmatpush.msra.mxu0 %v147
  %456 = vmatpush.msra.mxu0 %v146
  %457 = vmatpush.msra.mxu0 %v145
  %458 = vmatpush.msra.mxu0 %v144
  %459 = vmatpush.msra.mxu0 %v143
  %460 = vmatmul.f32.gmra.mxu0 %v157
  %v461 = vpop.f32.mrf.mxu0
  %v462 = vadd.f32 %v153, %v461
  %463 = vmatmul.f32.gmra.mxu0 %v160
  %v464 = vpop.f32.mrf.mxu0
  %v465 = vadd.f32 %v153, %v464
  %466 = vmatmul.f32.gmra.mxu0 %v163
  %v467 = vpop.f32.mrf.mxu0
  %v468 = vadd.f32 %v153, %v467
  %469 = vmatmul.f32.gmra.mxu0 %v166
  %v470 = vpop.f32.mrf.mxu0
  %v471 = vadd.f32 %v153, %v470
  %472 = vmatmul.f32.gmra.mxu0 %v169
  %v473 = vpop.f32.mrf.mxu0
  %v474 = vadd.f32 %v153, %v473
  %475 = vmatmul.f32.gmra.mxu0 %v172
  %v476 = vpop.f32.mrf.mxu0
  %v477 = vadd.f32 %v153, %v476
  %478 = vmatmul.f32.gmra.mxu0 %v175
  %v479 = vpop.f32.mrf.mxu0
  %v480 = vadd.f32 %v153, %v479
  %481 = vmatmul.f32.gmra.mxu0 %v178
  %v482 = vpop.f32.mrf.mxu0
  %v483 = vadd.f32 %v153, %v482
  %484 = vmatmul.f32.gmra.mxu0 %v181
  %v485 = vpop.f32.mrf.mxu0
  %v486 = vadd.f32 %v153, %v485
  %487 = vmatmul.f32.gmra.mxu0 %v184
  %v488 = vpop.f32.mrf.mxu0
  %v489 = vadd.f32 %v153, %v488
  %490 = vmatmul.f32.gmra.mxu0 %v187
  %v491 = vpop.f32.mrf.mxu0
  %v492 = vadd.f32 %v153, %v491
  %493 = vmatmul.f32.gmra.mxu0 %v190
  %v494 = vpop.f32.mrf.mxu0
  %v495 = vadd.f32 %v153, %v494
  %496 = vmatmul.f32.gmra.mxu0 %v193
  %v497 = vpop.f32.mrf.mxu0
  %v498 = vadd.f32 %v153, %v497
  %499 = vmatmul.f32.gmra.mxu0 %v196
  %v500 = vpop.f32.mrf.mxu0
  %v501 = vadd.f32 %v153, %v500
  %502 = vmatmul.f32.gmra.mxu0 %v199
  %v503 = vpop.f32.mrf.mxu0
  %v504 = vadd.f32 %v153, %v503
  %505 = vmatmul.f32.gmra.mxu0 %v202
  %v506 = vpop.f32.mrf.mxu0
  %v507 = vadd.f32 %v153, %v506
  %508 = vmatmul.f32.gmra.mxu0 %v205
  %v509 = vpop.f32.mrf.mxu0
  %v510 = vadd.f32 %v153, %v509
  %511 = vmatmul.f32.gmra.mxu0 %v208
  %v512 = vpop.f32.mrf.mxu0
  %v513 = vadd.f32 %v153, %v512
  %514 = vmatmul.f32.gmra.mxu0 %v211
  %v515 = vpop.f32.mrf.mxu0
  %v516 = vadd.f32 %v153, %v515
  %517 = vmatmul.f32.gmra.mxu0 %v214
  %v518 = vpop.f32.mrf.mxu0
  %v519 = vadd.f32 %v153, %v518
  %520 = vmatmul.f32.gmra.mxu0 %v217
  %v521 = vpop.f32.mrf.mxu0
  %v522 = vadd.f32 %v153, %v521
  %523 = vmatmul.f32.gmra.mxu0 %v220
  %v524 = vpop.f32.mrf.mxu0
  %v525 = vadd.f32 %v153, %v524
  %526 = vmatmul.f32.gmra.mxu0 %v223
  %v527 = vpop.f32.mrf.mxu0
  %v528 = vadd.f32 %v153, %v527
  %529 = vmatmul.f32.gmra.mxu0 %v226
  %v530 = vpop.f32.mrf.mxu0
  %v531 = vadd.f32 %v153, %v530
  %532 = vmatmul.f32.gmra.mxu0 %v229
  %v533 = vpop.f32.mrf.mxu0
  %v534 = vadd.f32 %v153, %v533
  %535 = vmatmul.f32.gmra.mxu0 %v232
  %v536 = vpop.f32.mrf.mxu0
  %v537 = vadd.f32 %v153, %v536
  %538 = vmatmul.f32.gmra.mxu0 %v235
  %v539 = vpop.f32.mrf.mxu0
  %v540 = vadd.f32 %v153, %v539
  %541 = vmatmul.f32.gmra.mxu0 %v238
  %v542 = vpop.f32.mrf.mxu0
  %v543 = vadd.f32 %v153, %v542
  %544 = vmatmul.f32.gmra.mxu0 %v241
  %v545 = vpop.f32.mrf.mxu0
  %v546 = vadd.f32 %v153, %v545
  %547 = vmatmul.f32.gmra.mxu0 %v244
  %v548 = vpop.f32.mrf.mxu0
  %v549 = vadd.f32 %v153, %v548
  %550 = vmatmul.f32.gmra.mxu0 %v247
  %v551 = vpop.f32.mrf.mxu0
  %v552 = vadd.f32 %v153, %v551
  %553 = vmatmul.f32.gmra.mxu0 %v250
  %v554 = vpop.f32.mrf.mxu0
  %v555 = vadd.f32 %v153, %v554
  %556 = vmatmul.f32.gmra.mxu0 %v253
  %v557 = vpop.f32.mrf.mxu0
  %v558 = vadd.f32 %v153, %v557
  %559 = vmatmul.f32.gmra.mxu0 %v256
  %v560 = vpop.f32.mrf.mxu0
  %v561 = vadd.f32 %v153, %v560
  %562 = vmatmul.f32.gmra.mxu0 %v259
  %v563 = vpop.f32.mrf.mxu0
  %v564 = vadd.f32 %v153, %v563
  %565 = vmatmul.f32.gmra.mxu0 %v262
  %v566 = vpop.f32.mrf.mxu0
  %v567 = vadd.f32 %v153, %v566
  %568 = vmatmul.f32.gmra.mxu0 %v265
  %v569 = vpop.f32.mrf.mxu0
  %v570 = vadd.f32 %v153, %v569
  %571 = vmatmul.f32.gmra.mxu0 %v268
  %v572 = vpop.f32.mrf.mxu0
  %v573 = vadd.f32 %v153, %v572
  %574 = vmatmul.f32.gmra.mxu0 %v271
  %v575 = vpop.f32.mrf.mxu0
  %v576 = vadd.f32 %v153, %v575
  %577 = vmatmul.f32.gmra.mxu0 %v274
  %v578 = vpop.f32.mrf.mxu0
  %v579 = vadd.f32 %v153, %v578
  %580 = vmatmul.f32.gmra.mxu0 %v277
  %v581 = vpop.f32.mrf.mxu0
  %v582 = vadd.f32 %v153, %v581
  %583 = vmatmul.f32.gmra.mxu0 %v280
  %v584 = vpop.f32.mrf.mxu0
  %v585 = vadd.f32 %v153, %v584
  %586 = vmatmul.f32.gmra.mxu0 %v283
  %v587 = vpop.f32.mrf.mxu0
  %v588 = vadd.f32 %v153, %v587
  %589 = vmatmul.f32.gmra.mxu0 %v286
  %v590 = vpop.f32.mrf.mxu0
  %v591 = vadd.f32 %v153, %v590
  %592 = vmatmul.f32.gmra.mxu0 %v289
  %v593 = vpop.f32.mrf.mxu0
  %v594 = vadd.f32 %v153, %v593
  %595 = vmatmul.f32.gmra.mxu0 %v292
  %v596 = vpop.f32.mrf.mxu0
  %v597 = vadd.f32 %v153, %v596
  %598 = vmatmul.f32.gmra.mxu0 %v295
  %v599 = vpop.f32.mrf.mxu0
  %v600 = vadd.f32 %v153, %v599
  %601 = vmatmul.f32.gmra.mxu0 %v298
  %v602 = vpop.f32.mrf.mxu0
  %v603 = vadd.f32 %v153, %v602
  %604 = vmatmul.f32.gmra.mxu0 %v301
  %v605 = vpop.f32.mrf.mxu0
  %v606 = vadd.f32 %v153, %v605
  %607 = vmatmul.f32.gmra.mxu0 %v304
  %v608 = vpop.f32.mrf.mxu0
  %v609 = vadd.f32 %v153, %v608
  %610 = vmatmul.f32.gmra.mxu0 %v307
  %v611 = vpop.f32.mrf.mxu0
  %v612 = vadd.f32 %v153, %v611
  %613 = vmatmul.f32.gmra.mxu0 %v310
  %v614 = vpop.f32.mrf.mxu0
  %v615 = vadd.f32 %v153, %v614
  %616 = vmatmul.f32.gmra.mxu0 %v313
  %v617 = vpop.f32.mrf.mxu0
  %v618 = vadd.f32 %v153, %v617
  %619 = vmatmul.f32.gmra.mxu0 %v316
  %v620 = vpop.f32.mrf.mxu0
  %v621 = vadd.f32 %v153, %v620
  %622 = vmatmul.f32.gmra.mxu0 %v319
  %v623 = vpop.f32.mrf.mxu0
  %v624 = vadd.f32 %v153, %v623
  %625 = vmatmul.f32.gmra.mxu0 %v322
  %v626 = vpop.f32.mrf.mxu0
  %v627 = vadd.f32 %v153, %v626
  %628 = vmatmul.f32.gmra.mxu0 %v325
  %v629 = vpop.f32.mrf.mxu0
  %v630 = vadd.f32 %v153, %v629
  %631 = vmatmul.f32.gmra.mxu0 %v328
  %v632 = vpop.f32.mrf.mxu0
  %v633 = vadd.f32 %v153, %v632
  %634 = vmatmul.f32.gmra.mxu0 %v331
  %v635 = vpop.f32.mrf.mxu0
  %v636 = vadd.f32 %v153, %v635
  %637 = vmatmul.f32.gmra.mxu0 %v334
  %v638 = vpop.f32.mrf.mxu0
  %v639 = vadd.f32 %v153, %v638
  %640 = vmatmul.f32.gmra.mxu0 %v337
  %v641 = vpop.f32.mrf.mxu0
  %v642 = vadd.f32 %v153, %v641
  %643 = vmatmul.f32.gmra.mxu0 %v340
  %v644 = vpop.f32.mrf.mxu0
  %v645 = vadd.f32 %v153, %v644
  %646 = vmatmul.f32.gmra.mxu0 %v343
  %v647 = vpop.f32.mrf.mxu0
  %v648 = vadd.f32 %v153, %v647
  %649 = vmatmul.f32.gmra.mxu0 %v346
  %v650 = vpop.f32.mrf.mxu0
  %v651 = vadd.f32 %v153, %v650
  %652 = vmatmul.f32.gmra.mxu0 %v349
  %v653 = vpop.f32.mrf.mxu0
  %v654 = vadd.f32 %v153, %v653
  %655 = vmatmul.f32.gmra.mxu0 %v352
  %v656 = vpop.f32.mrf.mxu0
  %v657 = vadd.f32 %v153, %v656
  %658 = vmatmul.f32.gmra.mxu0 %v355
  %v659 = vpop.f32.mrf.mxu0
  %v660 = vadd.f32 %v153, %v659
  %661 = vmatmul.f32.gmra.mxu0 %v358
  %v662 = vpop.f32.mrf.mxu0
  %v663 = vadd.f32 %v153, %v662
  %664 = vmatmul.f32.gmra.mxu0 %v361
  %v665 = vpop.f32.mrf.mxu0
  %v666 = vadd.f32 %v153, %v665
  %667 = vmatmul.f32.gmra.mxu0 %v364
  %v668 = vpop.f32.mrf.mxu0
  %v669 = vadd.f32 %v153, %v668
  %670 = vmatmul.f32.gmra.mxu0 %v367
  %v671 = vpop.f32.mrf.mxu0
  %v672 = vadd.f32 %v153, %v671
  %673 = vmatmul.f32.gmra.mxu0 %v370
  %v674 = vpop.f32.mrf.mxu0
  %v675 = vadd.f32 %v153, %v674
  %676 = vmatmul.f32.gmra.mxu0 %v373
  %v677 = vpop.f32.mrf.mxu0
  %v678 = vadd.f32 %v153, %v677
  %679 = vmatmul.f32.gmra.mxu0 %v376
  %v680 = vpop.f32.mrf.mxu0
  %v681 = vadd.f32 %v153, %v680
  %682 = vmatmul.f32.gmra.mxu0 %v379
  %v683 = vpop.f32.mrf.mxu0
  %v684 = vadd.f32 %v153, %v683
  %685 = vmatmul.f32.gmra.mxu0 %v382
  %v686 = vpop.f32.mrf.mxu0
  %v687 = vadd.f32 %v153, %v686
  %688 = vmatmul.f32.gmra.mxu0 %v385
  %v689 = vpop.f32.mrf.mxu0
  %v690 = vadd.f32 %v153, %v689
  %691 = vmatmul.f32.gmra.mxu0 %v388
  %v692 = vpop.f32.mrf.mxu0
  %v693 = vadd.f32 %v153, %v692
  %694 = vmatmul.f32.gmra.mxu0 %v391
  %v695 = vpop.f32.mrf.mxu0
  %v696 = vadd.f32 %v153, %v695
  %697 = vmatmul.f32.gmra.mxu0 %v394
  %v698 = vpop.f32.mrf.mxu0
  %v699 = vadd.f32 %v153, %v698
  %700 = vmatmul.f32.gmra.mxu0 %v397
  %v701 = vpop.f32.mrf.mxu0
  %v702 = vadd.f32 %v153, %v701
  %703 = vmatmul.f32.gmra.mxu0 %v400
  %v704 = vpop.f32.mrf.mxu0
  %v705 = vadd.f32 %v153, %v704
  %706 = vmatmul.f32.gmra.mxu0 %v403
  %v707 = vpop.f32.mrf.mxu0
  %v708 = vadd.f32 %v153, %v707
  %709 = vmatmul.f32.gmra.mxu0 %v406
  %v710 = vpop.f32.mrf.mxu0
  %v711 = vadd.f32 %v153, %v710
  %712 = vmatmul.f32.gmra.mxu0 %v409
  %v713 = vpop.f32.mrf.mxu0
  %v714 = vadd.f32 %v153, %v713
  %715 = vmatmul.f32.gmra.mxu0 %v412
  %v716 = vpop.f32.mrf.mxu0
  %v717 = vadd.f32 %v153, %v716
  %718 = vmatmul.f32.gmra.mxu0 %v415
  %v719 = vpop.f32.mrf.mxu0
  %v720 = vadd.f32 %v153, %v719
  %721 = vmatmul.f32.gmra.mxu0 %v418
  %v722 = vpop.f32.mrf.mxu0
  %v723 = vadd.f32 %v153, %v722
  %724 = vmatmul.f32.gmra.mxu0 %v421
  %v725 = vpop.f32.mrf.mxu0
  %v726 = vadd.f32 %v153, %v725
  %727 = vmatmul.f32.gmra.mxu0 %v424
  %v728 = vpop.f32.mrf.mxu0
  %v729 = vadd.f32 %v153, %v728
  %730 = vmatmul.f32.gmra.mxu0 %v427
  %v731 = vpop.f32.mrf.mxu0
  %v732 = vadd.f32 %v153, %v731
  %733 = vmatmul.f32.gmra.mxu0 %v430
  %v734 = vpop.f32.mrf.mxu0
  %v735 = vadd.f32 %v153, %v734
  %736 = vmatmul.f32.gmra.mxu0 %v433
  %v737 = vpop.f32.mrf.mxu0
  %v738 = vadd.f32 %v153, %v737
  %739 = vmatmul.f32.gmra.mxu0 %v436
  %v740 = vpop.f32.mrf.mxu0
  %v741 = vadd.f32 %v153, %v740
  %742 = vmatmul.f32.gmra.mxu0 %v439
  %v743 = vpop.f32.mrf.mxu0
  %v744 = vadd.f32 %v153, %v743
  %745 = vmatmul.f32.gmra.mxu0 %v442
  %v746 = vpop.f32.mrf.mxu0
  %v747 = vadd.f32 %v153, %v746
  %748 = vdwg.mxu0
  %749 = vst [vmem:[#allocation2] sm:$0xff] %v462
  %750 = vst [vmem:[#allocation2 + $0x8] sm:$0xff] %v465
  %751 = vst [vmem:[#allocation2 + $0x10] sm:$0xff] %v468
  %752 = vst [vmem:[#allocation2 + $0x18] sm:$0xff] %v471
  %753 = vst [vmem:[#allocation2 + $0x20] sm:$0xff] %v474
  %754 = vst [vmem:[#allocation2 + $0x28] sm:$0xff] %v477
  %755 = vst [vmem:[#allocation2 + $0x30] sm:$0xff] %v480
  %756 = vst [vmem:[#allocation2 + $0x38] sm:$0xff] %v483
  %757 = vst [vmem:[#allocation2 + $0x40] sm:$0xff] %v486
  %758 = vst [vmem:[#allocation2 + $0x48] sm:$0xff] %v489
  %759 = vst [vmem:[#allocation2 + $0x50] sm:$0xff] %v492
  %760 = vst [vmem:[#allocation2 + $0x58] sm:$0xff] %v495
  %761 = vst [vmem:[#allocation2 + $0x60] sm:$0xff] %v498
  %762 = vst [vmem:[#allocation2 + $0x68] sm:$0xff] %v501
  %763 = vst [vmem:[#allocation2 + $0x70] sm:$0xff] %v504
  %764 = vst [vmem:[#allocation2 + $0x78] sm:$0xff] %v507
  %765 = vst [vmem:[#allocation2 + $0x80] sm:$0xff] %v510
  %766 = vst [vmem:[#allocation2 + $0x88] sm:$0xff] %v513
  %767 = vst [vmem:[#allocation2 + $0x90] sm:$0xff] %v516
  %768 = vst [vmem:[#allocation2 + $0x98] sm:$0xff] %v519
  %769 = vst [vmem:[#allocation2 + $0xa0] sm:$0xff] %v522
  %770 = vst [vmem:[#allocation2 + $0xa8] sm:$0xff] %v525
  %771 = vst [vmem:[#allocation2 + $0xb0] sm:$0xff] %v528
  %772 = vst [vmem:[#allocation2 + $0xb8] sm:$0xff] %v531
  %773 = vst [vmem:[#allocation2 + $0xc0] sm:$0xff] %v534
  %774 = vst [vmem:[#allocation2 + $0xc8] sm:$0xff] %v537
  %775 = vst [vmem:[#allocation2 + $0xd0] sm:$0xff] %v540
  %776 = vst [vmem:[#allocation2 + $0xd8] sm:$0xff] %v543
  %777 = vst [vmem:[#allocation2 + $0xe0] sm:$0xff] %v546
  %778 = vst [vmem:[#allocation2 + $0xe8] sm:$0xff] %v549
  %779 = vst [vmem:[#allocation2 + $0xf0] sm:$0xff] %v552
  %780 = vst [vmem:[#allocation2 + $0xf8] sm:$0xff] %v555
  %781 = vst [vmem:[#allocation2 + $0x100] sm:$0xff] %v558
  %782 = vst [vmem:[#allocation2 + $0x108] sm:$0xff] %v561
  %783 = vst [vmem:[#allocation2 + $0x110] sm:$0xff] %v564
  %784 = vst [vmem:[#allocation2 + $0x118] sm:$0xff] %v567
  %785 = vst [vmem:[#allocation2 + $0x120] sm:$0xff] %v570
  %786 = vst [vmem:[#allocation2 + $0x128] sm:$0xff] %v573
  %787 = vst [vmem:[#allocation2 + $0x130] sm:$0xff] %v576
  %788 = vst [vmem:[#allocation2 + $0x138] sm:$0xff] %v579
  %789 = vst [vmem:[#allocation2 + $0x140] sm:$0xff] %v582
  %790 = vst [vmem:[#allocation2 + $0x148] sm:$0xff] %v585
  %791 = vst [vmem:[#allocation2 + $0x150] sm:$0xff] %v588
  %792 = vst [vmem:[#allocation2 + $0x158] sm:$0xff] %v591
  %793 = vst [vmem:[#allocation2 + $0x160] sm:$0xff] %v594
  %794 = vst [vmem:[#allocation2 + $0x168] sm:$0xff] %v597
  %795 = vst [vmem:[#allocation2 + $0x170] sm:$0xff] %v600
  %796 = vst [vmem:[#allocation2 + $0x178] sm:$0xff] %v603
  %797 = vst [vmem:[#allocation2 + $0x180] sm:$0xff] %v606
  %798 = vst [vmem:[#allocation2 + $0x188] sm:$0xff] %v609
  %799 = vst [vmem:[#allocation2 + $0x190] sm:$0xff] %v612
  %800 = vst [vmem:[#allocation2 + $0x198] sm:$0xff] %v615
  %801 = vst [vmem:[#allocation2 + $0x1a0] sm:$0xff] %v618
  %802 = vst [vmem:[#allocation2 + $0x1a8] sm:$0xff] %v621
  %803 = vst [vmem:[#allocation2 + $0x1b0] sm:$0xff] %v624
  %804 = vst [vmem:[#allocation2 + $0x1b8] sm:$0xff] %v627
  %805 = vst [vmem:[#allocation2 + $0x1c0] sm:$0xff] %v630
  %806 = vst [vmem:[#allocation2 + $0x1c8] sm:$0xff] %v633
  %807 = vst [vmem:[#allocation2 + $0x1d0] sm:$0xff] %v636
  %808 = vst [vmem:[#allocation2 + $0x1d8] sm:$0xff] %v639
  %809 = vst [vmem:[#allocation2 + $0x1e0] sm:$0xff] %v642
  %810 = vst [vmem:[#allocation2 + $0x1e8] sm:$0xff] %v645
  %811 = vst [vmem:[#allocation2 + $0x1f0] sm:$0xff] %v648
  %812 = vst [vmem:[#allocation2 + $0x1f8] sm:$0xff] %v651
  %813 = vst [vmem:[#allocation2 + $0x200] sm:$0xff] %v654
  %814 = vst [vmem:[#allocation2 + $0x208] sm:$0xff] %v657
  %815 = vst [vmem:[#allocation2 + $0x210] sm:$0xff] %v660
  %816 = vst [vmem:[#allocation2 + $0x218] sm:$0xff] %v663
  %817 = vst [vmem:[#allocation2 + $0x220] sm:$0xff] %v666
  %818 = vst [vmem:[#allocation2 + $0x228] sm:$0xff] %v669
  %819 = vst [vmem:[#allocation2 + $0x230] sm:$0xff] %v672
  %820 = vst [vmem:[#allocation2 + $0x238] sm:$0xff] %v675
  %821 = vst [vmem:[#allocation2 + $0x240] sm:$0xff] %v678
  %822 = vst [vmem:[#allocation2 + $0x248] sm:$0xff] %v681
  %823 = vst [vmem:[#allocation2 + $0x250] sm:$0xff] %v684
  %824 = vst [vmem:[#allocation2 + $0x258] sm:$0xff] %v687
  %825 = vst [vmem:[#allocation2 + $0x260] sm:$0xff] %v690
  %826 = vst [vmem:[#allocation2 + $0x268] sm:$0xff] %v693
  %827 = vst [vmem:[#allocation2 + $0x270] sm:$0xff] %v696
  %828 = vst [vmem:[#allocation2 + $0x278] sm:$0xff] %v699
  %829 = vst [vmem:[#allocation2 + $0x280] sm:$0xff] %v702
  %830 = vst [vmem:[#allocation2 + $0x288] sm:$0xff] %v705
  %831 = vst [vmem:[#allocation2 + $0x290] sm:$0xff] %v708
  %832 = vst [vmem:[#allocation2 + $0x298] sm:$0xff] %v711
  %833 = vst [vmem:[#allocation2 + $0x2a0] sm:$0xff] %v714
  %834 = vst [vmem:[#allocation2 + $0x2a8] sm:$0xff] %v717
  %835 = vst [vmem:[#allocation2 + $0x2b0] sm:$0xff] %v720
  %836 = vst [vmem:[#allocation2 + $0x2b8] sm:$0xff] %v723
  %837 = vst [vmem:[#allocation2 + $0x2c0] sm:$0xff] %v726
  %838 = vst [vmem:[#allocation2 + $0x2c8] sm:$0xff] %v729
  %839 = vst [vmem:[#allocation2 + $0x2d0] sm:$0xff] %v732
  %840 = vst [vmem:[#allocation2 + $0x2d8] sm:$0xff] %v735
  %841 = vst [vmem:[#allocation2 + $0x2e0] sm:$0xff] %v738
  %842 = vst [vmem:[#allocation2 + $0x2e8] sm:$0xff] %v741
  %843 = vst [vmem:[#allocation2 + $0x2f0] sm:$0xff] %v744
  %844 = vst [vmem:[#allocation2 + $0x2f8] sm:$0xff] %v747
  %v845 = vld [vmem:[%s2] sm:$0xff]
  %v846 = vld [vmem:[%s2 + $0x8] sm:$0xff]
  %v847 = vld [vmem:[%s2 + $0x10] sm:$0xff]
  %v848 = vld [vmem:[%s2 + $0x18] sm:$0xff]
  %v849 = vld [vmem:[%s4] sm:$0xff]
  %v850 = vld [vmem:[%s4 + $0x8] sm:$0xff]
  %v851 = vld [vmem:[%s4 + $0x10] sm:$0xff]
  %v852 = vld [vmem:[%s4 + $0x18] sm:$0xff]
  %v853 = vld [vmem:[%s4 + $0x20] sm:$0xff]
  %v854 = vld [vmem:[%s4 + $0x28] sm:$0xff]
  %v855 = vld [vmem:[%s4 + $0x30] sm:$0xff]
  %v856 = vld [vmem:[%s4 + $0x38] sm:$0xff]
  %v857 = vld [vmem:[%s5] sm:$0x1]
  loop: start=0, step=1, limit=6
  $region58: #{cnn_lstm_forward.3} parent=0 // loop_pre_header
    _
  $region59: #{cnn_lstm_forward.3} parent=0 // loop_header
    %s859 = sphi 0, %s863
    %p860 = scmp.ge.s32.totalorder %s859, 6
    %v864 = vphi 0.0, %v2933
    %v865 = vphi 0.0, %v2927
    %v866 = vphi 0.0, %v3002
    %v867 = vphi 0.0, %v2996
  $region60: #{cnn_lstm_forward.3} parent=0 // loop_header_branch
    %862 = sbr.rel (%p860) target = $region64
  $region61: #{cnn_lstm_forward.3} parent=0 // loop_body
    %s868 = smul.u32 %s859, 128
    %s869 = scalar_lea.vmem [#allocation2], %s868
    %v870 = vld [vmem:[%s869] sm:$0xff]
    %872 = vrot.lane.b32.xlu0 %v864, 32
    %v873 = vpop.permute.xlu0 %872
    %vm874 = vcmask 261120
    %v875 = vsel %vm874, %v873, 0
    %877 = vmatpush.msra.mxu0 0.0
    %878 = vmatpush.msra.mxu0 0.0
    %879 = vmatpush.msra.mxu0 0.0
    %880 = vmatpush.msra.mxu0 0.0
    %881 = vmatpush.msra.mxu0 0.0
    %882 = vmatpush.msra.mxu0 0.0
    %883 = vmatpush.msra.mxu0 0.0
    %884 = vmatpush.msra.mxu0 0.0
    %885 = vmatpush.msra.mxu0 0.0
    %886 = vmatpush.msra.mxu0 0.0
    %887 = vmatpush.msra.mxu0 0.0
    %888 = vmatpush.msra.mxu0 0.0
    %889 = vmatpush.msra.mxu0 %v848
    %890 = vmatpush.msra.mxu0 %v847
    %891 = vmatpush.msra.mxu0 %v846
    %892 = vmatpush.msra.mxu0 %v845
    %893 = vmatmul.f32.gmra.mxu0 %v875
    %v894 = vpop.f32.mrf.mxu0
    %v895 = vadd.f32 0.0, %v894
    %896 = vdwg.mxu0
    %v897 = vadd.f32 %v870, %v895
    %v898 = vsub.f32 0.0, %v897
    %v899 = vmul.f32 %v898, 1.442695
    %v900 = vpow.pop %v899
    %v901 = vadd.f32 %v900, 1.0
    %v902 = vrcp.pop %v901
    %v903 = vmul.f32 %v901, %v902
    %v904 = vsub.f32 1.0, %v903
    %v905 = vmul.f32 %v902, %v904
    %v906 = vadd.f32 %v902, %v905
    %vm907 = vweird.f32 %v901
    %vm908 = vweird.f32 %v902
    %vm909 = vmor %vm907, %vm908
    %v910 = vsel %vm909, %v902, %v906
    %v911 = vand.u32 2147483647, %v901
    %vm912 = vcmp.eq.f32.partialorder %v911, 8.507059e+37
    %v913 = vand.u32 %v901, 2147483648
    %v914 = vor.u32 1.1754944e-38, %v913
    %v915 = vsel %vm912, %v914, %v910
    %v916 = vmul.f32 1.0, %v915
    %v917 = vtanh.pop %v897
    %v918 = vmul.f32 %v916, %v865
    %920 = vrot.lane.b32.xlu0 %v917, 64
    %v921 = vpop.permute.xlu0 %920
    %v923 = vmul.f32 %v916, %v921
    %925 = vrot.lane.b32.xlu0 %v923, 32
    %v926 = vpop.permute.xlu0 %925
    %v928 = vadd.f32 %v918, %v926
    %v929 = vtanh.pop %v928
    %931 = vrot.lane.b32.xlu0 %v929, 64
    %v932 = vpop.permute.xlu0 %931
    %v934 = vmul.f32 %v916, %v932
    %936 = vrot.lane.b32.xlu0 %v934, 32
    %v937 = vpop.permute.xlu0 %936
    %940 = vrot.lane.b32.xlu0 %v866, 64
    %v941 = vpop.permute.xlu0 %940
    %v943 = vsel %vm874, %v937, %v941
    %v945 = vperm.slane %v857, 0
    %v948 = vsel %vm155, %v943, 0
    %950 = vmatpush.msra.mxu0 0.0
    %951 = vmatpush.msra.mxu0 0.0
    %952 = vmatpush.msra.mxu0 0.0
    %953 = vmatpush.msra.mxu0 0.0
    %954 = vmatpush.msra.mxu0 0.0
    %955 = vmatpush.msra.mxu0 0.0
    %956 = vmatpush.msra.mxu0 0.0
    %957 = vmatpush.msra.mxu0 0.0
    %958 = vmatpush.msra.mxu0 %v856
    %959 = vmatpush.msra.mxu0 %v855
    %960 = vmatpush.msra.mxu0 %v854
    %961 = vmatpush.msra.mxu0 %v853
    %962 = vmatpush.msra.mxu0 %v852
    %963 = vmatpush.msra.mxu0 %v851
    %964 = vmatpush.msra.mxu0 %v850
    %965 = vmatpush.msra.mxu0 %v849
    %966 = vmatmul.f32.gmra.mxu0 %v948
    %v967 = vpop.f32.mrf.mxu0
    %v968 = vadd.f32 %v945, %v967
    %969 = vdwg.mxu0
    %v970 = vsub.f32 0.0, %v968
    %v971 = vmul.f32 %v970, 1.442695
    %v972 = vpow.pop %v971
    %v973 = vadd.f32 %v972, 1.0
    %v974 = vrcp.pop %v973
    %v975 = vmul.f32 %v973, %v974
    %v976 = vsub.f32 1.0, %v975
    %v977 = vmul.f32 %v974, %v976
    %v978 = vadd.f32 %v974, %v977
    %vm979 = vweird.f32 %v973
    %vm980 = vweird.f32 %v974
    %vm981 = vmor %vm979, %vm980
    %v982 = vsel %vm981, %v974, %v978
    %v983 = vand.u32 2147483647, %v973
    %vm984 = vcmp.eq.f32.partialorder %v983, 8.507059e+37
    %v985 = vand.u32 %v973, 2147483648
    %v986 = vor.u32 1.1754944e-38, %v985
    %v987 = vsel %vm984, %v986, %v982
    %v988 = vmul.f32 1.0, %v987
    %v989 = vtanh.pop %v968
    %v990 = vmul.f32 %v988, %v867
    %992 = vrot.lane.b32.xlu0 %v989, 64
    %v993 = vpop.permute.xlu0 %992
    %v995 = vmul.f32 %v988, %v993
    %997 = vrot.lane.b32.xlu0 %v995, 32
    %v998 = vpop.permute.xlu0 %997
    %v1000 = vadd.f32 %v990, %v998
    %v1001 = vtanh.pop %v1000
    %1003 = vrot.lane.b32.xlu0 %v1001, 64
    %v1004 = vpop.permute.xlu0 %1003
    %v1006 = vmul.f32 %v988, %v1004
    %s1007 = smul.u32 %s859, 16
    %s1008 = sadd.s32 %s1007, 1
    %s1009 = smul.u32 %s1008, 8
    %s1010 = scalar_lea.vmem [#allocation2], %s1009
    %v1011 = vld [vmem:[%s1010] sm:$0xff]
    %v1012 = vsel %vm874, %v937, 0
    %1014 = vmatpush.msra.mxu0 0.0
    %1015 = vmatpush.msra.mxu0 0.0
    %1016 = vmatpush.msra.mxu0 0.0
    %1017 = vmatpush.msra.mxu0 0.0
    %1018 = vmatpush.msra.mxu0 0.0
    %1019 = vmatpush.msra.mxu0 0.0
    %1020 = vmatpush.msra.mxu0 0.0
    %1021 = vmatpush.msra.mxu0 0.0
    %1022 = vmatpush.msra.mxu0 0.0
    %1023 = vmatpush.msra.mxu0 0.0
    %1024 = vmatpush.msra.mxu0 0.0
    %1025 = vmatpush.msra.mxu0 0.0
    %1026 = vmatpush.msra.mxu0 %v848
    %1027 = vmatpush.msra.mxu0 %v847
    %1028 = vmatpush.msra.mxu0 %v846
    %1029 = vmatpush.msra.mxu0 %v845
    %1030 = vmatmul.f32.gmra.mxu0 %v1012
    %v1031 = vpop.f32.mrf.mxu0
    %v1032 = vadd.f32 0.0, %v1031
    %1033 = vdwg.mxu0
    %v1034 = vadd.f32 %v1011, %v1032
    %v1035 = vsub.f32 0.0, %v1034
    %v1036 = vmul.f32 %v1035, 1.442695
    %v1037 = vpow.pop %v1036
    %v1038 = vadd.f32 %v1037, 1.0
    %v1039 = vrcp.pop %v1038
    %v1040 = vmul.f32 %v1038, %v1039
    %v1041 = vsub.f32 1.0, %v1040
    %v1042 = vmul.f32 %v1039, %v1041
    %v1043 = vadd.f32 %v1039, %v1042
    %vm1044 = vweird.f32 %v1038
    %vm1045 = vweird.f32 %v1039
    %vm1046 = vmor %vm1044, %vm1045
    %v1047 = vsel %vm1046, %v1039, %v1043
    %v1048 = vand.u32 2147483647, %v1038
    %vm1049 = vcmp.eq.f32.partialorder %v1048, 8.507059e+37
    %v1050 = vand.u32 %v1038, 2147483648
    %v1051 = vor.u32 1.1754944e-38, %v1050
    %v1052 = vsel %vm1049, %v1051, %v1047
    %v1053 = vmul.f32 1.0, %v1052
    %v1054 = vtanh.pop %v1034
    %v1055 = vmul.f32 %v1053, %v928
    %1057 = vrot.lane.b32.xlu0 %v1054, 64
    %v1058 = vpop.permute.xlu0 %1057
    %v1060 = vmul.f32 %v1053, %v1058
    %1062 = vrot.lane.b32.xlu0 %v1060, 32
    %v1063 = vpop.permute.xlu0 %1062
    %v1065 = vadd.f32 %v1055, %v1063
    %v1066 = vtanh.pop %v1065
    %1068 = vrot.lane.b32.xlu0 %v1066, 64
    %v1069 = vpop.permute.xlu0 %1068
    %v1071 = vmul.f32 %v1053, %v1069
    %1073 = vrot.lane.b32.xlu0 %v1071, 32
    %v1074 = vpop.permute.xlu0 %1073
    %1077 = vrot.lane.b32.xlu0 %v1006, 64
    %v1078 = vpop.permute.xlu0 %1077
    %v1080 = vsel %vm874, %v1074, %v1078
    %v1082 = vsel %vm155, %v1080, 0
    %1084 = vmatpush.msra.mxu0 0.0
    %1085 = vmatpush.msra.mxu0 0.0
    %1086 = vmatpush.msra.mxu0 0.0
    %1087 = vmatpush.msra.mxu0 0.0
    %1088 = vmatpush.msra.mxu0 0.0
    %1089 = vmatpush.msra.mxu0 0.0
    %1090 = vmatpush.msra.mxu0 0.0
    %1091 = vmatpush.msra.mxu0 0.0
    %1092 = vmatpush.msra.mxu0 %v856
    %1093 = vmatpush.msra.mxu0 %v855
    %1094 = vmatpush.msra.mxu0 %v854
    %1095 = vmatpush.msra.mxu0 %v853
    %1096 = vmatpush.msra.mxu0 %v852
    %1097 = vmatpush.msra.mxu0 %v851
    %1098 = vmatpush.msra.mxu0 %v850
    %1099 = vmatpush.msra.mxu0 %v849
    %1100 = vmatmul.f32.gmra.mxu0 %v1082
    %v1101 = vpop.f32.mrf.mxu0
    %v1102 = vadd.f32 %v945, %v1101
    %1103 = vdwg.mxu0
    %v1104 = vsub.f32 0.0, %v1102
    %v1105 = vmul.f32 %v1104, 1.442695
    %v1106 = vpow.pop %v1105
    %v1107 = vadd.f32 %v1106, 1.0
    %v1108 = vrcp.pop %v1107
    %v1109 = vmul.f32 %v1107, %v1108
    %v1110 = vsub.f32 1.0, %v1109
    %v1111 = vmul.f32 %v1108, %v1110
    %v1112 = vadd.f32 %v1108, %v1111
    %vm1113 = vweird.f32 %v1107
    %vm1114 = vweird.f32 %v1108
    %vm1115 = vmor %vm1113, %vm1114
    %v1116 = vsel %vm1115, %v1108, %v1112
    %v1117 = vand.u32 2147483647, %v1107
    %vm1118 = vcmp.eq.f32.partialorder %v1117, 8.507059e+37
    %v1119 = vand.u32 %v1107, 2147483648
    %v1120 = vor.u32 1.1754944e-38, %v1119
    %v1121 = vsel %vm1118, %v1120, %v1116
    %v1122 = vmul.f32 1.0, %v1121
    %v1123 = vtanh.pop %v1102
    %v1124 = vmul.f32 %v1122, %v1000
    %1126 = vrot.lane.b32.xlu0 %v1123, 64
    %v1127 = vpop.permute.xlu0 %1126
    %v1129 = vmul.f32 %v1122, %v1127
    %1131 = vrot.lane.b32.xlu0 %v1129, 32
    %v1132 = vpop.permute.xlu0 %1131
    %v1134 = vadd.f32 %v1124, %v1132
    %v1135 = vtanh.pop %v1134
    %1137 = vrot.lane.b32.xlu0 %v1135, 64
    %v1138 = vpop.permute.xlu0 %1137
    %v1140 = vmul.f32 %v1122, %v1138
    %s1141 = sadd.s32 %s1007, 2
    %s1142 = smul.u32 %s1141, 8
    %s1143 = scalar_lea.vmem [#allocation2], %s1142
    %v1144 = vld [vmem:[%s1143] sm:$0xff]
    %v1145 = vsel %vm874, %v1074, 0
    %1147 = vmatpush.msra.mxu0 0.0
    %1148 = vmatpush.msra.mxu0 0.0
    %1149 = vmatpush.msra.mxu0 0.0
    %1150 = vmatpush.msra.mxu0 0.0
    %1151 = vmatpush.msra.mxu0 0.0
    %1152 = vmatpush.msra.mxu0 0.0
    %1153 = vmatpush.msra.mxu0 0.0
    %1154 = vmatpush.msra.mxu0 0.0
    %1155 = vmatpush.msra.mxu0 0.0
    %1156 = vmatpush.msra.mxu0 0.0
    %1157 = vmatpush.msra.mxu0 0.0
    %1158 = vmatpush.msra.mxu0 0.0
    %1159 = vmatpush.msra.mxu0 %v848
    %1160 = vmatpush.msra.mxu0 %v847
    %1161 = vmatpush.msra.mxu0 %v846
    %1162 = vmatpush.msra.mxu0 %v845
    %1163 = vmatmul.f32.gmra.mxu0 %v1145
    %v1164 = vpop.f32.mrf.mxu0
    %v1165 = vadd.f32 0.0, %v1164
    %1166 = vdwg.mxu0
    %v1167 = vadd.f32 %v1144, %v1165
    %v1168 = vsub.f32 0.0, %v1167
    %v1169 = vmul.f32 %v1168, 1.442695
    %v1170 = vpow.pop %v1169
    %v1171 = vadd.f32 %v1170, 1.0
    %v1172 = vrcp.pop %v1171
    %v1173 = vmul.f32 %v1171, %v1172
    %v1174 = vsub.f32 1.0, %v1173
    %v1175 = vmul.f32 %v1172, %v1174
    %v1176 = vadd.f32 %v1172, %v1175
    %vm1177 = vweird.f32 %v1171
    %vm1178 = vweird.f32 %v1172
    %vm1179 = vmor %vm1177, %vm1178
    %v1180 = vsel %vm1179, %v1172, %v1176
    %v1181 = vand.u32 2147483647, %v1171
    %vm1182 = vcmp.eq.f32.partialorder %v1181, 8.507059e+37
    %v1183 = vand.u32 %v1171, 2147483648
    %v1184 = vor.u32 1.1754944e-38, %v1183
    %v1185 = vsel %vm1182, %v1184, %v1180
    %v1186 = vmul.f32 1.0, %v1185
    %v1187 = vtanh.pop %v1167
    %v1188 = vmul.f32 %v1186, %v1065
    %1190 = vrot.lane.b32.xlu0 %v1187, 64
    %v1191 = vpop.permute.xlu0 %1190
    %v1193 = vmul.f32 %v1186, %v1191
    %1195 = vrot.lane.b32.xlu0 %v1193, 32
    %v1196 = vpop.permute.xlu0 %1195
    %v1198 = vadd.f32 %v1188, %v1196
    %v1199 = vtanh.pop %v1198
    %1201 = vrot.lane.b32.xlu0 %v1199, 64
    %v1202 = vpop.permute.xlu0 %1201
    %v1204 = vmul.f32 %v1186, %v1202
    %1206 = vrot.lane.b32.xlu0 %v1204, 32
    %v1207 = vpop.permute.xlu0 %1206
    %1210 = vrot.lane.b32.xlu0 %v1140, 64
    %v1211 = vpop.permute.xlu0 %1210
    %v1213 = vsel %vm874, %v1207, %v1211
    %v1215 = vsel %vm155, %v1213, 0
    %1217 = vmatpush.msra.mxu0 0.0
    %1218 = vmatpush.msra.mxu0 0.0
    %1219 = vmatpush.msra.mxu0 0.0
    %1220 = vmatpush.msra.mxu0 0.0
    %1221 = vmatpush.msra.mxu0 0.0
    %1222 = vmatpush.msra.mxu0 0.0
    %1223 = vmatpush.msra.mxu0 0.0
    %1224 = vmatpush.msra.mxu0 0.0
    %1225 = vmatpush.msra.mxu0 %v856
    %1226 = vmatpush.msra.mxu0 %v855
    %1227 = vmatpush.msra.mxu0 %v854
    %1228 = vmatpush.msra.mxu0 %v853
    %1229 = vmatpush.msra.mxu0 %v852
    %1230 = vmatpush.msra.mxu0 %v851
    %1231 = vmatpush.msra.mxu0 %v850
    %1232 = vmatpush.msra.mxu0 %v849
    %1233 = vmatmul.f32.gmra.mxu0 %v1215
    %v1234 = vpop.f32.mrf.mxu0
    %v1235 = vadd.f32 %v945, %v1234
    %1236 = vdwg.mxu0
    %v1237 = vsub.f32 0.0, %v1235
    %v1238 = vmul.f32 %v1237, 1.442695
    %v1239 = vpow.pop %v1238
    %v1240 = vadd.f32 %v1239, 1.0
    %v1241 = vrcp.pop %v1240
    %v1242 = vmul.f32 %v1240, %v1241
    %v1243 = vsub.f32 1.0, %v1242
    %v1244 = vmul.f32 %v1241, %v1243
    %v1245 = vadd.f32 %v1241, %v1244
    %vm1246 = vweird.f32 %v1240
    %vm1247 = vweird.f32 %v1241
    %vm1248 = vmor %vm1246, %vm1247
    %v1249 = vsel %vm1248, %v1241, %v1245
    %v1250 = vand.u32 2147483647, %v1240
    %vm1251 = vcmp.eq.f32.partialorder %v1250, 8.507059e+37
    %v1252 = vand.u32 %v1240, 2147483648
    %v1253 = vor.u32 1.1754944e-38, %v1252
    %v1254 = vsel %vm1251, %v1253, %v1249
    %v1255 = vmul.f32 1.0, %v1254
    %v1256 = vtanh.pop %v1235
    %v1257 = vmul.f32 %v1255, %v1134
    %1259 = vrot.lane.b32.xlu0 %v1256, 64
    %v1260 = vpop.permute.xlu0 %1259
    %v1262 = vmul.f32 %v1255, %v1260
    %1264 = vrot.lane.b32.xlu0 %v1262, 32
    %v1265 = vpop.permute.xlu0 %1264
    %v1267 = vadd.f32 %v1257, %v1265
    %v1268 = vtanh.pop %v1267
    %1270 = vrot.lane.b32.xlu0 %v1268, 64
    %v1271 = vpop.permute.xlu0 %1270
    %v1273 = vmul.f32 %v1255, %v1271
    %s1274 = sadd.s32 %s1007, 3
    %s1275 = smul.u32 %s1274, 8
    %s1276 = scalar_lea.vmem [#allocation2], %s1275
    %v1277 = vld [vmem:[%s1276] sm:$0xff]
    %v1278 = vsel %vm874, %v1207, 0
    %1280 = vmatpush.msra.mxu0 0.0
    %1281 = vmatpush.msra.mxu0 0.0
    %1282 = vmatpush.msra.mxu0 0.0
    %1283 = vmatpush.msra.mxu0 0.0
    %1284 = vmatpush.msra.mxu0 0.0
    %1285 = vmatpush.msra.mxu0 0.0
    %1286 = vmatpush.msra.mxu0 0.0
    %1287 = vmatpush.msra.mxu0 0.0
    %1288 = vmatpush.msra.mxu0 0.0
    %1289 = vmatpush.msra.mxu0 0.0
    %1290 = vmatpush.msra.mxu0 0.0
    %1291 = vmatpush.msra.mxu0 0.0
    %1292 = vmatpush.msra.mxu0 %v848
    %1293 = vmatpush.msra.mxu0 %v847
    %1294 = vmatpush.msra.mxu0 %v846
    %1295 = vmatpush.msra.mxu0 %v845
    %1296 = vmatmul.f32.gmra.mxu0 %v1278
    %v1297 = vpop.f32.mrf.mxu0
    %v1298 = vadd.f32 0.0, %v1297
    %1299 = vdwg.mxu0
    %v1300 = vadd.f32 %v1277, %v1298
    %v1301 = vsub.f32 0.0, %v1300
    %v1302 = vmul.f32 %v1301, 1.442695
    %v1303 = vpow.pop %v1302
    %v1304 = vadd.f32 %v1303, 1.0
    %v1305 = vrcp.pop %v1304
    %v1306 = vmul.f32 %v1304, %v1305
    %v1307 = vsub.f32 1.0, %v1306
    %v1308 = vmul.f32 %v1305, %v1307
    %v1309 = vadd.f32 %v1305, %v1308
    %vm1310 = vweird.f32 %v1304
    %vm1311 = vweird.f32 %v1305
    %vm1312 = vmor %vm1310, %vm1311
    %v1313 = vsel %vm1312, %v1305, %v1309
    %v1314 = vand.u32 2147483647, %v1304
    %vm1315 = vcmp.eq.f32.partialorder %v1314, 8.507059e+37
    %v1316 = vand.u32 %v1304, 2147483648
    %v1317 = vor.u32 1.1754944e-38, %v1316
    %v1318 = vsel %vm1315, %v1317, %v1313
    %v1319 = vmul.f32 1.0, %v1318
    %v1320 = vtanh.pop %v1300
    %v1321 = vmul.f32 %v1319, %v1198
    %1323 = vrot.lane.b32.xlu0 %v1320, 64
    %v1324 = vpop.permute.xlu0 %1323
    %v1326 = vmul.f32 %v1319, %v1324
    %1328 = vrot.lane.b32.xlu0 %v1326, 32
    %v1329 = vpop.permute.xlu0 %1328
    %v1331 = vadd.f32 %v1321, %v1329
    %v1332 = vtanh.pop %v1331
    %1334 = vrot.lane.b32.xlu0 %v1332, 64
    %v1335 = vpop.permute.xlu0 %1334
    %v1337 = vmul.f32 %v1319, %v1335
    %1339 = vrot.lane.b32.xlu0 %v1337, 32
    %v1340 = vpop.permute.xlu0 %1339
    %1343 = vrot.lane.b32.xlu0 %v1273, 64
    %v1344 = vpop.permute.xlu0 %1343
    %v1346 = vsel %vm874, %v1340, %v1344
    %v1348 = vsel %vm155, %v1346, 0
    %1350 = vmatpush.msra.mxu0 0.0
    %1351 = vmatpush.msra.mxu0 0.0
    %1352 = vmatpush.msra.mxu0 0.0
    %1353 = vmatpush.msra.mxu0 0.0
    %1354 = vmatpush.msra.mxu0 0.0
    %1355 = vmatpush.msra.mxu0 0.0
    %1356 = vmatpush.msra.mxu0 0.0
    %1357 = vmatpush.msra.mxu0 0.0
    %1358 = vmatpush.msra.mxu0 %v856
    %1359 = vmatpush.msra.mxu0 %v855
    %1360 = vmatpush.msra.mxu0 %v854
    %1361 = vmatpush.msra.mxu0 %v853
    %1362 = vmatpush.msra.mxu0 %v852
    %1363 = vmatpush.msra.mxu0 %v851
    %1364 = vmatpush.msra.mxu0 %v850
    %1365 = vmatpush.msra.mxu0 %v849
    %1366 = vmatmul.f32.gmra.mxu0 %v1348
    %v1367 = vpop.f32.mrf.mxu0
    %v1368 = vadd.f32 %v945, %v1367
    %1369 = vdwg.mxu0
    %v1370 = vsub.f32 0.0, %v1368
    %v1371 = vmul.f32 %v1370, 1.442695
    %v1372 = vpow.pop %v1371
    %v1373 = vadd.f32 %v1372, 1.0
    %v1374 = vrcp.pop %v1373
    %v1375 = vmul.f32 %v1373, %v1374
    %v1376 = vsub.f32 1.0, %v1375
    %v1377 = vmul.f32 %v1374, %v1376
    %v1378 = vadd.f32 %v1374, %v1377
    %vm1379 = vweird.f32 %v1373
    %vm1380 = vweird.f32 %v1374
    %vm1381 = vmor %vm1379, %vm1380
    %v1382 = vsel %vm1381, %v1374, %v1378
    %v1383 = vand.u32 2147483647, %v1373
    %vm1384 = vcmp.eq.f32.partialorder %v1383, 8.507059e+37
    %v1385 = vand.u32 %v1373, 2147483648
    %v1386 = vor.u32 1.1754944e-38, %v1385
    %v1387 = vsel %vm1384, %v1386, %v1382
    %v1388 = vmul.f32 1.0, %v1387
    %v1389 = vtanh.pop %v1368
    %v1390 = vmul.f32 %v1388, %v1267
    %1392 = vrot.lane.b32.xlu0 %v1389, 64
    %v1393 = vpop.permute.xlu0 %1392
    %v1395 = vmul.f32 %v1388, %v1393
    %1397 = vrot.lane.b32.xlu0 %v1395, 32
    %v1398 = vpop.permute.xlu0 %1397
    %v1400 = vadd.f32 %v1390, %v1398
    %v1401 = vtanh.pop %v1400
    %1403 = vrot.lane.b32.xlu0 %v1401, 64
    %v1404 = vpop.permute.xlu0 %1403
    %v1406 = vmul.f32 %v1388, %v1404
    %s1407 = sadd.s32 %s1007, 4
    %s1408 = smul.u32 %s1407, 8
    %s1409 = scalar_lea.vmem [#allocation2], %s1408
    %v1410 = vld [vmem:[%s1409] sm:$0xff]
    %v1411 = vsel %vm874, %v1340, 0
    %1413 = vmatpush.msra.mxu0 0.0
    %1414 = vmatpush.msra.mxu0 0.0
    %1415 = vmatpush.msra.mxu0 0.0
    %1416 = vmatpush.msra.mxu0 0.0
    %1417 = vmatpush.msra.mxu0 0.0
    %1418 = vmatpush.msra.mxu0 0.0
    %1419 = vmatpush.msra.mxu0 0.0
    %1420 = vmatpush.msra.mxu0 0.0
    %1421 = vmatpush.msra.mxu0 0.0
    %1422 = vmatpush.msra.mxu0 0.0
    %1423 = vmatpush.msra.mxu0 0.0
    %1424 = vmatpush.msra.mxu0 0.0
    %1425 = vmatpush.msra.mxu0 %v848
    %1426 = vmatpush.msra.mxu0 %v847
    %1427 = vmatpush.msra.mxu0 %v846
    %1428 = vmatpush.msra.mxu0 %v845
    %1429 = vmatmul.f32.gmra.mxu0 %v1411
    %v1430 = vpop.f32.mrf.mxu0
    %v1431 = vadd.f32 0.0, %v1430
    %1432 = vdwg.mxu0
    %v1433 = vadd.f32 %v1410, %v1431
    %v1434 = vsub.f32 0.0, %v1433
    %v1435 = vmul.f32 %v1434, 1.442695
    %v1436 = vpow.pop %v1435
    %v1437 = vadd.f32 %v1436, 1.0
    %v1438 = vrcp.pop %v1437
    %v1439 = vmul.f32 %v1437, %v1438
    %v1440 = vsub.f32 1.0, %v1439
    %v1441 = vmul.f32 %v1438, %v1440
    %v1442 = vadd.f32 %v1438, %v1441
    %vm1443 = vweird.f32 %v1437
    %vm1444 = vweird.f32 %v1438
    %vm1445 = vmor %vm1443, %vm1444
    %v1446 = vsel %vm1445, %v1438, %v1442
    %v1447 = vand.u32 2147483647, %v1437
    %vm1448 = vcmp.eq.f32.partialorder %v1447, 8.507059e+37
    %v1449 = vand.u32 %v1437, 2147483648
    %v1450 = vor.u32 1.1754944e-38, %v1449
    %v1451 = vsel %vm1448, %v1450, %v1446
    %v1452 = vmul.f32 1.0, %v1451
    %v1453 = vtanh.pop %v1433
    %v1454 = vmul.f32 %v1452, %v1331
    %1456 = vrot.lane.b32.xlu0 %v1453, 64
    %v1457 = vpop.permute.xlu0 %1456
    %v1459 = vmul.f32 %v1452, %v1457
    %1461 = vrot.lane.b32.xlu0 %v1459, 32
    %v1462 = vpop.permute.xlu0 %1461
    %v1464 = vadd.f32 %v1454, %v1462
    %v1465 = vtanh.pop %v1464
    %1467 = vrot.lane.b32.xlu0 %v1465, 64
    %v1468 = vpop.permute.xlu0 %1467
    %v1470 = vmul.f32 %v1452, %v1468
    %1472 = vrot.lane.b32.xlu0 %v1470, 32
    %v1473 = vpop.permute.xlu0 %1472
    %1476 = vrot.lane.b32.xlu0 %v1406, 64
    %v1477 = vpop.permute.xlu0 %1476
    %v1479 = vsel %vm874, %v1473, %v1477
    %v1481 = vsel %vm155, %v1479, 0
    %1483 = vmatpush.msra.mxu0 0.0
    %1484 = vmatpush.msra.mxu0 0.0
    %1485 = vmatpush.msra.mxu0 0.0
    %1486 = vmatpush.msra.mxu0 0.0
    %1487 = vmatpush.msra.mxu0 0.0
    %1488 = vmatpush.msra.mxu0 0.0
    %1489 = vmatpush.msra.mxu0 0.0
    %1490 = vmatpush.msra.mxu0 0.0
    %1491 = vmatpush.msra.mxu0 %v856
    %1492 = vmatpush.msra.mxu0 %v855
    %1493 = vmatpush.msra.mxu0 %v854
    %1494 = vmatpush.msra.mxu0 %v853
    %1495 = vmatpush.msra.mxu0 %v852
    %1496 = vmatpush.msra.mxu0 %v851
    %1497 = vmatpush.msra.mxu0 %v850
    %1498 = vmatpush.msra.mxu0 %v849
    %1499 = vmatmul.f32.gmra.mxu0 %v1481
    %v1500 = vpop.f32.mrf.mxu0
    %v1501 = vadd.f32 %v945, %v1500
    %1502 = vdwg.mxu0
    %v1503 = vsub.f32 0.0, %v1501
    %v1504 = vmul.f32 %v1503, 1.442695
    %v1505 = vpow.pop %v1504
    %v1506 = vadd.f32 %v1505, 1.0
    %v1507 = vrcp.pop %v1506
    %v1508 = vmul.f32 %v1506, %v1507
    %v1509 = vsub.f32 1.0, %v1508
    %v1510 = vmul.f32 %v1507, %v1509
    %v1511 = vadd.f32 %v1507, %v1510
    %vm1512 = vweird.f32 %v1506
    %vm1513 = vweird.f32 %v1507
    %vm1514 = vmor %vm1512, %vm1513
    %v1515 = vsel %vm1514, %v1507, %v1511
    %v1516 = vand.u32 2147483647, %v1506
    %vm1517 = vcmp.eq.f32.partialorder %v1516, 8.507059e+37
    %v1518 = vand.u32 %v1506, 2147483648
    %v1519 = vor.u32 1.1754944e-38, %v1518
    %v1520 = vsel %vm1517, %v1519, %v1515
    %v1521 = vmul.f32 1.0, %v1520
    %v1522 = vtanh.pop %v1501
    %v1523 = vmul.f32 %v1521, %v1400
    %1525 = vrot.lane.b32.xlu0 %v1522, 64
    %v1526 = vpop.permute.xlu0 %1525
    %v1528 = vmul.f32 %v1521, %v1526
    %1530 = vrot.lane.b32.xlu0 %v1528, 32
    %v1531 = vpop.permute.xlu0 %1530
    %v1533 = vadd.f32 %v1523, %v1531
    %v1534 = vtanh.pop %v1533
    %1536 = vrot.lane.b32.xlu0 %v1534, 64
    %v1537 = vpop.permute.xlu0 %1536
    %v1539 = vmul.f32 %v1521, %v1537
    %s1540 = sadd.s32 %s1007, 5
    %s1541 = smul.u32 %s1540, 8
    %s1542 = scalar_lea.vmem [#allocation2], %s1541
    %v1543 = vld [vmem:[%s1542] sm:$0xff]
    %v1544 = vsel %vm874, %v1473, 0
    %1546 = vmatpush.msra.mxu0 0.0
    %1547 = vmatpush.msra.mxu0 0.0
    %1548 = vmatpush.msra.mxu0 0.0
    %1549 = vmatpush.msra.mxu0 0.0
    %1550 = vmatpush.msra.mxu0 0.0
    %1551 = vmatpush.msra.mxu0 0.0
    %1552 = vmatpush.msra.mxu0 0.0
    %1553 = vmatpush.msra.mxu0 0.0
    %1554 = vmatpush.msra.mxu0 0.0
    %1555 = vmatpush.msra.mxu0 0.0
    %1556 = vmatpush.msra.mxu0 0.0
    %1557 = vmatpush.msra.mxu0 0.0
    %1558 = vmatpush.msra.mxu0 %v848
    %1559 = vmatpush.msra.mxu0 %v847
    %1560 = vmatpush.msra.mxu0 %v846
    %1561 = vmatpush.msra.mxu0 %v845
    %1562 = vmatmul.f32.gmra.mxu0 %v1544
    %v1563 = vpop.f32.mrf.mxu0
    %v1564 = vadd.f32 0.0, %v1563
    %1565 = vdwg.mxu0
    %v1566 = vadd.f32 %v1543, %v1564
    %v1567 = vsub.f32 0.0, %v1566
    %v1568 = vmul.f32 %v1567, 1.442695
    %v1569 = vpow.pop %v1568
    %v1570 = vadd.f32 %v1569, 1.0
    %v1571 = vrcp.pop %v1570
    %v1572 = vmul.f32 %v1570, %v1571
    %v1573 = vsub.f32 1.0, %v1572
    %v1574 = vmul.f32 %v1571, %v1573
    %v1575 = vadd.f32 %v1571, %v1574
    %vm1576 = vweird.f32 %v1570
    %vm1577 = vweird.f32 %v1571
    %vm1578 = vmor %vm1576, %vm1577
    %v1579 = vsel %vm1578, %v1571, %v1575
    %v1580 = vand.u32 2147483647, %v1570
    %vm1581 = vcmp.eq.f32.partialorder %v1580, 8.507059e+37
    %v1582 = vand.u32 %v1570, 2147483648
    %v1583 = vor.u32 1.1754944e-38, %v1582
    %v1584 = vsel %vm1581, %v1583, %v1579
    %v1585 = vmul.f32 1.0, %v1584
    %v1586 = vtanh.pop %v1566
    %v1587 = vmul.f32 %v1585, %v1464
    %1589 = vrot.lane.b32.xlu0 %v1586, 64
    %v1590 = vpop.permute.xlu0 %1589
    %v1592 = vmul.f32 %v1585, %v1590
    %1594 = vrot.lane.b32.xlu0 %v1592, 32
    %v1595 = vpop.permute.xlu0 %1594
    %v1597 = vadd.f32 %v1587, %v1595
    %v1598 = vtanh.pop %v1597
    %1600 = vrot.lane.b32.xlu0 %v1598, 64
    %v1601 = vpop.permute.xlu0 %1600
    %v1603 = vmul.f32 %v1585, %v1601
    %1605 = vrot.lane.b32.xlu0 %v1603, 32
    %v1606 = vpop.permute.xlu0 %1605
    %1609 = vrot.lane.b32.xlu0 %v1539, 64
    %v1610 = vpop.permute.xlu0 %1609
    %v1612 = vsel %vm874, %v1606, %v1610
    %v1614 = vsel %vm155, %v1612, 0
    %1616 = vmatpush.msra.mxu0 0.0
    %1617 = vmatpush.msra.mxu0 0.0
    %1618 = vmatpush.msra.mxu0 0.0
    %1619 = vmatpush.msra.mxu0 0.0
    %1620 = vmatpush.msra.mxu0 0.0
    %1621 = vmatpush.msra.mxu0 0.0
    %1622 = vmatpush.msra.mxu0 0.0
    %1623 = vmatpush.msra.mxu0 0.0
    %1624 = vmatpush.msra.mxu0 %v856
    %1625 = vmatpush.msra.mxu0 %v855
    %1626 = vmatpush.msra.mxu0 %v854
    %1627 = vmatpush.msra.mxu0 %v853
    %1628 = vmatpush.msra.mxu0 %v852
    %1629 = vmatpush.msra.mxu0 %v851
    %1630 = vmatpush.msra.mxu0 %v850
    %1631 = vmatpush.msra.mxu0 %v849
    %1632 = vmatmul.f32.gmra.mxu0 %v1614
    %v1633 = vpop.f32.mrf.mxu0
    %v1634 = vadd.f32 %v945, %v1633
    %1635 = vdwg.mxu0
    %v1636 = vsub.f32 0.0, %v1634
    %v1637 = vmul.f32 %v1636, 1.442695
    %v1638 = vpow.pop %v1637
    %v1639 = vadd.f32 %v1638, 1.0
    %v1640 = vrcp.pop %v1639
    %v1641 = vmul.f32 %v1639, %v1640
    %v1642 = vsub.f32 1.0, %v1641
    %v1643 = vmul.f32 %v1640, %v1642
    %v1644 = vadd.f32 %v1640, %v1643
    %vm1645 = vweird.f32 %v1639
    %vm1646 = vweird.f32 %v1640
    %vm1647 = vmor %vm1645, %vm1646
    %v1648 = vsel %vm1647, %v1640, %v1644
    %v1649 = vand.u32 2147483647, %v1639
    %vm1650 = vcmp.eq.f32.partialorder %v1649, 8.507059e+37
    %v1651 = vand.u32 %v1639, 2147483648
    %v1652 = vor.u32 1.1754944e-38, %v1651
    %v1653 = vsel %vm1650, %v1652, %v1648
    %v1654 = vmul.f32 1.0, %v1653
    %v1655 = vtanh.pop %v1634
    %v1656 = vmul.f32 %v1654, %v1533
    %1658 = vrot.lane.b32.xlu0 %v1655, 64
    %v1659 = vpop.permute.xlu0 %1658
    %v1661 = vmul.f32 %v1654, %v1659
    %1663 = vrot.lane.b32.xlu0 %v1661, 32
    %v1664 = vpop.permute.xlu0 %1663
    %v1666 = vadd.f32 %v1656, %v1664
    %v1667 = vtanh.pop %v1666
    %1669 = vrot.lane.b32.xlu0 %v1667, 64
    %v1670 = vpop.permute.xlu0 %1669
    %v1672 = vmul.f32 %v1654, %v1670
    %s1673 = sadd.s32 %s1007, 6
    %s1674 = smul.u32 %s1673, 8
    %s1675 = scalar_lea.vmem [#allocation2], %s1674
    %v1676 = vld [vmem:[%s1675] sm:$0xff]
    %v1677 = vsel %vm874, %v1606, 0
    %1679 = vmatpush.msra.mxu0 0.0
    %1680 = vmatpush.msra.mxu0 0.0
    %1681 = vmatpush.msra.mxu0 0.0
    %1682 = vmatpush.msra.mxu0 0.0
    %1683 = vmatpush.msra.mxu0 0.0
    %1684 = vmatpush.msra.mxu0 0.0
    %1685 = vmatpush.msra.mxu0 0.0
    %1686 = vmatpush.msra.mxu0 0.0
    %1687 = vmatpush.msra.mxu0 0.0
    %1688 = vmatpush.msra.mxu0 0.0
    %1689 = vmatpush.msra.mxu0 0.0
    %1690 = vmatpush.msra.mxu0 0.0
    %1691 = vmatpush.msra.mxu0 %v848
    %1692 = vmatpush.msra.mxu0 %v847
    %1693 = vmatpush.msra.mxu0 %v846
    %1694 = vmatpush.msra.mxu0 %v845
    %1695 = vmatmul.f32.gmra.mxu0 %v1677
    %v1696 = vpop.f32.mrf.mxu0
    %v1697 = vadd.f32 0.0, %v1696
    %1698 = vdwg.mxu0
    %v1699 = vadd.f32 %v1676, %v1697
    %v1700 = vsub.f32 0.0, %v1699
    %v1701 = vmul.f32 %v1700, 1.442695
    %v1702 = vpow.pop %v1701
    %v1703 = vadd.f32 %v1702, 1.0
    %v1704 = vrcp.pop %v1703
    %v1705 = vmul.f32 %v1703, %v1704
    %v1706 = vsub.f32 1.0, %v1705
    %v1707 = vmul.f32 %v1704, %v1706
    %v1708 = vadd.f32 %v1704, %v1707
    %vm1709 = vweird.f32 %v1703
    %vm1710 = vweird.f32 %v1704
    %vm1711 = vmor %vm1709, %vm1710
    %v1712 = vsel %vm1711, %v1704, %v1708
    %v1713 = vand.u32 2147483647, %v1703
    %vm1714 = vcmp.eq.f32.partialorder %v1713, 8.507059e+37
    %v1715 = vand.u32 %v1703, 2147483648
    %v1716 = vor.u32 1.1754944e-38, %v1715
    %v1717 = vsel %vm1714, %v1716, %v1712
    %v1718 = vmul.f32 1.0, %v1717
    %v1719 = vtanh.pop %v1699
    %v1720 = vmul.f32 %v1718, %v1597
    %1722 = vrot.lane.b32.xlu0 %v1719, 64
    %v1723 = vpop.permute.xlu0 %1722
    %v1725 = vmul.f32 %v1718, %v1723
    %1727 = vrot.lane.b32.xlu0 %v1725, 32
    %v1728 = vpop.permute.xlu0 %1727
    %v1730 = vadd.f32 %v1720, %v1728
    %v1731 = vtanh.pop %v1730
    %1733 = vrot.lane.b32.xlu0 %v1731, 64
    %v1734 = vpop.permute.xlu0 %1733
    %v1736 = vmul.f32 %v1718, %v1734
    %1738 = vrot.lane.b32.xlu0 %v1736, 32
    %v1739 = vpop.permute.xlu0 %1738
    %1742 = vrot.lane.b32.xlu0 %v1672, 64
    %v1743 = vpop.permute.xlu0 %1742
    %v1745 = vsel %vm874, %v1739, %v1743
    %v1747 = vsel %vm155, %v1745, 0
    %1749 = vmatpush.msra.mxu0 0.0
    %1750 = vmatpush.msra.mxu0 0.0
    %1751 = vmatpush.msra.mxu0 0.0
    %1752 = vmatpush.msra.mxu0 0.0
    %1753 = vmatpush.msra.mxu0 0.0
    %1754 = vmatpush.msra.mxu0 0.0
    %1755 = vmatpush.msra.mxu0 0.0
    %1756 = vmatpush.msra.mxu0 0.0
    %1757 = vmatpush.msra.mxu0 %v856
    %1758 = vmatpush.msra.mxu0 %v855
    %1759 = vmatpush.msra.mxu0 %v854
    %1760 = vmatpush.msra.mxu0 %v853
    %1761 = vmatpush.msra.mxu0 %v852
    %1762 = vmatpush.msra.mxu0 %v851
    %1763 = vmatpush.msra.mxu0 %v850
    %1764 = vmatpush.msra.mxu0 %v849
    %1765 = vmatmul.f32.gmra.mxu0 %v1747
    %v1766 = vpop.f32.mrf.mxu0
    %v1767 = vadd.f32 %v945, %v1766
    %1768 = vdwg.mxu0
    %v1769 = vsub.f32 0.0, %v1767
    %v1770 = vmul.f32 %v1769, 1.442695
    %v1771 = vpow.pop %v1770
    %v1772 = vadd.f32 %v1771, 1.0
    %v1773 = vrcp.pop %v1772
    %v1774 = vmul.f32 %v1772, %v1773
    %v1775 = vsub.f32 1.0, %v1774
    %v1776 = vmul.f32 %v1773, %v1775
    %v1777 = vadd.f32 %v1773, %v1776
    %vm1778 = vweird.f32 %v1772
    %vm1779 = vweird.f32 %v1773
    %vm1780 = vmor %vm1778, %vm1779
    %v1781 = vsel %vm1780, %v1773, %v1777
    %v1782 = vand.u32 2147483647, %v1772
    %vm1783 = vcmp.eq.f32.partialorder %v1782, 8.507059e+37
    %v1784 = vand.u32 %v1772, 2147483648
    %v1785 = vor.u32 1.1754944e-38, %v1784
    %v1786 = vsel %vm1783, %v1785, %v1781
    %v1787 = vmul.f32 1.0, %v1786
    %v1788 = vtanh.pop %v1767
    %v1789 = vmul.f32 %v1787, %v1666
    %1791 = vrot.lane.b32.xlu0 %v1788, 64
    %v1792 = vpop.permute.xlu0 %1791
    %v1794 = vmul.f32 %v1787, %v1792
    %1796 = vrot.lane.b32.xlu0 %v1794, 32
    %v1797 = vpop.permute.xlu0 %1796
    %v1799 = vadd.f32 %v1789, %v1797
    %v1800 = vtanh.pop %v1799
    %1802 = vrot.lane.b32.xlu0 %v1800, 64
    %v1803 = vpop.permute.xlu0 %1802
    %v1805 = vmul.f32 %v1787, %v1803
    %s1806 = sadd.s32 %s1007, 7
    %s1807 = smul.u32 %s1806, 8
    %s1808 = scalar_lea.vmem [#allocation2], %s1807
    %v1809 = vld [vmem:[%s1808] sm:$0xff]
    %v1810 = vsel %vm874, %v1739, 0
    %1812 = vmatpush.msra.mxu0 0.0
    %1813 = vmatpush.msra.mxu0 0.0
    %1814 = vmatpush.msra.mxu0 0.0
    %1815 = vmatpush.msra.mxu0 0.0
    %1816 = vmatpush.msra.mxu0 0.0
    %1817 = vmatpush.msra.mxu0 0.0
    %1818 = vmatpush.msra.mxu0 0.0
    %1819 = vmatpush.msra.mxu0 0.0
    %1820 = vmatpush.msra.mxu0 0.0
    %1821 = vmatpush.msra.mxu0 0.0
    %1822 = vmatpush.msra.mxu0 0.0
    %1823 = vmatpush.msra.mxu0 0.0
    %1824 = vmatpush.msra.mxu0 %v848
    %1825 = vmatpush.msra.mxu0 %v847
    %1826 = vmatpush.msra.mxu0 %v846
    %1827 = vmatpush.msra.mxu0 %v845
    %1828 = vmatmul.f32.gmra.mxu0 %v1810
    %v1829 = vpop.f32.mrf.mxu0
    %v1830 = vadd.f32 0.0, %v1829
    %1831 = vdwg.mxu0
    %v1832 = vadd.f32 %v1809, %v1830
    %v1833 = vsub.f32 0.0, %v1832
    %v1834 = vmul.f32 %v1833, 1.442695
    %v1835 = vpow.pop %v1834
    %v1836 = vadd.f32 %v1835, 1.0
    %v1837 = vrcp.pop %v1836
    %v1838 = vmul.f32 %v1836, %v1837
    %v1839 = vsub.f32 1.0, %v1838
    %v1840 = vmul.f32 %v1837, %v1839
    %v1841 = vadd.f32 %v1837, %v1840
    %vm1842 = vweird.f32 %v1836
    %vm1843 = vweird.f32 %v1837
    %vm1844 = vmor %vm1842, %vm1843
    %v1845 = vsel %vm1844, %v1837, %v1841
    %v1846 = vand.u32 2147483647, %v1836
    %vm1847 = vcmp.eq.f32.partialorder %v1846, 8.507059e+37
    %v1848 = vand.u32 %v1836, 2147483648
    %v1849 = vor.u32 1.1754944e-38, %v1848
    %v1850 = vsel %vm1847, %v1849, %v1845
    %v1851 = vmul.f32 1.0, %v1850
    %v1852 = vtanh.pop %v1832
    %v1853 = vmul.f32 %v1851, %v1730
    %1855 = vrot.lane.b32.xlu0 %v1852, 64
    %v1856 = vpop.permute.xlu0 %1855
    %v1858 = vmul.f32 %v1851, %v1856
    %1860 = vrot.lane.b32.xlu0 %v1858, 32
    %v1861 = vpop.permute.xlu0 %1860
    %v1863 = vadd.f32 %v1853, %v1861
    %v1864 = vtanh.pop %v1863
    %1866 = vrot.lane.b32.xlu0 %v1864, 64
    %v1867 = vpop.permute.xlu0 %1866
    %v1869 = vmul.f32 %v1851, %v1867
    %1871 = vrot.lane.b32.xlu0 %v1869, 32
    %v1872 = vpop.permute.xlu0 %1871
    %1875 = vrot.lane.b32.xlu0 %v1805, 64
    %v1876 = vpop.permute.xlu0 %1875
    %v1878 = vsel %vm874, %v1872, %v1876
    %v1880 = vsel %vm155, %v1878, 0
    %1882 = vmatpush.msra.mxu0 0.0
    %1883 = vmatpush.msra.mxu0 0.0
    %1884 = vmatpush.msra.mxu0 0.0
    %1885 = vmatpush.msra.mxu0 0.0
    %1886 = vmatpush.msra.mxu0 0.0
    %1887 = vmatpush.msra.mxu0 0.0
    %1888 = vmatpush.msra.mxu0 0.0
    %1889 = vmatpush.msra.mxu0 0.0
    %1890 = vmatpush.msra.mxu0 %v856
    %1891 = vmatpush.msra.mxu0 %v855
    %1892 = vmatpush.msra.mxu0 %v854
    %1893 = vmatpush.msra.mxu0 %v853
    %1894 = vmatpush.msra.mxu0 %v852
    %1895 = vmatpush.msra.mxu0 %v851
    %1896 = vmatpush.msra.mxu0 %v850
    %1897 = vmatpush.msra.mxu0 %v849
    %1898 = vmatmul.f32.gmra.mxu0 %v1880
    %v1899 = vpop.f32.mrf.mxu0
    %v1900 = vadd.f32 %v945, %v1899
    %1901 = vdwg.mxu0
    %v1902 = vsub.f32 0.0, %v1900
    %v1903 = vmul.f32 %v1902, 1.442695
    %v1904 = vpow.pop %v1903
    %v1905 = vadd.f32 %v1904, 1.0
    %v1906 = vrcp.pop %v1905
    %v1907 = vmul.f32 %v1905, %v1906
    %v1908 = vsub.f32 1.0, %v1907
    %v1909 = vmul.f32 %v1906, %v1908
    %v1910 = vadd.f32 %v1906, %v1909
    %vm1911 = vweird.f32 %v1905
    %vm1912 = vweird.f32 %v1906
    %vm1913 = vmor %vm1911, %vm1912
    %v1914 = vsel %vm1913, %v1906, %v1910
    %v1915 = vand.u32 2147483647, %v1905
    %vm1916 = vcmp.eq.f32.partialorder %v1915, 8.507059e+37
    %v1917 = vand.u32 %v1905, 2147483648
    %v1918 = vor.u32 1.1754944e-38, %v1917
    %v1919 = vsel %vm1916, %v1918, %v1914
    %v1920 = vmul.f32 1.0, %v1919
    %v1921 = vtanh.pop %v1900
    %v1922 = vmul.f32 %v1920, %v1799
    %1924 = vrot.lane.b32.xlu0 %v1921, 64
    %v1925 = vpop.permute.xlu0 %1924
    %v1927 = vmul.f32 %v1920, %v1925
    %1929 = vrot.lane.b32.xlu0 %v1927, 32
    %v1930 = vpop.permute.xlu0 %1929
    %v1932 = vadd.f32 %v1922, %v1930
    %v1933 = vtanh.pop %v1932
    %1935 = vrot.lane.b32.xlu0 %v1933, 64
    %v1936 = vpop.permute.xlu0 %1935
    %v1938 = vmul.f32 %v1920, %v1936
    %s1939 = sadd.s32 %s1007, 8
    %s1940 = smul.u32 %s1939, 8
    %s1941 = scalar_lea.vmem [#allocation2], %s1940
    %v1942 = vld [vmem:[%s1941] sm:$0xff]
    %v1943 = vsel %vm874, %v1872, 0
    %1945 = vmatpush.msra.mxu0 0.0
    %1946 = vmatpush.msra.mxu0 0.0
    %1947 = vmatpush.msra.mxu0 0.0
    %1948 = vmatpush.msra.mxu0 0.0
    %1949 = vmatpush.msra.mxu0 0.0
    %1950 = vmatpush.msra.mxu0 0.0
    %1951 = vmatpush.msra.mxu0 0.0
    %1952 = vmatpush.msra.mxu0 0.0
    %1953 = vmatpush.msra.mxu0 0.0
    %1954 = vmatpush.msra.mxu0 0.0
    %1955 = vmatpush.msra.mxu0 0.0
    %1956 = vmatpush.msra.mxu0 0.0
    %1957 = vmatpush.msra.mxu0 %v848
    %1958 = vmatpush.msra.mxu0 %v847
    %1959 = vmatpush.msra.mxu0 %v846
    %1960 = vmatpush.msra.mxu0 %v845
    %1961 = vmatmul.f32.gmra.mxu0 %v1943
    %v1962 = vpop.f32.mrf.mxu0
    %v1963 = vadd.f32 0.0, %v1962
    %1964 = vdwg.mxu0
    %v1965 = vadd.f32 %v1942, %v1963
    %v1966 = vsub.f32 0.0, %v1965
    %v1967 = vmul.f32 %v1966, 1.442695
    %v1968 = vpow.pop %v1967
    %v1969 = vadd.f32 %v1968, 1.0
    %v1970 = vrcp.pop %v1969
    %v1971 = vmul.f32 %v1969, %v1970
    %v1972 = vsub.f32 1.0, %v1971
    %v1973 = vmul.f32 %v1970, %v1972
    %v1974 = vadd.f32 %v1970, %v1973
    %vm1975 = vweird.f32 %v1969
    %vm1976 = vweird.f32 %v1970
    %vm1977 = vmor %vm1975, %vm1976
    %v1978 = vsel %vm1977, %v1970, %v1974
    %v1979 = vand.u32 2147483647, %v1969
    %vm1980 = vcmp.eq.f32.partialorder %v1979, 8.507059e+37
    %v1981 = vand.u32 %v1969, 2147483648
    %v1982 = vor.u32 1.1754944e-38, %v1981
    %v1983 = vsel %vm1980, %v1982, %v1978
    %v1984 = vmul.f32 1.0, %v1983
    %v1985 = vtanh.pop %v1965
    %v1986 = vmul.f32 %v1984, %v1863
    %1988 = vrot.lane.b32.xlu0 %v1985, 64
    %v1989 = vpop.permute.xlu0 %1988
    %v1991 = vmul.f32 %v1984, %v1989
    %1993 = vrot.lane.b32.xlu0 %v1991, 32
    %v1994 = vpop.permute.xlu0 %1993
    %v1996 = vadd.f32 %v1986, %v1994
    %v1997 = vtanh.pop %v1996
    %1999 = vrot.lane.b32.xlu0 %v1997, 64
    %v2000 = vpop.permute.xlu0 %1999
    %v2002 = vmul.f32 %v1984, %v2000
    %2004 = vrot.lane.b32.xlu0 %v2002, 32
    %v2005 = vpop.permute.xlu0 %2004
    %2008 = vrot.lane.b32.xlu0 %v1938, 64
    %v2009 = vpop.permute.xlu0 %2008
    %v2011 = vsel %vm874, %v2005, %v2009
    %v2013 = vsel %vm155, %v2011, 0
    %2015 = vmatpush.msra.mxu0 0.0
    %2016 = vmatpush.msra.mxu0 0.0
    %2017 = vmatpush.msra.mxu0 0.0
    %2018 = vmatpush.msra.mxu0 0.0
    %2019 = vmatpush.msra.mxu0 0.0
    %2020 = vmatpush.msra.mxu0 0.0
    %2021 = vmatpush.msra.mxu0 0.0
    %2022 = vmatpush.msra.mxu0 0.0
    %2023 = vmatpush.msra.mxu0 %v856
    %2024 = vmatpush.msra.mxu0 %v855
    %2025 = vmatpush.msra.mxu0 %v854
    %2026 = vmatpush.msra.mxu0 %v853
    %2027 = vmatpush.msra.mxu0 %v852
    %2028 = vmatpush.msra.mxu0 %v851
    %2029 = vmatpush.msra.mxu0 %v850
    %2030 = vmatpush.msra.mxu0 %v849
    %2031 = vmatmul.f32.gmra.mxu0 %v2013
    %v2032 = vpop.f32.mrf.mxu0
    %v2033 = vadd.f32 %v945, %v2032
    %2034 = vdwg.mxu0
    %v2035 = vsub.f32 0.0, %v2033
    %v2036 = vmul.f32 %v2035, 1.442695
    %v2037 = vpow.pop %v2036
    %v2038 = vadd.f32 %v2037, 1.0
    %v2039 = vrcp.pop %v2038
    %v2040 = vmul.f32 %v2038, %v2039
    %v2041 = vsub.f32 1.0, %v2040
    %v2042 = vmul.f32 %v2039, %v2041
    %v2043 = vadd.f32 %v2039, %v2042
    %vm2044 = vweird.f32 %v2038
    %vm2045 = vweird.f32 %v2039
    %vm2046 = vmor %vm2044, %vm2045
    %v2047 = vsel %vm2046, %v2039, %v2043
    %v2048 = vand.u32 2147483647, %v2038
    %vm2049 = vcmp.eq.f32.partialorder %v2048, 8.507059e+37
    %v2050 = vand.u32 %v2038, 2147483648
    %v2051 = vor.u32 1.1754944e-38, %v2050
    %v2052 = vsel %vm2049, %v2051, %v2047
    %v2053 = vmul.f32 1.0, %v2052
    %v2054 = vtanh.pop %v2033
    %v2055 = vmul.f32 %v2053, %v1932
    %2057 = vrot.lane.b32.xlu0 %v2054, 64
    %v2058 = vpop.permute.xlu0 %2057
    %v2060 = vmul.f32 %v2053, %v2058
    %2062 = vrot.lane.b32.xlu0 %v2060, 32
    %v2063 = vpop.permute.xlu0 %2062
    %v2065 = vadd.f32 %v2055, %v2063
    %v2066 = vtanh.pop %v2065
    %2068 = vrot.lane.b32.xlu0 %v2066, 64
    %v2069 = vpop.permute.xlu0 %2068
    %v2071 = vmul.f32 %v2053, %v2069
    %s2072 = sadd.s32 %s1007, 9
    %s2073 = smul.u32 %s2072, 8
    %s2074 = scalar_lea.vmem [#allocation2], %s2073
    %v2075 = vld [vmem:[%s2074] sm:$0xff]
    %v2076 = vsel %vm874, %v2005, 0
    %2078 = vmatpush.msra.mxu0 0.0
    %2079 = vmatpush.msra.mxu0 0.0
    %2080 = vmatpush.msra.mxu0 0.0
    %2081 = vmatpush.msra.mxu0 0.0
    %2082 = vmatpush.msra.mxu0 0.0
    %2083 = vmatpush.msra.mxu0 0.0
    %2084 = vmatpush.msra.mxu0 0.0
    %2085 = vmatpush.msra.mxu0 0.0
    %2086 = vmatpush.msra.mxu0 0.0
    %2087 = vmatpush.msra.mxu0 0.0
    %2088 = vmatpush.msra.mxu0 0.0
    %2089 = vmatpush.msra.mxu0 0.0
    %2090 = vmatpush.msra.mxu0 %v848
    %2091 = vmatpush.msra.mxu0 %v847
    %2092 = vmatpush.msra.mxu0 %v846
    %2093 = vmatpush.msra.mxu0 %v845
    %2094 = vmatmul.f32.gmra.mxu0 %v2076
    %v2095 = vpop.f32.mrf.mxu0
    %v2096 = vadd.f32 0.0, %v2095
    %2097 = vdwg.mxu0
    %v2098 = vadd.f32 %v2075, %v2096
    %v2099 = vsub.f32 0.0, %v2098
    %v2100 = vmul.f32 %v2099, 1.442695
    %v2101 = vpow.pop %v2100
    %v2102 = vadd.f32 %v2101, 1.0
    %v2103 = vrcp.pop %v2102
    %v2104 = vmul.f32 %v2102, %v2103
    %v2105 = vsub.f32 1.0, %v2104
    %v2106 = vmul.f32 %v2103, %v2105
    %v2107 = vadd.f32 %v2103, %v2106
    %vm2108 = vweird.f32 %v2102
    %vm2109 = vweird.f32 %v2103
    %vm2110 = vmor %vm2108, %vm2109
    %v2111 = vsel %vm2110, %v2103, %v2107
    %v2112 = vand.u32 2147483647, %v2102
    %vm2113 = vcmp.eq.f32.partialorder %v2112, 8.507059e+37
    %v2114 = vand.u32 %v2102, 2147483648
    %v2115 = vor.u32 1.1754944e-38, %v2114
    %v2116 = vsel %vm2113, %v2115, %v2111
    %v2117 = vmul.f32 1.0, %v2116
    %v2118 = vtanh.pop %v2098
    %v2119 = vmul.f32 %v2117, %v1996
    %2121 = vrot.lane.b32.xlu0 %v2118, 64
    %v2122 = vpop.permute.xlu0 %2121
    %v2124 = vmul.f32 %v2117, %v2122
    %2126 = vrot.lane.b32.xlu0 %v2124, 32
    %v2127 = vpop.permute.xlu0 %2126
    %v2129 = vadd.f32 %v2119, %v2127
    %v2130 = vtanh.pop %v2129
    %2132 = vrot.lane.b32.xlu0 %v2130, 64
    %v2133 = vpop.permute.xlu0 %2132
    %v2135 = vmul.f32 %v2117, %v2133
    %2137 = vrot.lane.b32.xlu0 %v2135, 32
    %v2138 = vpop.permute.xlu0 %2137
    %2141 = vrot.lane.b32.xlu0 %v2071, 64
    %v2142 = vpop.permute.xlu0 %2141
    %v2144 = vsel %vm874, %v2138, %v2142
    %v2146 = vsel %vm155, %v2144, 0
    %2148 = vmatpush.msra.mxu0 0.0
    %2149 = vmatpush.msra.mxu0 0.0
    %2150 = vmatpush.msra.mxu0 0.0
    %2151 = vmatpush.msra.mxu0 0.0
    %2152 = vmatpush.msra.mxu0 0.0
    %2153 = vmatpush.msra.mxu0 0.0
    %2154 = vmatpush.msra.mxu0 0.0
    %2155 = vmatpush.msra.mxu0 0.0
    %2156 = vmatpush.msra.mxu0 %v856
    %2157 = vmatpush.msra.mxu0 %v855
    %2158 = vmatpush.msra.mxu0 %v854
    %2159 = vmatpush.msra.mxu0 %v853
    %2160 = vmatpush.msra.mxu0 %v852
    %2161 = vmatpush.msra.mxu0 %v851
    %2162 = vmatpush.msra.mxu0 %v850
    %2163 = vmatpush.msra.mxu0 %v849
    %2164 = vmatmul.f32.gmra.mxu0 %v2146
    %v2165 = vpop.f32.mrf.mxu0
    %v2166 = vadd.f32 %v945, %v2165
    %2167 = vdwg.mxu0
    %v2168 = vsub.f32 0.0, %v2166
    %v2169 = vmul.f32 %v2168, 1.442695
    %v2170 = vpow.pop %v2169
    %v2171 = vadd.f32 %v2170, 1.0
    %v2172 = vrcp.pop %v2171
    %v2173 = vmul.f32 %v2171, %v2172
    %v2174 = vsub.f32 1.0, %v2173
    %v2175 = vmul.f32 %v2172, %v2174
    %v2176 = vadd.f32 %v2172, %v2175
    %vm2177 = vweird.f32 %v2171
    %vm2178 = vweird.f32 %v2172
    %vm2179 = vmor %vm2177, %vm2178
    %v2180 = vsel %vm2179, %v2172, %v2176
    %v2181 = vand.u32 2147483647, %v2171
    %vm2182 = vcmp.eq.f32.partialorder %v2181, 8.507059e+37
    %v2183 = vand.u32 %v2171, 2147483648
    %v2184 = vor.u32 1.1754944e-38, %v2183
    %v2185 = vsel %vm2182, %v2184, %v2180
    %v2186 = vmul.f32 1.0, %v2185
    %v2187 = vtanh.pop %v2166
    %v2188 = vmul.f32 %v2186, %v2065
    %2190 = vrot.lane.b32.xlu0 %v2187, 64
    %v2191 = vpop.permute.xlu0 %2190
    %v2193 = vmul.f32 %v2186, %v2191
    %2195 = vrot.lane.b32.xlu0 %v2193, 32
    %v2196 = vpop.permute.xlu0 %2195
    %v2198 = vadd.f32 %v2188, %v2196
    %v2199 = vtanh.pop %v2198
    %2201 = vrot.lane.b32.xlu0 %v2199, 64
    %v2202 = vpop.permute.xlu0 %2201
    %v2204 = vmul.f32 %v2186, %v2202
    %s2205 = sadd.s32 %s1007, 10
    %s2206 = smul.u32 %s2205, 8
    %s2207 = scalar_lea.vmem [#allocation2], %s2206
    %v2208 = vld [vmem:[%s2207] sm:$0xff]
    %v2209 = vsel %vm874, %v2138, 0
    %2211 = vmatpush.msra.mxu0 0.0
    %2212 = vmatpush.msra.mxu0 0.0
    %2213 = vmatpush.msra.mxu0 0.0
    %2214 = vmatpush.msra.mxu0 0.0
    %2215 = vmatpush.msra.mxu0 0.0
    %2216 = vmatpush.msra.mxu0 0.0
    %2217 = vmatpush.msra.mxu0 0.0
    %2218 = vmatpush.msra.mxu0 0.0
    %2219 = vmatpush.msra.mxu0 0.0
    %2220 = vmatpush.msra.mxu0 0.0
    %2221 = vmatpush.msra.mxu0 0.0
    %2222 = vmatpush.msra.mxu0 0.0
    %2223 = vmatpush.msra.mxu0 %v848
    %2224 = vmatpush.msra.mxu0 %v847
    %2225 = vmatpush.msra.mxu0 %v846
    %2226 = vmatpush.msra.mxu0 %v845
    %2227 = vmatmul.f32.gmra.mxu0 %v2209
    %v2228 = vpop.f32.mrf.mxu0
    %v2229 = vadd.f32 0.0, %v2228
    %2230 = vdwg.mxu0
    %v2231 = vadd.f32 %v2208, %v2229
    %v2232 = vsub.f32 0.0, %v2231
    %v2233 = vmul.f32 %v2232, 1.442695
    %v2234 = vpow.pop %v2233
    %v2235 = vadd.f32 %v2234, 1.0
    %v2236 = vrcp.pop %v2235
    %v2237 = vmul.f32 %v2235, %v2236
    %v2238 = vsub.f32 1.0, %v2237
    %v2239 = vmul.f32 %v2236, %v2238
    %v2240 = vadd.f32 %v2236, %v2239
    %vm2241 = vweird.f32 %v2235
    %vm2242 = vweird.f32 %v2236
    %vm2243 = vmor %vm2241, %vm2242
    %v2244 = vsel %vm2243, %v2236, %v2240
    %v2245 = vand.u32 2147483647, %v2235
    %vm2246 = vcmp.eq.f32.partialorder %v2245, 8.507059e+37
    %v2247 = vand.u32 %v2235, 2147483648
    %v2248 = vor.u32 1.1754944e-38, %v2247
    %v2249 = vsel %vm2246, %v2248, %v2244
    %v2250 = vmul.f32 1.0, %v2249
    %v2251 = vtanh.pop %v2231
    %v2252 = vmul.f32 %v2250, %v2129
    %2254 = vrot.lane.b32.xlu0 %v2251, 64
    %v2255 = vpop.permute.xlu0 %2254
    %v2257 = vmul.f32 %v2250, %v2255
    %2259 = vrot.lane.b32.xlu0 %v2257, 32
    %v2260 = vpop.permute.xlu0 %2259
    %v2262 = vadd.f32 %v2252, %v2260
    %v2263 = vtanh.pop %v2262
    %2265 = vrot.lane.b32.xlu0 %v2263, 64
    %v2266 = vpop.permute.xlu0 %2265
    %v2268 = vmul.f32 %v2250, %v2266
    %2270 = vrot.lane.b32.xlu0 %v2268, 32
    %v2271 = vpop.permute.xlu0 %2270
    %2274 = vrot.lane.b32.xlu0 %v2204, 64
    %v2275 = vpop.permute.xlu0 %2274
    %v2277 = vsel %vm874, %v2271, %v2275
    %v2279 = vsel %vm155, %v2277, 0
    %2281 = vmatpush.msra.mxu0 0.0
    %2282 = vmatpush.msra.mxu0 0.0
    %2283 = vmatpush.msra.mxu0 0.0
    %2284 = vmatpush.msra.mxu0 0.0
    %2285 = vmatpush.msra.mxu0 0.0
    %2286 = vmatpush.msra.mxu0 0.0
    %2287 = vmatpush.msra.mxu0 0.0
    %2288 = vmatpush.msra.mxu0 0.0
    %2289 = vmatpush.msra.mxu0 %v856
    %2290 = vmatpush.msra.mxu0 %v855
    %2291 = vmatpush.msra.mxu0 %v854
    %2292 = vmatpush.msra.mxu0 %v853
    %2293 = vmatpush.msra.mxu0 %v852
    %2294 = vmatpush.msra.mxu0 %v851
    %2295 = vmatpush.msra.mxu0 %v850
    %2296 = vmatpush.msra.mxu0 %v849
    %2297 = vmatmul.f32.gmra.mxu0 %v2279
    %v2298 = vpop.f32.mrf.mxu0
    %v2299 = vadd.f32 %v945, %v2298
    %2300 = vdwg.mxu0
    %v2301 = vsub.f32 0.0, %v2299
    %v2302 = vmul.f32 %v2301, 1.442695
    %v2303 = vpow.pop %v2302
    %v2304 = vadd.f32 %v2303, 1.0
    %v2305 = vrcp.pop %v2304
    %v2306 = vmul.f32 %v2304, %v2305
    %v2307 = vsub.f32 1.0, %v2306
    %v2308 = vmul.f32 %v2305, %v2307
    %v2309 = vadd.f32 %v2305, %v2308
    %vm2310 = vweird.f32 %v2304
    %vm2311 = vweird.f32 %v2305
    %vm2312 = vmor %vm2310, %vm2311
    %v2313 = vsel %vm2312, %v2305, %v2309
    %v2314 = vand.u32 2147483647, %v2304
    %vm2315 = vcmp.eq.f32.partialorder %v2314, 8.507059e+37
    %v2316 = vand.u32 %v2304, 2147483648
    %v2317 = vor.u32 1.1754944e-38, %v2316
    %v2318 = vsel %vm2315, %v2317, %v2313
    %v2319 = vmul.f32 1.0, %v2318
    %v2320 = vtanh.pop %v2299
    %v2321 = vmul.f32 %v2319, %v2198
    %2323 = vrot.lane.b32.xlu0 %v2320, 64
    %v2324 = vpop.permute.xlu0 %2323
    %v2326 = vmul.f32 %v2319, %v2324
    %2328 = vrot.lane.b32.xlu0 %v2326, 32
    %v2329 = vpop.permute.xlu0 %2328
    %v2331 = vadd.f32 %v2321, %v2329
    %v2332 = vtanh.pop %v2331
    %2334 = vrot.lane.b32.xlu0 %v2332, 64
    %v2335 = vpop.permute.xlu0 %2334
    %v2337 = vmul.f32 %v2319, %v2335
    %s2338 = sadd.s32 %s1007, 11
    %s2339 = smul.u32 %s2338, 8
    %s2340 = scalar_lea.vmem [#allocation2], %s2339
    %v2341 = vld [vmem:[%s2340] sm:$0xff]
    %v2342 = vsel %vm874, %v2271, 0
    %2344 = vmatpush.msra.mxu0 0.0
    %2345 = vmatpush.msra.mxu0 0.0
    %2346 = vmatpush.msra.mxu0 0.0
    %2347 = vmatpush.msra.mxu0 0.0
    %2348 = vmatpush.msra.mxu0 0.0
    %2349 = vmatpush.msra.mxu0 0.0
    %2350 = vmatpush.msra.mxu0 0.0
    %2351 = vmatpush.msra.mxu0 0.0
    %2352 = vmatpush.msra.mxu0 0.0
    %2353 = vmatpush.msra.mxu0 0.0
    %2354 = vmatpush.msra.mxu0 0.0
    %2355 = vmatpush.msra.mxu0 0.0
    %2356 = vmatpush.msra.mxu0 %v848
    %2357 = vmatpush.msra.mxu0 %v847
    %2358 = vmatpush.msra.mxu0 %v846
    %2359 = vmatpush.msra.mxu0 %v845
    %2360 = vmatmul.f32.gmra.mxu0 %v2342
    %v2361 = vpop.f32.mrf.mxu0
    %v2362 = vadd.f32 0.0, %v2361
    %2363 = vdwg.mxu0
    %v2364 = vadd.f32 %v2341, %v2362
    %v2365 = vsub.f32 0.0, %v2364
    %v2366 = vmul.f32 %v2365, 1.442695
    %v2367 = vpow.pop %v2366
    %v2368 = vadd.f32 %v2367, 1.0
    %v2369 = vrcp.pop %v2368
    %v2370 = vmul.f32 %v2368, %v2369
    %v2371 = vsub.f32 1.0, %v2370
    %v2372 = vmul.f32 %v2369, %v2371
    %v2373 = vadd.f32 %v2369, %v2372
    %vm2374 = vweird.f32 %v2368
    %vm2375 = vweird.f32 %v2369
    %vm2376 = vmor %vm2374, %vm2375
    %v2377 = vsel %vm2376, %v2369, %v2373
    %v2378 = vand.u32 2147483647, %v2368
    %vm2379 = vcmp.eq.f32.partialorder %v2378, 8.507059e+37
    %v2380 = vand.u32 %v2368, 2147483648
    %v2381 = vor.u32 1.1754944e-38, %v2380
    %v2382 = vsel %vm2379, %v2381, %v2377
    %v2383 = vmul.f32 1.0, %v2382
    %v2384 = vtanh.pop %v2364
    %v2385 = vmul.f32 %v2383, %v2262
    %2387 = vrot.lane.b32.xlu0 %v2384, 64
    %v2388 = vpop.permute.xlu0 %2387
    %v2390 = vmul.f32 %v2383, %v2388
    %2392 = vrot.lane.b32.xlu0 %v2390, 32
    %v2393 = vpop.permute.xlu0 %2392
    %v2395 = vadd.f32 %v2385, %v2393
    %v2396 = vtanh.pop %v2395
    %2398 = vrot.lane.b32.xlu0 %v2396, 64
    %v2399 = vpop.permute.xlu0 %2398
    %v2401 = vmul.f32 %v2383, %v2399
    %2403 = vrot.lane.b32.xlu0 %v2401, 32
    %v2404 = vpop.permute.xlu0 %2403
    %2407 = vrot.lane.b32.xlu0 %v2337, 64
    %v2408 = vpop.permute.xlu0 %2407
    %v2410 = vsel %vm874, %v2404, %v2408
    %v2412 = vsel %vm155, %v2410, 0
    %2414 = vmatpush.msra.mxu0 0.0
    %2415 = vmatpush.msra.mxu0 0.0
    %2416 = vmatpush.msra.mxu0 0.0
    %2417 = vmatpush.msra.mxu0 0.0
    %2418 = vmatpush.msra.mxu0 0.0
    %2419 = vmatpush.msra.mxu0 0.0
    %2420 = vmatpush.msra.mxu0 0.0
    %2421 = vmatpush.msra.mxu0 0.0
    %2422 = vmatpush.msra.mxu0 %v856
    %2423 = vmatpush.msra.mxu0 %v855
    %2424 = vmatpush.msra.mxu0 %v854
    %2425 = vmatpush.msra.mxu0 %v853
    %2426 = vmatpush.msra.mxu0 %v852
    %2427 = vmatpush.msra.mxu0 %v851
    %2428 = vmatpush.msra.mxu0 %v850
    %2429 = vmatpush.msra.mxu0 %v849
    %2430 = vmatmul.f32.gmra.mxu0 %v2412
    %v2431 = vpop.f32.mrf.mxu0
    %v2432 = vadd.f32 %v945, %v2431
    %2433 = vdwg.mxu0
    %v2434 = vsub.f32 0.0, %v2432
    %v2435 = vmul.f32 %v2434, 1.442695
    %v2436 = vpow.pop %v2435
    %v2437 = vadd.f32 %v2436, 1.0
    %v2438 = vrcp.pop %v2437
    %v2439 = vmul.f32 %v2437, %v2438
    %v2440 = vsub.f32 1.0, %v2439
    %v2441 = vmul.f32 %v2438, %v2440
    %v2442 = vadd.f32 %v2438, %v2441
    %vm2443 = vweird.f32 %v2437
    %vm2444 = vweird.f32 %v2438
    %vm2445 = vmor %vm2443, %vm2444
    %v2446 = vsel %vm2445, %v2438, %v2442
    %v2447 = vand.u32 2147483647, %v2437
    %vm2448 = vcmp.eq.f32.partialorder %v2447, 8.507059e+37
    %v2449 = vand.u32 %v2437, 2147483648
    %v2450 = vor.u32 1.1754944e-38, %v2449
    %v2451 = vsel %vm2448, %v2450, %v2446
    %v2452 = vmul.f32 1.0, %v2451
    %v2453 = vtanh.pop %v2432
    %v2454 = vmul.f32 %v2452, %v2331
    %2456 = vrot.lane.b32.xlu0 %v2453, 64
    %v2457 = vpop.permute.xlu0 %2456
    %v2459 = vmul.f32 %v2452, %v2457
    %2461 = vrot.lane.b32.xlu0 %v2459, 32
    %v2462 = vpop.permute.xlu0 %2461
    %v2464 = vadd.f32 %v2454, %v2462
    %v2465 = vtanh.pop %v2464
    %2467 = vrot.lane.b32.xlu0 %v2465, 64
    %v2468 = vpop.permute.xlu0 %2467
    %v2470 = vmul.f32 %v2452, %v2468
    %s2471 = sadd.s32 %s1007, 12
    %s2472 = smul.u32 %s2471, 8
    %s2473 = scalar_lea.vmem [#allocation2], %s2472
    %v2474 = vld [vmem:[%s2473] sm:$0xff]
    %v2475 = vsel %vm874, %v2404, 0
    %2477 = vmatpush.msra.mxu0 0.0
    %2478 = vmatpush.msra.mxu0 0.0
    %2479 = vmatpush.msra.mxu0 0.0
    %2480 = vmatpush.msra.mxu0 0.0
    %2481 = vmatpush.msra.mxu0 0.0
    %2482 = vmatpush.msra.mxu0 0.0
    %2483 = vmatpush.msra.mxu0 0.0
    %2484 = vmatpush.msra.mxu0 0.0
    %2485 = vmatpush.msra.mxu0 0.0
    %2486 = vmatpush.msra.mxu0 0.0
    %2487 = vmatpush.msra.mxu0 0.0
    %2488 = vmatpush.msra.mxu0 0.0
    %2489 = vmatpush.msra.mxu0 %v848
    %2490 = vmatpush.msra.mxu0 %v847
    %2491 = vmatpush.msra.mxu0 %v846
    %2492 = vmatpush.msra.mxu0 %v845
    %2493 = vmatmul.f32.gmra.mxu0 %v2475
    %v2494 = vpop.f32.mrf.mxu0
    %v2495 = vadd.f32 0.0, %v2494
    %2496 = vdwg.mxu0
    %v2497 = vadd.f32 %v2474, %v2495
    %v2498 = vsub.f32 0.0, %v2497
    %v2499 = vmul.f32 %v2498, 1.442695
    %v2500 = vpow.pop %v2499
    %v2501 = vadd.f32 %v2500, 1.0
    %v2502 = vrcp.pop %v2501
    %v2503 = vmul.f32 %v2501, %v2502
    %v2504 = vsub.f32 1.0, %v2503
    %v2505 = vmul.f32 %v2502, %v2504
    %v2506 = vadd.f32 %v2502, %v2505
    %vm2507 = vweird.f32 %v2501
    %vm2508 = vweird.f32 %v2502
    %vm2509 = vmor %vm2507, %vm2508
    %v2510 = vsel %vm2509, %v2502, %v2506
    %v2511 = vand.u32 2147483647, %v2501
    %vm2512 = vcmp.eq.f32.partialorder %v2511, 8.507059e+37
    %v2513 = vand.u32 %v2501, 2147483648
    %v2514 = vor.u32 1.1754944e-38, %v2513
    %v2515 = vsel %vm2512, %v2514, %v2510
    %v2516 = vmul.f32 1.0, %v2515
    %v2517 = vtanh.pop %v2497
    %v2518 = vmul.f32 %v2516, %v2395
    %2520 = vrot.lane.b32.xlu0 %v2517, 64
    %v2521 = vpop.permute.xlu0 %2520
    %v2523 = vmul.f32 %v2516, %v2521
    %2525 = vrot.lane.b32.xlu0 %v2523, 32
    %v2526 = vpop.permute.xlu0 %2525
    %v2528 = vadd.f32 %v2518, %v2526
    %v2529 = vtanh.pop %v2528
    %2531 = vrot.lane.b32.xlu0 %v2529, 64
    %v2532 = vpop.permute.xlu0 %2531
    %v2534 = vmul.f32 %v2516, %v2532
    %2536 = vrot.lane.b32.xlu0 %v2534, 32
    %v2537 = vpop.permute.xlu0 %2536
    %2540 = vrot.lane.b32.xlu0 %v2470, 64
    %v2541 = vpop.permute.xlu0 %2540
    %v2543 = vsel %vm874, %v2537, %v2541
    %v2545 = vsel %vm155, %v2543, 0
    %2547 = vmatpush.msra.mxu0 0.0
    %2548 = vmatpush.msra.mxu0 0.0
    %2549 = vmatpush.msra.mxu0 0.0
    %2550 = vmatpush.msra.mxu0 0.0
    %2551 = vmatpush.msra.mxu0 0.0
    %2552 = vmatpush.msra.mxu0 0.0
    %2553 = vmatpush.msra.mxu0 0.0
    %2554 = vmatpush.msra.mxu0 0.0
    %2555 = vmatpush.msra.mxu0 %v856
    %2556 = vmatpush.msra.mxu0 %v855
    %2557 = vmatpush.msra.mxu0 %v854
    %2558 = vmatpush.msra.mxu0 %v853
    %2559 = vmatpush.msra.mxu0 %v852
    %2560 = vmatpush.msra.mxu0 %v851
    %2561 = vmatpush.msra.mxu0 %v850
    %2562 = vmatpush.msra.mxu0 %v849
    %2563 = vmatmul.f32.gmra.mxu0 %v2545
    %v2564 = vpop.f32.mrf.mxu0
    %v2565 = vadd.f32 %v945, %v2564
    %2566 = vdwg.mxu0
    %v2567 = vsub.f32 0.0, %v2565
    %v2568 = vmul.f32 %v2567, 1.442695
    %v2569 = vpow.pop %v2568
    %v2570 = vadd.f32 %v2569, 1.0
    %v2571 = vrcp.pop %v2570
    %v2572 = vmul.f32 %v2570, %v2571
    %v2573 = vsub.f32 1.0, %v2572
    %v2574 = vmul.f32 %v2571, %v2573
    %v2575 = vadd.f32 %v2571, %v2574
    %vm2576 = vweird.f32 %v2570
    %vm2577 = vweird.f32 %v2571
    %vm2578 = vmor %vm2576, %vm2577
    %v2579 = vsel %vm2578, %v2571, %v2575
    %v2580 = vand.u32 2147483647, %v2570
    %vm2581 = vcmp.eq.f32.partialorder %v2580, 8.507059e+37
    %v2582 = vand.u32 %v2570, 2147483648
    %v2583 = vor.u32 1.1754944e-38, %v2582
    %v2584 = vsel %vm2581, %v2583, %v2579
    %v2585 = vmul.f32 1.0, %v2584
    %v2586 = vtanh.pop %v2565
    %v2587 = vmul.f32 %v2585, %v2464
    %2589 = vrot.lane.b32.xlu0 %v2586, 64
    %v2590 = vpop.permute.xlu0 %2589
    %v2592 = vmul.f32 %v2585, %v2590
    %2594 = vrot.lane.b32.xlu0 %v2592, 32
    %v2595 = vpop.permute.xlu0 %2594
    %v2597 = vadd.f32 %v2587, %v2595
    %v2598 = vtanh.pop %v2597
    %2600 = vrot.lane.b32.xlu0 %v2598, 64
    %v2601 = vpop.permute.xlu0 %2600
    %v2603 = vmul.f32 %v2585, %v2601
    %s2604 = sadd.s32 %s1007, 13
    %s2605 = smul.u32 %s2604, 8
    %s2606 = scalar_lea.vmem [#allocation2], %s2605
    %v2607 = vld [vmem:[%s2606] sm:$0xff]
    %v2608 = vsel %vm874, %v2537, 0
    %2610 = vmatpush.msra.mxu0 0.0
    %2611 = vmatpush.msra.mxu0 0.0
    %2612 = vmatpush.msra.mxu0 0.0
    %2613 = vmatpush.msra.mxu0 0.0
    %2614 = vmatpush.msra.mxu0 0.0
    %2615 = vmatpush.msra.mxu0 0.0
    %2616 = vmatpush.msra.mxu0 0.0
    %2617 = vmatpush.msra.mxu0 0.0
    %2618 = vmatpush.msra.mxu0 0.0
    %2619 = vmatpush.msra.mxu0 0.0
    %2620 = vmatpush.msra.mxu0 0.0
    %2621 = vmatpush.msra.mxu0 0.0
    %2622 = vmatpush.msra.mxu0 %v848
    %2623 = vmatpush.msra.mxu0 %v847
    %2624 = vmatpush.msra.mxu0 %v846
    %2625 = vmatpush.msra.mxu0 %v845
    %2626 = vmatmul.f32.gmra.mxu0 %v2608
    %v2627 = vpop.f32.mrf.mxu0
    %v2628 = vadd.f32 0.0, %v2627
    %2629 = vdwg.mxu0
    %v2630 = vadd.f32 %v2607, %v2628
    %v2631 = vsub.f32 0.0, %v2630
    %v2632 = vmul.f32 %v2631, 1.442695
    %v2633 = vpow.pop %v2632
    %v2634 = vadd.f32 %v2633, 1.0
    %v2635 = vrcp.pop %v2634
    %v2636 = vmul.f32 %v2634, %v2635
    %v2637 = vsub.f32 1.0, %v2636
    %v2638 = vmul.f32 %v2635, %v2637
    %v2639 = vadd.f32 %v2635, %v2638
    %vm2640 = vweird.f32 %v2634
    %vm2641 = vweird.f32 %v2635
    %vm2642 = vmor %vm2640, %vm2641
    %v2643 = vsel %vm2642, %v2635, %v2639
    %v2644 = vand.u32 2147483647, %v2634
    %vm2645 = vcmp.eq.f32.partialorder %v2644, 8.507059e+37
    %v2646 = vand.u32 %v2634, 2147483648
    %v2647 = vor.u32 1.1754944e-38, %v2646
    %v2648 = vsel %vm2645, %v2647, %v2643
    %v2649 = vmul.f32 1.0, %v2648
    %v2650 = vtanh.pop %v2630
    %v2651 = vmul.f32 %v2649, %v2528
    %2653 = vrot.lane.b32.xlu0 %v2650, 64
    %v2654 = vpop.permute.xlu0 %2653
    %v2656 = vmul.f32 %v2649, %v2654
    %2658 = vrot.lane.b32.xlu0 %v2656, 32
    %v2659 = vpop.permute.xlu0 %2658
    %v2661 = vadd.f32 %v2651, %v2659
    %v2662 = vtanh.pop %v2661
    %2664 = vrot.lane.b32.xlu0 %v2662, 64
    %v2665 = vpop.permute.xlu0 %2664
    %v2667 = vmul.f32 %v2649, %v2665
    %2669 = vrot.lane.b32.xlu0 %v2667, 32
    %v2670 = vpop.permute.xlu0 %2669
    %2673 = vrot.lane.b32.xlu0 %v2603, 64
    %v2674 = vpop.permute.xlu0 %2673
    %v2676 = vsel %vm874, %v2670, %v2674
    %v2678 = vsel %vm155, %v2676, 0
    %2680 = vmatpush.msra.mxu0 0.0
    %2681 = vmatpush.msra.mxu0 0.0
    %2682 = vmatpush.msra.mxu0 0.0
    %2683 = vmatpush.msra.mxu0 0.0
    %2684 = vmatpush.msra.mxu0 0.0
    %2685 = vmatpush.msra.mxu0 0.0
    %2686 = vmatpush.msra.mxu0 0.0
    %2687 = vmatpush.msra.mxu0 0.0
    %2688 = vmatpush.msra.mxu0 %v856
    %2689 = vmatpush.msra.mxu0 %v855
    %2690 = vmatpush.msra.mxu0 %v854
    %2691 = vmatpush.msra.mxu0 %v853
    %2692 = vmatpush.msra.mxu0 %v852
    %2693 = vmatpush.msra.mxu0 %v851
    %2694 = vmatpush.msra.mxu0 %v850
    %2695 = vmatpush.msra.mxu0 %v849
    %2696 = vmatmul.f32.gmra.mxu0 %v2678
    %v2697 = vpop.f32.mrf.mxu0
    %v2698 = vadd.f32 %v945, %v2697
    %2699 = vdwg.mxu0
    %v2700 = vsub.f32 0.0, %v2698
    %v2701 = vmul.f32 %v2700, 1.442695
    %v2702 = vpow.pop %v2701
    %v2703 = vadd.f32 %v2702, 1.0
    %v2704 = vrcp.pop %v2703
    %v2705 = vmul.f32 %v2703, %v2704
    %v2706 = vsub.f32 1.0, %v2705
    %v2707 = vmul.f32 %v2704, %v2706
    %v2708 = vadd.f32 %v2704, %v2707
    %vm2709 = vweird.f32 %v2703
    %vm2710 = vweird.f32 %v2704
    %vm2711 = vmor %vm2709, %vm2710
    %v2712 = vsel %vm2711, %v2704, %v2708
    %v2713 = vand.u32 2147483647, %v2703
    %vm2714 = vcmp.eq.f32.partialorder %v2713, 8.507059e+37
    %v2715 = vand.u32 %v2703, 2147483648
    %v2716 = vor.u32 1.1754944e-38, %v2715
    %v2717 = vsel %vm2714, %v2716, %v2712
    %v2718 = vmul.f32 1.0, %v2717
    %v2719 = vtanh.pop %v2698
    %v2720 = vmul.f32 %v2718, %v2597
    %2722 = vrot.lane.b32.xlu0 %v2719, 64
    %v2723 = vpop.permute.xlu0 %2722
    %v2725 = vmul.f32 %v2718, %v2723
    %2727 = vrot.lane.b32.xlu0 %v2725, 32
    %v2728 = vpop.permute.xlu0 %2727
    %v2730 = vadd.f32 %v2720, %v2728
    %v2731 = vtanh.pop %v2730
    %2733 = vrot.lane.b32.xlu0 %v2731, 64
    %v2734 = vpop.permute.xlu0 %2733
    %v2736 = vmul.f32 %v2718, %v2734
    %s2737 = sadd.s32 %s1007, 14
    %s2738 = smul.u32 %s2737, 8
    %s2739 = scalar_lea.vmem [#allocation2], %s2738
    %v2740 = vld [vmem:[%s2739] sm:$0xff]
    %v2741 = vsel %vm874, %v2670, 0
    %2743 = vmatpush.msra.mxu0 0.0
    %2744 = vmatpush.msra.mxu0 0.0
    %2745 = vmatpush.msra.mxu0 0.0
    %2746 = vmatpush.msra.mxu0 0.0
    %2747 = vmatpush.msra.mxu0 0.0
    %2748 = vmatpush.msra.mxu0 0.0
    %2749 = vmatpush.msra.mxu0 0.0
    %2750 = vmatpush.msra.mxu0 0.0
    %2751 = vmatpush.msra.mxu0 0.0
    %2752 = vmatpush.msra.mxu0 0.0
    %2753 = vmatpush.msra.mxu0 0.0
    %2754 = vmatpush.msra.mxu0 0.0
    %2755 = vmatpush.msra.mxu0 %v848
    %2756 = vmatpush.msra.mxu0 %v847
    %2757 = vmatpush.msra.mxu0 %v846
    %2758 = vmatpush.msra.mxu0 %v845
    %2759 = vmatmul.f32.gmra.mxu0 %v2741
    %v2760 = vpop.f32.mrf.mxu0
    %v2761 = vadd.f32 0.0, %v2760
    %2762 = vdwg.mxu0
    %v2763 = vadd.f32 %v2740, %v2761
    %v2764 = vsub.f32 0.0, %v2763
    %v2765 = vmul.f32 %v2764, 1.442695
    %v2766 = vpow.pop %v2765
    %v2767 = vadd.f32 %v2766, 1.0
    %v2768 = vrcp.pop %v2767
    %v2769 = vmul.f32 %v2767, %v2768
    %v2770 = vsub.f32 1.0, %v2769
    %v2771 = vmul.f32 %v2768, %v2770
    %v2772 = vadd.f32 %v2768, %v2771
    %vm2773 = vweird.f32 %v2767
    %vm2774 = vweird.f32 %v2768
    %vm2775 = vmor %vm2773, %vm2774
    %v2776 = vsel %vm2775, %v2768, %v2772
    %v2777 = vand.u32 2147483647, %v2767
    %vm2778 = vcmp.eq.f32.partialorder %v2777, 8.507059e+37
    %v2779 = vand.u32 %v2767, 2147483648
    %v2780 = vor.u32 1.1754944e-38, %v2779
    %v2781 = vsel %vm2778, %v2780, %v2776
    %v2782 = vmul.f32 1.0, %v2781
    %v2783 = vtanh.pop %v2763
    %v2784 = vmul.f32 %v2782, %v2661
    %2786 = vrot.lane.b32.xlu0 %v2783, 64
    %v2787 = vpop.permute.xlu0 %2786
    %v2789 = vmul.f32 %v2782, %v2787
    %2791 = vrot.lane.b32.xlu0 %v2789, 32
    %v2792 = vpop.permute.xlu0 %2791
    %v2794 = vadd.f32 %v2784, %v2792
    %v2795 = vtanh.pop %v2794
    %2797 = vrot.lane.b32.xlu0 %v2795, 64
    %v2798 = vpop.permute.xlu0 %2797
    %v2800 = vmul.f32 %v2782, %v2798
    %2802 = vrot.lane.b32.xlu0 %v2800, 32
    %v2803 = vpop.permute.xlu0 %2802
    %2806 = vrot.lane.b32.xlu0 %v2736, 64
    %v2807 = vpop.permute.xlu0 %2806
    %v2809 = vsel %vm874, %v2803, %v2807
    %v2811 = vsel %vm155, %v2809, 0
    %2813 = vmatpush.msra.mxu0 0.0
    %2814 = vmatpush.msra.mxu0 0.0
    %2815 = vmatpush.msra.mxu0 0.0
    %2816 = vmatpush.msra.mxu0 0.0
    %2817 = vmatpush.msra.mxu0 0.0
    %2818 = vmatpush.msra.mxu0 0.0
    %2819 = vmatpush.msra.mxu0 0.0
    %2820 = vmatpush.msra.mxu0 0.0
    %2821 = vmatpush.msra.mxu0 %v856
    %2822 = vmatpush.msra.mxu0 %v855
    %2823 = vmatpush.msra.mxu0 %v854
    %2824 = vmatpush.msra.mxu0 %v853
    %2825 = vmatpush.msra.mxu0 %v852
    %2826 = vmatpush.msra.mxu0 %v851
    %2827 = vmatpush.msra.mxu0 %v850
    %2828 = vmatpush.msra.mxu0 %v849
    %2829 = vmatmul.f32.gmra.mxu0 %v2811
    %v2830 = vpop.f32.mrf.mxu0
    %v2831 = vadd.f32 %v945, %v2830
    %2832 = vdwg.mxu0
    %v2833 = vsub.f32 0.0, %v2831
    %v2834 = vmul.f32 %v2833, 1.442695
    %v2835 = vpow.pop %v2834
    %v2836 = vadd.f32 %v2835, 1.0
    %v2837 = vrcp.pop %v2836
    %v2838 = vmul.f32 %v2836, %v2837
    %v2839 = vsub.f32 1.0, %v2838
    %v2840 = vmul.f32 %v2837, %v2839
    %v2841 = vadd.f32 %v2837, %v2840
    %vm2842 = vweird.f32 %v2836
    %vm2843 = vweird.f32 %v2837
    %vm2844 = vmor %vm2842, %vm2843
    %v2845 = vsel %vm2844, %v2837, %v2841
    %v2846 = vand.u32 2147483647, %v2836
    %vm2847 = vcmp.eq.f32.partialorder %v2846, 8.507059e+37
    %v2848 = vand.u32 %v2836, 2147483648
    %v2849 = vor.u32 1.1754944e-38, %v2848
    %v2850 = vsel %vm2847, %v2849, %v2845
    %v2851 = vmul.f32 1.0, %v2850
    %v2852 = vtanh.pop %v2831
    %v2853 = vmul.f32 %v2851, %v2730
    %2855 = vrot.lane.b32.xlu0 %v2852, 64
    %v2856 = vpop.permute.xlu0 %2855
    %v2858 = vmul.f32 %v2851, %v2856
    %2860 = vrot.lane.b32.xlu0 %v2858, 32
    %v2861 = vpop.permute.xlu0 %2860
    %v2863 = vadd.f32 %v2853, %v2861
    %v2864 = vtanh.pop %v2863
    %2866 = vrot.lane.b32.xlu0 %v2864, 64
    %v2867 = vpop.permute.xlu0 %2866
    %v2869 = vmul.f32 %v2851, %v2867
    %s2870 = sadd.s32 %s1007, 15
    %s2871 = smul.u32 %s2870, 8
    %s2872 = scalar_lea.vmem [#allocation2], %s2871
    %v2873 = vld [vmem:[%s2872] sm:$0xff]
    %v2874 = vsel %vm874, %v2803, 0
    %2876 = vmatpush.msra.mxu0 0.0
    %2877 = vmatpush.msra.mxu0 0.0
    %2878 = vmatpush.msra.mxu0 0.0
    %2879 = vmatpush.msra.mxu0 0.0
    %2880 = vmatpush.msra.mxu0 0.0
    %2881 = vmatpush.msra.mxu0 0.0
    %2882 = vmatpush.msra.mxu0 0.0
    %2883 = vmatpush.msra.mxu0 0.0
    %2884 = vmatpush.msra.mxu0 0.0
    %2885 = vmatpush.msra.mxu0 0.0
    %2886 = vmatpush.msra.mxu0 0.0
    %2887 = vmatpush.msra.mxu0 0.0
    %2888 = vmatpush.msra.mxu0 %v848
    %2889 = vmatpush.msra.mxu0 %v847
    %2890 = vmatpush.msra.mxu0 %v846
    %2891 = vmatpush.msra.mxu0 %v845
    %2892 = vmatmul.f32.gmra.mxu0 %v2874
    %v2893 = vpop.f32.mrf.mxu0
    %v2894 = vadd.f32 0.0, %v2893
    %2895 = vdwg.mxu0
    %v2896 = vadd.f32 %v2873, %v2894
    %v2897 = vsub.f32 0.0, %v2896
    %v2898 = vmul.f32 %v2897, 1.442695
    %v2899 = vpow.pop %v2898
    %v2900 = vadd.f32 %v2899, 1.0
    %v2901 = vrcp.pop %v2900
    %v2902 = vmul.f32 %v2900, %v2901
    %v2903 = vsub.f32 1.0, %v2902
    %v2904 = vmul.f32 %v2901, %v2903
    %v2905 = vadd.f32 %v2901, %v2904
    %vm2906 = vweird.f32 %v2900
    %vm2907 = vweird.f32 %v2901
    %vm2908 = vmor %vm2906, %vm2907
    %v2909 = vsel %vm2908, %v2901, %v2905
    %v2910 = vand.u32 2147483647, %v2900
    %vm2911 = vcmp.eq.f32.partialorder %v2910, 8.507059e+37
    %v2912 = vand.u32 %v2900, 2147483648
    %v2913 = vor.u32 1.1754944e-38, %v2912
    %v2914 = vsel %vm2911, %v2913, %v2909
    %v2915 = vmul.f32 1.0, %v2914
    %v2916 = vtanh.pop %v2896
    %v2917 = vmul.f32 %v2915, %v2794
    %2919 = vrot.lane.b32.xlu0 %v2916, 64
    %v2920 = vpop.permute.xlu0 %2919
    %v2922 = vmul.f32 %v2915, %v2920
    %2924 = vrot.lane.b32.xlu0 %v2922, 32
    %v2925 = vpop.permute.xlu0 %2924
    %v2927 = vadd.f32 %v2917, %v2925
    %v2928 = vtanh.pop %v2927
    %2930 = vrot.lane.b32.xlu0 %v2928, 64
    %v2931 = vpop.permute.xlu0 %2930
    %v2933 = vmul.f32 %v2915, %v2931
    %2935 = vrot.lane.b32.xlu0 %v2933, 32
    %v2936 = vpop.permute.xlu0 %2935
    %2939 = vrot.lane.b32.xlu0 %v2869, 64
    %v2940 = vpop.permute.xlu0 %2939
    %v2942 = vsel %vm874, %v2936, %v2940
    %v2944 = vsel %vm155, %v2942, 0
    %2946 = vmatpush.msra.mxu0 0.0
    %2947 = vmatpush.msra.mxu0 0.0
    %2948 = vmatpush.msra.mxu0 0.0
    %2949 = vmatpush.msra.mxu0 0.0
    %2950 = vmatpush.msra.mxu0 0.0
    %2951 = vmatpush.msra.mxu0 0.0
    %2952 = vmatpush.msra.mxu0 0.0
    %2953 = vmatpush.msra.mxu0 0.0
    %2954 = vmatpush.msra.mxu0 %v856
    %2955 = vmatpush.msra.mxu0 %v855
    %2956 = vmatpush.msra.mxu0 %v854
    %2957 = vmatpush.msra.mxu0 %v853
    %2958 = vmatpush.msra.mxu0 %v852
    %2959 = vmatpush.msra.mxu0 %v851
    %2960 = vmatpush.msra.mxu0 %v850
    %2961 = vmatpush.msra.mxu0 %v849
    %2962 = vmatmul.f32.gmra.mxu0 %v2944
    %v2963 = vpop.f32.mrf.mxu0
    %v2964 = vadd.f32 %v945, %v2963
    %2965 = vdwg.mxu0
    %v2966 = vsub.f32 0.0, %v2964
    %v2967 = vmul.f32 %v2966, 1.442695
    %v2968 = vpow.pop %v2967
    %v2969 = vadd.f32 %v2968, 1.0
    %v2970 = vrcp.pop %v2969
    %v2971 = vmul.f32 %v2969, %v2970
    %v2972 = vsub.f32 1.0, %v2971
    %v2973 = vmul.f32 %v2970, %v2972
    %v2974 = vadd.f32 %v2970, %v2973
    %vm2975 = vweird.f32 %v2969
    %vm2976 = vweird.f32 %v2970
    %vm2977 = vmor %vm2975, %vm2976
    %v2978 = vsel %vm2977, %v2970, %v2974
    %v2979 = vand.u32 2147483647, %v2969
    %vm2980 = vcmp.eq.f32.partialorder %v2979, 8.507059e+37
    %v2981 = vand.u32 %v2969, 2147483648
    %v2982 = vor.u32 1.1754944e-38, %v2981
    %v2983 = vsel %vm2980, %v2982, %v2978
    %v2984 = vmul.f32 1.0, %v2983
    %v2985 = vtanh.pop %v2964
    %v2986 = vmul.f32 %v2984, %v2863
    %2988 = vrot.lane.b32.xlu0 %v2985, 64
    %v2989 = vpop.permute.xlu0 %2988
    %v2991 = vmul.f32 %v2984, %v2989
    %2993 = vrot.lane.b32.xlu0 %v2991, 32
    %v2994 = vpop.permute.xlu0 %2993
    %v2996 = vadd.f32 %v2986, %v2994
    %v2997 = vtanh.pop %v2996
    %2999 = vrot.lane.b32.xlu0 %v2997, 64
    %v3000 = vpop.permute.xlu0 %2999
    %v3002 = vmul.f32 %v2984, %v3000
  $region62: #{cnn_lstm_forward.3} parent=0 // loop_footer
    %s863 = sadd.s32 1, %s859
  $region63: #{cnn_lstm_forward.3} parent=0 // loop_footer_branch
    %858 = sbr.rel target = $region59
  $region64: #{cnn_lstm_forward.3} parent=0 // loop_exit
    _
  %v3003 = vld [vmem:[%s6] sm:$0xff]
  %v3004 = vld [vmem:[%s6 + $0x8] sm:$0xff]
  %v3005 = vld [vmem:[%s6 + $0x10] sm:$0xff]
  %v3006 = vld [vmem:[%s6 + $0x18] sm:$0xff]
  %v3007 = vld [vmem:[%s7] sm:$0x1]
  %v3009 = vperm.slane %v3007, 0
  %3012 = vrot.lane.b32.xlu0 %v866, 32
  %v3013 = vpop.permute.xlu0 %3012
  %vm3014 = vcmask 261120
  %v3015 = vsel %vm3014, %v3013, 0
  %3017 = vmatpush.msra.mxu0 0.0
  %3018 = vmatpush.msra.mxu0 0.0
  %3019 = vmatpush.msra.mxu0 0.0
  %3020 = vmatpush.msra.mxu0 0.0
  %3021 = vmatpush.msra.mxu0 0.0
  %3022 = vmatpush.msra.mxu0 0.0
  %3023 = vmatpush.msra.mxu0 0.0
  %3024 = vmatpush.msra.mxu0 0.0
  %3025 = vmatpush.msra.mxu0 0.0
  %3026 = vmatpush.msra.mxu0 0.0
  %3027 = vmatpush.msra.mxu0 0.0
  %3028 = vmatpush.msra.mxu0 0.0
  %3029 = vmatpush.msra.mxu0 %v3006
  %3030 = vmatpush.msra.mxu0 %v3005
  %3031 = vmatpush.msra.mxu0 %v3004
  %3032 = vmatpush.msra.mxu0 %v3003
  %3033 = vmatmul.f32.gmra.mxu0 %v3015
  %v3034 = vpop.f32.mrf.mxu0
  %v3035 = vadd.f32 %v3009, %v3034
  %3036 = vdwg.mxu0
  %v3037 = vmax.f32 %v3035, 0.0
  %v3038 = vld [vmem:[%s8] sm:$0xff]
  %v3039 = vld [vmem:[%s8 + $0x8] sm:$0xff]
  %v3040 = vld [vmem:[%s8 + $0x10] sm:$0xff]
  %v3041 = vld [vmem:[%s8 + $0x18] sm:$0xff]
  %v3042 = vld [vmem:[%s9] sm:$0x1]
  %v3044 = vperm.slane %v3042, 0
  %v3047 = vsel %vm3014, %v3037, 0
  %3049 = vmatpush.msra.mxu0 0.0
  %3050 = vmatpush.msra.mxu0 0.0
  %3051 = vmatpush.msra.mxu0 0.0
  %3052 = vmatpush.msra.mxu0 0.0
  %3053 = vmatpush.msra.mxu0 0.0
  %3054 = vmatpush.msra.mxu0 0.0
  %3055 = vmatpush.msra.mxu0 0.0
  %3056 = vmatpush.msra.mxu0 0.0
  %3057 = vmatpush.msra.mxu0 0.0
  %3058 = vmatpush.msra.mxu0 0.0
  %3059 = vmatpush.msra.mxu0 0.0
  %3060 = vmatpush.msra.mxu0 0.0
  %3061 = vmatpush.msra.mxu0 %v3041
  %3062 = vmatpush.msra.mxu0 %v3040
  %3063 = vmatpush.msra.mxu0 %v3039
  %3064 = vmatpush.msra.mxu0 %v3038
  %3065 = vmatmul.f32.gmra.mxu0 %v3047
  %v3066 = vpop.f32.mrf.mxu0
  %v3067 = vadd.f32 %v3044, %v3066
  %3068 = vdwg.mxu0
  %v3069 = vmax.f32 %v3067, 0.0
  %v3070 = vld [vmem:[%s10] sm:$0xff]
  %v3071 = vld [vmem:[%s10 + $0x8] sm:$0xff]
  %v3072 = vld [vmem:[%s10 + $0x10] sm:$0xff]
  %v3073 = vld [vmem:[%s10 + $0x18] sm:$0xff]
  %v3074 = vld [vmem:[%s11] sm:$0x1]
  %v3076 = vperm.slane %v3074, 0
  %v3079 = vsel %vm3014, %v3069, 0
  %3081 = vmatpush.msra.mxu0 0.0
  %3082 = vmatpush.msra.mxu0 0.0
  %3083 = vmatpush.msra.mxu0 0.0
  %3084 = vmatpush.msra.mxu0 0.0
  %3085 = vmatpush.msra.mxu0 0.0
  %3086 = vmatpush.msra.mxu0 0.0
  %3087 = vmatpush.msra.mxu0 0.0
  %3088 = vmatpush.msra.mxu0 0.0
  %3089 = vmatpush.msra.mxu0 0.0
  %3090 = vmatpush.msra.mxu0 0.0
  %3091 = vmatpush.msra.mxu0 0.0
  %3092 = vmatpush.msra.mxu0 0.0
  %3093 = vmatpush.msra.mxu0 %v3073
  %3094 = vmatpush.msra.mxu0 %v3072
  %3095 = vmatpush.msra.mxu0 %v3071
  %3096 = vmatpush.msra.mxu0 %v3070
  %3097 = vmatmul.f32.gmra.mxu0 %v3079
  %v3098 = vpop.f32.mrf.mxu0
  %v3099 = vadd.f32 %v3076, %v3098
  %3100 = vdwg.mxu0
  %v3101 = vmax.f32 %v3099, 0.0
  %v3102 = vld [vmem:[%s12] sm:$0xff]
  %v3103 = vld [vmem:[%s12 + $0x8] sm:$0xff]
  %v3104 = vld [vmem:[%s12 + $0x10] sm:$0xff]
  %v3105 = vld [vmem:[%s12 + $0x18] sm:$0xff]
  %v3106 = vld [vmem:[%s13] sm:$0x1]
  %v3108 = vperm.slane %v3106, 0
  %v3111 = vsel %vm3014, %v3101, 0
  %3113 = vmatpush.msra.mxu0 0.0
  %3114 = vmatpush.msra.mxu0 0.0
  %3115 = vmatpush.msra.mxu0 0.0
  %3116 = vmatpush.msra.mxu0 0.0
  %3117 = vmatpush.msra.mxu0 0.0
  %3118 = vmatpush.msra.mxu0 0.0
  %3119 = vmatpush.msra.mxu0 0.0
  %3120 = vmatpush.msra.mxu0 0.0
  %3121 = vmatpush.msra.mxu0 0.0
  %3122 = vmatpush.msra.mxu0 0.0
  %3123 = vmatpush.msra.mxu0 0.0
  %3124 = vmatpush.msra.mxu0 0.0
  %3125 = vmatpush.msra.mxu0 %v3105
  %3126 = vmatpush.msra.mxu0 %v3104
  %3127 = vmatpush.msra.mxu0 %v3103
  %3128 = vmatpush.msra.mxu0 %v3102
  %3129 = vmatmul.f32.gmra.mxu0 %v3111
  %v3130 = vpop.f32.mrf.mxu0
  %v3131 = vadd.f32 %v3108, %v3130
  %3132 = vdwg.mxu0
  %vm3133 = vcmask 80896
  %v3134 = vsel %vm3133, %v3131, -inf
  %3135 = vmax.xlane.f32.xlu0 %v3134
  %v3136 = vpop.xlane.xlu0 %3135
  %v3137 = vsub.f32 %v3131, %v3136
  %v3138 = vmul.f32 %v3137, 1.442695
  %v3139 = vpow.pop %v3138
  %v3140 = vsel %vm3133, %v3139, 0.0
  %3141 = vadd.xlane.f32.xlu0 %v3140
  %v3142 = vpop.xlane.xlu0 %3141
  %v3143 = vrcp.pop %v3142
  %v3144 = vmul.f32 %v3142, %v3143
  %v3145 = vsub.f32 1.0, %v3144
  %v3146 = vmul.f32 %v3143, %v3145
  %v3147 = vadd.f32 %v3143, %v3146
  %vm3148 = vweird.f32 %v3142
  %vm3149 = vweird.f32 %v3143
  %vm3150 = vmor %vm3148, %vm3149
  %v3151 = vsel %vm3150, %v3143, %v3147
  %v3152 = vand.u32 2147483647, %v3142
  %vm3153 = vcmp.eq.f32.partialorder %v3152, 8.507059e+37
  %v3154 = vand.u32 %v3142, 2147483648
  %v3155 = vor.u32 1.1754944e-38, %v3154
  %v3156 = vsel %vm3153, %v3155, %v3151
  %v3157 = vmul.f32 %v3139, %v3156
  %3158 = vst.msk [vmem:[%s14] sm:$0xff] %vm3133, %v3157
  // Predicated region
  $region65: #{cnn_lstm_forward.3} parent=0 // pred_check
    _
  $region66: #{cnn_lstm_forward.3} parent=0 // pred_check_branch
    %3160 = sbr.rel (0) target = $region68
  $region67: #{cnn_lstm_forward.3} parent=0 // pred_region
    _
  $region68: #{cnn_lstm_forward.3} parent=0 // pred_fallthru
    _
  // Predicated region
  $region69: #{cnn_lstm_forward.3} parent=0 // pred_check
    _
  $region70: #{cnn_lstm_forward.3} parent=0 // pred_check_branch
    %3162 = sbr.rel (0) target = $region72
  $region71: #{cnn_lstm_forward.3} parent=0 // pred_region
    _
  $region72: #{cnn_lstm_forward.3} parent=0 // pred_fallthru
    _

// kernel: cnn_lstm_forward.2
$region0: #{cnn_lstm_forward.2}
  #allocation0 [shape = 'u32[]', space=smem, size = 0x4, offset = 0x4, fixed_abs, tag = 'smem constant byte address 0x4 - core index']
  #allocation1 [shape = 'u32[72,128]{1,0:T(1,128)}', space=vmem, size = 0x9000, scoped, tag = 'internal scratch']
  #allocation2 [shape = 'f32[624,128]{1,0:T(8,128)}', space=vmem, size = 0x4e000, scoped, tag = 'scratch operand']
  #allocation3 [shape = 'f32[624,128]{1,0:T(8,128)}', space=vmem, size = 0x4e000, scoped, tag = 'scratch operand']
  %s0 = inlined_call_operand.vmem [shape: f32[576,8], index: 0, kind: input, shape index: {}]
  %s1 = inlined_call_operand.vmem [shape: f32[8,64], index: 1, kind: input, shape index: {}]
  %s2 = inlined_call_operand.vmem [shape: f32[1,64], index: 2, kind: input, shape index: {}]
  %s3 = inlined_call_operand.vmem [shape: f32[3,128,64], index: 3, kind: input, shape index: {}]
  %s4 = inlined_call_operand.vmem [shape: f32[1,64], index: 4, kind: input, shape index: {}]
  %s5 = inlined_call_operand.vmem [shape: f32[3,128,64], index: 5, kind: input, shape index: {}]
  %s6 = inlined_call_operand.vmem [shape: f32[1,64], index: 6, kind: input, shape index: {}]
  %s7 = inlined_call_operand.vmem [shape: f32[3,128,64], index: 7, kind: input, shape index: {}]
  %s8 = inlined_call_operand.vmem [shape: f32[1,64], index: 8, kind: input, shape index: {}]
  %s9 = inlined_call_operand.vmem [shape: f32[512,64], index: 9, kind: output, shape index: {}]
  %s10 = sld [smem:[#allocation0]]
  $region46: #{cnn_lstm_forward.2} parent=0
    _
  %s12 = ssub.s32 1, %s10
  %s13 = scalar_select 0, %s12, %s10
  // Predicated region
  $region2: #{cnn_lstm_forward.2} parent=0 // pred_check
    _
  $region3: #{cnn_lstm_forward.2} parent=0 // pred_check_branch
    %15 = sbr.rel (0) target = $region5
  $region4: #{cnn_lstm_forward.2} parent=0 // pred_region
    _
  $region5: #{cnn_lstm_forward.2} parent=0 // pred_fallthru
    _
  // Predicated region
  $region6: #{cnn_lstm_forward.2} parent=0 // pred_check
    _
  $region7: #{cnn_lstm_forward.2} parent=0 // pred_check_branch
    %17 = sbr.rel (0) target = $region9
  $region8: #{cnn_lstm_forward.2} parent=0 // pred_region
    _
  $region9: #{cnn_lstm_forward.2} parent=0 // pred_fallthru
    _
  // Predicated region
  $region10: #{cnn_lstm_forward.2} parent=0 // pred_check
    _
  $region11: #{cnn_lstm_forward.2} parent=0 // pred_check_branch
    %19 = sbr.rel (0) target = $region13
  $region12: #{cnn_lstm_forward.2} parent=0 // pred_region
    _
  $region13: #{cnn_lstm_forward.2} parent=0 // pred_fallthru
    _
  // Predicated region
  $region14: #{cnn_lstm_forward.2} parent=0 // pred_check
    _
  $region15: #{cnn_lstm_forward.2} parent=0 // pred_check_branch
    %21 = sbr.rel (0) target = $region17
  $region16: #{cnn_lstm_forward.2} parent=0 // pred_region
    _
  $region17: #{cnn_lstm_forward.2} parent=0 // pred_fallthru
    _
  // Predicated region
  $region18: #{cnn_lstm_forward.2} parent=0 // pred_check
    _
  $region19: #{cnn_lstm_forward.2} parent=0 // pred_check_branch
    %23 = sbr.rel (0) target = $region21
  $region20: #{cnn_lstm_forward.2} parent=0 // pred_region
    _
  $region21: #{cnn_lstm_forward.2} parent=0 // pred_fallthru
    _
  // Predicated region
  $region22: #{cnn_lstm_forward.2} parent=0 // pred_check
    _
  $region23: #{cnn_lstm_forward.2} parent=0 // pred_check_branch
    %25 = sbr.rel (0) target = $region25
  $region24: #{cnn_lstm_forward.2} parent=0 // pred_region
    _
  $region25: #{cnn_lstm_forward.2} parent=0 // pred_fallthru
    _
  // Predicated region
  $region26: #{cnn_lstm_forward.2} parent=0 // pred_check
    _
  $region27: #{cnn_lstm_forward.2} parent=0 // pred_check_branch
    %27 = sbr.rel (0) target = $region29
  $region28: #{cnn_lstm_forward.2} parent=0 // pred_region
    _
  $region29: #{cnn_lstm_forward.2} parent=0 // pred_fallthru
    _
  // Predicated region
  $region30: #{cnn_lstm_forward.2} parent=0 // pred_check
    _
  $region31: #{cnn_lstm_forward.2} parent=0 // pred_check_branch
    %29 = sbr.rel (0) target = $region33
  $region32: #{cnn_lstm_forward.2} parent=0 // pred_region
    _
  $region33: #{cnn_lstm_forward.2} parent=0 // pred_fallthru
    _
  // Predicated region
  $region34: #{cnn_lstm_forward.2} parent=0 // pred_check
    _
  $region35: #{cnn_lstm_forward.2} parent=0 // pred_check_branch
    %31 = sbr.rel (0) target = $region37
  $region36: #{cnn_lstm_forward.2} parent=0 // pred_region
    _
  $region37: #{cnn_lstm_forward.2} parent=0 // pred_fallthru
    _
  %32 = vst [vmem:[#allocation2] sm:$0xff] 0.0
  %33 = vst [vmem:[#allocation2 + $0x8] sm:$0xff] 0.0
  %34 = vst [vmem:[#allocation2 + $0x10] sm:$0xff] 0.0
  %35 = vst [vmem:[#allocation2 + $0x18] sm:$0xff] 0.0
  %36 = vst [vmem:[#allocation2 + $0x20] sm:$0xff] 0.0
  %37 = vst [vmem:[#allocation2 + $0x28] sm:$0xff] 0.0
  %38 = vst [vmem:[#allocation2 + $0x30] sm:$0xff] 0.0
  %39 = vst [vmem:[#allocation2 + $0x38] sm:$0xff] 0.0
  %40 = vst [vmem:[#allocation2 + $0x40] sm:$0xff] 0.0
  %41 = vst [vmem:[#allocation2 + $0x48] sm:$0xff] 0.0
  %42 = vst [vmem:[#allocation2 + $0x50] sm:$0xff] 0.0
  %43 = vst [vmem:[#allocation2 + $0x58] sm:$0xff] 0.0
  %44 = vst [vmem:[#allocation2 + $0x60] sm:$0xff] 0.0
  %45 = vst [vmem:[#allocation2 + $0x68] sm:$0xff] 0.0
  %46 = vst [vmem:[#allocation2 + $0x70] sm:$0xff] 0.0
  %47 = vst [vmem:[#allocation2 + $0x78] sm:$0xff] 0.0
  %48 = vst [vmem:[#allocation2 + $0x80] sm:$0xff] 0.0
  %49 = vst [vmem:[#allocation2 + $0x88] sm:$0xff] 0.0
  %50 = vst [vmem:[#allocation2 + $0x90] sm:$0xff] 0.0
  %51 = vst [vmem:[#allocation2 + $0x98] sm:$0xff] 0.0
  %52 = vst [vmem:[#allocation2 + $0xa0] sm:$0xff] 0.0
  %53 = vst [vmem:[#allocation2 + $0xa8] sm:$0xff] 0.0
  %54 = vst [vmem:[#allocation2 + $0xb0] sm:$0xff] 0.0
  %55 = vst [vmem:[#allocation2 + $0xb8] sm:$0xff] 0.0
  %56 = vst [vmem:[#allocation2 + $0xc0] sm:$0xff] 0.0
  %57 = vst [vmem:[#allocation2 + $0xc8] sm:$0xff] 0.0
  %58 = vst [vmem:[#allocation2 + $0xd0] sm:$0xff] 0.0
  %59 = vst [vmem:[#allocation2 + $0xd8] sm:$0xff] 0.0
  %60 = vst [vmem:[#allocation2 + $0xe0] sm:$0xff] 0.0
  %61 = vst [vmem:[#allocation2 + $0xe8] sm:$0xff] 0.0
  %62 = vst [vmem:[#allocation2 + $0xf0] sm:$0xff] 0.0
  %63 = vst [vmem:[#allocation2 + $0xf8] sm:$0xff] 0.0
  %64 = vst [vmem:[#allocation2 + $0x100] sm:$0xff] 0.0
  %65 = vst [vmem:[#allocation2 + $0x108] sm:$0xff] 0.0
  %66 = vst [vmem:[#allocation2 + $0x110] sm:$0xff] 0.0
  %67 = vst [vmem:[#allocation2 + $0x118] sm:$0xff] 0.0
  %68 = vst [vmem:[#allocation2 + $0x120] sm:$0xff] 0.0
  %69 = vst [vmem:[#allocation2 + $0x128] sm:$0xff] 0.0
  %70 = vst [vmem:[#allocation2 + $0x130] sm:$0xff] 0.0
  %71 = vst [vmem:[#allocation2 + $0x138] sm:$0xff] 0.0
  %72 = vst [vmem:[#allocation2 + $0x140] sm:$0xff] 0.0
  %73 = vst [vmem:[#allocation2 + $0x148] sm:$0xff] 0.0
  %74 = vst [vmem:[#allocation2 + $0x150] sm:$0xff] 0.0
  %75 = vst [vmem:[#allocation2 + $0x158] sm:$0xff] 0.0
  %76 = vst [vmem:[#allocation2 + $0x160] sm:$0xff] 0.0
  %77 = vst [vmem:[#allocation2 + $0x168] sm:$0xff] 0.0
  %78 = vst [vmem:[#allocation2 + $0x170] sm:$0xff] 0.0
  %79 = vst [vmem:[#allocation2 + $0x178] sm:$0xff] 0.0
  %80 = vst [vmem:[#allocation2 + $0x180] sm:$0xff] 0.0
  %81 = vst [vmem:[#allocation2 + $0x188] sm:$0xff] 0.0
  %82 = vst [vmem:[#allocation2 + $0x190] sm:$0xff] 0.0
  %83 = vst [vmem:[#allocation2 + $0x198] sm:$0xff] 0.0
  %84 = vst [vmem:[#allocation2 + $0x1a0] sm:$0xff] 0.0
  %85 = vst [vmem:[#allocation2 + $0x1a8] sm:$0xff] 0.0
  %86 = vst [vmem:[#allocation2 + $0x1b0] sm:$0xff] 0.0
  %87 = vst [vmem:[#allocation2 + $0x1b8] sm:$0xff] 0.0
  %88 = vst [vmem:[#allocation2 + $0x1c0] sm:$0xff] 0.0
  %89 = vst [vmem:[#allocation2 + $0x1c8] sm:$0xff] 0.0
  %90 = vst [vmem:[#allocation2 + $0x1d0] sm:$0xff] 0.0
  %91 = vst [vmem:[#allocation2 + $0x1d8] sm:$0xff] 0.0
  %92 = vst [vmem:[#allocation2 + $0x1e0] sm:$0xff] 0.0
  %93 = vst [vmem:[#allocation2 + $0x1e8] sm:$0xff] 0.0
  %94 = vst [vmem:[#allocation2 + $0x1f0] sm:$0xff] 0.0
  %95 = vst [vmem:[#allocation2 + $0x1f8] sm:$0xff] 0.0
  %96 = vst [vmem:[#allocation2 + $0x200] sm:$0xff] 0.0
  %97 = vst [vmem:[#allocation2 + $0x208] sm:$0xff] 0.0
  %98 = vst [vmem:[#allocation2 + $0x210] sm:$0xff] 0.0
  %99 = vst [vmem:[#allocation2 + $0x218] sm:$0xff] 0.0
  %100 = vst [vmem:[#allocation2 + $0x220] sm:$0xff] 0.0
  %101 = vst [vmem:[#allocation2 + $0x228] sm:$0xff] 0.0
  %102 = vst [vmem:[#allocation2 + $0x230] sm:$0xff] 0.0
  %103 = vst [vmem:[#allocation2 + $0x238] sm:$0xff] 0.0
  %104 = vst [vmem:[#allocation2 + $0x240] sm:$0xff] 0.0
  %105 = vst [vmem:[#allocation2 + $0x248] sm:$0xff] 0.0
  %106 = vst [vmem:[#allocation2 + $0x250] sm:$0xff] 0.0
  %107 = vst [vmem:[#allocation2 + $0x258] sm:$0xff] 0.0
  %108 = vst [vmem:[#allocation2 + $0x260] sm:$0xff] 0.0
  %109 = vst [vmem:[#allocation2 + $0x268] sm:$0xff] 0.0
  %110 = vst [vmem:[#allocation3] sm:$0xff] 0.0
  %111 = vst [vmem:[#allocation3 + $0x8] sm:$0xff] 0.0
  %112 = vst [vmem:[#allocation3 + $0x10] sm:$0xff] 0.0
  %113 = vst [vmem:[#allocation3 + $0x18] sm:$0xff] 0.0
  %114 = vst [vmem:[#allocation3 + $0x20] sm:$0xff] 0.0
  %115 = vst [vmem:[#allocation3 + $0x28] sm:$0xff] 0.0
  %116 = vst [vmem:[#allocation3 + $0x30] sm:$0xff] 0.0
  %117 = vst [vmem:[#allocation3 + $0x38] sm:$0xff] 0.0
  %118 = vst [vmem:[#allocation3 + $0x40] sm:$0xff] 0.0
  %119 = vst [vmem:[#allocation3 + $0x48] sm:$0xff] 0.0
  %120 = vst [vmem:[#allocation3 + $0x50] sm:$0xff] 0.0
  %121 = vst [vmem:[#allocation3 + $0x58] sm:$0xff] 0.0
  %122 = vst [vmem:[#allocation3 + $0x60] sm:$0xff] 0.0
  %123 = vst [vmem:[#allocation3 + $0x68] sm:$0xff] 0.0
  %124 = vst [vmem:[#allocation3 + $0x70] sm:$0xff] 0.0
  %125 = vst [vmem:[#allocation3 + $0x78] sm:$0xff] 0.0
  %126 = vst [vmem:[#allocation3 + $0x80] sm:$0xff] 0.0
  %127 = vst [vmem:[#allocation3 + $0x88] sm:$0xff] 0.0
  %128 = vst [vmem:[#allocation3 + $0x90] sm:$0xff] 0.0
  %129 = vst [vmem:[#allocation3 + $0x98] sm:$0xff] 0.0
  %130 = vst [vmem:[#allocation3 + $0xa0] sm:$0xff] 0.0
  %131 = vst [vmem:[#allocation3 + $0xa8] sm:$0xff] 0.0
  %132 = vst [vmem:[#allocation3 + $0xb0] sm:$0xff] 0.0
  %133 = vst [vmem:[#allocation3 + $0xb8] sm:$0xff] 0.0
  %134 = vst [vmem:[#allocation3 + $0xc0] sm:$0xff] 0.0
  %135 = vst [vmem:[#allocation3 + $0xc8] sm:$0xff] 0.0
  %136 = vst [vmem:[#allocation3 + $0xd0] sm:$0xff] 0.0
  %137 = vst [vmem:[#allocation3 + $0xd8] sm:$0xff] 0.0
  %138 = vst [vmem:[#allocation3 + $0xe0] sm:$0xff] 0.0
  %139 = vst [vmem:[#allocation3 + $0xe8] sm:$0xff] 0.0
  %140 = vst [vmem:[#allocation3 + $0xf0] sm:$0xff] 0.0
  %141 = vst [vmem:[#allocation3 + $0xf8] sm:$0xff] 0.0
  %142 = vst [vmem:[#allocation3 + $0x100] sm:$0xff] 0.0
  %143 = vst [vmem:[#allocation3 + $0x108] sm:$0xff] 0.0
  %144 = vst [vmem:[#allocation3 + $0x110] sm:$0xff] 0.0
  %145 = vst [vmem:[#allocation3 + $0x118] sm:$0xff] 0.0
  %146 = vst [vmem:[#allocation3 + $0x120] sm:$0xff] 0.0
  %147 = vst [vmem:[#allocation3 + $0x128] sm:$0xff] 0.0
  %148 = vst [vmem:[#allocation3 + $0x130] sm:$0xff] 0.0
  %149 = vst [vmem:[#allocation3 + $0x138] sm:$0xff] 0.0
  %150 = vst [vmem:[#allocation3 + $0x140] sm:$0xff] 0.0
  %151 = vst [vmem:[#allocation3 + $0x148] sm:$0xff] 0.0
  %152 = vst [vmem:[#allocation3 + $0x150] sm:$0xff] 0.0
  %153 = vst [vmem:[#allocation3 + $0x158] sm:$0xff] 0.0
  %154 = vst [vmem:[#allocation3 + $0x160] sm:$0xff] 0.0
  %155 = vst [vmem:[#allocation3 + $0x168] sm:$0xff] 0.0
  %156 = vst [vmem:[#allocation3 + $0x170] sm:$0xff] 0.0
  %157 = vst [vmem:[#allocation3 + $0x178] sm:$0xff] 0.0
  %158 = vst [vmem:[#allocation3 + $0x180] sm:$0xff] 0.0
  %159 = vst [vmem:[#allocation3 + $0x188] sm:$0xff] 0.0
  %160 = vst [vmem:[#allocation3 + $0x190] sm:$0xff] 0.0
  %161 = vst [vmem:[#allocation3 + $0x198] sm:$0xff] 0.0
  %162 = vst [vmem:[#allocation3 + $0x1a0] sm:$0xff] 0.0
  %163 = vst [vmem:[#allocation3 + $0x1a8] sm:$0xff] 0.0
  %164 = vst [vmem:[#allocation3 + $0x1b0] sm:$0xff] 0.0
  %165 = vst [vmem:[#allocation3 + $0x1b8] sm:$0xff] 0.0
  %166 = vst [vmem:[#allocation3 + $0x1c0] sm:$0xff] 0.0
  %167 = vst [vmem:[#allocation3 + $0x1c8] sm:$0xff] 0.0
  %168 = vst [vmem:[#allocation3 + $0x1d0] sm:$0xff] 0.0
  %169 = vst [vmem:[#allocation3 + $0x1d8] sm:$0xff] 0.0
  %170 = vst [vmem:[#allocation3 + $0x1e0] sm:$0xff] 0.0
  %171 = vst [vmem:[#allocation3 + $0x1e8] sm:$0xff] 0.0
  %172 = vst [vmem:[#allocation3 + $0x1f0] sm:$0xff] 0.0
  %173 = vst [vmem:[#allocation3 + $0x1f8] sm:$0xff] 0.0
  %174 = vst [vmem:[#allocation3 + $0x200] sm:$0xff] 0.0
  %175 = vst [vmem:[#allocation3 + $0x208] sm:$0xff] 0.0
  %176 = vst [vmem:[#allocation3 + $0x210] sm:$0xff] 0.0
  %177 = vst [vmem:[#allocation3 + $0x218] sm:$0xff] 0.0
  %178 = vst [vmem:[#allocation3 + $0x220] sm:$0xff] 0.0
  %179 = vst [vmem:[#allocation3 + $0x228] sm:$0xff] 0.0
  %180 = vst [vmem:[#allocation3 + $0x230] sm:$0xff] 0.0
  %181 = vst [vmem:[#allocation3 + $0x238] sm:$0xff] 0.0
  %182 = vst [vmem:[#allocation3 + $0x240] sm:$0xff] 0.0
  %183 = vst [vmem:[#allocation3 + $0x248] sm:$0xff] 0.0
  %184 = vst [vmem:[#allocation3 + $0x250] sm:$0xff] 0.0
  %185 = vst [vmem:[#allocation3 + $0x258] sm:$0xff] 0.0
  %186 = vst [vmem:[#allocation3 + $0x260] sm:$0xff] 0.0
  %187 = vst [vmem:[#allocation3 + $0x268] sm:$0xff] 0.0
  %v188 = vld [vmem:[%s0] sm:$0xff]
  %v189 = vld [vmem:[%s0 + $0x8] sm:$0xff]
  %v190 = vld [vmem:[%s0 + $0x10] sm:$0xff]
  %v191 = vld [vmem:[%s0 + $0x18] sm:$0xff]
  %v192 = vld [vmem:[%s0 + $0x20] sm:$0xff]
  %v193 = vld [vmem:[%s0 + $0x28] sm:$0xff]
  %v194 = vld [vmem:[%s0 + $0x30] sm:$0xff]
  %v195 = vld [vmem:[%s0 + $0x38] sm:$0xff]
  %v196 = vld [vmem:[%s0 + $0x40] sm:$0xff]
  %v197 = vld [vmem:[%s0 + $0x48] sm:$0xff]
  %v198 = vld [vmem:[%s0 + $0x50] sm:$0xff]
  %v199 = vld [vmem:[%s0 + $0x58] sm:$0xff]
  %v200 = vld [vmem:[%s0 + $0x60] sm:$0xff]
  %v201 = vld [vmem:[%s0 + $0x68] sm:$0xff]
  %v202 = vld [vmem:[%s0 + $0x70] sm:$0xff]
  %v203 = vld [vmem:[%s0 + $0x78] sm:$0xff]
  %v204 = vld [vmem:[%s0 + $0x80] sm:$0xff]
  %v205 = vld [vmem:[%s0 + $0x88] sm:$0xff]
  %v206 = vld [vmem:[%s0 + $0x90] sm:$0xff]
  %v207 = vld [vmem:[%s0 + $0x98] sm:$0xff]
  %v208 = vld [vmem:[%s0 + $0xa0] sm:$0xff]
  %v209 = vld [vmem:[%s0 + $0xa8] sm:$0xff]
  %v210 = vld [vmem:[%s0 + $0xb0] sm:$0xff]
  %v211 = vld [vmem:[%s0 + $0xb8] sm:$0xff]
  %v212 = vld [vmem:[%s0 + $0xc0] sm:$0xff]
  %v213 = vld [vmem:[%s0 + $0xc8] sm:$0xff]
  %v214 = vld [vmem:[%s0 + $0xd0] sm:$0xff]
  %v215 = vld [vmem:[%s0 + $0xd8] sm:$0xff]
  %v216 = vld [vmem:[%s0 + $0xe0] sm:$0xff]
  %v217 = vld [vmem:[%s0 + $0xe8] sm:$0xff]
  %v218 = vld [vmem:[%s0 + $0xf0] sm:$0xff]
  %v219 = vld [vmem:[%s0 + $0xf8] sm:$0xff]
  %v220 = vld [vmem:[%s0 + $0x100] sm:$0xff]
  %v221 = vld [vmem:[%s0 + $0x108] sm:$0xff]
  %v222 = vld [vmem:[%s0 + $0x110] sm:$0xff]
  %v223 = vld [vmem:[%s0 + $0x118] sm:$0xff]
  %v224 = vld [vmem:[%s0 + $0x120] sm:$0xff]
  %v225 = vld [vmem:[%s0 + $0x128] sm:$0xff]
  %v226 = vld [vmem:[%s0 + $0x130] sm:$0xff]
  %v227 = vld [vmem:[%s0 + $0x138] sm:$0xff]
  %v228 = vld [vmem:[%s0 + $0x140] sm:$0xff]
  %v229 = vld [vmem:[%s0 + $0x148] sm:$0xff]
  %v230 = vld [vmem:[%s0 + $0x150] sm:$0xff]
  %v231 = vld [vmem:[%s0 + $0x158] sm:$0xff]
  %v232 = vld [vmem:[%s0 + $0x160] sm:$0xff]
  %v233 = vld [vmem:[%s0 + $0x168] sm:$0xff]
  %v234 = vld [vmem:[%s0 + $0x170] sm:$0xff]
  %v235 = vld [vmem:[%s0 + $0x178] sm:$0xff]
  %v236 = vld [vmem:[%s0 + $0x180] sm:$0xff]
  %v237 = vld [vmem:[%s0 + $0x188] sm:$0xff]
  %v238 = vld [vmem:[%s0 + $0x190] sm:$0xff]
  %v239 = vld [vmem:[%s0 + $0x198] sm:$0xff]
  %v240 = vld [vmem:[%s0 + $0x1a0] sm:$0xff]
  %v241 = vld [vmem:[%s0 + $0x1a8] sm:$0xff]
  %v242 = vld [vmem:[%s0 + $0x1b0] sm:$0xff]
  %v243 = vld [vmem:[%s0 + $0x1b8] sm:$0xff]
  %v244 = vld [vmem:[%s0 + $0x1c0] sm:$0xff]
  %v245 = vld [vmem:[%s0 + $0x1c8] sm:$0xff]
  %v246 = vld [vmem:[%s0 + $0x1d0] sm:$0xff]
  %v247 = vld [vmem:[%s0 + $0x1d8] sm:$0xff]
  %v248 = vld [vmem:[%s0 + $0x1e0] sm:$0xff]
  %v249 = vld [vmem:[%s0 + $0x1e8] sm:$0xff]
  %v250 = vld [vmem:[%s0 + $0x1f0] sm:$0xff]
  %v251 = vld [vmem:[%s0 + $0x1f8] sm:$0xff]
  %v252 = vld [vmem:[%s0 + $0x200] sm:$0xff]
  %v253 = vld [vmem:[%s0 + $0x208] sm:$0xff]
  %v254 = vld [vmem:[%s0 + $0x210] sm:$0xff]
  %v255 = vld [vmem:[%s0 + $0x218] sm:$0xff]
  %v256 = vld [vmem:[%s0 + $0x220] sm:$0xff]
  %v257 = vld [vmem:[%s0 + $0x228] sm:$0xff]
  %v258 = vld [vmem:[%s0 + $0x230] sm:$0xff]
  %v259 = vld [vmem:[%s0 + $0x238] sm:$0xff]
  %v260 = vld [vmem:[%s1] sm:$0xff]
  %v261 = vld [vmem:[%s2] sm:$0x1]
  %v263 = vperm.slane %v261, 0
  %vm265 = vcmask 64512
  %v267 = vsel %vm265, %v188, 0
  %v270 = vsel %vm265, %v189, 0
  %v273 = vsel %vm265, %v190, 0
  %v276 = vsel %vm265, %v191, 0
  %v279 = vsel %vm265, %v192, 0
  %v282 = vsel %vm265, %v193, 0
  %v285 = vsel %vm265, %v194, 0
  %v288 = vsel %vm265, %v195, 0
  %v291 = vsel %vm265, %v196, 0
  %v294 = vsel %vm265, %v197, 0
  %v297 = vsel %vm265, %v198, 0
  %v300 = vsel %vm265, %v199, 0
  %v303 = vsel %vm265, %v200, 0
  %v306 = vsel %vm265, %v201, 0
  %v309 = vsel %vm265, %v202, 0
  %v312 = vsel %vm265, %v203, 0
  %v315 = vsel %vm265, %v204, 0
  %v318 = vsel %vm265, %v205, 0
  %v321 = vsel %vm265, %v206, 0
  %v324 = vsel %vm265, %v207, 0
  %v327 = vsel %vm265, %v208, 0
  %v330 = vsel %vm265, %v209, 0
  %v333 = vsel %vm265, %v210, 0
  %v336 = vsel %vm265, %v211, 0
  %v339 = vsel %vm265, %v212, 0
  %v342 = vsel %vm265, %v213, 0
  %v345 = vsel %vm265, %v214, 0
  %v348 = vsel %vm265, %v215, 0
  %v351 = vsel %vm265, %v216, 0
  %v354 = vsel %vm265, %v217, 0
  %v357 = vsel %vm265, %v218, 0
  %v360 = vsel %vm265, %v219, 0
  %v363 = vsel %vm265, %v220, 0
  %v366 = vsel %vm265, %v221, 0
  %v369 = vsel %vm265, %v222, 0
  %v372 = vsel %vm265, %v223, 0
  %v375 = vsel %vm265, %v224, 0
  %v378 = vsel %vm265, %v225, 0
  %v381 = vsel %vm265, %v226, 0
  %v384 = vsel %vm265, %v227, 0
  %v387 = vsel %vm265, %v228, 0
  %v390 = vsel %vm265, %v229, 0
  %v393 = vsel %vm265, %v230, 0
  %v396 = vsel %vm265, %v231, 0
  %v399 = vsel %vm265, %v232, 0
  %v402 = vsel %vm265, %v233, 0
  %v405 = vsel %vm265, %v234, 0
  %v408 = vsel %vm265, %v235, 0
  %v411 = vsel %vm265, %v236, 0
  %v414 = vsel %vm265, %v237, 0
  %v417 = vsel %vm265, %v238, 0
  %v420 = vsel %vm265, %v239, 0
  %v423 = vsel %vm265, %v240, 0
  %v426 = vsel %vm265, %v241, 0
  %v429 = vsel %vm265, %v242, 0
  %v432 = vsel %vm265, %v243, 0
  %v435 = vsel %vm265, %v244, 0
  %v438 = vsel %vm265, %v245, 0
  %v441 = vsel %vm265, %v246, 0
  %v444 = vsel %vm265, %v247, 0
  %v447 = vsel %vm265, %v248, 0
  %v450 = vsel %vm265, %v249, 0
  %v453 = vsel %vm265, %v250, 0
  %v456 = vsel %vm265, %v251, 0
  %v459 = vsel %vm265, %v252, 0
  %v462 = vsel %vm265, %v253, 0
  %v465 = vsel %vm265, %v254, 0
  %v468 = vsel %vm265, %v255, 0
  %v471 = vsel %vm265, %v256, 0
  %v474 = vsel %vm265, %v257, 0
  %v477 = vsel %vm265, %v258, 0
  %v480 = vsel %vm265, %v259, 0
  %482 = vmatpush.msra.mxu0 0.0
  %483 = vmatpush.msra.mxu0 0.0
  %484 = vmatpush.msra.mxu0 0.0
  %485 = vmatpush.msra.mxu0 0.0
  %486 = vmatpush.msra.mxu0 0.0
  %487 = vmatpush.msra.mxu0 0.0
  %488 = vmatpush.msra.mxu0 0.0
  %489 = vmatpush.msra.mxu0 0.0
  %490 = vmatpush.msra.mxu0 0.0
  %491 = vmatpush.msra.mxu0 0.0
  %492 = vmatpush.msra.mxu0 0.0
  %493 = vmatpush.msra.mxu0 0.0
  %494 = vmatpush.msra.mxu0 0.0
  %495 = vmatpush.msra.mxu0 0.0
  %496 = vmatpush.msra.mxu0 0.0
  %497 = vmatpush.msra.mxu0 %v260
  %498 = vmatmul.f32.gmra.mxu0 %v267
  %v499 = vpop.f32.mrf.mxu0
  %500 = vmatmul.f32.gmra.mxu0 %v270
  %v501 = vpop.f32.mrf.mxu0
  %502 = vmatmul.f32.gmra.mxu0 %v273
  %v503 = vpop.f32.mrf.mxu0
  %v504 = vadd.f32 %v263, %v503
  %505 = vmatmul.f32.gmra.mxu0 %v276
  %v506 = vpop.f32.mrf.mxu0
  %v507 = vadd.f32 %v263, %v506
  %508 = vmatmul.f32.gmra.mxu0 %v279
  %v509 = vpop.f32.mrf.mxu0
  %v510 = vadd.f32 %v263, %v509
  %511 = vmatmul.f32.gmra.mxu0 %v282
  %v512 = vpop.f32.mrf.mxu0
  %v513 = vadd.f32 %v263, %v512
  %514 = vmatmul.f32.gmra.mxu0 %v285
  %v515 = vpop.f32.mrf.mxu0
  %v516 = vadd.f32 %v263, %v515
  %517 = vmatmul.f32.gmra.mxu0 %v288
  %v518 = vpop.f32.mrf.mxu0
  %v519 = vadd.f32 %v263, %v518
  %520 = vmatmul.f32.gmra.mxu0 %v291
  %v521 = vpop.f32.mrf.mxu0
  %v522 = vadd.f32 %v263, %v521
  %523 = vmatmul.f32.gmra.mxu0 %v294
  %v524 = vpop.f32.mrf.mxu0
  %v525 = vadd.f32 %v263, %v524
  %526 = vmatmul.f32.gmra.mxu0 %v297
  %v527 = vpop.f32.mrf.mxu0
  %v528 = vadd.f32 %v263, %v527
  %529 = vmatmul.f32.gmra.mxu0 %v300
  %v530 = vpop.f32.mrf.mxu0
  %v531 = vadd.f32 %v263, %v530
  %532 = vmatmul.f32.gmra.mxu0 %v303
  %v533 = vpop.f32.mrf.mxu0
  %v534 = vadd.f32 %v263, %v533
  %535 = vmatmul.f32.gmra.mxu0 %v306
  %v536 = vpop.f32.mrf.mxu0
  %v537 = vadd.f32 %v263, %v536
  %538 = vmatmul.f32.gmra.mxu0 %v309
  %v539 = vpop.f32.mrf.mxu0
  %v540 = vadd.f32 %v263, %v539
  %541 = vmatmul.f32.gmra.mxu0 %v312
  %v542 = vpop.f32.mrf.mxu0
  %v543 = vadd.f32 %v263, %v542
  %544 = vmatmul.f32.gmra.mxu0 %v315
  %v545 = vpop.f32.mrf.mxu0
  %v546 = vadd.f32 %v263, %v545
  %547 = vmatmul.f32.gmra.mxu0 %v318
  %v548 = vpop.f32.mrf.mxu0
  %v549 = vadd.f32 %v263, %v548
  %550 = vmatmul.f32.gmra.mxu0 %v321
  %v551 = vpop.f32.mrf.mxu0
  %v552 = vadd.f32 %v263, %v551
  %553 = vmatmul.f32.gmra.mxu0 %v324
  %v554 = vpop.f32.mrf.mxu0
  %v555 = vadd.f32 %v263, %v554
  %556 = vmatmul.f32.gmra.mxu0 %v327
  %v557 = vpop.f32.mrf.mxu0
  %v558 = vadd.f32 %v263, %v557
  %559 = vmatmul.f32.gmra.mxu0 %v330
  %v560 = vpop.f32.mrf.mxu0
  %v561 = vadd.f32 %v263, %v560
  %562 = vmatmul.f32.gmra.mxu0 %v333
  %v563 = vpop.f32.mrf.mxu0
  %v564 = vadd.f32 %v263, %v563
  %565 = vmatmul.f32.gmra.mxu0 %v336
  %v566 = vpop.f32.mrf.mxu0
  %v567 = vadd.f32 %v263, %v566
  %568 = vmatmul.f32.gmra.mxu0 %v339
  %v569 = vpop.f32.mrf.mxu0
  %v570 = vadd.f32 %v263, %v569
  %571 = vmatmul.f32.gmra.mxu0 %v342
  %v572 = vpop.f32.mrf.mxu0
  %v573 = vadd.f32 %v263, %v572
  %574 = vmatmul.f32.gmra.mxu0 %v345
  %v575 = vpop.f32.mrf.mxu0
  %v576 = vadd.f32 %v263, %v575
  %577 = vmatmul.f32.gmra.mxu0 %v348
  %v578 = vpop.f32.mrf.mxu0
  %v579 = vadd.f32 %v263, %v578
  %580 = vmatmul.f32.gmra.mxu0 %v351
  %v581 = vpop.f32.mrf.mxu0
  %v582 = vadd.f32 %v263, %v581
  %583 = vmatmul.f32.gmra.mxu0 %v354
  %v584 = vpop.f32.mrf.mxu0
  %v585 = vadd.f32 %v263, %v584
  %586 = vmatmul.f32.gmra.mxu0 %v357
  %v587 = vpop.f32.mrf.mxu0
  %v588 = vadd.f32 %v263, %v587
  %589 = vmatmul.f32.gmra.mxu0 %v360
  %v590 = vpop.f32.mrf.mxu0
  %v591 = vadd.f32 %v263, %v590
  %592 = vmatmul.f32.gmra.mxu0 %v363
  %v593 = vpop.f32.mrf.mxu0
  %v594 = vadd.f32 %v263, %v593
  %595 = vmatmul.f32.gmra.mxu0 %v366
  %v596 = vpop.f32.mrf.mxu0
  %v597 = vadd.f32 %v263, %v596
  %598 = vmatmul.f32.gmra.mxu0 %v369
  %v599 = vpop.f32.mrf.mxu0
  %600 = vmatmul.f32.gmra.mxu0 %v372
  %v601 = vpop.f32.mrf.mxu0
  %602 = vmatmul.f32.gmra.mxu0 %v375
  %v603 = vpop.f32.mrf.mxu0
  %604 = vmatmul.f32.gmra.mxu0 %v378
  %v605 = vpop.f32.mrf.mxu0
  %606 = vmatmul.f32.gmra.mxu0 %v381
  %v607 = vpop.f32.mrf.mxu0
  %v608 = vadd.f32 %v263, %v607
  %609 = vmatmul.f32.gmra.mxu0 %v384
  %v610 = vpop.f32.mrf.mxu0
  %v611 = vadd.f32 %v263, %v610
  %612 = vmatmul.f32.gmra.mxu0 %v387
  %v613 = vpop.f32.mrf.mxu0
  %v614 = vadd.f32 %v263, %v613
  %615 = vmatmul.f32.gmra.mxu0 %v390
  %v616 = vpop.f32.mrf.mxu0
  %v617 = vadd.f32 %v263, %v616
  %618 = vmatmul.f32.gmra.mxu0 %v393
  %v619 = vpop.f32.mrf.mxu0
  %v620 = vadd.f32 %v263, %v619
  %621 = vmatmul.f32.gmra.mxu0 %v396
  %v622 = vpop.f32.mrf.mxu0
  %v623 = vadd.f32 %v263, %v622
  %624 = vmatmul.f32.gmra.mxu0 %v399
  %v625 = vpop.f32.mrf.mxu0
  %v626 = vadd.f32 %v263, %v625
  %627 = vmatmul.f32.gmra.mxu0 %v402
  %v628 = vpop.f32.mrf.mxu0
  %v629 = vadd.f32 %v263, %v628
  %630 = vmatmul.f32.gmra.mxu0 %v405
  %v631 = vpop.f32.mrf.mxu0
  %v632 = vadd.f32 %v263, %v631
  %633 = vmatmul.f32.gmra.mxu0 %v408
  %v634 = vpop.f32.mrf.mxu0
  %v635 = vadd.f32 %v263, %v634
  %636 = vmatmul.f32.gmra.mxu0 %v411
  %v637 = vpop.f32.mrf.mxu0
  %v638 = vadd.f32 %v263, %v637
  %639 = vmatmul.f32.gmra.mxu0 %v414
  %v640 = vpop.f32.mrf.mxu0
  %v641 = vadd.f32 %v263, %v640
  %642 = vmatmul.f32.gmra.mxu0 %v417
  %v643 = vpop.f32.mrf.mxu0
  %v644 = vadd.f32 %v263, %v643
  %645 = vmatmul.f32.gmra.mxu0 %v420
  %v646 = vpop.f32.mrf.mxu0
  %v647 = vadd.f32 %v263, %v646
  %648 = vmatmul.f32.gmra.mxu0 %v423
  %v649 = vpop.f32.mrf.mxu0
  %v650 = vadd.f32 %v263, %v649
  %651 = vmatmul.f32.gmra.mxu0 %v426
  %v652 = vpop.f32.mrf.mxu0
  %v653 = vadd.f32 %v263, %v652
  %654 = vmatmul.f32.gmra.mxu0 %v429
  %v655 = vpop.f32.mrf.mxu0
  %v656 = vadd.f32 %v263, %v655
  %657 = vmatmul.f32.gmra.mxu0 %v432
  %v658 = vpop.f32.mrf.mxu0
  %v659 = vadd.f32 %v263, %v658
  %660 = vmatmul.f32.gmra.mxu0 %v435
  %v661 = vpop.f32.mrf.mxu0
  %v662 = vadd.f32 %v263, %v661
  %663 = vmatmul.f32.gmra.mxu0 %v438
  %v664 = vpop.f32.mrf.mxu0
  %v665 = vadd.f32 %v263, %v664
  %666 = vmatmul.f32.gmra.mxu0 %v441
  %v667 = vpop.f32.mrf.mxu0
  %v668 = vadd.f32 %v263, %v667
  %669 = vmatmul.f32.gmra.mxu0 %v444
  %v670 = vpop.f32.mrf.mxu0
  %v671 = vadd.f32 %v263, %v670
  %672 = vmatmul.f32.gmra.mxu0 %v447
  %v673 = vpop.f32.mrf.mxu0
  %v674 = vadd.f32 %v263, %v673
  %675 = vmatmul.f32.gmra.mxu0 %v450
  %v676 = vpop.f32.mrf.mxu0
  %v677 = vadd.f32 %v263, %v676
  %678 = vmatmul.f32.gmra.mxu0 %v453
  %v679 = vpop.f32.mrf.mxu0
  %v680 = vadd.f32 %v263, %v679
  %681 = vmatmul.f32.gmra.mxu0 %v456
  %v682 = vpop.f32.mrf.mxu0
  %v683 = vadd.f32 %v263, %v682
  %684 = vmatmul.f32.gmra.mxu0 %v459
  %v685 = vpop.f32.mrf.mxu0
  %v686 = vadd.f32 %v263, %v685
  %687 = vmatmul.f32.gmra.mxu0 %v462
  %v688 = vpop.f32.mrf.mxu0
  %v689 = vadd.f32 %v263, %v688
  %690 = vmatmul.f32.gmra.mxu0 %v465
  %v691 = vpop.f32.mrf.mxu0
  %v692 = vadd.f32 %v263, %v691
  %693 = vmatmul.f32.gmra.mxu0 %v468
  %v694 = vpop.f32.mrf.mxu0
  %v695 = vadd.f32 %v263, %v694
  %696 = vmatmul.f32.gmra.mxu0 %v471
  %v697 = vpop.f32.mrf.mxu0
  %v698 = vadd.f32 %v263, %v697
  %699 = vmatmul.f32.gmra.mxu0 %v474
  %v700 = vpop.f32.mrf.mxu0
  %v701 = vadd.f32 %v263, %v700
  %702 = vmatmul.f32.gmra.mxu0 %v477
  %v703 = vpop.f32.mrf.mxu0
  %704 = vmatmul.f32.gmra.mxu0 %v480
  %v705 = vpop.f32.mrf.mxu0
  %706 = vdwg.mxu0
  %v707 = vmax.f32 %v504, 0.0
  %v708 = vmax.f32 %v507, 0.0
  %v709 = vmax.f32 %v510, 0.0
  %v710 = vmax.f32 %v513, 0.0
  %v711 = vmax.f32 %v516, 0.0
  %v712 = vmax.f32 %v519, 0.0
  %v713 = vmax.f32 %v522, 0.0
  %v714 = vmax.f32 %v525, 0.0
  %v715 = vmax.f32 %v528, 0.0
  %v716 = vmax.f32 %v531, 0.0
  %v717 = vmax.f32 %v534, 0.0
  %v718 = vmax.f32 %v537, 0.0
  %v719 = vmax.f32 %v540, 0.0
  %v720 = vmax.f32 %v543, 0.0
  %v721 = vmax.f32 %v546, 0.0
  %v722 = vmax.f32 %v549, 0.0
  %v723 = vmax.f32 %v552, 0.0
  %v724 = vmax.f32 %v555, 0.0
  %v725 = vmax.f32 %v558, 0.0
  %v726 = vmax.f32 %v561, 0.0
  %v727 = vmax.f32 %v564, 0.0
  %v728 = vmax.f32 %v567, 0.0
  %v729 = vmax.f32 %v570, 0.0
  %v730 = vmax.f32 %v573, 0.0
  %v731 = vmax.f32 %v576, 0.0
  %v732 = vmax.f32 %v579, 0.0
  %v733 = vmax.f32 %v582, 0.0
  %v734 = vmax.f32 %v585, 0.0
  %v735 = vmax.f32 %v588, 0.0
  %v736 = vmax.f32 %v591, 0.0
  %v737 = vmax.f32 %v594, 0.0
  %v738 = vmax.f32 %v597, 0.0
  %v739 = vmax.f32 %v608, 0.0
  %v740 = vmax.f32 %v611, 0.0
  %v741 = vmax.f32 %v614, 0.0
  %v742 = vmax.f32 %v617, 0.0
  %v743 = vmax.f32 %v620, 0.0
  %v744 = vmax.f32 %v623, 0.0
  %v745 = vmax.f32 %v626, 0.0
  %v746 = vmax.f32 %v629, 0.0
  %v747 = vmax.f32 %v632, 0.0
  %v748 = vmax.f32 %v635, 0.0
  %v749 = vmax.f32 %v638, 0.0
  %v750 = vmax.f32 %v641, 0.0
  %v751 = vmax.f32 %v644, 0.0
  %v752 = vmax.f32 %v647, 0.0
  %v753 = vmax.f32 %v650, 0.0
  %v754 = vmax.f32 %v653, 0.0
  %v755 = vmax.f32 %v656, 0.0
  %v756 = vmax.f32 %v659, 0.0
  %v757 = vmax.f32 %v662, 0.0
  %v758 = vmax.f32 %v665, 0.0
  %v759 = vmax.f32 %v668, 0.0
  %v760 = vmax.f32 %v671, 0.0
  %v761 = vmax.f32 %v674, 0.0
  %v762 = vmax.f32 %v677, 0.0
  %v763 = vmax.f32 %v680, 0.0
  %v764 = vmax.f32 %v683, 0.0
  %v765 = vmax.f32 %v686, 0.0
  %v766 = vmax.f32 %v689, 0.0
  %v767 = vmax.f32 %v692, 0.0
  %v768 = vmax.f32 %v695, 0.0
  %v769 = vmax.f32 %v698, 0.0
  %v770 = vmax.f32 %v701, 0.0
  %vm771 = vcmask 523264
  %772 = vst.msk [vmem:[#allocation2 + $0x28] sm:$0xff] %vm771, %v707
  %773 = vst.msk [vmem:[#allocation2 + $0x30] sm:$0xff] %vm771, %v708
  %774 = vst.msk [vmem:[#allocation2 + $0x38] sm:$0xff] %vm771, %v709
  %775 = vst.msk [vmem:[#allocation2 + $0x40] sm:$0xff] %vm771, %v710
  %776 = vst.msk [vmem:[#allocation2 + $0x48] sm:$0xff] %vm771, %v711
  %777 = vst.msk [vmem:[#allocation2 + $0x50] sm:$0xff] %vm771, %v712
  %778 = vst.msk [vmem:[#allocation2 + $0x58] sm:$0xff] %vm771, %v713
  %779 = vst.msk [vmem:[#allocation2 + $0x60] sm:$0xff] %vm771, %v714
  %780 = vst.msk [vmem:[#allocation2 + $0x68] sm:$0xff] %vm771, %v715
  %781 = vst.msk [vmem:[#allocation2 + $0x70] sm:$0xff] %vm771, %v716
  %782 = vst.msk [vmem:[#allocation2 + $0x78] sm:$0xff] %vm771, %v717
  %783 = vst.msk [vmem:[#allocation2 + $0x80] sm:$0xff] %vm771, %v718
  %784 = vst.msk [vmem:[#allocation2 + $0x88] sm:$0xff] %vm771, %v719
  %785 = vst.msk [vmem:[#allocation2 + $0x90] sm:$0xff] %vm771, %v720
  %786 = vst.msk [vmem:[#allocation2 + $0x98] sm:$0xff] %vm771, %v721
  %787 = vst.msk [vmem:[#allocation2 + $0xa0] sm:$0xff] %vm771, %v722
  %788 = vst.msk [vmem:[#allocation2 + $0xa8] sm:$0xff] %vm771, %v723
  %789 = vst.msk [vmem:[#allocation2 + $0xb0] sm:$0xff] %vm771, %v724
  %790 = vst.msk [vmem:[#allocation2 + $0xb8] sm:$0xff] %vm771, %v725
  %791 = vst.msk [vmem:[#allocation2 + $0xc0] sm:$0xff] %vm771, %v726
  %792 = vst.msk [vmem:[#allocation2 + $0xc8] sm:$0xff] %vm771, %v727
  %793 = vst.msk [vmem:[#allocation2 + $0xd0] sm:$0xff] %vm771, %v728
  %794 = vst.msk [vmem:[#allocation2 + $0xd8] sm:$0xff] %vm771, %v729
  %795 = vst.msk [vmem:[#allocation2 + $0xe0] sm:$0xff] %vm771, %v730
  %796 = vst.msk [vmem:[#allocation2 + $0xe8] sm:$0xff] %vm771, %v731
  %797 = vst.msk [vmem:[#allocation2 + $0xf0] sm:$0xff] %vm771, %v732
  %798 = vst.msk [vmem:[#allocation2 + $0xf8] sm:$0xff] %vm771, %v733
  %799 = vst.msk [vmem:[#allocation2 + $0x100] sm:$0xff] %vm771, %v734
  %800 = vst.msk [vmem:[#allocation2 + $0x108] sm:$0xff] %vm771, %v735
  %801 = vst.msk [vmem:[#allocation2 + $0x110] sm:$0xff] %vm771, %v736
  %802 = vst.msk [vmem:[#allocation2 + $0x118] sm:$0xff] %vm771, %v737
  %803 = vst.msk [vmem:[#allocation2 + $0x120] sm:$0xff] %vm771, %v738
  %836 = vrot.lane.b32.xlu0 %v707, 64
  %v837 = vpop.permute.xlu0 %836
  %838 = vrot.lane.b32.xlu0 %v708, 64
  %v839 = vpop.permute.xlu0 %838
  %840 = vrot.lane.b32.xlu0 %v709, 64
  %v841 = vpop.permute.xlu0 %840
  %842 = vrot.lane.b32.xlu0 %v710, 64
  %v843 = vpop.permute.xlu0 %842
  %844 = vrot.lane.b32.xlu0 %v711, 64
  %v845 = vpop.permute.xlu0 %844
  %846 = vrot.lane.b32.xlu0 %v712, 64
  %v847 = vpop.permute.xlu0 %846
  %848 = vrot.lane.b32.xlu0 %v713, 64
  %v849 = vpop.permute.xlu0 %848
  %850 = vrot.lane.b32.xlu0 %v714, 64
  %v851 = vpop.permute.xlu0 %850
  %852 = vrot.lane.b32.xlu0 %v715, 64
  %v853 = vpop.permute.xlu0 %852
  %854 = vrot.lane.b32.xlu0 %v716, 64
  %v855 = vpop.permute.xlu0 %854
  %856 = vrot.lane.b32.xlu0 %v717, 64
  %v857 = vpop.permute.xlu0 %856
  %858 = vrot.lane.b32.xlu0 %v718, 64
  %v859 = vpop.permute.xlu0 %858
  %860 = vrot.lane.b32.xlu0 %v719, 64
  %v861 = vpop.permute.xlu0 %860
  %862 = vrot.lane.b32.xlu0 %v720, 64
  %v863 = vpop.permute.xlu0 %862
  %864 = vrot.lane.b32.xlu0 %v721, 64
  %v865 = vpop.permute.xlu0 %864
  %866 = vrot.lane.b32.xlu0 %v722, 64
  %v867 = vpop.permute.xlu0 %866
  %868 = vrot.lane.b32.xlu0 %v723, 64
  %v869 = vpop.permute.xlu0 %868
  %870 = vrot.lane.b32.xlu0 %v724, 64
  %v871 = vpop.permute.xlu0 %870
  %872 = vrot.lane.b32.xlu0 %v725, 64
  %v873 = vpop.permute.xlu0 %872
  %874 = vrot.lane.b32.xlu0 %v726, 64
  %v875 = vpop.permute.xlu0 %874
  %876 = vrot.lane.b32.xlu0 %v727, 64
  %v877 = vpop.permute.xlu0 %876
  %878 = vrot.lane.b32.xlu0 %v728, 64
  %v879 = vpop.permute.xlu0 %878
  %880 = vrot.lane.b32.xlu0 %v729, 64
  %v881 = vpop.permute.xlu0 %880
  %882 = vrot.lane.b32.xlu0 %v730, 64
  %v883 = vpop.permute.xlu0 %882
  %884 = vrot.lane.b32.xlu0 %v731, 64
  %v885 = vpop.permute.xlu0 %884
  %886 = vrot.lane.b32.xlu0 %v732, 64
  %v887 = vpop.permute.xlu0 %886
  %888 = vrot.lane.b32.xlu0 %v733, 64
  %v889 = vpop.permute.xlu0 %888
  %890 = vrot.lane.b32.xlu0 %v734, 64
  %v891 = vpop.permute.xlu0 %890
  %892 = vrot.lane.b32.xlu0 %v735, 64
  %v893 = vpop.permute.xlu0 %892
  %894 = vrot.lane.b32.xlu0 %v736, 64
  %v895 = vpop.permute.xlu0 %894
  %896 = vrot.lane.b32.xlu0 %v737, 64
  %v897 = vpop.permute.xlu0 %896
  %898 = vrot.lane.b32.xlu0 %v738, 64
  %v899 = vpop.permute.xlu0 %898
  %vm932 = vcmask 1048064
  %933 = vst.msk [vmem:[#allocation2 + $0x27] sm:$0xff] %vm932, %v837
  %934 = vst.msk [vmem:[#allocation2 + $0x2f] sm:$0xff] %vm932, %v839
  %935 = vst.msk [vmem:[#allocation2 + $0x37] sm:$0xff] %vm932, %v841
  %936 = vst.msk [vmem:[#allocation2 + $0x3f] sm:$0xff] %vm932, %v843
  %937 = vst.msk [vmem:[#allocation2 + $0x47] sm:$0xff] %vm932, %v845
  %938 = vst.msk [vmem:[#allocation2 + $0x4f] sm:$0xff] %vm932, %v847
  %939 = vst.msk [vmem:[#allocation2 + $0x57] sm:$0xff] %vm932, %v849
  %940 = vst.msk [vmem:[#allocation2 + $0x5f] sm:$0xff] %vm932, %v851
  %941 = vst.msk [vmem:[#allocation2 + $0x67] sm:$0xff] %vm932, %v853
  %942 = vst.msk [vmem:[#allocation2 + $0x6f] sm:$0xff] %vm932, %v855
  %943 = vst.msk [vmem:[#allocation2 + $0x77] sm:$0xff] %vm932, %v857
  %944 = vst.msk [vmem:[#allocation2 + $0x7f] sm:$0xff] %vm932, %v859
  %945 = vst.msk [vmem:[#allocation2 + $0x87] sm:$0xff] %vm932, %v861
  %946 = vst.msk [vmem:[#allocation2 + $0x8f] sm:$0xff] %vm932, %v863
  %947 = vst.msk [vmem:[#allocation2 + $0x97] sm:$0xff] %vm932, %v865
  %948 = vst.msk [vmem:[#allocation2 + $0x9f] sm:$0xff] %vm932, %v867
  %949 = vst.msk [vmem:[#allocation2 + $0xa7] sm:$0xff] %vm932, %v869
  %950 = vst.msk [vmem:[#allocation2 + $0xaf] sm:$0xff] %vm932, %v871
  %951 = vst.msk [vmem:[#allocation2 + $0xb7] sm:$0xff] %vm932, %v873
  %952 = vst.msk [vmem:[#allocation2 + $0xbf] sm:$0xff] %vm932, %v875
  %953 = vst.msk [vmem:[#allocation2 + $0xc7] sm:$0xff] %vm932, %v877
  %954 = vst.msk [vmem:[#allocation2 + $0xcf] sm:$0xff] %vm932, %v879
  %955 = vst.msk [vmem:[#allocation2 + $0xd7] sm:$0xff] %vm932, %v881
  %956 = vst.msk [vmem:[#allocation2 + $0xdf] sm:$0xff] %vm932, %v883
  %957 = vst.msk [vmem:[#allocation2 + $0xe7] sm:$0xff] %vm932, %v885
  %958 = vst.msk [vmem:[#allocation2 + $0xef] sm:$0xff] %vm932, %v887
  %959 = vst.msk [vmem:[#allocation2 + $0xf7] sm:$0xff] %vm932, %v889
  %960 = vst.msk [vmem:[#allocation2 + $0xff] sm:$0xff] %vm932, %v891
  %961 = vst.msk [vmem:[#allocation2 + $0x107] sm:$0xff] %vm932, %v893
  %962 = vst.msk [vmem:[#allocation2 + $0x10f] sm:$0xff] %vm932, %v895
  %963 = vst.msk [vmem:[#allocation2 + $0x117] sm:$0xff] %vm932, %v897
  %964 = vst.msk [vmem:[#allocation2 + $0x11f] sm:$0xff] %vm932, %v899
  %965 = vst.msk [vmem:[#allocation2 + $0x148] sm:$0xff] %vm771, %v739
  %966 = vst.msk [vmem:[#allocation2 + $0x150] sm:$0xff] %vm771, %v740
  %967 = vst.msk [vmem:[#allocation2 + $0x158] sm:$0xff] %vm771, %v741
  %968 = vst.msk [vmem:[#allocation2 + $0x160] sm:$0xff] %vm771, %v742
  %969 = vst.msk [vmem:[#allocation2 + $0x168] sm:$0xff] %vm771, %v743
  %970 = vst.msk [vmem:[#allocation2 + $0x170] sm:$0xff] %vm771, %v744
  %971 = vst.msk [vmem:[#allocation2 + $0x178] sm:$0xff] %vm771, %v745
  %972 = vst.msk [vmem:[#allocation2 + $0x180] sm:$0xff] %vm771, %v746
  %973 = vst.msk [vmem:[#allocation2 + $0x188] sm:$0xff] %vm771, %v747
  %974 = vst.msk [vmem:[#allocation2 + $0x190] sm:$0xff] %vm771, %v748
  %975 = vst.msk [vmem:[#allocation2 + $0x198] sm:$0xff] %vm771, %v749
  %976 = vst.msk [vmem:[#allocation2 + $0x1a0] sm:$0xff] %vm771, %v750
  %977 = vst.msk [vmem:[#allocation2 + $0x1a8] sm:$0xff] %vm771, %v751
  %978 = vst.msk [vmem:[#allocation2 + $0x1b0] sm:$0xff] %vm771, %v752
  %979 = vst.msk [vmem:[#allocation2 + $0x1b8] sm:$0xff] %vm771, %v753
  %980 = vst.msk [vmem:[#allocation2 + $0x1c0] sm:$0xff] %vm771, %v754
  %981 = vst.msk [vmem:[#allocation2 + $0x1c8] sm:$0xff] %vm771, %v755
  %982 = vst.msk [vmem:[#allocation2 + $0x1d0] sm:$0xff] %vm771, %v756
  %983 = vst.msk [vmem:[#allocation2 + $0x1d8] sm:$0xff] %vm771, %v757
  %984 = vst.msk [vmem:[#allocation2 + $0x1e0] sm:$0xff] %vm771, %v758
  %985 = vst.msk [vmem:[#allocation2 + $0x1e8] sm:$0xff] %vm771, %v759
  %986 = vst.msk [vmem:[#allocation2 + $0x1f0] sm:$0xff] %vm771, %v760
  %987 = vst.msk [vmem:[#allocation2 + $0x1f8] sm:$0xff] %vm771, %v761
  %988 = vst.msk [vmem:[#allocation2 + $0x200] sm:$0xff] %vm771, %v762
  %989 = vst.msk [vmem:[#allocation2 + $0x208] sm:$0xff] %vm771, %v763
  %990 = vst.msk [vmem:[#allocation2 + $0x210] sm:$0xff] %vm771, %v764
  %991 = vst.msk [vmem:[#allocation2 + $0x218] sm:$0xff] %vm771, %v765
  %992 = vst.msk [vmem:[#allocation2 + $0x220] sm:$0xff] %vm771, %v766
  %993 = vst.msk [vmem:[#allocation2 + $0x228] sm:$0xff] %vm771, %v767
  %994 = vst.msk [vmem:[#allocation2 + $0x230] sm:$0xff] %vm771, %v768
  %995 = vst.msk [vmem:[#allocation2 + $0x238] sm:$0xff] %vm771, %v769
  %996 = vst.msk [vmem:[#allocation2 + $0x240] sm:$0xff] %vm771, %v770
  %1029 = vrot.lane.b32.xlu0 %v739, 64
  %v1030 = vpop.permute.xlu0 %1029
  %1031 = vrot.lane.b32.xlu0 %v740, 64
  %v1032 = vpop.permute.xlu0 %1031
  %1033 = vrot.lane.b32.xlu0 %v741, 64
  %v1034 = vpop.permute.xlu0 %1033
  %1035 = vrot.lane.b32.xlu0 %v742, 64
  %v1036 = vpop.permute.xlu0 %1035
  %1037 = vrot.lane.b32.xlu0 %v743, 64
  %v1038 = vpop.permute.xlu0 %1037
  %1039 = vrot.lane.b32.xlu0 %v744, 64
  %v1040 = vpop.permute.xlu0 %1039
  %1041 = vrot.lane.b32.xlu0 %v745, 64
  %v1042 = vpop.permute.xlu0 %1041
  %1043 = vrot.lane.b32.xlu0 %v746, 64
  %v1044 = vpop.permute.xlu0 %1043
  %1045 = vrot.lane.b32.xlu0 %v747, 64
  %v1046 = vpop.permute.xlu0 %1045
  %1047 = vrot.lane.b32.xlu0 %v748, 64
  %v1048 = vpop.permute.xlu0 %1047
  %1049 = vrot.lane.b32.xlu0 %v749, 64
  %v1050 = vpop.permute.xlu0 %1049
  %1051 = vrot.lane.b32.xlu0 %v750, 64
  %v1052 = vpop.permute.xlu0 %1051
  %1053 = vrot.lane.b32.xlu0 %v751, 64
  %v1054 = vpop.permute.xlu0 %1053
  %1055 = vrot.lane.b32.xlu0 %v752, 64
  %v1056 = vpop.permute.xlu0 %1055
  %1057 = vrot.lane.b32.xlu0 %v753, 64
  %v1058 = vpop.permute.xlu0 %1057
  %1059 = vrot.lane.b32.xlu0 %v754, 64
  %v1060 = vpop.permute.xlu0 %1059
  %1061 = vrot.lane.b32.xlu0 %v755, 64
  %v1062 = vpop.permute.xlu0 %1061
  %1063 = vrot.lane.b32.xlu0 %v756, 64
  %v1064 = vpop.permute.xlu0 %1063
  %1065 = vrot.lane.b32.xlu0 %v757, 64
  %v1066 = vpop.permute.xlu0 %1065
  %1067 = vrot.lane.b32.xlu0 %v758, 64
  %v1068 = vpop.permute.xlu0 %1067
  %1069 = vrot.lane.b32.xlu0 %v759, 64
  %v1070 = vpop.permute.xlu0 %1069
  %1071 = vrot.lane.b32.xlu0 %v760, 64
  %v1072 = vpop.permute.xlu0 %1071
  %1073 = vrot.lane.b32.xlu0 %v761, 64
  %v1074 = vpop.permute.xlu0 %1073
  %1075 = vrot.lane.b32.xlu0 %v762, 64
  %v1076 = vpop.permute.xlu0 %1075
  %1077 = vrot.lane.b32.xlu0 %v763, 64
  %v1078 = vpop.permute.xlu0 %1077
  %1079 = vrot.lane.b32.xlu0 %v764, 64
  %v1080 = vpop.permute.xlu0 %1079
  %1081 = vrot.lane.b32.xlu0 %v765, 64
  %v1082 = vpop.permute.xlu0 %1081
  %1083 = vrot.lane.b32.xlu0 %v766, 64
  %v1084 = vpop.permute.xlu0 %1083
  %1085 = vrot.lane.b32.xlu0 %v767, 64
  %v1086 = vpop.permute.xlu0 %1085
  %1087 = vrot.lane.b32.xlu0 %v768, 64
  %v1088 = vpop.permute.xlu0 %1087
  %1089 = vrot.lane.b32.xlu0 %v769, 64
  %v1090 = vpop.permute.xlu0 %1089
  %1091 = vrot.lane.b32.xlu0 %v770, 64
  %v1092 = vpop.permute.xlu0 %1091
  %1125 = vst.msk [vmem:[#allocation2 + $0x147] sm:$0xff] %vm932, %v1030
  %1126 = vst.msk [vmem:[#allocation2 + $0x14f] sm:$0xff] %vm932, %v1032
  %1127 = vst.msk [vmem:[#allocation2 + $0x157] sm:$0xff] %vm932, %v1034
  %1128 = vst.msk [vmem:[#allocation2 + $0x15f] sm:$0xff] %vm932, %v1036
  %1129 = vst.msk [vmem:[#allocation2 + $0x167] sm:$0xff] %vm932, %v1038
  %1130 = vst.msk [vmem:[#allocation2 + $0x16f] sm:$0xff] %vm932, %v1040
  %1131 = vst.msk [vmem:[#allocation2 + $0x177] sm:$0xff] %vm932, %v1042
  %1132 = vst.msk [vmem:[#allocation2 + $0x17f] sm:$0xff] %vm932, %v1044
  %1133 = vst.msk [vmem:[#allocation2 + $0x187] sm:$0xff] %vm932, %v1046
  %1134 = vst.msk [vmem:[#allocation2 + $0x18f] sm:$0xff] %vm932, %v1048
  %1135 = vst.msk [vmem:[#allocation2 + $0x197] sm:$0xff] %vm932, %v1050
  %1136 = vst.msk [vmem:[#allocation2 + $0x19f] sm:$0xff] %vm932, %v1052
  %1137 = vst.msk [vmem:[#allocation2 + $0x1a7] sm:$0xff] %vm932, %v1054
  %1138 = vst.msk [vmem:[#allocation2 + $0x1af] sm:$0xff] %vm932, %v1056
  %1139 = vst.msk [vmem:[#allocation2 + $0x1b7] sm:$0xff] %vm932, %v1058
  %1140 = vst.msk [vmem:[#allocation2 + $0x1bf] sm:$0xff] %vm932, %v1060
  %1141 = vst.msk [vmem:[#allocation2 + $0x1c7] sm:$0xff] %vm932, %v1062
  %1142 = vst.msk [vmem:[#allocation2 + $0x1cf] sm:$0xff] %vm932, %v1064
  %1143 = vst.msk [vmem:[#allocation2 + $0x1d7] sm:$0xff] %vm932, %v1066
  %1144 = vst.msk [vmem:[#allocation2 + $0x1df] sm:$0xff] %vm932, %v1068
  %1145 = vst.msk [vmem:[#allocation2 + $0x1e7] sm:$0xff] %vm932, %v1070
  %1146 = vst.msk [vmem:[#allocation2 + $0x1ef] sm:$0xff] %vm932, %v1072
  %1147 = vst.msk [vmem:[#allocation2 + $0x1f7] sm:$0xff] %vm932, %v1074
  %1148 = vst.msk [vmem:[#allocation2 + $0x1ff] sm:$0xff] %vm932, %v1076
  %1149 = vst.msk [vmem:[#allocation2 + $0x207] sm:$0xff] %vm932, %v1078
  %1150 = vst.msk [vmem:[#allocation2 + $0x20f] sm:$0xff] %vm932, %v1080
  %1151 = vst.msk [vmem:[#allocation2 + $0x217] sm:$0xff] %vm932, %v1082
  %1152 = vst.msk [vmem:[#allocation2 + $0x21f] sm:$0xff] %vm932, %v1084
  %1153 = vst.msk [vmem:[#allocation2 + $0x227] sm:$0xff] %vm932, %v1086
  %1154 = vst.msk [vmem:[#allocation2 + $0x22f] sm:$0xff] %vm932, %v1088
  %1155 = vst.msk [vmem:[#allocation2 + $0x237] sm:$0xff] %vm932, %v1090
  %1156 = vst.msk [vmem:[#allocation2 + $0x23f] sm:$0xff] %vm932, %v1092
  %v1157 = vld [vmem:[#allocation2 + $0x8] sm:$0xff]
  %v1158 = vld [vmem:[#allocation2 + $0x10] sm:$0xff]
  %v1159 = vld [vmem:[#allocation2 + $0x18] sm:$0xff]
  %v1160 = vld [vmem:[#allocation2 + $0x20] sm:$0xff]
  %v1161 = vld [vmem:[#allocation2 + $0x28] sm:$0xff]
  %v1162 = vld [vmem:[#allocation2 + $0x30] sm:$0xff]
  %v1163 = vld [vmem:[#allocation2 + $0x38] sm:$0xff]
  %v1164 = vld [vmem:[#allocation2 + $0x40] sm:$0xff]
  %v1165 = vld [vmem:[#allocation2 + $0x48] sm:$0xff]
  %v1166 = vld [vmem:[#allocation2 + $0x50] sm:$0xff]
  %v1167 = vld [vmem:[#allocation2 + $0x58] sm:$0xff]
  %v1168 = vld [vmem:[#allocation2 + $0x60] sm:$0xff]
  %v1169 = vld [vmem:[#allocation2 + $0x68] sm:$0xff]
  %v1170 = vld [vmem:[#allocation2 + $0x70] sm:$0xff]
  %v1171 = vld [vmem:[#allocation2 + $0x78] sm:$0xff]
  %v1172 = vld [vmem:[#allocation2 + $0x80] sm:$0xff]
  %v1173 = vld [vmem:[#allocation2 + $0x88] sm:$0xff]
  %v1174 = vld [vmem:[#allocation2 + $0x90] sm:$0xff]
  %v1175 = vld [vmem:[#allocation2 + $0x98] sm:$0xff]
  %v1176 = vld [vmem:[#allocation2 + $0xa0] sm:$0xff]
  %v1177 = vld [vmem:[#allocation2 + $0xa8] sm:$0xff]
  %v1178 = vld [vmem:[#allocation2 + $0xb0] sm:$0xff]
  %v1179 = vld [vmem:[#allocation2 + $0xb8] sm:$0xff]
  %v1180 = vld [vmem:[#allocation2 + $0xc0] sm:$0xff]
  %v1181 = vld [vmem:[#allocation2 + $0xc8] sm:$0xff]
  %v1182 = vld [vmem:[#allocation2 + $0xd0] sm:$0xff]
  %v1183 = vld [vmem:[#allocation2 + $0xd8] sm:$0xff]
  %v1184 = vld [vmem:[#allocation2 + $0xe0] sm:$0xff]
  %v1185 = vld [vmem:[#allocation2 + $0xe8] sm:$0xff]
  %v1186 = vld [vmem:[#allocation2 + $0xf0] sm:$0xff]
  %v1187 = vld [vmem:[#allocation2 + $0xf8] sm:$0xff]
  %v1188 = vld [vmem:[#allocation2 + $0x100] sm:$0xff]
  %v1189 = vld [vmem:[#allocation2 + $0x108] sm:$0xff]
  %v1190 = vld [vmem:[#allocation2 + $0x110] sm:$0xff]
  %v1191 = vld [vmem:[#allocation2 + $0x118] sm:$0xff]
  %v1192 = vld [vmem:[#allocation2 + $0x120] sm:$0xff]
  %v1193 = vld [vmem:[#allocation2 + $0x128] sm:$0xff]
  %v1194 = vld [vmem:[#allocation2 + $0x130] sm:$0xff]
  %v1195 = vld [vmem:[#allocation2 + $0x138] sm:$0xff]
  %v1196 = vld [vmem:[#allocation2 + $0x140] sm:$0xff]
  %v1197 = vld [vmem:[#allocation2 + $0x148] sm:$0xff]
  %v1198 = vld [vmem:[#allocation2 + $0x150] sm:$0xff]
  %v1199 = vld [vmem:[#allocation2 + $0x158] sm:$0xff]
  %v1200 = vld [vmem:[#allocation2 + $0x160] sm:$0xff]
  %v1201 = vld [vmem:[#allocation2 + $0x168] sm:$0xff]
  %v1202 = vld [vmem:[#allocation2 + $0x170] sm:$0xff]
  %v1203 = vld [vmem:[#allocation2 + $0x178] sm:$0xff]
  %v1204 = vld [vmem:[#allocation2 + $0x180] sm:$0xff]
  %v1205 = vld [vmem:[#allocation2 + $0x188] sm:$0xff]
  %v1206 = vld [vmem:[#allocation2 + $0x190] sm:$0xff]
  %v1207 = vld [vmem:[#allocation2 + $0x198] sm:$0xff]
  %v1208 = vld [vmem:[#allocation2 + $0x1a0] sm:$0xff]
  %v1209 = vld [vmem:[#allocation2 + $0x1a8] sm:$0xff]
  %v1210 = vld [vmem:[#allocation2 + $0x1b0] sm:$0xff]
  %v1211 = vld [vmem:[#allocation2 + $0x1b8] sm:$0xff]
  %v1212 = vld [vmem:[#allocation2 + $0x1c0] sm:$0xff]
  %v1213 = vld [vmem:[#allocation2 + $0x1c8] sm:$0xff]
  %v1214 = vld [vmem:[#allocation2 + $0x1d0] sm:$0xff]
  %v1215 = vld [vmem:[#allocation2 + $0x1d8] sm:$0xff]
  %v1216 = vld [vmem:[#allocation2 + $0x1e0] sm:$0xff]
  %v1217 = vld [vmem:[#allocation2 + $0x1e8] sm:$0xff]
  %v1218 = vld [vmem:[#allocation2 + $0x1f0] sm:$0xff]
  %v1219 = vld [vmem:[#allocation2 + $0x1f8] sm:$0xff]
  %v1220 = vld [vmem:[#allocation2 + $0x200] sm:$0xff]
  %v1221 = vld [vmem:[#allocation2 + $0x208] sm:$0xff]
  %v1222 = vld [vmem:[#allocation2 + $0x210] sm:$0xff]
  %v1223 = vld [vmem:[#allocation2 + $0x218] sm:$0xff]
  %v1224 = vld [vmem:[#allocation2 + $0x220] sm:$0xff]
  %v1225 = vld [vmem:[#allocation2 + $0x228] sm:$0xff]
  %v1226 = vld [vmem:[#allocation2 + $0x230] sm:$0xff]
  %v1227 = vld [vmem:[#allocation2 + $0x238] sm:$0xff]
  %v1228 = vld [vmem:[#allocation2 + $0x240] sm:$0xff]
  %v1229 = vld [vmem:[%s3] sm:$0xff]
  %v1230 = vld [vmem:[%s3 + $0x8] sm:$0xff]
  %v1231 = vld [vmem:[%s3 + $0x10] sm:$0xff]
  %v1232 = vld [vmem:[%s3 + $0x18] sm:$0xff]
  %v1233 = vld [vmem:[%s3 + $0x20] sm:$0xff]
  %v1234 = vld [vmem:[%s3 + $0x28] sm:$0xff]
  %v1235 = vld [vmem:[%s3 + $0x30] sm:$0xff]
  %v1236 = vld [vmem:[%s3 + $0x38] sm:$0xff]
  %v1237 = vld [vmem:[%s3 + $0x40] sm:$0xff]
  %v1238 = vld [vmem:[%s3 + $0x48] sm:$0xff]
  %v1239 = vld [vmem:[%s3 + $0x50] sm:$0xff]
  %v1240 = vld [vmem:[%s3 + $0x58] sm:$0xff]
  %v1241 = vld [vmem:[%s3 + $0x60] sm:$0xff]
  %v1242 = vld [vmem:[%s3 + $0x68] sm:$0xff]
  %v1243 = vld [vmem:[%s3 + $0x70] sm:$0xff]
  %v1244 = vld [vmem:[%s3 + $0x78] sm:$0xff]
  %v1245 = vld [vmem:[#allocation2 + $0x248] sm:$0xff]
  %v1246 = vld [vmem:[#allocation2 + $0x250] sm:$0xff]
  %s1247 = scalar_lea.vmem %s3, 128
  %v1248 = vld [vmem:[%s1247] sm:$0xff]
  %v1249 = vld [vmem:[%s1247 + $0x8] sm:$0xff]
  %v1250 = vld [vmem:[%s1247 + $0x10] sm:$0xff]
  %v1251 = vld [vmem:[%s1247 + $0x18] sm:$0xff]
  %v1252 = vld [vmem:[%s1247 + $0x20] sm:$0xff]
  %v1253 = vld [vmem:[%s1247 + $0x28] sm:$0xff]
  %v1254 = vld [vmem:[%s1247 + $0x30] sm:$0xff]
  %v1255 = vld [vmem:[%s1247 + $0x38] sm:$0xff]
  %v1256 = vld [vmem:[%s1247 + $0x40] sm:$0xff]
  %v1257 = vld [vmem:[%s1247 + $0x48] sm:$0xff]
  %v1258 = vld [vmem:[%s1247 + $0x50] sm:$0xff]
  %v1259 = vld [vmem:[%s1247 + $0x58] sm:$0xff]
  %v1260 = vld [vmem:[%s1247 + $0x60] sm:$0xff]
  %v1261 = vld [vmem:[%s1247 + $0x68] sm:$0xff]
  %v1262 = vld [vmem:[%s1247 + $0x70] sm:$0xff]
  %v1263 = vld [vmem:[%s1247 + $0x78] sm:$0xff]
  %1264 = vmatpush.msra.mxu0 %v1263
  %1265 = vmatpush.msra.mxu0 %v1262
  %1266 = vmatpush.msra.mxu0 %v1261
  %1267 = vmatpush.msra.mxu0 %v1260
  %1268 = vmatpush.msra.mxu0 %v1259
  %1269 = vmatpush.msra.mxu0 %v1258
  %1270 = vmatpush.msra.mxu0 %v1257
  %1271 = vmatpush.msra.mxu0 %v1256
  %1272 = vmatpush.msra.mxu0 %v1255
  %1273 = vmatpush.msra.mxu0 %v1254
  %1274 = vmatpush.msra.mxu0 %v1253
  %1275 = vmatpush.msra.mxu0 %v1252
  %1276 = vmatpush.msra.mxu0 %v1251
  %1277 = vmatpush.msra.mxu0 %v1250
  %1278 = vmatpush.msra.mxu0 %v1249
  %1279 = vmatpush.msra.mxu0 %v1248
  %1280 = vmatmul.f32.gmra.mxu0 %v1159
  %v1281 = vpop.f32.mrf.mxu0
  %1282 = vmatmul.f32.gmra.mxu0 %v1160
  %v1283 = vpop.f32.mrf.mxu0
  %1284 = vmatmul.f32.gmra.mxu0 %v1161
  %v1285 = vpop.f32.mrf.mxu0
  %v1286 = vadd.f32 0.0, %v1285
  %1287 = vmatmul.f32.gmra.mxu0 %v1162
  %v1288 = vpop.f32.mrf.mxu0
  %v1289 = vadd.f32 0.0, %v1288
  %1290 = vmatmul.f32.gmra.mxu0 %v1163
  %v1291 = vpop.f32.mrf.mxu0
  %v1292 = vadd.f32 0.0, %v1291
  %1293 = vmatmul.f32.gmra.mxu0 %v1164
  %v1294 = vpop.f32.mrf.mxu0
  %v1295 = vadd.f32 0.0, %v1294
  %1296 = vmatmul.f32.gmra.mxu0 %v1165
  %v1297 = vpop.f32.mrf.mxu0
  %v1298 = vadd.f32 0.0, %v1297
  %1299 = vmatmul.f32.gmra.mxu0 %v1166
  %v1300 = vpop.f32.mrf.mxu0
  %v1301 = vadd.f32 0.0, %v1300
  %1302 = vmatmul.f32.gmra.mxu0 %v1167
  %v1303 = vpop.f32.mrf.mxu0
  %v1304 = vadd.f32 0.0, %v1303
  %1305 = vmatmul.f32.gmra.mxu0 %v1168
  %v1306 = vpop.f32.mrf.mxu0
  %v1307 = vadd.f32 0.0, %v1306
  %1308 = vmatmul.f32.gmra.mxu0 %v1169
  %v1309 = vpop.f32.mrf.mxu0
  %v1310 = vadd.f32 0.0, %v1309
  %1311 = vmatmul.f32.gmra.mxu0 %v1170
  %v1312 = vpop.f32.mrf.mxu0
  %v1313 = vadd.f32 0.0, %v1312
  %1314 = vmatmul.f32.gmra.mxu0 %v1171
  %v1315 = vpop.f32.mrf.mxu0
  %v1316 = vadd.f32 0.0, %v1315
  %1317 = vmatmul.f32.gmra.mxu0 %v1172
  %v1318 = vpop.f32.mrf.mxu0
  %v1319 = vadd.f32 0.0, %v1318
  %1320 = vmatmul.f32.gmra.mxu0 %v1173
  %v1321 = vpop.f32.mrf.mxu0
  %v1322 = vadd.f32 0.0, %v1321
  %1323 = vmatmul.f32.gmra.mxu0 %v1174
  %v1324 = vpop.f32.mrf.mxu0
  %v1325 = vadd.f32 0.0, %v1324
  %1326 = vmatmul.f32.gmra.mxu0 %v1175
  %v1327 = vpop.f32.mrf.mxu0
  %v1328 = vadd.f32 0.0, %v1327
  %1329 = vmatmul.f32.gmra.mxu0 %v1176
  %v1330 = vpop.f32.mrf.mxu0
  %v1331 = vadd.f32 0.0, %v1330
  %1332 = vmatmul.f32.gmra.mxu0 %v1177
  %v1333 = vpop.f32.mrf.mxu0
  %v1334 = vadd.f32 0.0, %v1333
  %1335 = vmatmul.f32.gmra.mxu0 %v1178
  %v1336 = vpop.f32.mrf.mxu0
  %v1337 = vadd.f32 0.0, %v1336
  %1338 = vmatmul.f32.gmra.mxu0 %v1179
  %v1339 = vpop.f32.mrf.mxu0
  %v1340 = vadd.f32 0.0, %v1339
  %1341 = vmatmul.f32.gmra.mxu0 %v1180
  %v1342 = vpop.f32.mrf.mxu0
  %v1343 = vadd.f32 0.0, %v1342
  %1344 = vmatmul.f32.gmra.mxu0 %v1181
  %v1345 = vpop.f32.mrf.mxu0
  %v1346 = vadd.f32 0.0, %v1345
  %1347 = vmatmul.f32.gmra.mxu0 %v1182
  %v1348 = vpop.f32.mrf.mxu0
  %v1349 = vadd.f32 0.0, %v1348
  %1350 = vmatmul.f32.gmra.mxu0 %v1183
  %v1351 = vpop.f32.mrf.mxu0
  %v1352 = vadd.f32 0.0, %v1351
  %1353 = vmatmul.f32.gmra.mxu0 %v1184
  %v1354 = vpop.f32.mrf.mxu0
  %v1355 = vadd.f32 0.0, %v1354
  %1356 = vmatmul.f32.gmra.mxu0 %v1185
  %v1357 = vpop.f32.mrf.mxu0
  %v1358 = vadd.f32 0.0, %v1357
  %1359 = vmatmul.f32.gmra.mxu0 %v1186
  %v1360 = vpop.f32.mrf.mxu0
  %v1361 = vadd.f32 0.0, %v1360
  %1362 = vmatmul.f32.gmra.mxu0 %v1187
  %v1363 = vpop.f32.mrf.mxu0
  %v1364 = vadd.f32 0.0, %v1363
  %1365 = vmatmul.f32.gmra.mxu0 %v1188
  %v1366 = vpop.f32.mrf.mxu0
  %v1367 = vadd.f32 0.0, %v1366
  %1368 = vmatmul.f32.gmra.mxu0 %v1189
  %v1369 = vpop.f32.mrf.mxu0
  %v1370 = vadd.f32 0.0, %v1369
  %1371 = vmatmul.f32.gmra.mxu0 %v1190
  %v1372 = vpop.f32.mrf.mxu0
  %v1373 = vadd.f32 0.0, %v1372
  %1374 = vmatmul.f32.gmra.mxu0 %v1191
  %v1375 = vpop.f32.mrf.mxu0
  %v1376 = vadd.f32 0.0, %v1375
  %1377 = vmatmul.f32.gmra.mxu0 %v1192
  %v1378 = vpop.f32.mrf.mxu0
  %v1379 = vadd.f32 0.0, %v1378
  %1380 = vmatmul.f32.gmra.mxu0 %v1193
  %v1381 = vpop.f32.mrf.mxu0
  %1382 = vmatmul.f32.gmra.mxu0 %v1194
  %v1383 = vpop.f32.mrf.mxu0
  %1384 = vmatmul.f32.gmra.mxu0 %v1195
  %v1385 = vpop.f32.mrf.mxu0
  %1386 = vmatmul.f32.gmra.mxu0 %v1196
  %v1387 = vpop.f32.mrf.mxu0
  %1388 = vmatmul.f32.gmra.mxu0 %v1197
  %v1389 = vpop.f32.mrf.mxu0
  %v1390 = vadd.f32 0.0, %v1389
  %1391 = vmatmul.f32.gmra.mxu0 %v1198
  %v1392 = vpop.f32.mrf.mxu0
  %v1393 = vadd.f32 0.0, %v1392
  %1394 = vmatmul.f32.gmra.mxu0 %v1199
  %v1395 = vpop.f32.mrf.mxu0
  %v1396 = vadd.f32 0.0, %v1395
  %1397 = vmatmul.f32.gmra.mxu0 %v1200
  %v1398 = vpop.f32.mrf.mxu0
  %v1399 = vadd.f32 0.0, %v1398
  %1400 = vmatmul.f32.gmra.mxu0 %v1201
  %v1401 = vpop.f32.mrf.mxu0
  %v1402 = vadd.f32 0.0, %v1401
  %1403 = vmatmul.f32.gmra.mxu0 %v1202
  %v1404 = vpop.f32.mrf.mxu0
  %v1405 = vadd.f32 0.0, %v1404
  %1406 = vmatmul.f32.gmra.mxu0 %v1203
  %v1407 = vpop.f32.mrf.mxu0
  %v1408 = vadd.f32 0.0, %v1407
  %1409 = vmatmul.f32.gmra.mxu0 %v1204
  %v1410 = vpop.f32.mrf.mxu0
  %v1411 = vadd.f32 0.0, %v1410
  %1412 = vmatmul.f32.gmra.mxu0 %v1205
  %v1413 = vpop.f32.mrf.mxu0
  %v1414 = vadd.f32 0.0, %v1413
  %1415 = vmatmul.f32.gmra.mxu0 %v1206
  %v1416 = vpop.f32.mrf.mxu0
  %v1417 = vadd.f32 0.0, %v1416
  %1418 = vmatmul.f32.gmra.mxu0 %v1207
  %v1419 = vpop.f32.mrf.mxu0
  %v1420 = vadd.f32 0.0, %v1419
  %1421 = vmatmul.f32.gmra.mxu0 %v1208
  %v1422 = vpop.f32.mrf.mxu0
  %v1423 = vadd.f32 0.0, %v1422
  %1424 = vmatmul.f32.gmra.mxu0 %v1209
  %v1425 = vpop.f32.mrf.mxu0
  %v1426 = vadd.f32 0.0, %v1425
  %1427 = vmatmul.f32.gmra.mxu0 %v1210
  %v1428 = vpop.f32.mrf.mxu0
  %v1429 = vadd.f32 0.0, %v1428
  %1430 = vmatmul.f32.gmra.mxu0 %v1211
  %v1431 = vpop.f32.mrf.mxu0
  %v1432 = vadd.f32 0.0, %v1431
  %1433 = vmatmul.f32.gmra.mxu0 %v1212
  %v1434 = vpop.f32.mrf.mxu0
  %v1435 = vadd.f32 0.0, %v1434
  %1436 = vmatmul.f32.gmra.mxu0 %v1213
  %v1437 = vpop.f32.mrf.mxu0
  %v1438 = vadd.f32 0.0, %v1437
  %1439 = vmatmul.f32.gmra.mxu0 %v1214
  %v1440 = vpop.f32.mrf.mxu0
  %v1441 = vadd.f32 0.0, %v1440
  %1442 = vmatmul.f32.gmra.mxu0 %v1215
  %v1443 = vpop.f32.mrf.mxu0
  %v1444 = vadd.f32 0.0, %v1443
  %1445 = vmatmul.f32.gmra.mxu0 %v1216
  %v1446 = vpop.f32.mrf.mxu0
  %v1447 = vadd.f32 0.0, %v1446
  %1448 = vmatmul.f32.gmra.mxu0 %v1217
  %v1449 = vpop.f32.mrf.mxu0
  %v1450 = vadd.f32 0.0, %v1449
  %1451 = vmatmul.f32.gmra.mxu0 %v1218
  %v1452 = vpop.f32.mrf.mxu0
  %v1453 = vadd.f32 0.0, %v1452
  %1454 = vmatmul.f32.gmra.mxu0 %v1219
  %v1455 = vpop.f32.mrf.mxu0
  %v1456 = vadd.f32 0.0, %v1455
  %1457 = vmatmul.f32.gmra.mxu0 %v1220
  %v1458 = vpop.f32.mrf.mxu0
  %v1459 = vadd.f32 0.0, %v1458
  %1460 = vmatmul.f32.gmra.mxu0 %v1221
  %v1461 = vpop.f32.mrf.mxu0
  %v1462 = vadd.f32 0.0, %v1461
  %1463 = vmatmul.f32.gmra.mxu0 %v1222
  %v1464 = vpop.f32.mrf.mxu0
  %v1465 = vadd.f32 0.0, %v1464
  %1466 = vmatmul.f32.gmra.mxu0 %v1223
  %v1467 = vpop.f32.mrf.mxu0
  %v1468 = vadd.f32 0.0, %v1467
  %1469 = vmatmul.f32.gmra.mxu0 %v1224
  %v1470 = vpop.f32.mrf.mxu0
  %v1471 = vadd.f32 0.0, %v1470
  %1472 = vmatmul.f32.gmra.mxu0 %v1225
  %v1473 = vpop.f32.mrf.mxu0
  %v1474 = vadd.f32 0.0, %v1473
  %1475 = vmatmul.f32.gmra.mxu0 %v1226
  %v1476 = vpop.f32.mrf.mxu0
  %v1477 = vadd.f32 0.0, %v1476
  %1478 = vmatmul.f32.gmra.mxu0 %v1227
  %v1479 = vpop.f32.mrf.mxu0
  %v1480 = vadd.f32 0.0, %v1479
  %1481 = vmatmul.f32.gmra.mxu0 %v1228
  %v1482 = vpop.f32.mrf.mxu0
  %v1483 = vadd.f32 0.0, %v1482
  %1484 = vmatmul.f32.gmra.mxu0 %v1245
  %v1485 = vpop.f32.mrf.mxu0
  %1486 = vmatmul.f32.gmra.mxu0 %v1246
  %v1487 = vpop.f32.mrf.mxu0
  %1488 = vdwg.mxu0
  %1489 = vmatpush.msra.mxu0 %v1244
  %1490 = vmatpush.msra.mxu0 %v1243
  %1491 = vmatpush.msra.mxu0 %v1242
  %1492 = vmatpush.msra.mxu0 %v1241
  %1493 = vmatpush.msra.mxu0 %v1240
  %1494 = vmatpush.msra.mxu0 %v1239
  %1495 = vmatpush.msra.mxu0 %v1238
  %1496 = vmatpush.msra.mxu0 %v1237
  %1497 = vmatpush.msra.mxu0 %v1236
  %1498 = vmatpush.msra.mxu0 %v1235
  %1499 = vmatpush.msra.mxu0 %v1234
  %1500 = vmatpush.msra.mxu0 %v1233
  %1501 = vmatpush.msra.mxu0 %v1232
  %1502 = vmatpush.msra.mxu0 %v1231
  %1503 = vmatpush.msra.mxu0 %v1230
  %1504 = vmatpush.msra.mxu0 %v1229
  %1505 = vmatmul.f32.gmra.mxu0 %v1157
  %v1506 = vpop.f32.mrf.mxu0
  %1507 = vmatmul.f32.gmra.mxu0 %v1158
  %v1508 = vpop.f32.mrf.mxu0
  %1509 = vmatmul.f32.gmra.mxu0 %v1159
  %v1510 = vpop.f32.mrf.mxu0
  %v1511 = vadd.f32 %v1286, %v1510
  %1512 = vmatmul.f32.gmra.mxu0 %v1160
  %v1513 = vpop.f32.mrf.mxu0
  %v1514 = vadd.f32 %v1289, %v1513
  %1515 = vmatmul.f32.gmra.mxu0 %v1161
  %v1516 = vpop.f32.mrf.mxu0
  %v1517 = vadd.f32 %v1292, %v1516
  %1518 = vmatmul.f32.gmra.mxu0 %v1162
  %v1519 = vpop.f32.mrf.mxu0
  %v1520 = vadd.f32 %v1295, %v1519
  %1521 = vmatmul.f32.gmra.mxu0 %v1163
  %v1522 = vpop.f32.mrf.mxu0
  %v1523 = vadd.f32 %v1298, %v1522
  %1524 = vmatmul.f32.gmra.mxu0 %v1164
  %v1525 = vpop.f32.mrf.mxu0
  %v1526 = vadd.f32 %v1301, %v1525
  %1527 = vmatmul.f32.gmra.mxu0 %v1165
  %v1528 = vpop.f32.mrf.mxu0
  %v1529 = vadd.f32 %v1304, %v1528
  %1530 = vmatmul.f32.gmra.mxu0 %v1166
  %v1531 = vpop.f32.mrf.mxu0
  %v1532 = vadd.f32 %v1307, %v1531
  %1533 = vmatmul.f32.gmra.mxu0 %v1167
  %v1534 = vpop.f32.mrf.mxu0
  %v1535 = vadd.f32 %v1310, %v1534
  %1536 = vmatmul.f32.gmra.mxu0 %v1168
  %v1537 = vpop.f32.mrf.mxu0
  %v1538 = vadd.f32 %v1313, %v1537
  %1539 = vmatmul.f32.gmra.mxu0 %v1169
  %v1540 = vpop.f32.mrf.mxu0
  %v1541 = vadd.f32 %v1316, %v1540
  %1542 = vmatmul.f32.gmra.mxu0 %v1170
  %v1543 = vpop.f32.mrf.mxu0
  %v1544 = vadd.f32 %v1319, %v1543
  %1545 = vmatmul.f32.gmra.mxu0 %v1171
  %v1546 = vpop.f32.mrf.mxu0
  %v1547 = vadd.f32 %v1322, %v1546
  %1548 = vmatmul.f32.gmra.mxu0 %v1172
  %v1549 = vpop.f32.mrf.mxu0
  %v1550 = vadd.f32 %v1325, %v1549
  %1551 = vmatmul.f32.gmra.mxu0 %v1173
  %v1552 = vpop.f32.mrf.mxu0
  %v1553 = vadd.f32 %v1328, %v1552
  %1554 = vmatmul.f32.gmra.mxu0 %v1174
  %v1555 = vpop.f32.mrf.mxu0
  %v1556 = vadd.f32 %v1331, %v1555
  %1557 = vmatmul.f32.gmra.mxu0 %v1175
  %v1558 = vpop.f32.mrf.mxu0
  %v1559 = vadd.f32 %v1334, %v1558
  %1560 = vmatmul.f32.gmra.mxu0 %v1176
  %v1561 = vpop.f32.mrf.mxu0
  %v1562 = vadd.f32 %v1337, %v1561
  %1563 = vmatmul.f32.gmra.mxu0 %v1177
  %v1564 = vpop.f32.mrf.mxu0
  %v1565 = vadd.f32 %v1340, %v1564
  %1566 = vmatmul.f32.gmra.mxu0 %v1178
  %v1567 = vpop.f32.mrf.mxu0
  %v1568 = vadd.f32 %v1343, %v1567
  %1569 = vmatmul.f32.gmra.mxu0 %v1179
  %v1570 = vpop.f32.mrf.mxu0
  %v1571 = vadd.f32 %v1346, %v1570
  %1572 = vmatmul.f32.gmra.mxu0 %v1180
  %v1573 = vpop.f32.mrf.mxu0
  %v1574 = vadd.f32 %v1349, %v1573
  %1575 = vmatmul.f32.gmra.mxu0 %v1181
  %v1576 = vpop.f32.mrf.mxu0
  %v1577 = vadd.f32 %v1352, %v1576
  %1578 = vmatmul.f32.gmra.mxu0 %v1182
  %v1579 = vpop.f32.mrf.mxu0
  %v1580 = vadd.f32 %v1355, %v1579
  %1581 = vmatmul.f32.gmra.mxu0 %v1183
  %v1582 = vpop.f32.mrf.mxu0
  %v1583 = vadd.f32 %v1358, %v1582
  %1584 = vmatmul.f32.gmra.mxu0 %v1184
  %v1585 = vpop.f32.mrf.mxu0
  %v1586 = vadd.f32 %v1361, %v1585
  %1587 = vmatmul.f32.gmra.mxu0 %v1185
  %v1588 = vpop.f32.mrf.mxu0
  %v1589 = vadd.f32 %v1364, %v1588
  %1590 = vmatmul.f32.gmra.mxu0 %v1186
  %v1591 = vpop.f32.mrf.mxu0
  %v1592 = vadd.f32 %v1367, %v1591
  %1593 = vmatmul.f32.gmra.mxu0 %v1187
  %v1594 = vpop.f32.mrf.mxu0
  %v1595 = vadd.f32 %v1370, %v1594
  %1596 = vmatmul.f32.gmra.mxu0 %v1188
  %v1597 = vpop.f32.mrf.mxu0
  %v1598 = vadd.f32 %v1373, %v1597
  %1599 = vmatmul.f32.gmra.mxu0 %v1189
  %v1600 = vpop.f32.mrf.mxu0
  %v1601 = vadd.f32 %v1376, %v1600
  %1602 = vmatmul.f32.gmra.mxu0 %v1190
  %v1603 = vpop.f32.mrf.mxu0
  %v1604 = vadd.f32 %v1379, %v1603
  %1605 = vmatmul.f32.gmra.mxu0 %v1191
  %v1606 = vpop.f32.mrf.mxu0
  %1607 = vmatmul.f32.gmra.mxu0 %v1192
  %v1608 = vpop.f32.mrf.mxu0
  %1609 = vmatmul.f32.gmra.mxu0 %v1193
  %v1610 = vpop.f32.mrf.mxu0
  %1611 = vmatmul.f32.gmra.mxu0 %v1194
  %v1612 = vpop.f32.mrf.mxu0
  %1613 = vmatmul.f32.gmra.mxu0 %v1195
  %v1614 = vpop.f32.mrf.mxu0
  %v1615 = vadd.f32 %v1390, %v1614
  %1616 = vmatmul.f32.gmra.mxu0 %v1196
  %v1617 = vpop.f32.mrf.mxu0
  %v1618 = vadd.f32 %v1393, %v1617
  %1619 = vmatmul.f32.gmra.mxu0 %v1197
  %v1620 = vpop.f32.mrf.mxu0
  %v1621 = vadd.f32 %v1396, %v1620
  %1622 = vmatmul.f32.gmra.mxu0 %v1198
  %v1623 = vpop.f32.mrf.mxu0
  %v1624 = vadd.f32 %v1399, %v1623
  %1625 = vmatmul.f32.gmra.mxu0 %v1199
  %v1626 = vpop.f32.mrf.mxu0
  %v1627 = vadd.f32 %v1402, %v1626
  %1628 = vmatmul.f32.gmra.mxu0 %v1200
  %v1629 = vpop.f32.mrf.mxu0
  %v1630 = vadd.f32 %v1405, %v1629
  %1631 = vmatmul.f32.gmra.mxu0 %v1201
  %v1632 = vpop.f32.mrf.mxu0
  %v1633 = vadd.f32 %v1408, %v1632
  %1634 = vmatmul.f32.gmra.mxu0 %v1202
  %v1635 = vpop.f32.mrf.mxu0
  %v1636 = vadd.f32 %v1411, %v1635
  %1637 = vmatmul.f32.gmra.mxu0 %v1203
  %v1638 = vpop.f32.mrf.mxu0
  %v1639 = vadd.f32 %v1414, %v1638
  %1640 = vmatmul.f32.gmra.mxu0 %v1204
  %v1641 = vpop.f32.mrf.mxu0
  %v1642 = vadd.f32 %v1417, %v1641
  %1643 = vmatmul.f32.gmra.mxu0 %v1205
  %v1644 = vpop.f32.mrf.mxu0
  %v1645 = vadd.f32 %v1420, %v1644
  %1646 = vmatmul.f32.gmra.mxu0 %v1206
  %v1647 = vpop.f32.mrf.mxu0
  %v1648 = vadd.f32 %v1423, %v1647
  %1649 = vmatmul.f32.gmra.mxu0 %v1207
  %v1650 = vpop.f32.mrf.mxu0
  %v1651 = vadd.f32 %v1426, %v1650
  %1652 = vmatmul.f32.gmra.mxu0 %v1208
  %v1653 = vpop.f32.mrf.mxu0
  %v1654 = vadd.f32 %v1429, %v1653
  %1655 = vmatmul.f32.gmra.mxu0 %v1209
  %v1656 = vpop.f32.mrf.mxu0
  %v1657 = vadd.f32 %v1432, %v1656
  %1658 = vmatmul.f32.gmra.mxu0 %v1210
  %v1659 = vpop.f32.mrf.mxu0
  %v1660 = vadd.f32 %v1435, %v1659
  %1661 = vmatmul.f32.gmra.mxu0 %v1211
  %v1662 = vpop.f32.mrf.mxu0
  %v1663 = vadd.f32 %v1438, %v1662
  %1664 = vmatmul.f32.gmra.mxu0 %v1212
  %v1665 = vpop.f32.mrf.mxu0
  %v1666 = vadd.f32 %v1441, %v1665
  %1667 = vmatmul.f32.gmra.mxu0 %v1213
  %v1668 = vpop.f32.mrf.mxu0
  %v1669 = vadd.f32 %v1444, %v1668
  %1670 = vmatmul.f32.gmra.mxu0 %v1214
  %v1671 = vpop.f32.mrf.mxu0
  %v1672 = vadd.f32 %v1447, %v1671
  %1673 = vmatmul.f32.gmra.mxu0 %v1215
  %v1674 = vpop.f32.mrf.mxu0
  %v1675 = vadd.f32 %v1450, %v1674
  %1676 = vmatmul.f32.gmra.mxu0 %v1216
  %v1677 = vpop.f32.mrf.mxu0
  %v1678 = vadd.f32 %v1453, %v1677
  %1679 = vmatmul.f32.gmra.mxu0 %v1217
  %v1680 = vpop.f32.mrf.mxu0
  %v1681 = vadd.f32 %v1456, %v1680
  %1682 = vmatmul.f32.gmra.mxu0 %v1218
  %v1683 = vpop.f32.mrf.mxu0
  %v1684 = vadd.f32 %v1459, %v1683
  %1685 = vmatmul.f32.gmra.mxu0 %v1219
  %v1686 = vpop.f32.mrf.mxu0
  %v1687 = vadd.f32 %v1462, %v1686
  %1688 = vmatmul.f32.gmra.mxu0 %v1220
  %v1689 = vpop.f32.mrf.mxu0
  %v1690 = vadd.f32 %v1465, %v1689
  %1691 = vmatmul.f32.gmra.mxu0 %v1221
  %v1692 = vpop.f32.mrf.mxu0
  %v1693 = vadd.f32 %v1468, %v1692
  %1694 = vmatmul.f32.gmra.mxu0 %v1222
  %v1695 = vpop.f32.mrf.mxu0
  %v1696 = vadd.f32 %v1471, %v1695
  %1697 = vmatmul.f32.gmra.mxu0 %v1223
  %v1698 = vpop.f32.mrf.mxu0
  %v1699 = vadd.f32 %v1474, %v1698
  %1700 = vmatmul.f32.gmra.mxu0 %v1224
  %v1701 = vpop.f32.mrf.mxu0
  %v1702 = vadd.f32 %v1477, %v1701
  %1703 = vmatmul.f32.gmra.mxu0 %v1225
  %v1704 = vpop.f32.mrf.mxu0
  %v1705 = vadd.f32 %v1480, %v1704
  %1706 = vmatmul.f32.gmra.mxu0 %v1226
  %v1707 = vpop.f32.mrf.mxu0
  %v1708 = vadd.f32 %v1483, %v1707
  %1709 = vmatmul.f32.gmra.mxu0 %v1227
  %v1710 = vpop.f32.mrf.mxu0
  %1711 = vmatmul.f32.gmra.mxu0 %v1228
  %v1712 = vpop.f32.mrf.mxu0
  %1713 = vdwg.mxu0
  %v1714 = vld [vmem:[#allocation2 + $0x28] sm:$0xff]
  %v1715 = vld [vmem:[#allocation2 + $0x30] sm:$0xff]
  %v1716 = vld [vmem:[#allocation2 + $0x38] sm:$0xff]
  %v1717 = vld [vmem:[#allocation2 + $0x40] sm:$0xff]
  %v1718 = vld [vmem:[#allocation2 + $0x48] sm:$0xff]
  %v1719 = vld [vmem:[#allocation2 + $0x50] sm:$0xff]
  %v1720 = vld [vmem:[#allocation2 + $0x58] sm:$0xff]
  %v1721 = vld [vmem:[#allocation2 + $0x60] sm:$0xff]
  %v1722 = vld [vmem:[#allocation2 + $0x68] sm:$0xff]
  %v1723 = vld [vmem:[#allocation2 + $0x70] sm:$0xff]
  %v1724 = vld [vmem:[#allocation2 + $0x78] sm:$0xff]
  %v1725 = vld [vmem:[#allocation2 + $0x80] sm:$0xff]
  %v1726 = vld [vmem:[#allocation2 + $0x88] sm:$0xff]
  %v1727 = vld [vmem:[#allocation2 + $0x90] sm:$0xff]
  %v1728 = vld [vmem:[#allocation2 + $0x98] sm:$0xff]
  %v1729 = vld [vmem:[#allocation2 + $0xa0] sm:$0xff]
  %v1730 = vld [vmem:[#allocation2 + $0xa8] sm:$0xff]
  %v1731 = vld [vmem:[#allocation2 + $0xb0] sm:$0xff]
  %v1732 = vld [vmem:[#allocation2 + $0xb8] sm:$0xff]
  %v1733 = vld [vmem:[#allocation2 + $0xc0] sm:$0xff]
  %v1734 = vld [vmem:[#allocation2 + $0xc8] sm:$0xff]
  %v1735 = vld [vmem:[#allocation2 + $0xd0] sm:$0xff]
  %v1736 = vld [vmem:[#allocation2 + $0xd8] sm:$0xff]
  %v1737 = vld [vmem:[#allocation2 + $0xe0] sm:$0xff]
  %v1738 = vld [vmem:[#allocation2 + $0xe8] sm:$0xff]
  %v1739 = vld [vmem:[#allocation2 + $0xf0] sm:$0xff]
  %v1740 = vld [vmem:[#allocation2 + $0xf8] sm:$0xff]
  %v1741 = vld [vmem:[#allocation2 + $0x100] sm:$0xff]
  %v1742 = vld [vmem:[#allocation2 + $0x108] sm:$0xff]
  %v1743 = vld [vmem:[#allocation2 + $0x110] sm:$0xff]
  %v1744 = vld [vmem:[#allocation2 + $0x118] sm:$0xff]
  %v1745 = vld [vmem:[#allocation2 + $0x120] sm:$0xff]
  %v1746 = vld [vmem:[#allocation2 + $0x128] sm:$0xff]
  %v1747 = vld [vmem:[#allocation2 + $0x130] sm:$0xff]
  %v1748 = vld [vmem:[#allocation2 + $0x138] sm:$0xff]
  %v1749 = vld [vmem:[#allocation2 + $0x140] sm:$0xff]
  %v1750 = vld [vmem:[#allocation2 + $0x148] sm:$0xff]
  %v1751 = vld [vmem:[#allocation2 + $0x150] sm:$0xff]
  %v1752 = vld [vmem:[#allocation2 + $0x158] sm:$0xff]
  %v1753 = vld [vmem:[#allocation2 + $0x160] sm:$0xff]
  %v1754 = vld [vmem:[#allocation2 + $0x168] sm:$0xff]
  %v1755 = vld [vmem:[#allocation2 + $0x170] sm:$0xff]
  %v1756 = vld [vmem:[#allocation2 + $0x178] sm:$0xff]
  %v1757 = vld [vmem:[#allocation2 + $0x180] sm:$0xff]
  %v1758 = vld [vmem:[#allocation2 + $0x188] sm:$0xff]
  %v1759 = vld [vmem:[#allocation2 + $0x190] sm:$0xff]
  %v1760 = vld [vmem:[#allocation2 + $0x198] sm:$0xff]
  %v1761 = vld [vmem:[#allocation2 + $0x1a0] sm:$0xff]
  %v1762 = vld [vmem:[#allocation2 + $0x1a8] sm:$0xff]
  %v1763 = vld [vmem:[#allocation2 + $0x1b0] sm:$0xff]
  %v1764 = vld [vmem:[#allocation2 + $0x1b8] sm:$0xff]
  %v1765 = vld [vmem:[#allocation2 + $0x1c0] sm:$0xff]
  %v1766 = vld [vmem:[#allocation2 + $0x1c8] sm:$0xff]
  %v1767 = vld [vmem:[#allocation2 + $0x1d0] sm:$0xff]
  %v1768 = vld [vmem:[#allocation2 + $0x1d8] sm:$0xff]
  %v1769 = vld [vmem:[#allocation2 + $0x1e0] sm:$0xff]
  %v1770 = vld [vmem:[#allocation2 + $0x1e8] sm:$0xff]
  %v1771 = vld [vmem:[#allocation2 + $0x1f0] sm:$0xff]
  %v1772 = vld [vmem:[#allocation2 + $0x1f8] sm:$0xff]
  %v1773 = vld [vmem:[#allocation2 + $0x200] sm:$0xff]
  %v1774 = vld [vmem:[#allocation2 + $0x208] sm:$0xff]
  %v1775 = vld [vmem:[#allocation2 + $0x210] sm:$0xff]
  %v1776 = vld [vmem:[#allocation2 + $0x218] sm:$0xff]
  %v1777 = vld [vmem:[#allocation2 + $0x220] sm:$0xff]
  %v1778 = vld [vmem:[#allocation2 + $0x228] sm:$0xff]
  %v1779 = vld [vmem:[#allocation2 + $0x230] sm:$0xff]
  %v1780 = vld [vmem:[#allocation2 + $0x238] sm:$0xff]
  %v1781 = vld [vmem:[#allocation2 + $0x240] sm:$0xff]
  %v1782 = vld [vmem:[#allocation2 + $0x248] sm:$0xff]
  %v1783 = vld [vmem:[#allocation2 + $0x250] sm:$0xff]
  %v1784 = vld [vmem:[#allocation2 + $0x258] sm:$0xff]
  %v1785 = vld [vmem:[#allocation2 + $0x260] sm:$0xff]
  %s1786 = scalar_lea.vmem %s3, 256
  %v1787 = vld [vmem:[%s1786] sm:$0xff]
  %v1788 = vld [vmem:[%s1786 + $0x8] sm:$0xff]
  %v1789 = vld [vmem:[%s1786 + $0x10] sm:$0xff]
  %v1790 = vld [vmem:[%s1786 + $0x18] sm:$0xff]
  %v1791 = vld [vmem:[%s1786 + $0x20] sm:$0xff]
  %v1792 = vld [vmem:[%s1786 + $0x28] sm:$0xff]
  %v1793 = vld [vmem:[%s1786 + $0x30] sm:$0xff]
  %v1794 = vld [vmem:[%s1786 + $0x38] sm:$0xff]
  %v1795 = vld [vmem:[%s1786 + $0x40] sm:$0xff]
  %v1796 = vld [vmem:[%s1786 + $0x48] sm:$0xff]
  %v1797 = vld [vmem:[%s1786 + $0x50] sm:$0xff]
  %v1798 = vld [vmem:[%s1786 + $0x58] sm:$0xff]
  %v1799 = vld [vmem:[%s1786 + $0x60] sm:$0xff]
  %v1800 = vld [vmem:[%s1786 + $0x68] sm:$0xff]
  %v1801 = vld [vmem:[%s1786 + $0x70] sm:$0xff]
  %v1802 = vld [vmem:[%s1786 + $0x78] sm:$0xff]
  %1803 = vmatpush.msra.mxu0 %v1802
  %1804 = vmatpush.msra.mxu0 %v1801
  %1805 = vmatpush.msra.mxu0 %v1800
  %1806 = vmatpush.msra.mxu0 %v1799
  %1807 = vmatpush.msra.mxu0 %v1798
  %1808 = vmatpush.msra.mxu0 %v1797
  %1809 = vmatpush.msra.mxu0 %v1796
  %1810 = vmatpush.msra.mxu0 %v1795
  %1811 = vmatpush.msra.mxu0 %v1794
  %1812 = vmatpush.msra.mxu0 %v1793
  %1813 = vmatpush.msra.mxu0 %v1792
  %1814 = vmatpush.msra.mxu0 %v1791
  %1815 = vmatpush.msra.mxu0 %v1790
  %1816 = vmatpush.msra.mxu0 %v1789
  %1817 = vmatpush.msra.mxu0 %v1788
  %1818 = vmatpush.msra.mxu0 %v1787
  %1819 = vmatmul.f32.gmra.mxu0 %v1714
  %v1820 = vpop.f32.mrf.mxu0
  %1821 = vmatmul.f32.gmra.mxu0 %v1715
  %v1822 = vpop.f32.mrf.mxu0
  %1823 = vmatmul.f32.gmra.mxu0 %v1716
  %v1824 = vpop.f32.mrf.mxu0
  %v1825 = vadd.f32 0.0, %v1824
  %1826 = vmatmul.f32.gmra.mxu0 %v1717
  %v1827 = vpop.f32.mrf.mxu0
  %v1828 = vadd.f32 0.0, %v1827
  %1829 = vmatmul.f32.gmra.mxu0 %v1718
  %v1830 = vpop.f32.mrf.mxu0
  %v1831 = vadd.f32 0.0, %v1830
  %1832 = vmatmul.f32.gmra.mxu0 %v1719
  %v1833 = vpop.f32.mrf.mxu0
  %v1834 = vadd.f32 0.0, %v1833
  %1835 = vmatmul.f32.gmra.mxu0 %v1720
  %v1836 = vpop.f32.mrf.mxu0
  %v1837 = vadd.f32 0.0, %v1836
  %1838 = vmatmul.f32.gmra.mxu0 %v1721
  %v1839 = vpop.f32.mrf.mxu0
  %v1840 = vadd.f32 0.0, %v1839
  %1841 = vmatmul.f32.gmra.mxu0 %v1722
  %v1842 = vpop.f32.mrf.mxu0
  %v1843 = vadd.f32 0.0, %v1842
  %1844 = vmatmul.f32.gmra.mxu0 %v1723
  %v1845 = vpop.f32.mrf.mxu0
  %v1846 = vadd.f32 0.0, %v1845
  %1847 = vmatmul.f32.gmra.mxu0 %v1724
  %v1848 = vpop.f32.mrf.mxu0
  %v1849 = vadd.f32 0.0, %v1848
  %1850 = vmatmul.f32.gmra.mxu0 %v1725
  %v1851 = vpop.f32.mrf.mxu0
  %v1852 = vadd.f32 0.0, %v1851
  %1853 = vmatmul.f32.gmra.mxu0 %v1726
  %v1854 = vpop.f32.mrf.mxu0
  %v1855 = vadd.f32 0.0, %v1854
  %1856 = vmatmul.f32.gmra.mxu0 %v1727
  %v1857 = vpop.f32.mrf.mxu0
  %v1858 = vadd.f32 0.0, %v1857
  %1859 = vmatmul.f32.gmra.mxu0 %v1728
  %v1860 = vpop.f32.mrf.mxu0
  %v1861 = vadd.f32 0.0, %v1860
  %1862 = vmatmul.f32.gmra.mxu0 %v1729
  %v1863 = vpop.f32.mrf.mxu0
  %v1864 = vadd.f32 0.0, %v1863
  %1865 = vmatmul.f32.gmra.mxu0 %v1730
  %v1866 = vpop.f32.mrf.mxu0
  %v1867 = vadd.f32 0.0, %v1866
  %1868 = vmatmul.f32.gmra.mxu0 %v1731
  %v1869 = vpop.f32.mrf.mxu0
  %v1870 = vadd.f32 0.0, %v1869
  %1871 = vmatmul.f32.gmra.mxu0 %v1732
  %v1872 = vpop.f32.mrf.mxu0
  %v1873 = vadd.f32 0.0, %v1872
  %1874 = vmatmul.f32.gmra.mxu0 %v1733
  %v1875 = vpop.f32.mrf.mxu0
  %v1876 = vadd.f32 0.0, %v1875
  %1877 = vmatmul.f32.gmra.mxu0 %v1734
  %v1878 = vpop.f32.mrf.mxu0
  %v1879 = vadd.f32 0.0, %v1878
  %1880 = vmatmul.f32.gmra.mxu0 %v1735
  %v1881 = vpop.f32.mrf.mxu0
  %v1882 = vadd.f32 0.0, %v1881
  %1883 = vmatmul.f32.gmra.mxu0 %v1736
  %v1884 = vpop.f32.mrf.mxu0
  %v1885 = vadd.f32 0.0, %v1884
  %1886 = vmatmul.f32.gmra.mxu0 %v1737
  %v1887 = vpop.f32.mrf.mxu0
  %v1888 = vadd.f32 0.0, %v1887
  %1889 = vmatmul.f32.gmra.mxu0 %v1738
  %v1890 = vpop.f32.mrf.mxu0
  %v1891 = vadd.f32 0.0, %v1890
  %1892 = vmatmul.f32.gmra.mxu0 %v1739
  %v1893 = vpop.f32.mrf.mxu0
  %v1894 = vadd.f32 0.0, %v1893
  %1895 = vmatmul.f32.gmra.mxu0 %v1740
  %v1896 = vpop.f32.mrf.mxu0
  %v1897 = vadd.f32 0.0, %v1896
  %1898 = vmatmul.f32.gmra.mxu0 %v1741
  %v1899 = vpop.f32.mrf.mxu0
  %v1900 = vadd.f32 0.0, %v1899
  %1901 = vmatmul.f32.gmra.mxu0 %v1742
  %v1902 = vpop.f32.mrf.mxu0
  %v1903 = vadd.f32 0.0, %v1902
  %1904 = vmatmul.f32.gmra.mxu0 %v1743
  %v1905 = vpop.f32.mrf.mxu0
  %v1906 = vadd.f32 0.0, %v1905
  %1907 = vmatmul.f32.gmra.mxu0 %v1744
  %v1908 = vpop.f32.mrf.mxu0
  %v1909 = vadd.f32 0.0, %v1908
  %1910 = vmatmul.f32.gmra.mxu0 %v1745
  %v1911 = vpop.f32.mrf.mxu0
  %v1912 = vadd.f32 0.0, %v1911
  %1913 = vmatmul.f32.gmra.mxu0 %v1746
  %v1914 = vpop.f32.mrf.mxu0
  %v1915 = vadd.f32 0.0, %v1914
  %1916 = vmatmul.f32.gmra.mxu0 %v1747
  %v1917 = vpop.f32.mrf.mxu0
  %v1918 = vadd.f32 0.0, %v1917
  %1919 = vmatmul.f32.gmra.mxu0 %v1748
  %v1920 = vpop.f32.mrf.mxu0
  %1921 = vmatmul.f32.gmra.mxu0 %v1749
  %v1922 = vpop.f32.mrf.mxu0
  %1923 = vmatmul.f32.gmra.mxu0 %v1750
  %v1924 = vpop.f32.mrf.mxu0
  %1925 = vmatmul.f32.gmra.mxu0 %v1751
  %v1926 = vpop.f32.mrf.mxu0
  %1927 = vmatmul.f32.gmra.mxu0 %v1752
  %v1928 = vpop.f32.mrf.mxu0
  %v1929 = vadd.f32 0.0, %v1928
  %1930 = vmatmul.f32.gmra.mxu0 %v1753
  %v1931 = vpop.f32.mrf.mxu0
  %v1932 = vadd.f32 0.0, %v1931
  %1933 = vmatmul.f32.gmra.mxu0 %v1754
  %v1934 = vpop.f32.mrf.mxu0
  %v1935 = vadd.f32 0.0, %v1934
  %1936 = vmatmul.f32.gmra.mxu0 %v1755
  %v1937 = vpop.f32.mrf.mxu0
  %v1938 = vadd.f32 0.0, %v1937
  %1939 = vmatmul.f32.gmra.mxu0 %v1756
  %v1940 = vpop.f32.mrf.mxu0
  %v1941 = vadd.f32 0.0, %v1940
  %1942 = vmatmul.f32.gmra.mxu0 %v1757
  %v1943 = vpop.f32.mrf.mxu0
  %v1944 = vadd.f32 0.0, %v1943
  %1945 = vmatmul.f32.gmra.mxu0 %v1758
  %v1946 = vpop.f32.mrf.mxu0
  %v1947 = vadd.f32 0.0, %v1946
  %1948 = vmatmul.f32.gmra.mxu0 %v1759
  %v1949 = vpop.f32.mrf.mxu0
  %v1950 = vadd.f32 0.0, %v1949
  %1951 = vmatmul.f32.gmra.mxu0 %v1760
  %v1952 = vpop.f32.mrf.mxu0
  %v1953 = vadd.f32 0.0, %v1952
  %1954 = vmatmul.f32.gmra.mxu0 %v1761
  %v1955 = vpop.f32.mrf.mxu0
  %v1956 = vadd.f32 0.0, %v1955
  %1957 = vmatmul.f32.gmra.mxu0 %v1762
  %v1958 = vpop.f32.mrf.mxu0
  %v1959 = vadd.f32 0.0, %v1958
  %1960 = vmatmul.f32.gmra.mxu0 %v1763
  %v1961 = vpop.f32.mrf.mxu0
  %v1962 = vadd.f32 0.0, %v1961
  %1963 = vmatmul.f32.gmra.mxu0 %v1764
  %v1964 = vpop.f32.mrf.mxu0
  %v1965 = vadd.f32 0.0, %v1964
  %1966 = vmatmul.f32.gmra.mxu0 %v1765
  %v1967 = vpop.f32.mrf.mxu0
  %v1968 = vadd.f32 0.0, %v1967
  %1969 = vmatmul.f32.gmra.mxu0 %v1766
  %v1970 = vpop.f32.mrf.mxu0
  %v1971 = vadd.f32 0.0, %v1970
  %1972 = vmatmul.f32.gmra.mxu0 %v1767
  %v1973 = vpop.f32.mrf.mxu0
  %v1974 = vadd.f32 0.0, %v1973
  %1975 = vmatmul.f32.gmra.mxu0 %v1768
  %v1976 = vpop.f32.mrf.mxu0
  %v1977 = vadd.f32 0.0, %v1976
  %1978 = vmatmul.f32.gmra.mxu0 %v1769
  %v1979 = vpop.f32.mrf.mxu0
  %v1980 = vadd.f32 0.0, %v1979
  %1981 = vmatmul.f32.gmra.mxu0 %v1770
  %v1982 = vpop.f32.mrf.mxu0
  %v1983 = vadd.f32 0.0, %v1982
  %1984 = vmatmul.f32.gmra.mxu0 %v1771
  %v1985 = vpop.f32.mrf.mxu0
  %v1986 = vadd.f32 0.0, %v1985
  %1987 = vmatmul.f32.gmra.mxu0 %v1772
  %v1988 = vpop.f32.mrf.mxu0
  %v1989 = vadd.f32 0.0, %v1988
  %1990 = vmatmul.f32.gmra.mxu0 %v1773
  %v1991 = vpop.f32.mrf.mxu0
  %v1992 = vadd.f32 0.0, %v1991
  %1993 = vmatmul.f32.gmra.mxu0 %v1774
  %v1994 = vpop.f32.mrf.mxu0
  %v1995 = vadd.f32 0.0, %v1994
  %1996 = vmatmul.f32.gmra.mxu0 %v1775
  %v1997 = vpop.f32.mrf.mxu0
  %v1998 = vadd.f32 0.0, %v1997
  %1999 = vmatmul.f32.gmra.mxu0 %v1776
  %v2000 = vpop.f32.mrf.mxu0
  %v2001 = vadd.f32 0.0, %v2000
  %2002 = vmatmul.f32.gmra.mxu0 %v1777
  %v2003 = vpop.f32.mrf.mxu0
  %v2004 = vadd.f32 0.0, %v2003
  %2005 = vmatmul.f32.gmra.mxu0 %v1778
  %v2006 = vpop.f32.mrf.mxu0
  %v2007 = vadd.f32 0.0, %v2006
  %2008 = vmatmul.f32.gmra.mxu0 %v1779
  %v2009 = vpop.f32.mrf.mxu0
  %v2010 = vadd.f32 0.0, %v2009
  %2011 = vmatmul.f32.gmra.mxu0 %v1780
  %v2012 = vpop.f32.mrf.mxu0
  %v2013 = vadd.f32 0.0, %v2012
  %2014 = vmatmul.f32.gmra.mxu0 %v1781
  %v2015 = vpop.f32.mrf.mxu0
  %v2016 = vadd.f32 0.0, %v2015
  %2017 = vmatmul.f32.gmra.mxu0 %v1782
  %v2018 = vpop.f32.mrf.mxu0
  %v2019 = vadd.f32 0.0, %v2018
  %2020 = vmatmul.f32.gmra.mxu0 %v1783
  %v2021 = vpop.f32.mrf.mxu0
  %v2022 = vadd.f32 0.0, %v2021
  %2023 = vmatmul.f32.gmra.mxu0 %v1784
  %v2024 = vpop.f32.mrf.mxu0
  %2025 = vmatmul.f32.gmra.mxu0 %v1785
  %v2026 = vpop.f32.mrf.mxu0
  %2027 = vdwg.mxu0
  %v2028 = vadd.f32 %v1511, %v1825
  %v2029 = vadd.f32 %v1514, %v1828
  %v2030 = vadd.f32 %v1517, %v1831
  %v2031 = vadd.f32 %v1520, %v1834
  %v2032 = vadd.f32 %v1523, %v1837
  %v2033 = vadd.f32 %v1526, %v1840
  %v2034 = vadd.f32 %v1529, %v1843
  %v2035 = vadd.f32 %v1532, %v1846
  %v2036 = vadd.f32 %v1535, %v1849
  %v2037 = vadd.f32 %v1538, %v1852
  %v2038 = vadd.f32 %v1541, %v1855
  %v2039 = vadd.f32 %v1544, %v1858
  %v2040 = vadd.f32 %v1547, %v1861
  %v2041 = vadd.f32 %v1550, %v1864
  %v2042 = vadd.f32 %v1553, %v1867
  %v2043 = vadd.f32 %v1556, %v1870
  %v2044 = vadd.f32 %v1559, %v1873
  %v2045 = vadd.f32 %v1562, %v1876
  %v2046 = vadd.f32 %v1565, %v1879
  %v2047 = vadd.f32 %v1568, %v1882
  %v2048 = vadd.f32 %v1571, %v1885
  %v2049 = vadd.f32 %v1574, %v1888
  %v2050 = vadd.f32 %v1577, %v1891
  %v2051 = vadd.f32 %v1580, %v1894
  %v2052 = vadd.f32 %v1583, %v1897
  %v2053 = vadd.f32 %v1586, %v1900
  %v2054 = vadd.f32 %v1589, %v1903
  %v2055 = vadd.f32 %v1592, %v1906
  %v2056 = vadd.f32 %v1595, %v1909
  %v2057 = vadd.f32 %v1598, %v1912
  %v2058 = vadd.f32 %v1601, %v1915
  %v2059 = vadd.f32 %v1604, %v1918
  %v2060 = vadd.f32 %v1615, %v1929
  %v2061 = vadd.f32 %v1618, %v1932
  %v2062 = vadd.f32 %v1621, %v1935
  %v2063 = vadd.f32 %v1624, %v1938
  %v2064 = vadd.f32 %v1627, %v1941
  %v2065 = vadd.f32 %v1630, %v1944
  %v2066 = vadd.f32 %v1633, %v1947
  %v2067 = vadd.f32 %v1636, %v1950
  %v2068 = vadd.f32 %v1639, %v1953
  %v2069 = vadd.f32 %v1642, %v1956
  %v2070 = vadd.f32 %v1645, %v1959
  %v2071 = vadd.f32 %v1648, %v1962
  %v2072 = vadd.f32 %v1651, %v1965
  %v2073 = vadd.f32 %v1654, %v1968
  %v2074 = vadd.f32 %v1657, %v1971
  %v2075 = vadd.f32 %v1660, %v1974
  %v2076 = vadd.f32 %v1663, %v1977
  %v2077 = vadd.f32 %v1666, %v1980
  %v2078 = vadd.f32 %v1669, %v1983
  %v2079 = vadd.f32 %v1672, %v1986
  %v2080 = vadd.f32 %v1675, %v1989
  %v2081 = vadd.f32 %v1678, %v1992
  %v2082 = vadd.f32 %v1681, %v1995
  %v2083 = vadd.f32 %v1684, %v1998
  %v2084 = vadd.f32 %v1687, %v2001
  %v2085 = vadd.f32 %v1690, %v2004
  %v2086 = vadd.f32 %v1693, %v2007
  %v2087 = vadd.f32 %v1696, %v2010
  %v2088 = vadd.f32 %v1699, %v2013
  %v2089 = vadd.f32 %v1702, %v2016
  %v2090 = vadd.f32 %v1705, %v2019
  %v2091 = vadd.f32 %v1708, %v2022
  %v2092 = vld [vmem:[%s4] sm:$0x1]
  %v2094 = vperm.slane %v2092, 0
  %v2096 = vadd.f32 %v2028, %v2094
  %v2097 = vadd.f32 %v2029, %v2094
  %v2098 = vadd.f32 %v2030, %v2094
  %v2099 = vadd.f32 %v2031, %v2094
  %v2100 = vadd.f32 %v2032, %v2094
  %v2101 = vadd.f32 %v2033, %v2094
  %v2102 = vadd.f32 %v2034, %v2094
  %v2103 = vadd.f32 %v2035, %v2094
  %v2104 = vadd.f32 %v2036, %v2094
  %v2105 = vadd.f32 %v2037, %v2094
  %v2106 = vadd.f32 %v2038, %v2094
  %v2107 = vadd.f32 %v2039, %v2094
  %v2108 = vadd.f32 %v2040, %v2094
  %v2109 = vadd.f32 %v2041, %v2094
  %v2110 = vadd.f32 %v2042, %v2094
  %v2111 = vadd.f32 %v2043, %v2094
  %v2112 = vadd.f32 %v2044, %v2094
  %v2113 = vadd.f32 %v2045, %v2094
  %v2114 = vadd.f32 %v2046, %v2094
  %v2115 = vadd.f32 %v2047, %v2094
  %v2116 = vadd.f32 %v2048, %v2094
  %v2117 = vadd.f32 %v2049, %v2094
  %v2118 = vadd.f32 %v2050, %v2094
  %v2119 = vadd.f32 %v2051, %v2094
  %v2120 = vadd.f32 %v2052, %v2094
  %v2121 = vadd.f32 %v2053, %v2094
  %v2122 = vadd.f32 %v2054, %v2094
  %v2123 = vadd.f32 %v2055, %v2094
  %v2124 = vadd.f32 %v2056, %v2094
  %v2125 = vadd.f32 %v2057, %v2094
  %v2126 = vadd.f32 %v2058, %v2094
  %v2127 = vadd.f32 %v2059, %v2094
  %v2128 = vadd.f32 %v2060, %v2094
  %v2129 = vadd.f32 %v2061, %v2094
  %v2130 = vadd.f32 %v2062, %v2094
  %v2131 = vadd.f32 %v2063, %v2094
  %v2132 = vadd.f32 %v2064, %v2094
  %v2133 = vadd.f32 %v2065, %v2094
  %v2134 = vadd.f32 %v2066, %v2094
  %v2135 = vadd.f32 %v2067, %v2094
  %v2136 = vadd.f32 %v2068, %v2094
  %v2137 = vadd.f32 %v2069, %v2094
  %v2138 = vadd.f32 %v2070, %v2094
  %v2139 = vadd.f32 %v2071, %v2094
  %v2140 = vadd.f32 %v2072, %v2094
  %v2141 = vadd.f32 %v2073, %v2094
  %v2142 = vadd.f32 %v2074, %v2094
  %v2143 = vadd.f32 %v2075, %v2094
  %v2144 = vadd.f32 %v2076, %v2094
  %v2145 = vadd.f32 %v2077, %v2094
  %v2146 = vadd.f32 %v2078, %v2094
  %v2147 = vadd.f32 %v2079, %v2094
  %v2148 = vadd.f32 %v2080, %v2094
  %v2149 = vadd.f32 %v2081, %v2094
  %v2150 = vadd.f32 %v2082, %v2094
  %v2151 = vadd.f32 %v2083, %v2094
  %v2152 = vadd.f32 %v2084, %v2094
  %v2153 = vadd.f32 %v2085, %v2094
  %v2154 = vadd.f32 %v2086, %v2094
  %v2155 = vadd.f32 %v2087, %v2094
  %v2156 = vadd.f32 %v2088, %v2094
  %v2157 = vadd.f32 %v2089, %v2094
  %v2158 = vadd.f32 %v2090, %v2094
  %v2159 = vadd.f32 %v2091, %v2094
  %v2160 = vmax.f32 %v2096, 0.0
  %v2161 = vmax.f32 %v2097, 0.0
  %v2162 = vmax.f32 %v2098, 0.0
  %v2163 = vmax.f32 %v2099, 0.0
  %v2164 = vmax.f32 %v2100, 0.0
  %v2165 = vmax.f32 %v2101, 0.0
  %v2166 = vmax.f32 %v2102, 0.0
  %v2167 = vmax.f32 %v2103, 0.0
  %v2168 = vmax.f32 %v2104, 0.0
  %v2169 = vmax.f32 %v2105, 0.0
  %v2170 = vmax.f32 %v2106, 0.0
  %v2171 = vmax.f32 %v2107, 0.0
  %v2172 = vmax.f32 %v2108, 0.0
  %v2173 = vmax.f32 %v2109, 0.0
  %v2174 = vmax.f32 %v2110, 0.0
  %v2175 = vmax.f32 %v2111, 0.0
  %v2176 = vmax.f32 %v2112, 0.0
  %v2177 = vmax.f32 %v2113, 0.0
  %v2178 = vmax.f32 %v2114, 0.0
  %v2179 = vmax.f32 %v2115, 0.0
  %v2180 = vmax.f32 %v2116, 0.0
  %v2181 = vmax.f32 %v2117, 0.0
  %v2182 = vmax.f32 %v2118, 0.0
  %v2183 = vmax.f32 %v2119, 0.0
  %v2184 = vmax.f32 %v2120, 0.0
  %v2185 = vmax.f32 %v2121, 0.0
  %v2186 = vmax.f32 %v2122, 0.0
  %v2187 = vmax.f32 %v2123, 0.0
  %v2188 = vmax.f32 %v2124, 0.0
  %v2189 = vmax.f32 %v2125, 0.0
  %v2190 = vmax.f32 %v2126, 0.0
  %v2191 = vmax.f32 %v2127, 0.0
  %v2192 = vmax.f32 %v2128, 0.0
  %v2193 = vmax.f32 %v2129, 0.0
  %v2194 = vmax.f32 %v2130, 0.0
  %v2195 = vmax.f32 %v2131, 0.0
  %v2196 = vmax.f32 %v2132, 0.0
  %v2197 = vmax.f32 %v2133, 0.0
  %v2198 = vmax.f32 %v2134, 0.0
  %v2199 = vmax.f32 %v2135, 0.0
  %v2200 = vmax.f32 %v2136, 0.0
  %v2201 = vmax.f32 %v2137, 0.0
  %v2202 = vmax.f32 %v2138, 0.0
  %v2203 = vmax.f32 %v2139, 0.0
  %v2204 = vmax.f32 %v2140, 0.0
  %v2205 = vmax.f32 %v2141, 0.0
  %v2206 = vmax.f32 %v2142, 0.0
  %v2207 = vmax.f32 %v2143, 0.0
  %v2208 = vmax.f32 %v2144, 0.0
  %v2209 = vmax.f32 %v2145, 0.0
  %v2210 = vmax.f32 %v2146, 0.0
  %v2211 = vmax.f32 %v2147, 0.0
  %v2212 = vmax.f32 %v2148, 0.0
  %v2213 = vmax.f32 %v2149, 0.0
  %v2214 = vmax.f32 %v2150, 0.0
  %v2215 = vmax.f32 %v2151, 0.0
  %v2216 = vmax.f32 %v2152, 0.0
  %v2217 = vmax.f32 %v2153, 0.0
  %v2218 = vmax.f32 %v2154, 0.0
  %v2219 = vmax.f32 %v2155, 0.0
  %v2220 = vmax.f32 %v2156, 0.0
  %v2221 = vmax.f32 %v2157, 0.0
  %v2222 = vmax.f32 %v2158, 0.0
  %v2223 = vmax.f32 %v2159, 0.0
  %2224 = vst.msk [vmem:[#allocation3 + $0x28] sm:$0xff] %vm771, %v2160
  %2225 = vst.msk [vmem:[#allocation3 + $0x30] sm:$0xff] %vm771, %v2161
  %2226 = vst.msk [vmem:[#allocation3 + $0x38] sm:$0xff] %vm771, %v2162
  %2227 = vst.msk [vmem:[#allocation3 + $0x40] sm:$0xff] %vm771, %v2163
  %2228 = vst.msk [vmem:[#allocation3 + $0x48] sm:$0xff] %vm771, %v2164
  %2229 = vst.msk [vmem:[#allocation3 + $0x50] sm:$0xff] %vm771, %v2165
  %2230 = vst.msk [vmem:[#allocation3 + $0x58] sm:$0xff] %vm771, %v2166
  %2231 = vst.msk [vmem:[#allocation3 + $0x60] sm:$0xff] %vm771, %v2167
  %2232 = vst.msk [vmem:[#allocation3 + $0x68] sm:$0xff] %vm771, %v2168
  %2233 = vst.msk [vmem:[#allocation3 + $0x70] sm:$0xff] %vm771, %v2169
  %2234 = vst.msk [vmem:[#allocation3 + $0x78] sm:$0xff] %vm771, %v2170
  %2235 = vst.msk [vmem:[#allocation3 + $0x80] sm:$0xff] %vm771, %v2171
  %2236 = vst.msk [vmem:[#allocation3 + $0x88] sm:$0xff] %vm771, %v2172
  %2237 = vst.msk [vmem:[#allocation3 + $0x90] sm:$0xff] %vm771, %v2173
  %2238 = vst.msk [vmem:[#allocation3 + $0x98] sm:$0xff] %vm771, %v2174
  %2239 = vst.msk [vmem:[#allocation3 + $0xa0] sm:$0xff] %vm771, %v2175
  %2240 = vst.msk [vmem:[#allocation3 + $0xa8] sm:$0xff] %vm771, %v2176
  %2241 = vst.msk [vmem:[#allocation3 + $0xb0] sm:$0xff] %vm771, %v2177
  %2242 = vst.msk [vmem:[#allocation3 + $0xb8] sm:$0xff] %vm771, %v2178
  %2243 = vst.msk [vmem:[#allocation3 + $0xc0] sm:$0xff] %vm771, %v2179
  %2244 = vst.msk [vmem:[#allocation3 + $0xc8] sm:$0xff] %vm771, %v2180
  %2245 = vst.msk [vmem:[#allocation3 + $0xd0] sm:$0xff] %vm771, %v2181
  %2246 = vst.msk [vmem:[#allocation3 + $0xd8] sm:$0xff] %vm771, %v2182
  %2247 = vst.msk [vmem:[#allocation3 + $0xe0] sm:$0xff] %vm771, %v2183
  %2248 = vst.msk [vmem:[#allocation3 + $0xe8] sm:$0xff] %vm771, %v2184
  %2249 = vst.msk [vmem:[#allocation3 + $0xf0] sm:$0xff] %vm771, %v2185
  %2250 = vst.msk [vmem:[#allocation3 + $0xf8] sm:$0xff] %vm771, %v2186
  %2251 = vst.msk [vmem:[#allocation3 + $0x100] sm:$0xff] %vm771, %v2187
  %2252 = vst.msk [vmem:[#allocation3 + $0x108] sm:$0xff] %vm771, %v2188
  %2253 = vst.msk [vmem:[#allocation3 + $0x110] sm:$0xff] %vm771, %v2189
  %2254 = vst.msk [vmem:[#allocation3 + $0x118] sm:$0xff] %vm771, %v2190
  %2255 = vst.msk [vmem:[#allocation3 + $0x120] sm:$0xff] %vm771, %v2191
  %2288 = vrot.lane.b32.xlu0 %v2160, 64
  %v2289 = vpop.permute.xlu0 %2288
  %2290 = vrot.lane.b32.xlu0 %v2161, 64
  %v2291 = vpop.permute.xlu0 %2290
  %2292 = vrot.lane.b32.xlu0 %v2162, 64
  %v2293 = vpop.permute.xlu0 %2292
  %2294 = vrot.lane.b32.xlu0 %v2163, 64
  %v2295 = vpop.permute.xlu0 %2294
  %2296 = vrot.lane.b32.xlu0 %v2164, 64
  %v2297 = vpop.permute.xlu0 %2296
  %2298 = vrot.lane.b32.xlu0 %v2165, 64
  %v2299 = vpop.permute.xlu0 %2298
  %2300 = vrot.lane.b32.xlu0 %v2166, 64
  %v2301 = vpop.permute.xlu0 %2300
  %2302 = vrot.lane.b32.xlu0 %v2167, 64
  %v2303 = vpop.permute.xlu0 %2302
  %2304 = vrot.lane.b32.xlu0 %v2168, 64
  %v2305 = vpop.permute.xlu0 %2304
  %2306 = vrot.lane.b32.xlu0 %v2169, 64
  %v2307 = vpop.permute.xlu0 %2306
  %2308 = vrot.lane.b32.xlu0 %v2170, 64
  %v2309 = vpop.permute.xlu0 %2308
  %2310 = vrot.lane.b32.xlu0 %v2171, 64
  %v2311 = vpop.permute.xlu0 %2310
  %2312 = vrot.lane.b32.xlu0 %v2172, 64
  %v2313 = vpop.permute.xlu0 %2312
  %2314 = vrot.lane.b32.xlu0 %v2173, 64
  %v2315 = vpop.permute.xlu0 %2314
  %2316 = vrot.lane.b32.xlu0 %v2174, 64
  %v2317 = vpop.permute.xlu0 %2316
  %2318 = vrot.lane.b32.xlu0 %v2175, 64
  %v2319 = vpop.permute.xlu0 %2318
  %2320 = vrot.lane.b32.xlu0 %v2176, 64
  %v2321 = vpop.permute.xlu0 %2320
  %2322 = vrot.lane.b32.xlu0 %v2177, 64
  %v2323 = vpop.permute.xlu0 %2322
  %2324 = vrot.lane.b32.xlu0 %v2178, 64
  %v2325 = vpop.permute.xlu0 %2324
  %2326 = vrot.lane.b32.xlu0 %v2179, 64
  %v2327 = vpop.permute.xlu0 %2326
  %2328 = vrot.lane.b32.xlu0 %v2180, 64
  %v2329 = vpop.permute.xlu0 %2328
  %2330 = vrot.lane.b32.xlu0 %v2181, 64
  %v2331 = vpop.permute.xlu0 %2330
  %2332 = vrot.lane.b32.xlu0 %v2182, 64
  %v2333 = vpop.permute.xlu0 %2332
  %2334 = vrot.lane.b32.xlu0 %v2183, 64
  %v2335 = vpop.permute.xlu0 %2334
  %2336 = vrot.lane.b32.xlu0 %v2184, 64
  %v2337 = vpop.permute.xlu0 %2336
  %2338 = vrot.lane.b32.xlu0 %v2185, 64
  %v2339 = vpop.permute.xlu0 %2338
  %2340 = vrot.lane.b32.xlu0 %v2186, 64
  %v2341 = vpop.permute.xlu0 %2340
  %2342 = vrot.lane.b32.xlu0 %v2187, 64
  %v2343 = vpop.permute.xlu0 %2342
  %2344 = vrot.lane.b32.xlu0 %v2188, 64
  %v2345 = vpop.permute.xlu0 %2344
  %2346 = vrot.lane.b32.xlu0 %v2189, 64
  %v2347 = vpop.permute.xlu0 %2346
  %2348 = vrot.lane.b32.xlu0 %v2190, 64
  %v2349 = vpop.permute.xlu0 %2348
  %2350 = vrot.lane.b32.xlu0 %v2191, 64
  %v2351 = vpop.permute.xlu0 %2350
  %2384 = vst.msk [vmem:[#allocation3 + $0x27] sm:$0xff] %vm932, %v2289
  %2385 = vst.msk [vmem:[#allocation3 + $0x2f] sm:$0xff] %vm932, %v2291
  %2386 = vst.msk [vmem:[#allocation3 + $0x37] sm:$0xff] %vm932, %v2293
  %2387 = vst.msk [vmem:[#allocation3 + $0x3f] sm:$0xff] %vm932, %v2295
  %2388 = vst.msk [vmem:[#allocation3 + $0x47] sm:$0xff] %vm932, %v2297
  %2389 = vst.msk [vmem:[#allocation3 + $0x4f] sm:$0xff] %vm932, %v2299
  %2390 = vst.msk [vmem:[#allocation3 + $0x57] sm:$0xff] %vm932, %v2301
  %2391 = vst.msk [vmem:[#allocation3 + $0x5f] sm:$0xff] %vm932, %v2303
  %2392 = vst.msk [vmem:[#allocation3 + $0x67] sm:$0xff] %vm932, %v2305
  %2393 = vst.msk [vmem:[#allocation3 + $0x6f] sm:$0xff] %vm932, %v2307
  %2394 = vst.msk [vmem:[#allocation3 + $0x77] sm:$0xff] %vm932, %v2309
  %2395 = vst.msk [vmem:[#allocation3 + $0x7f] sm:$0xff] %vm932, %v2311
  %2396 = vst.msk [vmem:[#allocation3 + $0x87] sm:$0xff] %vm932, %v2313
  %2397 = vst.msk [vmem:[#allocation3 + $0x8f] sm:$0xff] %vm932, %v2315
  %2398 = vst.msk [vmem:[#allocation3 + $0x97] sm:$0xff] %vm932, %v2317
  %2399 = vst.msk [vmem:[#allocation3 + $0x9f] sm:$0xff] %vm932, %v2319
  %2400 = vst.msk [vmem:[#allocation3 + $0xa7] sm:$0xff] %vm932, %v2321
  %2401 = vst.msk [vmem:[#allocation3 + $0xaf] sm:$0xff] %vm932, %v2323
  %2402 = vst.msk [vmem:[#allocation3 + $0xb7] sm:$0xff] %vm932, %v2325
  %2403 = vst.msk [vmem:[#allocation3 + $0xbf] sm:$0xff] %vm932, %v2327
  %2404 = vst.msk [vmem:[#allocation3 + $0xc7] sm:$0xff] %vm932, %v2329
  %2405 = vst.msk [vmem:[#allocation3 + $0xcf] sm:$0xff] %vm932, %v2331
  %2406 = vst.msk [vmem:[#allocation3 + $0xd7] sm:$0xff] %vm932, %v2333
  %2407 = vst.msk [vmem:[#allocation3 + $0xdf] sm:$0xff] %vm932, %v2335
  %2408 = vst.msk [vmem:[#allocation3 + $0xe7] sm:$0xff] %vm932, %v2337
  %2409 = vst.msk [vmem:[#allocation3 + $0xef] sm:$0xff] %vm932, %v2339
  %2410 = vst.msk [vmem:[#allocation3 + $0xf7] sm:$0xff] %vm932, %v2341
  %2411 = vst.msk [vmem:[#allocation3 + $0xff] sm:$0xff] %vm932, %v2343
  %2412 = vst.msk [vmem:[#allocation3 + $0x107] sm:$0xff] %vm932, %v2345
  %2413 = vst.msk [vmem:[#allocation3 + $0x10f] sm:$0xff] %vm932, %v2347
  %2414 = vst.msk [vmem:[#allocation3 + $0x117] sm:$0xff] %vm932, %v2349
  %2415 = vst.msk [vmem:[#allocation3 + $0x11f] sm:$0xff] %vm932, %v2351
  %2416 = vst.msk [vmem:[#allocation3 + $0x148] sm:$0xff] %vm771, %v2192
  %2417 = vst.msk [vmem:[#allocation3 + $0x150] sm:$0xff] %vm771, %v2193
  %2418 = vst.msk [vmem:[#allocation3 + $0x158] sm:$0xff] %vm771, %v2194
  %2419 = vst.msk [vmem:[#allocation3 + $0x160] sm:$0xff] %vm771, %v2195
  %2420 = vst.msk [vmem:[#allocation3 + $0x168] sm:$0xff] %vm771, %v2196
  %2421 = vst.msk [vmem:[#allocation3 + $0x170] sm:$0xff] %vm771, %v2197
  %2422 = vst.msk [vmem:[#allocation3 + $0x178] sm:$0xff] %vm771, %v2198
  %2423 = vst.msk [vmem:[#allocation3 + $0x180] sm:$0xff] %vm771, %v2199
  %2424 = vst.msk [vmem:[#allocation3 + $0x188] sm:$0xff] %vm771, %v2200
  %2425 = vst.msk [vmem:[#allocation3 + $0x190] sm:$0xff] %vm771, %v2201
  %2426 = vst.msk [vmem:[#allocation3 + $0x198] sm:$0xff] %vm771, %v2202
  %2427 = vst.msk [vmem:[#allocation3 + $0x1a0] sm:$0xff] %vm771, %v2203
  %2428 = vst.msk [vmem:[#allocation3 + $0x1a8] sm:$0xff] %vm771, %v2204
  %2429 = vst.msk [vmem:[#allocation3 + $0x1b0] sm:$0xff] %vm771, %v2205
  %2430 = vst.msk [vmem:[#allocation3 + $0x1b8] sm:$0xff] %vm771, %v2206
  %2431 = vst.msk [vmem:[#allocation3 + $0x1c0] sm:$0xff] %vm771, %v2207
  %2432 = vst.msk [vmem:[#allocation3 + $0x1c8] sm:$0xff] %vm771, %v2208
  %2433 = vst.msk [vmem:[#allocation3 + $0x1d0] sm:$0xff] %vm771, %v2209
  %2434 = vst.msk [vmem:[#allocation3 + $0x1d8] sm:$0xff] %vm771, %v2210
  %2435 = vst.msk [vmem:[#allocation3 + $0x1e0] sm:$0xff] %vm771, %v2211
  %2436 = vst.msk [vmem:[#allocation3 + $0x1e8] sm:$0xff] %vm771, %v2212
  %2437 = vst.msk [vmem:[#allocation3 + $0x1f0] sm:$0xff] %vm771, %v2213
  %2438 = vst.msk [vmem:[#allocation3 + $0x1f8] sm:$0xff] %vm771, %v2214
  %2439 = vst.msk [vmem:[#allocation3 + $0x200] sm:$0xff] %vm771, %v2215
  %2440 = vst.msk [vmem:[#allocation3 + $0x208] sm:$0xff] %vm771, %v2216
  %2441 = vst.msk [vmem:[#allocation3 + $0x210] sm:$0xff] %vm771, %v2217
  %2442 = vst.msk [vmem:[#allocation3 + $0x218] sm:$0xff] %vm771, %v2218
  %2443 = vst.msk [vmem:[#allocation3 + $0x220] sm:$0xff] %vm771, %v2219
  %2444 = vst.msk [vmem:[#allocation3 + $0x228] sm:$0xff] %vm771, %v2220
  %2445 = vst.msk [vmem:[#allocation3 + $0x230] sm:$0xff] %vm771, %v2221
  %2446 = vst.msk [vmem:[#allocation3 + $0x238] sm:$0xff] %vm771, %v2222
  %2447 = vst.msk [vmem:[#allocation3 + $0x240] sm:$0xff] %vm771, %v2223
  %2480 = vrot.lane.b32.xlu0 %v2192, 64
  %v2481 = vpop.permute.xlu0 %2480
  %2482 = vrot.lane.b32.xlu0 %v2193, 64
  %v2483 = vpop.permute.xlu0 %2482
  %2484 = vrot.lane.b32.xlu0 %v2194, 64
  %v2485 = vpop.permute.xlu0 %2484
  %2486 = vrot.lane.b32.xlu0 %v2195, 64
  %v2487 = vpop.permute.xlu0 %2486
  %2488 = vrot.lane.b32.xlu0 %v2196, 64
  %v2489 = vpop.permute.xlu0 %2488
  %2490 = vrot.lane.b32.xlu0 %v2197, 64
  %v2491 = vpop.permute.xlu0 %2490
  %2492 = vrot.lane.b32.xlu0 %v2198, 64
  %v2493 = vpop.permute.xlu0 %2492
  %2494 = vrot.lane.b32.xlu0 %v2199, 64
  %v2495 = vpop.permute.xlu0 %2494
  %2496 = vrot.lane.b32.xlu0 %v2200, 64
  %v2497 = vpop.permute.xlu0 %2496
  %2498 = vrot.lane.b32.xlu0 %v2201, 64
  %v2499 = vpop.permute.xlu0 %2498
  %2500 = vrot.lane.b32.xlu0 %v2202, 64
  %v2501 = vpop.permute.xlu0 %2500
  %2502 = vrot.lane.b32.xlu0 %v2203, 64
  %v2503 = vpop.permute.xlu0 %2502
  %2504 = vrot.lane.b32.xlu0 %v2204, 64
  %v2505 = vpop.permute.xlu0 %2504
  %2506 = vrot.lane.b32.xlu0 %v2205, 64
  %v2507 = vpop.permute.xlu0 %2506
  %2508 = vrot.lane.b32.xlu0 %v2206, 64
  %v2509 = vpop.permute.xlu0 %2508
  %2510 = vrot.lane.b32.xlu0 %v2207, 64
  %v2511 = vpop.permute.xlu0 %2510
  %2512 = vrot.lane.b32.xlu0 %v2208, 64
  %v2513 = vpop.permute.xlu0 %2512
  %2514 = vrot.lane.b32.xlu0 %v2209, 64
  %v2515 = vpop.permute.xlu0 %2514
  %2516 = vrot.lane.b32.xlu0 %v2210, 64
  %v2517 = vpop.permute.xlu0 %2516
  %2518 = vrot.lane.b32.xlu0 %v2211, 64
  %v2519 = vpop.permute.xlu0 %2518
  %2520 = vrot.lane.b32.xlu0 %v2212, 64
  %v2521 = vpop.permute.xlu0 %2520
  %2522 = vrot.lane.b32.xlu0 %v2213, 64
  %v2523 = vpop.permute.xlu0 %2522
  %2524 = vrot.lane.b32.xlu0 %v2214, 64
  %v2525 = vpop.permute.xlu0 %2524
  %2526 = vrot.lane.b32.xlu0 %v2215, 64
  %v2527 = vpop.permute.xlu0 %2526
  %2528 = vrot.lane.b32.xlu0 %v2216, 64
  %v2529 = vpop.permute.xlu0 %2528
  %2530 = vrot.lane.b32.xlu0 %v2217, 64
  %v2531 = vpop.permute.xlu0 %2530
  %2532 = vrot.lane.b32.xlu0 %v2218, 64
  %v2533 = vpop.permute.xlu0 %2532
  %2534 = vrot.lane.b32.xlu0 %v2219, 64
  %v2535 = vpop.permute.xlu0 %2534
  %2536 = vrot.lane.b32.xlu0 %v2220, 64
  %v2537 = vpop.permute.xlu0 %2536
  %2538 = vrot.lane.b32.xlu0 %v2221, 64
  %v2539 = vpop.permute.xlu0 %2538
  %2540 = vrot.lane.b32.xlu0 %v2222, 64
  %v2541 = vpop.permute.xlu0 %2540
  %2542 = vrot.lane.b32.xlu0 %v2223, 64
  %v2543 = vpop.permute.xlu0 %2542
  %2576 = vst.msk [vmem:[#allocation3 + $0x147] sm:$0xff] %vm932, %v2481
  %2577 = vst.msk [vmem:[#allocation3 + $0x14f] sm:$0xff] %vm932, %v2483
  %2578 = vst.msk [vmem:[#allocation3 + $0x157] sm:$0xff] %vm932, %v2485
  %2579 = vst.msk [vmem:[#allocation3 + $0x15f] sm:$0xff] %vm932, %v2487
  %2580 = vst.msk [vmem:[#allocation3 + $0x167] sm:$0xff] %vm932, %v2489
  %2581 = vst.msk [vmem:[#allocation3 + $0x16f] sm:$0xff] %vm932, %v2491
  %2582 = vst.msk [vmem:[#allocation3 + $0x177] sm:$0xff] %vm932, %v2493
  %2583 = vst.msk [vmem:[#allocation3 + $0x17f] sm:$0xff] %vm932, %v2495
  %2584 = vst.msk [vmem:[#allocation3 + $0x187] sm:$0xff] %vm932, %v2497
  %2585 = vst.msk [vmem:[#allocation3 + $0x18f] sm:$0xff] %vm932, %v2499
  %2586 = vst.msk [vmem:[#allocation3 + $0x197] sm:$0xff] %vm932, %v2501
  %2587 = vst.msk [vmem:[#allocation3 + $0x19f] sm:$0xff] %vm932, %v2503
  %2588 = vst.msk [vmem:[#allocation3 + $0x1a7] sm:$0xff] %vm932, %v2505
  %2589 = vst.msk [vmem:[#allocation3 + $0x1af] sm:$0xff] %vm932, %v2507
  %2590 = vst.msk [vmem:[#allocation3 + $0x1b7] sm:$0xff] %vm932, %v2509
  %2591 = vst.msk [vmem:[#allocation3 + $0x1bf] sm:$0xff] %vm932, %v2511
  %2592 = vst.msk [vmem:[#allocation3 + $0x1c7] sm:$0xff] %vm932, %v2513
  %2593 = vst.msk [vmem:[#allocation3 + $0x1cf] sm:$0xff] %vm932, %v2515
  %2594 = vst.msk [vmem:[#allocation3 + $0x1d7] sm:$0xff] %vm932, %v2517
  %2595 = vst.msk [vmem:[#allocation3 + $0x1df] sm:$0xff] %vm932, %v2519
  %2596 = vst.msk [vmem:[#allocation3 + $0x1e7] sm:$0xff] %vm932, %v2521
  %2597 = vst.msk [vmem:[#allocation3 + $0x1ef] sm:$0xff] %vm932, %v2523
  %2598 = vst.msk [vmem:[#allocation3 + $0x1f7] sm:$0xff] %vm932, %v2525
  %2599 = vst.msk [vmem:[#allocation3 + $0x1ff] sm:$0xff] %vm932, %v2527
  %2600 = vst.msk [vmem:[#allocation3 + $0x207] sm:$0xff] %vm932, %v2529
  %2601 = vst.msk [vmem:[#allocation3 + $0x20f] sm:$0xff] %vm932, %v2531
  %2602 = vst.msk [vmem:[#allocation3 + $0x217] sm:$0xff] %vm932, %v2533
  %2603 = vst.msk [vmem:[#allocation3 + $0x21f] sm:$0xff] %vm932, %v2535
  %2604 = vst.msk [vmem:[#allocation3 + $0x227] sm:$0xff] %vm932, %v2537
  %2605 = vst.msk [vmem:[#allocation3 + $0x22f] sm:$0xff] %vm932, %v2539
  %2606 = vst.msk [vmem:[#allocation3 + $0x237] sm:$0xff] %vm932, %v2541
  %2607 = vst.msk [vmem:[#allocation3 + $0x23f] sm:$0xff] %vm932, %v2543
  %v2608 = vld [vmem:[#allocation3 + $0x8] sm:$0xff]
  %v2609 = vld [vmem:[#allocation3 + $0x10] sm:$0xff]
  %v2610 = vld [vmem:[#allocation3 + $0x18] sm:$0xff]
  %v2611 = vld [vmem:[#allocation3 + $0x20] sm:$0xff]
  %v2612 = vld [vmem:[#allocation3 + $0x28] sm:$0xff]
  %v2613 = vld [vmem:[#allocation3 + $0x30] sm:$0xff]
  %v2614 = vld [vmem:[#allocation3 + $0x38] sm:$0xff]
  %v2615 = vld [vmem:[#allocation3 + $0x40] sm:$0xff]
  %v2616 = vld [vmem:[#allocation3 + $0x48] sm:$0xff]
  %v2617 = vld [vmem:[#allocation3 + $0x50] sm:$0xff]
  %v2618 = vld [vmem:[#allocation3 + $0x58] sm:$0xff]
  %v2619 = vld [vmem:[#allocation3 + $0x60] sm:$0xff]
  %v2620 = vld [vmem:[#allocation3 + $0x68] sm:$0xff]
  %v2621 = vld [vmem:[#allocation3 + $0x70] sm:$0xff]
  %v2622 = vld [vmem:[#allocation3 + $0x78] sm:$0xff]
  %v2623 = vld [vmem:[#allocation3 + $0x80] sm:$0xff]
  %v2624 = vld [vmem:[#allocation3 + $0x88] sm:$0xff]
  %v2625 = vld [vmem:[#allocation3 + $0x90] sm:$0xff]
  %v2626 = vld [vmem:[#allocation3 + $0x98] sm:$0xff]
  %v2627 = vld [vmem:[#allocation3 + $0xa0] sm:$0xff]
  %v2628 = vld [vmem:[#allocation3 + $0xa8] sm:$0xff]
  %v2629 = vld [vmem:[#allocation3 + $0xb0] sm:$0xff]
  %v2630 = vld [vmem:[#allocation3 + $0xb8] sm:$0xff]
  %v2631 = vld [vmem:[#allocation3 + $0xc0] sm:$0xff]
  %v2632 = vld [vmem:[#allocation3 + $0xc8] sm:$0xff]
  %v2633 = vld [vmem:[#allocation3 + $0xd0] sm:$0xff]
  %v2634 = vld [vmem:[#allocation3 + $0xd8] sm:$0xff]
  %v2635 = vld [vmem:[#allocation3 + $0xe0] sm:$0xff]
  %v2636 = vld [vmem:[#allocation3 + $0xe8] sm:$0xff]
  %v2637 = vld [vmem:[#allocation3 + $0xf0] sm:$0xff]
  %v2638 = vld [vmem:[#allocation3 + $0xf8] sm:$0xff]
  %v2639 = vld [vmem:[#allocation3 + $0x100] sm:$0xff]
  %v2640 = vld [vmem:[#allocation3 + $0x108] sm:$0xff]
  %v2641 = vld [vmem:[#allocation3 + $0x110] sm:$0xff]
  %v2642 = vld [vmem:[#allocation3 + $0x118] sm:$0xff]
  %v2643 = vld [vmem:[#allocation3 + $0x120] sm:$0xff]
  %v2644 = vld [vmem:[#allocation3 + $0x128] sm:$0xff]
  %v2645 = vld [vmem:[#allocation3 + $0x130] sm:$0xff]
  %v2646 = vld [vmem:[#allocation3 + $0x138] sm:$0xff]
  %v2647 = vld [vmem:[#allocation3 + $0x140] sm:$0xff]
  %v2648 = vld [vmem:[#allocation3 + $0x148] sm:$0xff]
  %v2649 = vld [vmem:[#allocation3 + $0x150] sm:$0xff]
  %v2650 = vld [vmem:[#allocation3 + $0x158] sm:$0xff]
  %v2651 = vld [vmem:[#allocation3 + $0x160] sm:$0xff]
  %v2652 = vld [vmem:[#allocation3 + $0x168] sm:$0xff]
  %v2653 = vld [vmem:[#allocation3 + $0x170] sm:$0xff]
  %v2654 = vld [vmem:[#allocation3 + $0x178] sm:$0xff]
  %v2655 = vld [vmem:[#allocation3 + $0x180] sm:$0xff]
  %v2656 = vld [vmem:[#allocation3 + $0x188] sm:$0xff]
  %v2657 = vld [vmem:[#allocation3 + $0x190] sm:$0xff]
  %v2658 = vld [vmem:[#allocation3 + $0x198] sm:$0xff]
  %v2659 = vld [vmem:[#allocation3 + $0x1a0] sm:$0xff]
  %v2660 = vld [vmem:[#allocation3 + $0x1a8] sm:$0xff]
  %v2661 = vld [vmem:[#allocation3 + $0x1b0] sm:$0xff]
  %v2662 = vld [vmem:[#allocation3 + $0x1b8] sm:$0xff]
  %v2663 = vld [vmem:[#allocation3 + $0x1c0] sm:$0xff]
  %v2664 = vld [vmem:[#allocation3 + $0x1c8] sm:$0xff]
  %v2665 = vld [vmem:[#allocation3 + $0x1d0] sm:$0xff]
  %v2666 = vld [vmem:[#allocation3 + $0x1d8] sm:$0xff]
  %v2667 = vld [vmem:[#allocation3 + $0x1e0] sm:$0xff]
  %v2668 = vld [vmem:[#allocation3 + $0x1e8] sm:$0xff]
  %v2669 = vld [vmem:[#allocation3 + $0x1f0] sm:$0xff]
  %v2670 = vld [vmem:[#allocation3 + $0x1f8] sm:$0xff]
  %v2671 = vld [vmem:[#allocation3 + $0x200] sm:$0xff]
  %v2672 = vld [vmem:[#allocation3 + $0x208] sm:$0xff]
  %v2673 = vld [vmem:[#allocation3 + $0x210] sm:$0xff]
  %v2674 = vld [vmem:[#allocation3 + $0x218] sm:$0xff]
  %v2675 = vld [vmem:[#allocation3 + $0x220] sm:$0xff]
  %v2676 = vld [vmem:[#allocation3 + $0x228] sm:$0xff]
  %v2677 = vld [vmem:[#allocation3 + $0x230] sm:$0xff]
  %v2678 = vld [vmem:[#allocation3 + $0x238] sm:$0xff]
  %v2679 = vld [vmem:[#allocation3 + $0x240] sm:$0xff]
  %v2680 = vld [vmem:[%s5] sm:$0xff]
  %v2681 = vld [vmem:[%s5 + $0x8] sm:$0xff]
  %v2682 = vld [vmem:[%s5 + $0x10] sm:$0xff]
  %v2683 = vld [vmem:[%s5 + $0x18] sm:$0xff]
  %v2684 = vld [vmem:[%s5 + $0x20] sm:$0xff]
  %v2685 = vld [vmem:[%s5 + $0x28] sm:$0xff]
  %v2686 = vld [vmem:[%s5 + $0x30] sm:$0xff]
  %v2687 = vld [vmem:[%s5 + $0x38] sm:$0xff]
  %v2688 = vld [vmem:[%s5 + $0x40] sm:$0xff]
  %v2689 = vld [vmem:[%s5 + $0x48] sm:$0xff]
  %v2690 = vld [vmem:[%s5 + $0x50] sm:$0xff]
  %v2691 = vld [vmem:[%s5 + $0x58] sm:$0xff]
  %v2692 = vld [vmem:[%s5 + $0x60] sm:$0xff]
  %v2693 = vld [vmem:[%s5 + $0x68] sm:$0xff]
  %v2694 = vld [vmem:[%s5 + $0x70] sm:$0xff]
  %v2695 = vld [vmem:[%s5 + $0x78] sm:$0xff]
  %v2696 = vld [vmem:[#allocation3 + $0x248] sm:$0xff]
  %v2697 = vld [vmem:[#allocation3 + $0x250] sm:$0xff]
  %s2698 = scalar_lea.vmem %s5, 128
  %v2699 = vld [vmem:[%s2698] sm:$0xff]
  %v2700 = vld [vmem:[%s2698 + $0x8] sm:$0xff]
  %v2701 = vld [vmem:[%s2698 + $0x10] sm:$0xff]
  %v2702 = vld [vmem:[%s2698 + $0x18] sm:$0xff]
  %v2703 = vld [vmem:[%s2698 + $0x20] sm:$0xff]
  %v2704 = vld [vmem:[%s2698 + $0x28] sm:$0xff]
  %v2705 = vld [vmem:[%s2698 + $0x30] sm:$0xff]
  %v2706 = vld [vmem:[%s2698 + $0x38] sm:$0xff]
  %v2707 = vld [vmem:[%s2698 + $0x40] sm:$0xff]
  %v2708 = vld [vmem:[%s2698 + $0x48] sm:$0xff]
  %v2709 = vld [vmem:[%s2698 + $0x50] sm:$0xff]
  %v2710 = vld [vmem:[%s2698 + $0x58] sm:$0xff]
  %v2711 = vld [vmem:[%s2698 + $0x60] sm:$0xff]
  %v2712 = vld [vmem:[%s2698 + $0x68] sm:$0xff]
  %v2713 = vld [vmem:[%s2698 + $0x70] sm:$0xff]
  %v2714 = vld [vmem:[%s2698 + $0x78] sm:$0xff]
  %2715 = vmatpush.msra.mxu0 %v2714
  %2716 = vmatpush.msra.mxu0 %v2713
  %2717 = vmatpush.msra.mxu0 %v2712
  %2718 = vmatpush.msra.mxu0 %v2711
  %2719 = vmatpush.msra.mxu0 %v2710
  %2720 = vmatpush.msra.mxu0 %v2709
  %2721 = vmatpush.msra.mxu0 %v2708
  %2722 = vmatpush.msra.mxu0 %v2707
  %2723 = vmatpush.msra.mxu0 %v2706
  %2724 = vmatpush.msra.mxu0 %v2705
  %2725 = vmatpush.msra.mxu0 %v2704
  %2726 = vmatpush.msra.mxu0 %v2703
  %2727 = vmatpush.msra.mxu0 %v2702
  %2728 = vmatpush.msra.mxu0 %v2701
  %2729 = vmatpush.msra.mxu0 %v2700
  %2730 = vmatpush.msra.mxu0 %v2699
  %2731 = vmatmul.f32.gmra.mxu0 %v2610
  %v2732 = vpop.f32.mrf.mxu0
  %2733 = vmatmul.f32.gmra.mxu0 %v2611
  %v2734 = vpop.f32.mrf.mxu0
  %2735 = vmatmul.f32.gmra.mxu0 %v2612
  %v2736 = vpop.f32.mrf.mxu0
  %v2737 = vadd.f32 0.0, %v2736
  %2738 = vmatmul.f32.gmra.mxu0 %v2613
  %v2739 = vpop.f32.mrf.mxu0
  %v2740 = vadd.f32 0.0, %v2739
  %2741 = vmatmul.f32.gmra.mxu0 %v2614
  %v2742 = vpop.f32.mrf.mxu0
  %v2743 = vadd.f32 0.0, %v2742
  %2744 = vmatmul.f32.gmra.mxu0 %v2615
  %v2745 = vpop.f32.mrf.mxu0
  %v2746 = vadd.f32 0.0, %v2745
  %2747 = vmatmul.f32.gmra.mxu0 %v2616
  %v2748 = vpop.f32.mrf.mxu0
  %v2749 = vadd.f32 0.0, %v2748
  %2750 = vmatmul.f32.gmra.mxu0 %v2617
  %v2751 = vpop.f32.mrf.mxu0
  %v2752 = vadd.f32 0.0, %v2751
  %2753 = vmatmul.f32.gmra.mxu0 %v2618
  %v2754 = vpop.f32.mrf.mxu0
  %v2755 = vadd.f32 0.0, %v2754
  %2756 = vmatmul.f32.gmra.mxu0 %v2619
  %v2757 = vpop.f32.mrf.mxu0
  %v2758 = vadd.f32 0.0, %v2757
  %2759 = vmatmul.f32.gmra.mxu0 %v2620
  %v2760 = vpop.f32.mrf.mxu0
  %v2761 = vadd.f32 0.0, %v2760
  %2762 = vmatmul.f32.gmra.mxu0 %v2621
  %v2763 = vpop.f32.mrf.mxu0
  %v2764 = vadd.f32 0.0, %v2763
  %2765 = vmatmul.f32.gmra.mxu0 %v2622
  %v2766 = vpop.f32.mrf.mxu0
  %v2767 = vadd.f32 0.0, %v2766
  %2768 = vmatmul.f32.gmra.mxu0 %v2623
  %v2769 = vpop.f32.mrf.mxu0
  %v2770 = vadd.f32 0.0, %v2769
  %2771 = vmatmul.f32.gmra.mxu0 %v2624
  %v2772 = vpop.f32.mrf.mxu0
  %v2773 = vadd.f32 0.0, %v2772
  %2774 = vmatmul.f32.gmra.mxu0 %v2625
  %v2775 = vpop.f32.mrf.mxu0
  %v2776 = vadd.f32 0.0, %v2775
  %2777 = vmatmul.f32.gmra.mxu0 %v2626
  %v2778 = vpop.f32.mrf.mxu0
  %v2779 = vadd.f32 0.0, %v2778
  %2780 = vmatmul.f32.gmra.mxu0 %v2627
  %v2781 = vpop.f32.mrf.mxu0
  %v2782 = vadd.f32 0.0, %v2781
  %2783 = vmatmul.f32.gmra.mxu0 %v2628
  %v2784 = vpop.f32.mrf.mxu0
  %v2785 = vadd.f32 0.0, %v2784
  %2786 = vmatmul.f32.gmra.mxu0 %v2629
  %v2787 = vpop.f32.mrf.mxu0
  %v2788 = vadd.f32 0.0, %v2787
  %2789 = vmatmul.f32.gmra.mxu0 %v2630
  %v2790 = vpop.f32.mrf.mxu0
  %v2791 = vadd.f32 0.0, %v2790
  %2792 = vmatmul.f32.gmra.mxu0 %v2631
  %v2793 = vpop.f32.mrf.mxu0
  %v2794 = vadd.f32 0.0, %v2793
  %2795 = vmatmul.f32.gmra.mxu0 %v2632
  %v2796 = vpop.f32.mrf.mxu0
  %v2797 = vadd.f32 0.0, %v2796
  %2798 = vmatmul.f32.gmra.mxu0 %v2633
  %v2799 = vpop.f32.mrf.mxu0
  %v2800 = vadd.f32 0.0, %v2799
  %2801 = vmatmul.f32.gmra.mxu0 %v2634
  %v2802 = vpop.f32.mrf.mxu0
  %v2803 = vadd.f32 0.0, %v2802
  %2804 = vmatmul.f32.gmra.mxu0 %v2635
  %v2805 = vpop.f32.mrf.mxu0
  %v2806 = vadd.f32 0.0, %v2805
  %2807 = vmatmul.f32.gmra.mxu0 %v2636
  %v2808 = vpop.f32.mrf.mxu0
  %v2809 = vadd.f32 0.0, %v2808
  %2810 = vmatmul.f32.gmra.mxu0 %v2637
  %v2811 = vpop.f32.mrf.mxu0
  %v2812 = vadd.f32 0.0, %v2811
  %2813 = vmatmul.f32.gmra.mxu0 %v2638
  %v2814 = vpop.f32.mrf.mxu0
  %v2815 = vadd.f32 0.0, %v2814
  %2816 = vmatmul.f32.gmra.mxu0 %v2639
  %v2817 = vpop.f32.mrf.mxu0
  %v2818 = vadd.f32 0.0, %v2817
  %2819 = vmatmul.f32.gmra.mxu0 %v2640
  %v2820 = vpop.f32.mrf.mxu0
  %v2821 = vadd.f32 0.0, %v2820
  %2822 = vmatmul.f32.gmra.mxu0 %v2641
  %v2823 = vpop.f32.mrf.mxu0
  %v2824 = vadd.f32 0.0, %v2823
  %2825 = vmatmul.f32.gmra.mxu0 %v2642
  %v2826 = vpop.f32.mrf.mxu0
  %v2827 = vadd.f32 0.0, %v2826
  %2828 = vmatmul.f32.gmra.mxu0 %v2643
  %v2829 = vpop.f32.mrf.mxu0
  %v2830 = vadd.f32 0.0, %v2829
  %2831 = vmatmul.f32.gmra.mxu0 %v2644
  %v2832 = vpop.f32.mrf.mxu0
  %2833 = vmatmul.f32.gmra.mxu0 %v2645
  %v2834 = vpop.f32.mrf.mxu0
  %2835 = vmatmul.f32.gmra.mxu0 %v2646
  %v2836 = vpop.f32.mrf.mxu0
  %2837 = vmatmul.f32.gmra.mxu0 %v2647
  %v2838 = vpop.f32.mrf.mxu0
  %2839 = vmatmul.f32.gmra.mxu0 %v2648
  %v2840 = vpop.f32.mrf.mxu0
  %v2841 = vadd.f32 0.0, %v2840
  %2842 = vmatmul.f32.gmra.mxu0 %v2649
  %v2843 = vpop.f32.mrf.mxu0
  %v2844 = vadd.f32 0.0, %v2843
  %2845 = vmatmul.f32.gmra.mxu0 %v2650
  %v2846 = vpop.f32.mrf.mxu0
  %v2847 = vadd.f32 0.0, %v2846
  %2848 = vmatmul.f32.gmra.mxu0 %v2651
  %v2849 = vpop.f32.mrf.mxu0
  %v2850 = vadd.f32 0.0, %v2849
  %2851 = vmatmul.f32.gmra.mxu0 %v2652
  %v2852 = vpop.f32.mrf.mxu0
  %v2853 = vadd.f32 0.0, %v2852
  %2854 = vmatmul.f32.gmra.mxu0 %v2653
  %v2855 = vpop.f32.mrf.mxu0
  %v2856 = vadd.f32 0.0, %v2855
  %2857 = vmatmul.f32.gmra.mxu0 %v2654
  %v2858 = vpop.f32.mrf.mxu0
  %v2859 = vadd.f32 0.0, %v2858
  %2860 = vmatmul.f32.gmra.mxu0 %v2655
  %v2861 = vpop.f32.mrf.mxu0
  %v2862 = vadd.f32 0.0, %v2861
  %2863 = vmatmul.f32.gmra.mxu0 %v2656
  %v2864 = vpop.f32.mrf.mxu0
  %v2865 = vadd.f32 0.0, %v2864
  %2866 = vmatmul.f32.gmra.mxu0 %v2657
  %v2867 = vpop.f32.mrf.mxu0
  %v2868 = vadd.f32 0.0, %v2867
  %2869 = vmatmul.f32.gmra.mxu0 %v2658
  %v2870 = vpop.f32.mrf.mxu0
  %v2871 = vadd.f32 0.0, %v2870
  %2872 = vmatmul.f32.gmra.mxu0 %v2659
  %v2873 = vpop.f32.mrf.mxu0
  %v2874 = vadd.f32 0.0, %v2873
  %2875 = vmatmul.f32.gmra.mxu0 %v2660
  %v2876 = vpop.f32.mrf.mxu0
  %v2877 = vadd.f32 0.0, %v2876
  %2878 = vmatmul.f32.gmra.mxu0 %v2661
  %v2879 = vpop.f32.mrf.mxu0
  %v2880 = vadd.f32 0.0, %v2879
  %2881 = vmatmul.f32.gmra.mxu0 %v2662
  %v2882 = vpop.f32.mrf.mxu0
  %v2883 = vadd.f32 0.0, %v2882
  %2884 = vmatmul.f32.gmra.mxu0 %v2663
  %v2885 = vpop.f32.mrf.mxu0
  %v2886 = vadd.f32 0.0, %v2885
  %2887 = vmatmul.f32.gmra.mxu0 %v2664
  %v2888 = vpop.f32.mrf.mxu0
  %v2889 = vadd.f32 0.0, %v2888
  %2890 = vmatmul.f32.gmra.mxu0 %v2665
  %v2891 = vpop.f32.mrf.mxu0
  %v2892 = vadd.f32 0.0, %v2891
  %2893 = vmatmul.f32.gmra.mxu0 %v2666
  %v2894 = vpop.f32.mrf.mxu0
  %v2895 = vadd.f32 0.0, %v2894
  %2896 = vmatmul.f32.gmra.mxu0 %v2667
  %v2897 = vpop.f32.mrf.mxu0
  %v2898 = vadd.f32 0.0, %v2897
  %2899 = vmatmul.f32.gmra.mxu0 %v2668
  %v2900 = vpop.f32.mrf.mxu0
  %v2901 = vadd.f32 0.0, %v2900
  %2902 = vmatmul.f32.gmra.mxu0 %v2669
  %v2903 = vpop.f32.mrf.mxu0
  %v2904 = vadd.f32 0.0, %v2903
  %2905 = vmatmul.f32.gmra.mxu0 %v2670
  %v2906 = vpop.f32.mrf.mxu0
  %v2907 = vadd.f32 0.0, %v2906
  %2908 = vmatmul.f32.gmra.mxu0 %v2671
  %v2909 = vpop.f32.mrf.mxu0
  %v2910 = vadd.f32 0.0, %v2909
  %2911 = vmatmul.f32.gmra.mxu0 %v2672
  %v2912 = vpop.f32.mrf.mxu0
  %v2913 = vadd.f32 0.0, %v2912
  %2914 = vmatmul.f32.gmra.mxu0 %v2673
  %v2915 = vpop.f32.mrf.mxu0
  %v2916 = vadd.f32 0.0, %v2915
  %2917 = vmatmul.f32.gmra.mxu0 %v2674
  %v2918 = vpop.f32.mrf.mxu0
  %v2919 = vadd.f32 0.0, %v2918
  %2920 = vmatmul.f32.gmra.mxu0 %v2675
  %v2921 = vpop.f32.mrf.mxu0
  %v2922 = vadd.f32 0.0, %v2921
  %2923 = vmatmul.f32.gmra.mxu0 %v2676
  %v2924 = vpop.f32.mrf.mxu0
  %v2925 = vadd.f32 0.0, %v2924
  %2926 = vmatmul.f32.gmra.mxu0 %v2677
  %v2927 = vpop.f32.mrf.mxu0
  %v2928 = vadd.f32 0.0, %v2927
  %2929 = vmatmul.f32.gmra.mxu0 %v2678
  %v2930 = vpop.f32.mrf.mxu0
  %v2931 = vadd.f32 0.0, %v2930
  %2932 = vmatmul.f32.gmra.mxu0 %v2679
  %v2933 = vpop.f32.mrf.mxu0
  %v2934 = vadd.f32 0.0, %v2933
  %2935 = vmatmul.f32.gmra.mxu0 %v2696
  %v2936 = vpop.f32.mrf.mxu0
  %2937 = vmatmul.f32.gmra.mxu0 %v2697
  %v2938 = vpop.f32.mrf.mxu0
  %2939 = vdwg.mxu0
  %2940 = vmatpush.msra.mxu0 %v2695
  %2941 = vmatpush.msra.mxu0 %v2694
  %2942 = vmatpush.msra.mxu0 %v2693
  %2943 = vmatpush.msra.mxu0 %v2692
  %2944 = vmatpush.msra.mxu0 %v2691
  %2945 = vmatpush.msra.mxu0 %v2690
  %2946 = vmatpush.msra.mxu0 %v2689
  %2947 = vmatpush.msra.mxu0 %v2688
  %2948 = vmatpush.msra.mxu0 %v2687
  %2949 = vmatpush.msra.mxu0 %v2686
  %2950 = vmatpush.msra.mxu0 %v2685
  %2951 = vmatpush.msra.mxu0 %v2684
  %2952 = vmatpush.msra.mxu0 %v2683
  %2953 = vmatpush.msra.mxu0 %v2682
  %2954 = vmatpush.msra.mxu0 %v2681
  %2955 = vmatpush.msra.mxu0 %v2680
  %2956 = vmatmul.f32.gmra.mxu0 %v2608
  %v2957 = vpop.f32.mrf.mxu0
  %2958 = vmatmul.f32.gmra.mxu0 %v2609
  %v2959 = vpop.f32.mrf.mxu0
  %2960 = vmatmul.f32.gmra.mxu0 %v2610
  %v2961 = vpop.f32.mrf.mxu0
  %v2962 = vadd.f32 %v2737, %v2961
  %2963 = vmatmul.f32.gmra.mxu0 %v2611
  %v2964 = vpop.f32.mrf.mxu0
  %v2965 = vadd.f32 %v2740, %v2964
  %2966 = vmatmul.f32.gmra.mxu0 %v2612
  %v2967 = vpop.f32.mrf.mxu0
  %v2968 = vadd.f32 %v2743, %v2967
  %2969 = vmatmul.f32.gmra.mxu0 %v2613
  %v2970 = vpop.f32.mrf.mxu0
  %v2971 = vadd.f32 %v2746, %v2970
  %2972 = vmatmul.f32.gmra.mxu0 %v2614
  %v2973 = vpop.f32.mrf.mxu0
  %v2974 = vadd.f32 %v2749, %v2973
  %2975 = vmatmul.f32.gmra.mxu0 %v2615
  %v2976 = vpop.f32.mrf.mxu0
  %v2977 = vadd.f32 %v2752, %v2976
  %2978 = vmatmul.f32.gmra.mxu0 %v2616
  %v2979 = vpop.f32.mrf.mxu0
  %v2980 = vadd.f32 %v2755, %v2979
  %2981 = vmatmul.f32.gmra.mxu0 %v2617
  %v2982 = vpop.f32.mrf.mxu0
  %v2983 = vadd.f32 %v2758, %v2982
  %2984 = vmatmul.f32.gmra.mxu0 %v2618
  %v2985 = vpop.f32.mrf.mxu0
  %v2986 = vadd.f32 %v2761, %v2985
  %2987 = vmatmul.f32.gmra.mxu0 %v2619
  %v2988 = vpop.f32.mrf.mxu0
  %v2989 = vadd.f32 %v2764, %v2988
  %2990 = vmatmul.f32.gmra.mxu0 %v2620
  %v2991 = vpop.f32.mrf.mxu0
  %v2992 = vadd.f32 %v2767, %v2991
  %2993 = vmatmul.f32.gmra.mxu0 %v2621
  %v2994 = vpop.f32.mrf.mxu0
  %v2995 = vadd.f32 %v2770, %v2994
  %2996 = vmatmul.f32.gmra.mxu0 %v2622
  %v2997 = vpop.f32.mrf.mxu0
  %v2998 = vadd.f32 %v2773, %v2997
  %2999 = vmatmul.f32.gmra.mxu0 %v2623
  %v3000 = vpop.f32.mrf.mxu0
  %v3001 = vadd.f32 %v2776, %v3000
  %3002 = vmatmul.f32.gmra.mxu0 %v2624
  %v3003 = vpop.f32.mrf.mxu0
  %v3004 = vadd.f32 %v2779, %v3003
  %3005 = vmatmul.f32.gmra.mxu0 %v2625
  %v3006 = vpop.f32.mrf.mxu0
  %v3007 = vadd.f32 %v2782, %v3006
  %3008 = vmatmul.f32.gmra.mxu0 %v2626
  %v3009 = vpop.f32.mrf.mxu0
  %v3010 = vadd.f32 %v2785, %v3009
  %3011 = vmatmul.f32.gmra.mxu0 %v2627
  %v3012 = vpop.f32.mrf.mxu0
  %v3013 = vadd.f32 %v2788, %v3012
  %3014 = vmatmul.f32.gmra.mxu0 %v2628
  %v3015 = vpop.f32.mrf.mxu0
  %v3016 = vadd.f32 %v2791, %v3015
  %3017 = vmatmul.f32.gmra.mxu0 %v2629
  %v3018 = vpop.f32.mrf.mxu0
  %v3019 = vadd.f32 %v2794, %v3018
  %3020 = vmatmul.f32.gmra.mxu0 %v2630
  %v3021 = vpop.f32.mrf.mxu0
  %v3022 = vadd.f32 %v2797, %v3021
  %3023 = vmatmul.f32.gmra.mxu0 %v2631
  %v3024 = vpop.f32.mrf.mxu0
  %v3025 = vadd.f32 %v2800, %v3024
  %3026 = vmatmul.f32.gmra.mxu0 %v2632
  %v3027 = vpop.f32.mrf.mxu0
  %v3028 = vadd.f32 %v2803, %v3027
  %3029 = vmatmul.f32.gmra.mxu0 %v2633
  %v3030 = vpop.f32.mrf.mxu0
  %v3031 = vadd.f32 %v2806, %v3030
  %3032 = vmatmul.f32.gmra.mxu0 %v2634
  %v3033 = vpop.f32.mrf.mxu0
  %v3034 = vadd.f32 %v2809, %v3033
  %3035 = vmatmul.f32.gmra.mxu0 %v2635
  %v3036 = vpop.f32.mrf.mxu0
  %v3037 = vadd.f32 %v2812, %v3036
  %3038 = vmatmul.f32.gmra.mxu0 %v2636
  %v3039 = vpop.f32.mrf.mxu0
  %v3040 = vadd.f32 %v2815, %v3039
  %3041 = vmatmul.f32.gmra.mxu0 %v2637
  %v3042 = vpop.f32.mrf.mxu0
  %v3043 = vadd.f32 %v2818, %v3042
  %3044 = vmatmul.f32.gmra.mxu0 %v2638
  %v3045 = vpop.f32.mrf.mxu0
  %v3046 = vadd.f32 %v2821, %v3045
  %3047 = vmatmul.f32.gmra.mxu0 %v2639
  %v3048 = vpop.f32.mrf.mxu0
  %v3049 = vadd.f32 %v2824, %v3048
  %3050 = vmatmul.f32.gmra.mxu0 %v2640
  %v3051 = vpop.f32.mrf.mxu0
  %v3052 = vadd.f32 %v2827, %v3051
  %3053 = vmatmul.f32.gmra.mxu0 %v2641
  %v3054 = vpop.f32.mrf.mxu0
  %v3055 = vadd.f32 %v2830, %v3054
  %3056 = vmatmul.f32.gmra.mxu0 %v2642
  %v3057 = vpop.f32.mrf.mxu0
  %3058 = vmatmul.f32.gmra.mxu0 %v2643
  %v3059 = vpop.f32.mrf.mxu0
  %3060 = vmatmul.f32.gmra.mxu0 %v2644
  %v3061 = vpop.f32.mrf.mxu0
  %3062 = vmatmul.f32.gmra.mxu0 %v2645
  %v3063 = vpop.f32.mrf.mxu0
  %3064 = vmatmul.f32.gmra.mxu0 %v2646
  %v3065 = vpop.f32.mrf.mxu0
  %v3066 = vadd.f32 %v2841, %v3065
  %3067 = vmatmul.f32.gmra.mxu0 %v2647
  %v3068 = vpop.f32.mrf.mxu0
  %v3069 = vadd.f32 %v2844, %v3068
  %3070 = vmatmul.f32.gmra.mxu0 %v2648
  %v3071 = vpop.f32.mrf.mxu0
  %v3072 = vadd.f32 %v2847, %v3071
  %3073 = vmatmul.f32.gmra.mxu0 %v2649
  %v3074 = vpop.f32.mrf.mxu0
  %v3075 = vadd.f32 %v2850, %v3074
  %3076 = vmatmul.f32.gmra.mxu0 %v2650
  %v3077 = vpop.f32.mrf.mxu0
  %v3078 = vadd.f32 %v2853, %v3077
  %3079 = vmatmul.f32.gmra.mxu0 %v2651
  %v3080 = vpop.f32.mrf.mxu0
  %v3081 = vadd.f32 %v2856, %v3080
  %3082 = vmatmul.f32.gmra.mxu0 %v2652
  %v3083 = vpop.f32.mrf.mxu0
  %v3084 = vadd.f32 %v2859, %v3083
  %3085 = vmatmul.f32.gmra.mxu0 %v2653
  %v3086 = vpop.f32.mrf.mxu0
  %v3087 = vadd.f32 %v2862, %v3086
  %3088 = vmatmul.f32.gmra.mxu0 %v2654
  %v3089 = vpop.f32.mrf.mxu0
  %v3090 = vadd.f32 %v2865, %v3089
  %3091 = vmatmul.f32.gmra.mxu0 %v2655
  %v3092 = vpop.f32.mrf.mxu0
  %v3093 = vadd.f32 %v2868, %v3092
  %3094 = vmatmul.f32.gmra.mxu0 %v2656
  %v3095 = vpop.f32.mrf.mxu0
  %v3096 = vadd.f32 %v2871, %v3095
  %3097 = vmatmul.f32.gmra.mxu0 %v2657
  %v3098 = vpop.f32.mrf.mxu0
  %v3099 = vadd.f32 %v2874, %v3098
  %3100 = vmatmul.f32.gmra.mxu0 %v2658
  %v3101 = vpop.f32.mrf.mxu0
  %v3102 = vadd.f32 %v2877, %v3101
  %3103 = vmatmul.f32.gmra.mxu0 %v2659
  %v3104 = vpop.f32.mrf.mxu0
  %v3105 = vadd.f32 %v2880, %v3104
  %3106 = vmatmul.f32.gmra.mxu0 %v2660
  %v3107 = vpop.f32.mrf.mxu0
  %v3108 = vadd.f32 %v2883, %v3107
  %3109 = vmatmul.f32.gmra.mxu0 %v2661
  %v3110 = vpop.f32.mrf.mxu0
  %v3111 = vadd.f32 %v2886, %v3110
  %3112 = vmatmul.f32.gmra.mxu0 %v2662
  %v3113 = vpop.f32.mrf.mxu0
  %v3114 = vadd.f32 %v2889, %v3113
  %3115 = vmatmul.f32.gmra.mxu0 %v2663
  %v3116 = vpop.f32.mrf.mxu0
  %v3117 = vadd.f32 %v2892, %v3116
  %3118 = vmatmul.f32.gmra.mxu0 %v2664
  %v3119 = vpop.f32.mrf.mxu0
  %v3120 = vadd.f32 %v2895, %v3119
  %3121 = vmatmul.f32.gmra.mxu0 %v2665
  %v3122 = vpop.f32.mrf.mxu0
  %v3123 = vadd.f32 %v2898, %v3122
  %3124 = vmatmul.f32.gmra.mxu0 %v2666
  %v3125 = vpop.f32.mrf.mxu0
  %v3126 = vadd.f32 %v2901, %v3125
  %3127 = vmatmul.f32.gmra.mxu0 %v2667
  %v3128 = vpop.f32.mrf.mxu0
  %v3129 = vadd.f32 %v2904, %v3128
  %3130 = vmatmul.f32.gmra.mxu0 %v2668
  %v3131 = vpop.f32.mrf.mxu0
  %v3132 = vadd.f32 %v2907, %v3131
  %3133 = vmatmul.f32.gmra.mxu0 %v2669
  %v3134 = vpop.f32.mrf.mxu0
  %v3135 = vadd.f32 %v2910, %v3134
  %3136 = vmatmul.f32.gmra.mxu0 %v2670
  %v3137 = vpop.f32.mrf.mxu0
  %v3138 = vadd.f32 %v2913, %v3137
  %3139 = vmatmul.f32.gmra.mxu0 %v2671
  %v3140 = vpop.f32.mrf.mxu0
  %v3141 = vadd.f32 %v2916, %v3140
  %3142 = vmatmul.f32.gmra.mxu0 %v2672
  %v3143 = vpop.f32.mrf.mxu0
  %v3144 = vadd.f32 %v2919, %v3143
  %3145 = vmatmul.f32.gmra.mxu0 %v2673
  %v3146 = vpop.f32.mrf.mxu0
  %v3147 = vadd.f32 %v2922, %v3146
  %3148 = vmatmul.f32.gmra.mxu0 %v2674
  %v3149 = vpop.f32.mrf.mxu0
  %v3150 = vadd.f32 %v2925, %v3149
  %3151 = vmatmul.f32.gmra.mxu0 %v2675
  %v3152 = vpop.f32.mrf.mxu0
  %v3153 = vadd.f32 %v2928, %v3152
  %3154 = vmatmul.f32.gmra.mxu0 %v2676
  %v3155 = vpop.f32.mrf.mxu0
  %v3156 = vadd.f32 %v2931, %v3155
  %3157 = vmatmul.f32.gmra.mxu0 %v2677
  %v3158 = vpop.f32.mrf.mxu0
  %v3159 = vadd.f32 %v2934, %v3158
  %3160 = vmatmul.f32.gmra.mxu0 %v2678
  %v3161 = vpop.f32.mrf.mxu0
  %3162 = vmatmul.f32.gmra.mxu0 %v2679
  %v3163 = vpop.f32.mrf.mxu0
  %3164 = vdwg.mxu0
  %v3165 = vld [vmem:[#allocation3 + $0x28] sm:$0xff]
  %v3166 = vld [vmem:[#allocation3 + $0x30] sm:$0xff]
  %v3167 = vld [vmem:[#allocation3 + $0x38] sm:$0xff]
  %v3168 = vld [vmem:[#allocation3 + $0x40] sm:$0xff]
  %v3169 = vld [vmem:[#allocation3 + $0x48] sm:$0xff]
  %v3170 = vld [vmem:[#allocation3 + $0x50] sm:$0xff]
  %v3171 = vld [vmem:[#allocation3 + $0x58] sm:$0xff]
  %v3172 = vld [vmem:[#allocation3 + $0x60] sm:$0xff]
  %v3173 = vld [vmem:[#allocation3 + $0x68] sm:$0xff]
  %v3174 = vld [vmem:[#allocation3 + $0x70] sm:$0xff]
  %v3175 = vld [vmem:[#allocation3 + $0x78] sm:$0xff]
  %v3176 = vld [vmem:[#allocation3 + $0x80] sm:$0xff]
  %v3177 = vld [vmem:[#allocation3 + $0x88] sm:$0xff]
  %v3178 = vld [vmem:[#allocation3 + $0x90] sm:$0xff]
  %v3179 = vld [vmem:[#allocation3 + $0x98] sm:$0xff]
  %v3180 = vld [vmem:[#allocation3 + $0xa0] sm:$0xff]
  %v3181 = vld [vmem:[#allocation3 + $0xa8] sm:$0xff]
  %v3182 = vld [vmem:[#allocation3 + $0xb0] sm:$0xff]
  %v3183 = vld [vmem:[#allocation3 + $0xb8] sm:$0xff]
  %v3184 = vld [vmem:[#allocation3 + $0xc0] sm:$0xff]
  %v3185 = vld [vmem:[#allocation3 + $0xc8] sm:$0xff]
  %v3186 = vld [vmem:[#allocation3 + $0xd0] sm:$0xff]
  %v3187 = vld [vmem:[#allocation3 + $0xd8] sm:$0xff]
  %v3188 = vld [vmem:[#allocation3 + $0xe0] sm:$0xff]
  %v3189 = vld [vmem:[#allocation3 + $0xe8] sm:$0xff]
  %v3190 = vld [vmem:[#allocation3 + $0xf0] sm:$0xff]
  %v3191 = vld [vmem:[#allocation3 + $0xf8] sm:$0xff]
  %v3192 = vld [vmem:[#allocation3 + $0x100] sm:$0xff]
  %v3193 = vld [vmem:[#allocation3 + $0x108] sm:$0xff]
  %v3194 = vld [vmem:[#allocation3 + $0x110] sm:$0xff]
  %v3195 = vld [vmem:[#allocation3 + $0x118] sm:$0xff]
  %v3196 = vld [vmem:[#allocation3 + $0x120] sm:$0xff]
  %v3197 = vld [vmem:[#allocation3 + $0x128] sm:$0xff]
  %v3198 = vld [vmem:[#allocation3 + $0x130] sm:$0xff]
  %v3199 = vld [vmem:[#allocation3 + $0x138] sm:$0xff]
  %v3200 = vld [vmem:[#allocation3 + $0x140] sm:$0xff]
  %v3201 = vld [vmem:[#allocation3 + $0x148] sm:$0xff]
  %v3202 = vld [vmem:[#allocation3 + $0x150] sm:$0xff]
  %v3203 = vld [vmem:[#allocation3 + $0x158] sm:$0xff]
  %v3204 = vld [vmem:[#allocation3 + $0x160] sm:$0xff]
  %v3205 = vld [vmem:[#allocation3 + $0x168] sm:$0xff]
  %v3206 = vld [vmem:[#allocation3 + $0x170] sm:$0xff]
  %v3207 = vld [vmem:[#allocation3 + $0x178] sm:$0xff]
  %v3208 = vld [vmem:[#allocation3 + $0x180] sm:$0xff]
  %v3209 = vld [vmem:[#allocation3 + $0x188] sm:$0xff]
  %v3210 = vld [vmem:[#allocation3 + $0x190] sm:$0xff]
  %v3211 = vld [vmem:[#allocation3 + $0x198] sm:$0xff]
  %v3212 = vld [vmem:[#allocation3 + $0x1a0] sm:$0xff]
  %v3213 = vld [vmem:[#allocation3 + $0x1a8] sm:$0xff]
  %v3214 = vld [vmem:[#allocation3 + $0x1b0] sm:$0xff]
  %v3215 = vld [vmem:[#allocation3 + $0x1b8] sm:$0xff]
  %v3216 = vld [vmem:[#allocation3 + $0x1c0] sm:$0xff]
  %v3217 = vld [vmem:[#allocation3 + $0x1c8] sm:$0xff]
  %v3218 = vld [vmem:[#allocation3 + $0x1d0] sm:$0xff]
  %v3219 = vld [vmem:[#allocation3 + $0x1d8] sm:$0xff]
  %v3220 = vld [vmem:[#allocation3 + $0x1e0] sm:$0xff]
  %v3221 = vld [vmem:[#allocation3 + $0x1e8] sm:$0xff]
  %v3222 = vld [vmem:[#allocation3 + $0x1f0] sm:$0xff]
  %v3223 = vld [vmem:[#allocation3 + $0x1f8] sm:$0xff]
  %v3224 = vld [vmem:[#allocation3 + $0x200] sm:$0xff]
  %v3225 = vld [vmem:[#allocation3 + $0x208] sm:$0xff]
  %v3226 = vld [vmem:[#allocation3 + $0x210] sm:$0xff]
  %v3227 = vld [vmem:[#allocation3 + $0x218] sm:$0xff]
  %v3228 = vld [vmem:[#allocation3 + $0x220] sm:$0xff]
  %v3229 = vld [vmem:[#allocation3 + $0x228] sm:$0xff]
  %v3230 = vld [vmem:[#allocation3 + $0x230] sm:$0xff]
  %v3231 = vld [vmem:[#allocation3 + $0x238] sm:$0xff]
  %v3232 = vld [vmem:[#allocation3 + $0x240] sm:$0xff]
  %v3233 = vld [vmem:[#allocation3 + $0x248] sm:$0xff]
  %v3234 = vld [vmem:[#allocation3 + $0x250] sm:$0xff]
  %v3235 = vld [vmem:[#allocation3 + $0x258] sm:$0xff]
  %v3236 = vld [vmem:[#allocation3 + $0x260] sm:$0xff]
  %s3237 = scalar_lea.vmem %s5, 256
  %v3238 = vld [vmem:[%s3237] sm:$0xff]
  %v3239 = vld [vmem:[%s3237 + $0x8] sm:$0xff]
  %v3240 = vld [vmem:[%s3237 + $0x10] sm:$0xff]
  %v3241 = vld [vmem:[%s3237 + $0x18] sm:$0xff]
  %v3242 = vld [vmem:[%s3237 + $0x20] sm:$0xff]
  %v3243 = vld [vmem:[%s3237 + $0x28] sm:$0xff]
  %v3244 = vld [vmem:[%s3237 + $0x30] sm:$0xff]
  %v3245 = vld [vmem:[%s3237 + $0x38] sm:$0xff]
  %v3246 = vld [vmem:[%s3237 + $0x40] sm:$0xff]
  %v3247 = vld [vmem:[%s3237 + $0x48] sm:$0xff]
  %v3248 = vld [vmem:[%s3237 + $0x50] sm:$0xff]
  %v3249 = vld [vmem:[%s3237 + $0x58] sm:$0xff]
  %v3250 = vld [vmem:[%s3237 + $0x60] sm:$0xff]
  %v3251 = vld [vmem:[%s3237 + $0x68] sm:$0xff]
  %v3252 = vld [vmem:[%s3237 + $0x70] sm:$0xff]
  %v3253 = vld [vmem:[%s3237 + $0x78] sm:$0xff]
  %3254 = vmatpush.msra.mxu0 %v3253
  %3255 = vmatpush.msra.mxu0 %v3252
  %3256 = vmatpush.msra.mxu0 %v3251
  %3257 = vmatpush.msra.mxu0 %v3250
  %3258 = vmatpush.msra.mxu0 %v3249
  %3259 = vmatpush.msra.mxu0 %v3248
  %3260 = vmatpush.msra.mxu0 %v3247
  %3261 = vmatpush.msra.mxu0 %v3246
  %3262 = vmatpush.msra.mxu0 %v3245
  %3263 = vmatpush.msra.mxu0 %v3244
  %3264 = vmatpush.msra.mxu0 %v3243
  %3265 = vmatpush.msra.mxu0 %v3242
  %3266 = vmatpush.msra.mxu0 %v3241
  %3267 = vmatpush.msra.mxu0 %v3240
  %3268 = vmatpush.msra.mxu0 %v3239
  %3269 = vmatpush.msra.mxu0 %v3238
  %3270 = vmatmul.f32.gmra.mxu0 %v3165
  %v3271 = vpop.f32.mrf.mxu0
  %3272 = vmatmul.f32.gmra.mxu0 %v3166
  %v3273 = vpop.f32.mrf.mxu0
  %3274 = vmatmul.f32.gmra.mxu0 %v3167
  %v3275 = vpop.f32.mrf.mxu0
  %v3276 = vadd.f32 0.0, %v3275
  %3277 = vmatmul.f32.gmra.mxu0 %v3168
  %v3278 = vpop.f32.mrf.mxu0
  %v3279 = vadd.f32 0.0, %v3278
  %3280 = vmatmul.f32.gmra.mxu0 %v3169
  %v3281 = vpop.f32.mrf.mxu0
  %v3282 = vadd.f32 0.0, %v3281
  %3283 = vmatmul.f32.gmra.mxu0 %v3170
  %v3284 = vpop.f32.mrf.mxu0
  %v3285 = vadd.f32 0.0, %v3284
  %3286 = vmatmul.f32.gmra.mxu0 %v3171
  %v3287 = vpop.f32.mrf.mxu0
  %v3288 = vadd.f32 0.0, %v3287
  %3289 = vmatmul.f32.gmra.mxu0 %v3172
  %v3290 = vpop.f32.mrf.mxu0
  %v3291 = vadd.f32 0.0, %v3290
  %3292 = vmatmul.f32.gmra.mxu0 %v3173
  %v3293 = vpop.f32.mrf.mxu0
  %v3294 = vadd.f32 0.0, %v3293
  %3295 = vmatmul.f32.gmra.mxu0 %v3174
  %v3296 = vpop.f32.mrf.mxu0
  %v3297 = vadd.f32 0.0, %v3296
  %3298 = vmatmul.f32.gmra.mxu0 %v3175
  %v3299 = vpop.f32.mrf.mxu0
  %v3300 = vadd.f32 0.0, %v3299
  %3301 = vmatmul.f32.gmra.mxu0 %v3176
  %v3302 = vpop.f32.mrf.mxu0
  %v3303 = vadd.f32 0.0, %v3302
  %3304 = vmatmul.f32.gmra.mxu0 %v3177
  %v3305 = vpop.f32.mrf.mxu0
  %v3306 = vadd.f32 0.0, %v3305
  %3307 = vmatmul.f32.gmra.mxu0 %v3178
  %v3308 = vpop.f32.mrf.mxu0
  %v3309 = vadd.f32 0.0, %v3308
  %3310 = vmatmul.f32.gmra.mxu0 %v3179
  %v3311 = vpop.f32.mrf.mxu0
  %v3312 = vadd.f32 0.0, %v3311
  %3313 = vmatmul.f32.gmra.mxu0 %v3180
  %v3314 = vpop.f32.mrf.mxu0
  %v3315 = vadd.f32 0.0, %v3314
  %3316 = vmatmul.f32.gmra.mxu0 %v3181
  %v3317 = vpop.f32.mrf.mxu0
  %v3318 = vadd.f32 0.0, %v3317
  %3319 = vmatmul.f32.gmra.mxu0 %v3182
  %v3320 = vpop.f32.mrf.mxu0
  %v3321 = vadd.f32 0.0, %v3320
  %3322 = vmatmul.f32.gmra.mxu0 %v3183
  %v3323 = vpop.f32.mrf.mxu0
  %v3324 = vadd.f32 0.0, %v3323
  %3325 = vmatmul.f32.gmra.mxu0 %v3184
  %v3326 = vpop.f32.mrf.mxu0
  %v3327 = vadd.f32 0.0, %v3326
  %3328 = vmatmul.f32.gmra.mxu0 %v3185
  %v3329 = vpop.f32.mrf.mxu0
  %v3330 = vadd.f32 0.0, %v3329
  %3331 = vmatmul.f32.gmra.mxu0 %v3186
  %v3332 = vpop.f32.mrf.mxu0
  %v3333 = vadd.f32 0.0, %v3332
  %3334 = vmatmul.f32.gmra.mxu0 %v3187
  %v3335 = vpop.f32.mrf.mxu0
  %v3336 = vadd.f32 0.0, %v3335
  %3337 = vmatmul.f32.gmra.mxu0 %v3188
  %v3338 = vpop.f32.mrf.mxu0
  %v3339 = vadd.f32 0.0, %v3338
  %3340 = vmatmul.f32.gmra.mxu0 %v3189
  %v3341 = vpop.f32.mrf.mxu0
  %v3342 = vadd.f32 0.0, %v3341
  %3343 = vmatmul.f32.gmra.mxu0 %v3190
  %v3344 = vpop.f32.mrf.mxu0
  %v3345 = vadd.f32 0.0, %v3344
  %3346 = vmatmul.f32.gmra.mxu0 %v3191
  %v3347 = vpop.f32.mrf.mxu0
  %v3348 = vadd.f32 0.0, %v3347
  %3349 = vmatmul.f32.gmra.mxu0 %v3192
  %v3350 = vpop.f32.mrf.mxu0
  %v3351 = vadd.f32 0.0, %v3350
  %3352 = vmatmul.f32.gmra.mxu0 %v3193
  %v3353 = vpop.f32.mrf.mxu0
  %v3354 = vadd.f32 0.0, %v3353
  %3355 = vmatmul.f32.gmra.mxu0 %v3194
  %v3356 = vpop.f32.mrf.mxu0
  %v3357 = vadd.f32 0.0, %v3356
  %3358 = vmatmul.f32.gmra.mxu0 %v3195
  %v3359 = vpop.f32.mrf.mxu0
  %v3360 = vadd.f32 0.0, %v3359
  %3361 = vmatmul.f32.gmra.mxu0 %v3196
  %v3362 = vpop.f32.mrf.mxu0
  %v3363 = vadd.f32 0.0, %v3362
  %3364 = vmatmul.f32.gmra.mxu0 %v3197
  %v3365 = vpop.f32.mrf.mxu0
  %v3366 = vadd.f32 0.0, %v3365
  %3367 = vmatmul.f32.gmra.mxu0 %v3198
  %v3368 = vpop.f32.mrf.mxu0
  %v3369 = vadd.f32 0.0, %v3368
  %3370 = vmatmul.f32.gmra.mxu0 %v3199
  %v3371 = vpop.f32.mrf.mxu0
  %3372 = vmatmul.f32.gmra.mxu0 %v3200
  %v3373 = vpop.f32.mrf.mxu0
  %3374 = vmatmul.f32.gmra.mxu0 %v3201
  %v3375 = vpop.f32.mrf.mxu0
  %3376 = vmatmul.f32.gmra.mxu0 %v3202
  %v3377 = vpop.f32.mrf.mxu0
  %3378 = vmatmul.f32.gmra.mxu0 %v3203
  %v3379 = vpop.f32.mrf.mxu0
  %v3380 = vadd.f32 0.0, %v3379
  %3381 = vmatmul.f32.gmra.mxu0 %v3204
  %v3382 = vpop.f32.mrf.mxu0
  %v3383 = vadd.f32 0.0, %v3382
  %3384 = vmatmul.f32.gmra.mxu0 %v3205
  %v3385 = vpop.f32.mrf.mxu0
  %v3386 = vadd.f32 0.0, %v3385
  %3387 = vmatmul.f32.gmra.mxu0 %v3206
  %v3388 = vpop.f32.mrf.mxu0
  %v3389 = vadd.f32 0.0, %v3388
  %3390 = vmatmul.f32.gmra.mxu0 %v3207
  %v3391 = vpop.f32.mrf.mxu0
  %v3392 = vadd.f32 0.0, %v3391
  %3393 = vmatmul.f32.gmra.mxu0 %v3208
  %v3394 = vpop.f32.mrf.mxu0
  %v3395 = vadd.f32 0.0, %v3394
  %3396 = vmatmul.f32.gmra.mxu0 %v3209
  %v3397 = vpop.f32.mrf.mxu0
  %v3398 = vadd.f32 0.0, %v3397
  %3399 = vmatmul.f32.gmra.mxu0 %v3210
  %v3400 = vpop.f32.mrf.mxu0
  %v3401 = vadd.f32 0.0, %v3400
  %3402 = vmatmul.f32.gmra.mxu0 %v3211
  %v3403 = vpop.f32.mrf.mxu0
  %v3404 = vadd.f32 0.0, %v3403
  %3405 = vmatmul.f32.gmra.mxu0 %v3212
  %v3406 = vpop.f32.mrf.mxu0
  %v3407 = vadd.f32 0.0, %v3406
  %3408 = vmatmul.f32.gmra.mxu0 %v3213
  %v3409 = vpop.f32.mrf.mxu0
  %v3410 = vadd.f32 0.0, %v3409
  %3411 = vmatmul.f32.gmra.mxu0 %v3214
  %v3412 = vpop.f32.mrf.mxu0
  %v3413 = vadd.f32 0.0, %v3412
  %3414 = vmatmul.f32.gmra.mxu0 %v3215
  %v3415 = vpop.f32.mrf.mxu0
  %v3416 = vadd.f32 0.0, %v3415
  %3417 = vmatmul.f32.gmra.mxu0 %v3216
  %v3418 = vpop.f32.mrf.mxu0
  %v3419 = vadd.f32 0.0, %v3418
  %3420 = vmatmul.f32.gmra.mxu0 %v3217
  %v3421 = vpop.f32.mrf.mxu0
  %v3422 = vadd.f32 0.0, %v3421
  %3423 = vmatmul.f32.gmra.mxu0 %v3218
  %v3424 = vpop.f32.mrf.mxu0
  %v3425 = vadd.f32 0.0, %v3424
  %3426 = vmatmul.f32.gmra.mxu0 %v3219
  %v3427 = vpop.f32.mrf.mxu0
  %v3428 = vadd.f32 0.0, %v3427
  %3429 = vmatmul.f32.gmra.mxu0 %v3220
  %v3430 = vpop.f32.mrf.mxu0
  %v3431 = vadd.f32 0.0, %v3430
  %3432 = vmatmul.f32.gmra.mxu0 %v3221
  %v3433 = vpop.f32.mrf.mxu0
  %v3434 = vadd.f32 0.0, %v3433
  %3435 = vmatmul.f32.gmra.mxu0 %v3222
  %v3436 = vpop.f32.mrf.mxu0
  %v3437 = vadd.f32 0.0, %v3436
  %3438 = vmatmul.f32.gmra.mxu0 %v3223
  %v3439 = vpop.f32.mrf.mxu0
  %v3440 = vadd.f32 0.0, %v3439
  %3441 = vmatmul.f32.gmra.mxu0 %v3224
  %v3442 = vpop.f32.mrf.mxu0
  %v3443 = vadd.f32 0.0, %v3442
  %3444 = vmatmul.f32.gmra.mxu0 %v3225
  %v3445 = vpop.f32.mrf.mxu0
  %v3446 = vadd.f32 0.0, %v3445
  %3447 = vmatmul.f32.gmra.mxu0 %v3226
  %v3448 = vpop.f32.mrf.mxu0
  %v3449 = vadd.f32 0.0, %v3448
  %3450 = vmatmul.f32.gmra.mxu0 %v3227
  %v3451 = vpop.f32.mrf.mxu0
  %v3452 = vadd.f32 0.0, %v3451
  %3453 = vmatmul.f32.gmra.mxu0 %v3228
  %v3454 = vpop.f32.mrf.mxu0
  %v3455 = vadd.f32 0.0, %v3454
  %3456 = vmatmul.f32.gmra.mxu0 %v3229
  %v3457 = vpop.f32.mrf.mxu0
  %v3458 = vadd.f32 0.0, %v3457
  %3459 = vmatmul.f32.gmra.mxu0 %v3230
  %v3460 = vpop.f32.mrf.mxu0
  %v3461 = vadd.f32 0.0, %v3460
  %3462 = vmatmul.f32.gmra.mxu0 %v3231
  %v3463 = vpop.f32.mrf.mxu0
  %v3464 = vadd.f32 0.0, %v3463
  %3465 = vmatmul.f32.gmra.mxu0 %v3232
  %v3466 = vpop.f32.mrf.mxu0
  %v3467 = vadd.f32 0.0, %v3466
  %3468 = vmatmul.f32.gmra.mxu0 %v3233
  %v3469 = vpop.f32.mrf.mxu0
  %v3470 = vadd.f32 0.0, %v3469
  %3471 = vmatmul.f32.gmra.mxu0 %v3234
  %v3472 = vpop.f32.mrf.mxu0
  %v3473 = vadd.f32 0.0, %v3472
  %3474 = vmatmul.f32.gmra.mxu0 %v3235
  %v3475 = vpop.f32.mrf.mxu0
  %3476 = vmatmul.f32.gmra.mxu0 %v3236
  %v3477 = vpop.f32.mrf.mxu0
  %3478 = vdwg.mxu0
  %v3479 = vadd.f32 %v2962, %v3276
  %v3480 = vadd.f32 %v2965, %v3279
  %v3481 = vadd.f32 %v2968, %v3282
  %v3482 = vadd.f32 %v2971, %v3285
  %v3483 = vadd.f32 %v2974, %v3288
  %v3484 = vadd.f32 %v2977, %v3291
  %v3485 = vadd.f32 %v2980, %v3294
  %v3486 = vadd.f32 %v2983, %v3297
  %v3487 = vadd.f32 %v2986, %v3300
  %v3488 = vadd.f32 %v2989, %v3303
  %v3489 = vadd.f32 %v2992, %v3306
  %v3490 = vadd.f32 %v2995, %v3309
  %v3491 = vadd.f32 %v2998, %v3312
  %v3492 = vadd.f32 %v3001, %v3315
  %v3493 = vadd.f32 %v3004, %v3318
  %v3494 = vadd.f32 %v3007, %v3321
  %v3495 = vadd.f32 %v3010, %v3324
  %v3496 = vadd.f32 %v3013, %v3327
  %v3497 = vadd.f32 %v3016, %v3330
  %v3498 = vadd.f32 %v3019, %v3333
  %v3499 = vadd.f32 %v3022, %v3336
  %v3500 = vadd.f32 %v3025, %v3339
  %v3501 = vadd.f32 %v3028, %v3342
  %v3502 = vadd.f32 %v3031, %v3345
  %v3503 = vadd.f32 %v3034, %v3348
  %v3504 = vadd.f32 %v3037, %v3351
  %v3505 = vadd.f32 %v3040, %v3354
  %v3506 = vadd.f32 %v3043, %v3357
  %v3507 = vadd.f32 %v3046, %v3360
  %v3508 = vadd.f32 %v3049, %v3363
  %v3509 = vadd.f32 %v3052, %v3366
  %v3510 = vadd.f32 %v3055, %v3369
  %v3511 = vadd.f32 %v3066, %v3380
  %v3512 = vadd.f32 %v3069, %v3383
  %v3513 = vadd.f32 %v3072, %v3386
  %v3514 = vadd.f32 %v3075, %v3389
  %v3515 = vadd.f32 %v3078, %v3392
  %v3516 = vadd.f32 %v3081, %v3395
  %v3517 = vadd.f32 %v3084, %v3398
  %v3518 = vadd.f32 %v3087, %v3401
  %v3519 = vadd.f32 %v3090, %v3404
  %v3520 = vadd.f32 %v3093, %v3407
  %v3521 = vadd.f32 %v3096, %v3410
  %v3522 = vadd.f32 %v3099, %v3413
  %v3523 = vadd.f32 %v3102, %v3416
  %v3524 = vadd.f32 %v3105, %v3419
  %v3525 = vadd.f32 %v3108, %v3422
  %v3526 = vadd.f32 %v3111, %v3425
  %v3527 = vadd.f32 %v3114, %v3428
  %v3528 = vadd.f32 %v3117, %v3431
  %v3529 = vadd.f32 %v3120, %v3434
  %v3530 = vadd.f32 %v3123, %v3437
  %v3531 = vadd.f32 %v3126, %v3440
  %v3532 = vadd.f32 %v3129, %v3443
  %v3533 = vadd.f32 %v3132, %v3446
  %v3534 = vadd.f32 %v3135, %v3449
  %v3535 = vadd.f32 %v3138, %v3452
  %v3536 = vadd.f32 %v3141, %v3455
  %v3537 = vadd.f32 %v3144, %v3458
  %v3538 = vadd.f32 %v3147, %v3461
  %v3539 = vadd.f32 %v3150, %v3464
  %v3540 = vadd.f32 %v3153, %v3467
  %v3541 = vadd.f32 %v3156, %v3470
  %v3542 = vadd.f32 %v3159, %v3473
  %v3543 = vld [vmem:[%s6] sm:$0x1]
  %v3545 = vperm.slane %v3543, 0
  %v3547 = vadd.f32 %v3479, %v3545
  %v3548 = vadd.f32 %v3480, %v3545
  %v3549 = vadd.f32 %v3481, %v3545
  %v3550 = vadd.f32 %v3482, %v3545
  %v3551 = vadd.f32 %v3483, %v3545
  %v3552 = vadd.f32 %v3484, %v3545
  %v3553 = vadd.f32 %v3485, %v3545
  %v3554 = vadd.f32 %v3486, %v3545
  %v3555 = vadd.f32 %v3487, %v3545
  %v3556 = vadd.f32 %v3488, %v3545
  %v3557 = vadd.f32 %v3489, %v3545
  %v3558 = vadd.f32 %v3490, %v3545
  %v3559 = vadd.f32 %v3491, %v3545
  %v3560 = vadd.f32 %v3492, %v3545
  %v3561 = vadd.f32 %v3493, %v3545
  %v3562 = vadd.f32 %v3494, %v3545
  %v3563 = vadd.f32 %v3495, %v3545
  %v3564 = vadd.f32 %v3496, %v3545
  %v3565 = vadd.f32 %v3497, %v3545
  %v3566 = vadd.f32 %v3498, %v3545
  %v3567 = vadd.f32 %v3499, %v3545
  %v3568 = vadd.f32 %v3500, %v3545
  %v3569 = vadd.f32 %v3501, %v3545
  %v3570 = vadd.f32 %v3502, %v3545
  %v3571 = vadd.f32 %v3503, %v3545
  %v3572 = vadd.f32 %v3504, %v3545
  %v3573 = vadd.f32 %v3505, %v3545
  %v3574 = vadd.f32 %v3506, %v3545
  %v3575 = vadd.f32 %v3507, %v3545
  %v3576 = vadd.f32 %v3508, %v3545
  %v3577 = vadd.f32 %v3509, %v3545
  %v3578 = vadd.f32 %v3510, %v3545
  %v3579 = vadd.f32 %v3511, %v3545
  %v3580 = vadd.f32 %v3512, %v3545
  %v3581 = vadd.f32 %v3513, %v3545
  %v3582 = vadd.f32 %v3514, %v3545
  %v3583 = vadd.f32 %v3515, %v3545
  %v3584 = vadd.f32 %v3516, %v3545
  %v3585 = vadd.f32 %v3517, %v3545
  %v3586 = vadd.f32 %v3518, %v3545
  %v3587 = vadd.f32 %v3519, %v3545
  %v3588 = vadd.f32 %v3520, %v3545
  %v3589 = vadd.f32 %v3521, %v3545
  %v3590 = vadd.f32 %v3522, %v3545
  %v3591 = vadd.f32 %v3523, %v3545
  %v3592 = vadd.f32 %v3524, %v3545
  %v3593 = vadd.f32 %v3525, %v3545
  %v3594 = vadd.f32 %v3526, %v3545
  %v3595 = vadd.f32 %v3527, %v3545
  %v3596 = vadd.f32 %v3528, %v3545
  %v3597 = vadd.f32 %v3529, %v3545
  %v3598 = vadd.f32 %v3530, %v3545
  %v3599 = vadd.f32 %v3531, %v3545
  %v3600 = vadd.f32 %v3532, %v3545
  %v3601 = vadd.f32 %v3533, %v3545
  %v3602 = vadd.f32 %v3534, %v3545
  %v3603 = vadd.f32 %v3535, %v3545
  %v3604 = vadd.f32 %v3536, %v3545
  %v3605 = vadd.f32 %v3537, %v3545
  %v3606 = vadd.f32 %v3538, %v3545
  %v3607 = vadd.f32 %v3539, %v3545
  %v3608 = vadd.f32 %v3540, %v3545
  %v3609 = vadd.f32 %v3541, %v3545
  %v3610 = vadd.f32 %v3542, %v3545
  %v3611 = vmax.f32 %v3547, 0.0
  %v3612 = vmax.f32 %v3548, 0.0
  %v3613 = vmax.f32 %v3549, 0.0
  %v3614 = vmax.f32 %v3550, 0.0
  %v3615 = vmax.f32 %v3551, 0.0
  %v3616 = vmax.f32 %v3552, 0.0
  %v3617 = vmax.f32 %v3553, 0.0
  %v3618 = vmax.f32 %v3554, 0.0
  %v3619 = vmax.f32 %v3555, 0.0
  %v3620 = vmax.f32 %v3556, 0.0
  %v3621 = vmax.f32 %v3557, 0.0
  %v3622 = vmax.f32 %v3558, 0.0
  %v3623 = vmax.f32 %v3559, 0.0
  %v3624 = vmax.f32 %v3560, 0.0
  %v3625 = vmax.f32 %v3561, 0.0
  %v3626 = vmax.f32 %v3562, 0.0
  %v3627 = vmax.f32 %v3563, 0.0
  %v3628 = vmax.f32 %v3564, 0.0
  %v3629 = vmax.f32 %v3565, 0.0
  %v3630 = vmax.f32 %v3566, 0.0
  %v3631 = vmax.f32 %v3567, 0.0
  %v3632 = vmax.f32 %v3568, 0.0
  %v3633 = vmax.f32 %v3569, 0.0
  %v3634 = vmax.f32 %v3570, 0.0
  %v3635 = vmax.f32 %v3571, 0.0
  %v3636 = vmax.f32 %v3572, 0.0
  %v3637 = vmax.f32 %v3573, 0.0
  %v3638 = vmax.f32 %v3574, 0.0
  %v3639 = vmax.f32 %v3575, 0.0
  %v3640 = vmax.f32 %v3576, 0.0
  %v3641 = vmax.f32 %v3577, 0.0
  %v3642 = vmax.f32 %v3578, 0.0
  %v3643 = vmax.f32 %v3579, 0.0
  %v3644 = vmax.f32 %v3580, 0.0
  %v3645 = vmax.f32 %v3581, 0.0
  %v3646 = vmax.f32 %v3582, 0.0
  %v3647 = vmax.f32 %v3583, 0.0
  %v3648 = vmax.f32 %v3584, 0.0
  %v3649 = vmax.f32 %v3585, 0.0
  %v3650 = vmax.f32 %v3586, 0.0
  %v3651 = vmax.f32 %v3587, 0.0
  %v3652 = vmax.f32 %v3588, 0.0
  %v3653 = vmax.f32 %v3589, 0.0
  %v3654 = vmax.f32 %v3590, 0.0
  %v3655 = vmax.f32 %v3591, 0.0
  %v3656 = vmax.f32 %v3592, 0.0
  %v3657 = vmax.f32 %v3593, 0.0
  %v3658 = vmax.f32 %v3594, 0.0
  %v3659 = vmax.f32 %v3595, 0.0
  %v3660 = vmax.f32 %v3596, 0.0
  %v3661 = vmax.f32 %v3597, 0.0
  %v3662 = vmax.f32 %v3598, 0.0
  %v3663 = vmax.f32 %v3599, 0.0
  %v3664 = vmax.f32 %v3600, 0.0
  %v3665 = vmax.f32 %v3601, 0.0
  %v3666 = vmax.f32 %v3602, 0.0
  %v3667 = vmax.f32 %v3603, 0.0
  %v3668 = vmax.f32 %v3604, 0.0
  %v3669 = vmax.f32 %v3605, 0.0
  %v3670 = vmax.f32 %v3606, 0.0
  %v3671 = vmax.f32 %v3607, 0.0
  %v3672 = vmax.f32 %v3608, 0.0
  %v3673 = vmax.f32 %v3609, 0.0
  %v3674 = vmax.f32 %v3610, 0.0
  %3675 = vst.msk [vmem:[#allocation2 + $0x28] sm:$0xff] %vm771, %v3611
  %3676 = vst.msk [vmem:[#allocation2 + $0x30] sm:$0xff] %vm771, %v3612
  %3677 = vst.msk [vmem:[#allocation2 + $0x38] sm:$0xff] %vm771, %v3613
  %3678 = vst.msk [vmem:[#allocation2 + $0x40] sm:$0xff] %vm771, %v3614
  %3679 = vst.msk [vmem:[#allocation2 + $0x48] sm:$0xff] %vm771, %v3615
  %3680 = vst.msk [vmem:[#allocation2 + $0x50] sm:$0xff] %vm771, %v3616
  %3681 = vst.msk [vmem:[#allocation2 + $0x58] sm:$0xff] %vm771, %v3617
  %3682 = vst.msk [vmem:[#allocation2 + $0x60] sm:$0xff] %vm771, %v3618
  %3683 = vst.msk [vmem:[#allocation2 + $0x68] sm:$0xff] %vm771, %v3619
  %3684 = vst.msk [vmem:[#allocation2 + $0x70] sm:$0xff] %vm771, %v3620
  %3685 = vst.msk [vmem:[#allocation2 + $0x78] sm:$0xff] %vm771, %v3621
  %3686 = vst.msk [vmem:[#allocation2 + $0x80] sm:$0xff] %vm771, %v3622
  %3687 = vst.msk [vmem:[#allocation2 + $0x88] sm:$0xff] %vm771, %v3623
  %3688 = vst.msk [vmem:[#allocation2 + $0x90] sm:$0xff] %vm771, %v3624
  %3689 = vst.msk [vmem:[#allocation2 + $0x98] sm:$0xff] %vm771, %v3625
  %3690 = vst.msk [vmem:[#allocation2 + $0xa0] sm:$0xff] %vm771, %v3626
  %3691 = vst.msk [vmem:[#allocation2 + $0xa8] sm:$0xff] %vm771, %v3627
  %3692 = vst.msk [vmem:[#allocation2 + $0xb0] sm:$0xff] %vm771, %v3628
  %3693 = vst.msk [vmem:[#allocation2 + $0xb8] sm:$0xff] %vm771, %v3629
  %3694 = vst.msk [vmem:[#allocation2 + $0xc0] sm:$0xff] %vm771, %v3630
  %3695 = vst.msk [vmem:[#allocation2 + $0xc8] sm:$0xff] %vm771, %v3631
  %3696 = vst.msk [vmem:[#allocation2 + $0xd0] sm:$0xff] %vm771, %v3632
  %3697 = vst.msk [vmem:[#allocation2 + $0xd8] sm:$0xff] %vm771, %v3633
  %3698 = vst.msk [vmem:[#allocation2 + $0xe0] sm:$0xff] %vm771, %v3634
  %3699 = vst.msk [vmem:[#allocation2 + $0xe8] sm:$0xff] %vm771, %v3635
  %3700 = vst.msk [vmem:[#allocation2 + $0xf0] sm:$0xff] %vm771, %v3636
  %3701 = vst.msk [vmem:[#allocation2 + $0xf8] sm:$0xff] %vm771, %v3637
  %3702 = vst.msk [vmem:[#allocation2 + $0x100] sm:$0xff] %vm771, %v3638
  %3703 = vst.msk [vmem:[#allocation2 + $0x108] sm:$0xff] %vm771, %v3639
  %3704 = vst.msk [vmem:[#allocation2 + $0x110] sm:$0xff] %vm771, %v3640
  %3705 = vst.msk [vmem:[#allocation2 + $0x118] sm:$0xff] %vm771, %v3641
  %3706 = vst.msk [vmem:[#allocation2 + $0x120] sm:$0xff] %vm771, %v3642
  %3739 = vrot.lane.b32.xlu0 %v3611, 64
  %v3740 = vpop.permute.xlu0 %3739
  %3741 = vrot.lane.b32.xlu0 %v3612, 64
  %v3742 = vpop.permute.xlu0 %3741
  %3743 = vrot.lane.b32.xlu0 %v3613, 64
  %v3744 = vpop.permute.xlu0 %3743
  %3745 = vrot.lane.b32.xlu0 %v3614, 64
  %v3746 = vpop.permute.xlu0 %3745
  %3747 = vrot.lane.b32.xlu0 %v3615, 64
  %v3748 = vpop.permute.xlu0 %3747
  %3749 = vrot.lane.b32.xlu0 %v3616, 64
  %v3750 = vpop.permute.xlu0 %3749
  %3751 = vrot.lane.b32.xlu0 %v3617, 64
  %v3752 = vpop.permute.xlu0 %3751
  %3753 = vrot.lane.b32.xlu0 %v3618, 64
  %v3754 = vpop.permute.xlu0 %3753
  %3755 = vrot.lane.b32.xlu0 %v3619, 64
  %v3756 = vpop.permute.xlu0 %3755
  %3757 = vrot.lane.b32.xlu0 %v3620, 64
  %v3758 = vpop.permute.xlu0 %3757
  %3759 = vrot.lane.b32.xlu0 %v3621, 64
  %v3760 = vpop.permute.xlu0 %3759
  %3761 = vrot.lane.b32.xlu0 %v3622, 64
  %v3762 = vpop.permute.xlu0 %3761
  %3763 = vrot.lane.b32.xlu0 %v3623, 64
  %v3764 = vpop.permute.xlu0 %3763
  %3765 = vrot.lane.b32.xlu0 %v3624, 64
  %v3766 = vpop.permute.xlu0 %3765
  %3767 = vrot.lane.b32.xlu0 %v3625, 64
  %v3768 = vpop.permute.xlu0 %3767
  %3769 = vrot.lane.b32.xlu0 %v3626, 64
  %v3770 = vpop.permute.xlu0 %3769
  %3771 = vrot.lane.b32.xlu0 %v3627, 64
  %v3772 = vpop.permute.xlu0 %3771
  %3773 = vrot.lane.b32.xlu0 %v3628, 64
  %v3774 = vpop.permute.xlu0 %3773
  %3775 = vrot.lane.b32.xlu0 %v3629, 64
  %v3776 = vpop.permute.xlu0 %3775
  %3777 = vrot.lane.b32.xlu0 %v3630, 64
  %v3778 = vpop.permute.xlu0 %3777
  %3779 = vrot.lane.b32.xlu0 %v3631, 64
  %v3780 = vpop.permute.xlu0 %3779
  %3781 = vrot.lane.b32.xlu0 %v3632, 64
  %v3782 = vpop.permute.xlu0 %3781
  %3783 = vrot.lane.b32.xlu0 %v3633, 64
  %v3784 = vpop.permute.xlu0 %3783
  %3785 = vrot.lane.b32.xlu0 %v3634, 64
  %v3786 = vpop.permute.xlu0 %3785
  %3787 = vrot.lane.b32.xlu0 %v3635, 64
  %v3788 = vpop.permute.xlu0 %3787
  %3789 = vrot.lane.b32.xlu0 %v3636, 64
  %v3790 = vpop.permute.xlu0 %3789
  %3791 = vrot.lane.b32.xlu0 %v3637, 64
  %v3792 = vpop.permute.xlu0 %3791
  %3793 = vrot.lane.b32.xlu0 %v3638, 64
  %v3794 = vpop.permute.xlu0 %3793
  %3795 = vrot.lane.b32.xlu0 %v3639, 64
  %v3796 = vpop.permute.xlu0 %3795
  %3797 = vrot.lane.b32.xlu0 %v3640, 64
  %v3798 = vpop.permute.xlu0 %3797
  %3799 = vrot.lane.b32.xlu0 %v3641, 64
  %v3800 = vpop.permute.xlu0 %3799
  %3801 = vrot.lane.b32.xlu0 %v3642, 64
  %v3802 = vpop.permute.xlu0 %3801
  %3835 = vst.msk [vmem:[#allocation2 + $0x27] sm:$0xff] %vm932, %v3740
  %3836 = vst.msk [vmem:[#allocation2 + $0x2f] sm:$0xff] %vm932, %v3742
  %3837 = vst.msk [vmem:[#allocation2 + $0x37] sm:$0xff] %vm932, %v3744
  %3838 = vst.msk [vmem:[#allocation2 + $0x3f] sm:$0xff] %vm932, %v3746
  %3839 = vst.msk [vmem:[#allocation2 + $0x47] sm:$0xff] %vm932, %v3748
  %3840 = vst.msk [vmem:[#allocation2 + $0x4f] sm:$0xff] %vm932, %v3750
  %3841 = vst.msk [vmem:[#allocation2 + $0x57] sm:$0xff] %vm932, %v3752
  %3842 = vst.msk [vmem:[#allocation2 + $0x5f] sm:$0xff] %vm932, %v3754
  %3843 = vst.msk [vmem:[#allocation2 + $0x67] sm:$0xff] %vm932, %v3756
  %3844 = vst.msk [vmem:[#allocation2 + $0x6f] sm:$0xff] %vm932, %v3758
  %3845 = vst.msk [vmem:[#allocation2 + $0x77] sm:$0xff] %vm932, %v3760
  %3846 = vst.msk [vmem:[#allocation2 + $0x7f] sm:$0xff] %vm932, %v3762
  %3847 = vst.msk [vmem:[#allocation2 + $0x87] sm:$0xff] %vm932, %v3764
  %3848 = vst.msk [vmem:[#allocation2 + $0x8f] sm:$0xff] %vm932, %v3766
  %3849 = vst.msk [vmem:[#allocation2 + $0x97] sm:$0xff] %vm932, %v3768
  %3850 = vst.msk [vmem:[#allocation2 + $0x9f] sm:$0xff] %vm932, %v3770
  %3851 = vst.msk [vmem:[#allocation2 + $0xa7] sm:$0xff] %vm932, %v3772
  %3852 = vst.msk [vmem:[#allocation2 + $0xaf] sm:$0xff] %vm932, %v3774
  %3853 = vst.msk [vmem:[#allocation2 + $0xb7] sm:$0xff] %vm932, %v3776
  %3854 = vst.msk [vmem:[#allocation2 + $0xbf] sm:$0xff] %vm932, %v3778
  %3855 = vst.msk [vmem:[#allocation2 + $0xc7] sm:$0xff] %vm932, %v3780
  %3856 = vst.msk [vmem:[#allocation2 + $0xcf] sm:$0xff] %vm932, %v3782
  %3857 = vst.msk [vmem:[#allocation2 + $0xd7] sm:$0xff] %vm932, %v3784
  %3858 = vst.msk [vmem:[#allocation2 + $0xdf] sm:$0xff] %vm932, %v3786
  %3859 = vst.msk [vmem:[#allocation2 + $0xe7] sm:$0xff] %vm932, %v3788
  %3860 = vst.msk [vmem:[#allocation2 + $0xef] sm:$0xff] %vm932, %v3790
  %3861 = vst.msk [vmem:[#allocation2 + $0xf7] sm:$0xff] %vm932, %v3792
  %3862 = vst.msk [vmem:[#allocation2 + $0xff] sm:$0xff] %vm932, %v3794
  %3863 = vst.msk [vmem:[#allocation2 + $0x107] sm:$0xff] %vm932, %v3796
  %3864 = vst.msk [vmem:[#allocation2 + $0x10f] sm:$0xff] %vm932, %v3798
  %3865 = vst.msk [vmem:[#allocation2 + $0x117] sm:$0xff] %vm932, %v3800
  %3866 = vst.msk [vmem:[#allocation2 + $0x11f] sm:$0xff] %vm932, %v3802
  %3867 = vst.msk [vmem:[#allocation2 + $0x148] sm:$0xff] %vm771, %v3643
  %3868 = vst.msk [vmem:[#allocation2 + $0x150] sm:$0xff] %vm771, %v3644
  %3869 = vst.msk [vmem:[#allocation2 + $0x158] sm:$0xff] %vm771, %v3645
  %3870 = vst.msk [vmem:[#allocation2 + $0x160] sm:$0xff] %vm771, %v3646
  %3871 = vst.msk [vmem:[#allocation2 + $0x168] sm:$0xff] %vm771, %v3647
  %3872 = vst.msk [vmem:[#allocation2 + $0x170] sm:$0xff] %vm771, %v3648
  %3873 = vst.msk [vmem:[#allocation2 + $0x178] sm:$0xff] %vm771, %v3649
  %3874 = vst.msk [vmem:[#allocation2 + $0x180] sm:$0xff] %vm771, %v3650
  %3875 = vst.msk [vmem:[#allocation2 + $0x188] sm:$0xff] %vm771, %v3651
  %3876 = vst.msk [vmem:[#allocation2 + $0x190] sm:$0xff] %vm771, %v3652
  %3877 = vst.msk [vmem:[#allocation2 + $0x198] sm:$0xff] %vm771, %v3653
  %3878 = vst.msk [vmem:[#allocation2 + $0x1a0] sm:$0xff] %vm771, %v3654
  %3879 = vst.msk [vmem:[#allocation2 + $0x1a8] sm:$0xff] %vm771, %v3655
  %3880 = vst.msk [vmem:[#allocation2 + $0x1b0] sm:$0xff] %vm771, %v3656
  %3881 = vst.msk [vmem:[#allocation2 + $0x1b8] sm:$0xff] %vm771, %v3657
  %3882 = vst.msk [vmem:[#allocation2 + $0x1c0] sm:$0xff] %vm771, %v3658
  %3883 = vst.msk [vmem:[#allocation2 + $0x1c8] sm:$0xff] %vm771, %v3659
  %3884 = vst.msk [vmem:[#allocation2 + $0x1d0] sm:$0xff] %vm771, %v3660
  %3885 = vst.msk [vmem:[#allocation2 + $0x1d8] sm:$0xff] %vm771, %v3661
  %3886 = vst.msk [vmem:[#allocation2 + $0x1e0] sm:$0xff] %vm771, %v3662
  %3887 = vst.msk [vmem:[#allocation2 + $0x1e8] sm:$0xff] %vm771, %v3663
  %3888 = vst.msk [vmem:[#allocation2 + $0x1f0] sm:$0xff] %vm771, %v3664
  %3889 = vst.msk [vmem:[#allocation2 + $0x1f8] sm:$0xff] %vm771, %v3665
  %3890 = vst.msk [vmem:[#allocation2 + $0x200] sm:$0xff] %vm771, %v3666
  %3891 = vst.msk [vmem:[#allocation2 + $0x208] sm:$0xff] %vm771, %v3667
  %3892 = vst.msk [vmem:[#allocation2 + $0x210] sm:$0xff] %vm771, %v3668
  %3893 = vst.msk [vmem:[#allocation2 + $0x218] sm:$0xff] %vm771, %v3669
  %3894 = vst.msk [vmem:[#allocation2 + $0x220] sm:$0xff] %vm771, %v3670
  %3895 = vst.msk [vmem:[#allocation2 + $0x228] sm:$0xff] %vm771, %v3671
  %3896 = vst.msk [vmem:[#allocation2 + $0x230] sm:$0xff] %vm771, %v3672
  %3897 = vst.msk [vmem:[#allocation2 + $0x238] sm:$0xff] %vm771, %v3673
  %3898 = vst.msk [vmem:[#allocation2 + $0x240] sm:$0xff] %vm771, %v3674
  %3931 = vrot.lane.b32.xlu0 %v3643, 64
  %v3932 = vpop.permute.xlu0 %3931
  %3933 = vrot.lane.b32.xlu0 %v3644, 64
  %v3934 = vpop.permute.xlu0 %3933
  %3935 = vrot.lane.b32.xlu0 %v3645, 64
  %v3936 = vpop.permute.xlu0 %3935
  %3937 = vrot.lane.b32.xlu0 %v3646, 64
  %v3938 = vpop.permute.xlu0 %3937
  %3939 = vrot.lane.b32.xlu0 %v3647, 64
  %v3940 = vpop.permute.xlu0 %3939
  %3941 = vrot.lane.b32.xlu0 %v3648, 64
  %v3942 = vpop.permute.xlu0 %3941
  %3943 = vrot.lane.b32.xlu0 %v3649, 64
  %v3944 = vpop.permute.xlu0 %3943
  %3945 = vrot.lane.b32.xlu0 %v3650, 64
  %v3946 = vpop.permute.xlu0 %3945
  %3947 = vrot.lane.b32.xlu0 %v3651, 64
  %v3948 = vpop.permute.xlu0 %3947
  %3949 = vrot.lane.b32.xlu0 %v3652, 64
  %v3950 = vpop.permute.xlu0 %3949
  %3951 = vrot.lane.b32.xlu0 %v3653, 64
  %v3952 = vpop.permute.xlu0 %3951
  %3953 = vrot.lane.b32.xlu0 %v3654, 64
  %v3954 = vpop.permute.xlu0 %3953
  %3955 = vrot.lane.b32.xlu0 %v3655, 64
  %v3956 = vpop.permute.xlu0 %3955
  %3957 = vrot.lane.b32.xlu0 %v3656, 64
  %v3958 = vpop.permute.xlu0 %3957
  %3959 = vrot.lane.b32.xlu0 %v3657, 64
  %v3960 = vpop.permute.xlu0 %3959
  %3961 = vrot.lane.b32.xlu0 %v3658, 64
  %v3962 = vpop.permute.xlu0 %3961
  %3963 = vrot.lane.b32.xlu0 %v3659, 64
  %v3964 = vpop.permute.xlu0 %3963
  %3965 = vrot.lane.b32.xlu0 %v3660, 64
  %v3966 = vpop.permute.xlu0 %3965
  %3967 = vrot.lane.b32.xlu0 %v3661, 64
  %v3968 = vpop.permute.xlu0 %3967
  %3969 = vrot.lane.b32.xlu0 %v3662, 64
  %v3970 = vpop.permute.xlu0 %3969
  %3971 = vrot.lane.b32.xlu0 %v3663, 64
  %v3972 = vpop.permute.xlu0 %3971
  %3973 = vrot.lane.b32.xlu0 %v3664, 64
  %v3974 = vpop.permute.xlu0 %3973
  %3975 = vrot.lane.b32.xlu0 %v3665, 64
  %v3976 = vpop.permute.xlu0 %3975
  %3977 = vrot.lane.b32.xlu0 %v3666, 64
  %v3978 = vpop.permute.xlu0 %3977
  %3979 = vrot.lane.b32.xlu0 %v3667, 64
  %v3980 = vpop.permute.xlu0 %3979
  %3981 = vrot.lane.b32.xlu0 %v3668, 64
  %v3982 = vpop.permute.xlu0 %3981
  %3983 = vrot.lane.b32.xlu0 %v3669, 64
  %v3984 = vpop.permute.xlu0 %3983
  %3985 = vrot.lane.b32.xlu0 %v3670, 64
  %v3986 = vpop.permute.xlu0 %3985
  %3987 = vrot.lane.b32.xlu0 %v3671, 64
  %v3988 = vpop.permute.xlu0 %3987
  %3989 = vrot.lane.b32.xlu0 %v3672, 64
  %v3990 = vpop.permute.xlu0 %3989
  %3991 = vrot.lane.b32.xlu0 %v3673, 64
  %v3992 = vpop.permute.xlu0 %3991
  %3993 = vrot.lane.b32.xlu0 %v3674, 64
  %v3994 = vpop.permute.xlu0 %3993
  %4027 = vst.msk [vmem:[#allocation2 + $0x147] sm:$0xff] %vm932, %v3932
  %4028 = vst.msk [vmem:[#allocation2 + $0x14f] sm:$0xff] %vm932, %v3934
  %4029 = vst.msk [vmem:[#allocation2 + $0x157] sm:$0xff] %vm932, %v3936
  %4030 = vst.msk [vmem:[#allocation2 + $0x15f] sm:$0xff] %vm932, %v3938
  %4031 = vst.msk [vmem:[#allocation2 + $0x167] sm:$0xff] %vm932, %v3940
  %4032 = vst.msk [vmem:[#allocation2 + $0x16f] sm:$0xff] %vm932, %v3942
  %4033 = vst.msk [vmem:[#allocation2 + $0x177] sm:$0xff] %vm932, %v3944
  %4034 = vst.msk [vmem:[#allocation2 + $0x17f] sm:$0xff] %vm932, %v3946
  %4035 = vst.msk [vmem:[#allocation2 + $0x187] sm:$0xff] %vm932, %v3948
  %4036 = vst.msk [vmem:[#allocation2 + $0x18f] sm:$0xff] %vm932, %v3950
  %4037 = vst.msk [vmem:[#allocation2 + $0x197] sm:$0xff] %vm932, %v3952
  %4038 = vst.msk [vmem:[#allocation2 + $0x19f] sm:$0xff] %vm932, %v3954
  %4039 = vst.msk [vmem:[#allocation2 + $0x1a7] sm:$0xff] %vm932, %v3956
  %4040 = vst.msk [vmem:[#allocation2 + $0x1af] sm:$0xff] %vm932, %v3958
  %4041 = vst.msk [vmem:[#allocation2 + $0x1b7] sm:$0xff] %vm932, %v3960
  %4042 = vst.msk [vmem:[#allocation2 + $0x1bf] sm:$0xff] %vm932, %v3962
  %4043 = vst.msk [vmem:[#allocation2 + $0x1c7] sm:$0xff] %vm932, %v3964
  %4044 = vst.msk [vmem:[#allocation2 + $0x1cf] sm:$0xff] %vm932, %v3966
  %4045 = vst.msk [vmem:[#allocation2 + $0x1d7] sm:$0xff] %vm932, %v3968
  %4046 = vst.msk [vmem:[#allocation2 + $0x1df] sm:$0xff] %vm932, %v3970
  %4047 = vst.msk [vmem:[#allocation2 + $0x1e7] sm:$0xff] %vm932, %v3972
  %4048 = vst.msk [vmem:[#allocation2 + $0x1ef] sm:$0xff] %vm932, %v3974
  %4049 = vst.msk [vmem:[#allocation2 + $0x1f7] sm:$0xff] %vm932, %v3976
  %4050 = vst.msk [vmem:[#allocation2 + $0x1ff] sm:$0xff] %vm932, %v3978
  %4051 = vst.msk [vmem:[#allocation2 + $0x207] sm:$0xff] %vm932, %v3980
  %4052 = vst.msk [vmem:[#allocation2 + $0x20f] sm:$0xff] %vm932, %v3982
  %4053 = vst.msk [vmem:[#allocation2 + $0x217] sm:$0xff] %vm932, %v3984
  %4054 = vst.msk [vmem:[#allocation2 + $0x21f] sm:$0xff] %vm932, %v3986
  %4055 = vst.msk [vmem:[#allocation2 + $0x227] sm:$0xff] %vm932, %v3988
  %4056 = vst.msk [vmem:[#allocation2 + $0x22f] sm:$0xff] %vm932, %v3990
  %4057 = vst.msk [vmem:[#allocation2 + $0x237] sm:$0xff] %vm932, %v3992
  %4058 = vst.msk [vmem:[#allocation2 + $0x23f] sm:$0xff] %vm932, %v3994
  %v4059 = vld [vmem:[#allocation2 + $0x8] sm:$0xff]
  %v4060 = vld [vmem:[#allocation2 + $0x10] sm:$0xff]
  %v4061 = vld [vmem:[#allocation2 + $0x18] sm:$0xff]
  %v4062 = vld [vmem:[#allocation2 + $0x20] sm:$0xff]
  %v4063 = vld [vmem:[#allocation2 + $0x28] sm:$0xff]
  %v4064 = vld [vmem:[#allocation2 + $0x30] sm:$0xff]
  %v4065 = vld [vmem:[#allocation2 + $0x38] sm:$0xff]
  %v4066 = vld [vmem:[#allocation2 + $0x40] sm:$0xff]
  %v4067 = vld [vmem:[#allocation2 + $0x48] sm:$0xff]
  %v4068 = vld [vmem:[#allocation2 + $0x50] sm:$0xff]
  %v4069 = vld [vmem:[#allocation2 + $0x58] sm:$0xff]
  %v4070 = vld [vmem:[#allocation2 + $0x60] sm:$0xff]
  %v4071 = vld [vmem:[#allocation2 + $0x68] sm:$0xff]
  %v4072 = vld [vmem:[#allocation2 + $0x70] sm:$0xff]
  %v4073 = vld [vmem:[#allocation2 + $0x78] sm:$0xff]
  %v4074 = vld [vmem:[#allocation2 + $0x80] sm:$0xff]
  %v4075 = vld [vmem:[#allocation2 + $0x88] sm:$0xff]
  %v4076 = vld [vmem:[#allocation2 + $0x90] sm:$0xff]
  %v4077 = vld [vmem:[#allocation2 + $0x98] sm:$0xff]
  %v4078 = vld [vmem:[#allocation2 + $0xa0] sm:$0xff]
  %v4079 = vld [vmem:[#allocation2 + $0xa8] sm:$0xff]
  %v4080 = vld [vmem:[#allocation2 + $0xb0] sm:$0xff]
  %v4081 = vld [vmem:[#allocation2 + $0xb8] sm:$0xff]
  %v4082 = vld [vmem:[#allocation2 + $0xc0] sm:$0xff]
  %v4083 = vld [vmem:[#allocation2 + $0xc8] sm:$0xff]
  %v4084 = vld [vmem:[#allocation2 + $0xd0] sm:$0xff]
  %v4085 = vld [vmem:[#allocation2 + $0xd8] sm:$0xff]
  %v4086 = vld [vmem:[#allocation2 + $0xe0] sm:$0xff]
  %v4087 = vld [vmem:[#allocation2 + $0xe8] sm:$0xff]
  %v4088 = vld [vmem:[#allocation2 + $0xf0] sm:$0xff]
  %v4089 = vld [vmem:[#allocation2 + $0xf8] sm:$0xff]
  %v4090 = vld [vmem:[#allocation2 + $0x100] sm:$0xff]
  %v4091 = vld [vmem:[#allocation2 + $0x108] sm:$0xff]
  %v4092 = vld [vmem:[#allocation2 + $0x110] sm:$0xff]
  %v4093 = vld [vmem:[#allocation2 + $0x118] sm:$0xff]
  %v4094 = vld [vmem:[#allocation2 + $0x120] sm:$0xff]
  %v4095 = vld [vmem:[#allocation2 + $0x128] sm:$0xff]
  %v4096 = vld [vmem:[#allocation2 + $0x130] sm:$0xff]
  %v4097 = vld [vmem:[#allocation2 + $0x138] sm:$0xff]
  %v4098 = vld [vmem:[#allocation2 + $0x140] sm:$0xff]
  %v4099 = vld [vmem:[#allocation2 + $0x148] sm:$0xff]
  %v4100 = vld [vmem:[#allocation2 + $0x150] sm:$0xff]
  %v4101 = vld [vmem:[#allocation2 + $0x158] sm:$0xff]
  %v4102 = vld [vmem:[#allocation2 + $0x160] sm:$0xff]
  %v4103 = vld [vmem:[#allocation2 + $0x168] sm:$0xff]
  %v4104 = vld [vmem:[#allocation2 + $0x170] sm:$0xff]
  %v4105 = vld [vmem:[#allocation2 + $0x178] sm:$0xff]
  %v4106 = vld [vmem:[#allocation2 + $0x180] sm:$0xff]
  %v4107 = vld [vmem:[#allocation2 + $0x188] sm:$0xff]
  %v4108 = vld [vmem:[#allocation2 + $0x190] sm:$0xff]
  %v4109 = vld [vmem:[#allocation2 + $0x198] sm:$0xff]
  %v4110 = vld [vmem:[#allocation2 + $0x1a0] sm:$0xff]
  %v4111 = vld [vmem:[#allocation2 + $0x1a8] sm:$0xff]
  %v4112 = vld [vmem:[#allocation2 + $0x1b0] sm:$0xff]
  %v4113 = vld [vmem:[#allocation2 + $0x1b8] sm:$0xff]
  %v4114 = vld [vmem:[#allocation2 + $0x1c0] sm:$0xff]
  %v4115 = vld [vmem:[#allocation2 + $0x1c8] sm:$0xff]
  %v4116 = vld [vmem:[#allocation2 + $0x1d0] sm:$0xff]
  %v4117 = vld [vmem:[#allocation2 + $0x1d8] sm:$0xff]
  %v4118 = vld [vmem:[#allocation2 + $0x1e0] sm:$0xff]
  %v4119 = vld [vmem:[#allocation2 + $0x1e8] sm:$0xff]
  %v4120 = vld [vmem:[#allocation2 + $0x1f0] sm:$0xff]
  %v4121 = vld [vmem:[#allocation2 + $0x1f8] sm:$0xff]
  %v4122 = vld [vmem:[#allocation2 + $0x200] sm:$0xff]
  %v4123 = vld [vmem:[#allocation2 + $0x208] sm:$0xff]
  %v4124 = vld [vmem:[#allocation2 + $0x210] sm:$0xff]
  %v4125 = vld [vmem:[#allocation2 + $0x218] sm:$0xff]
  %v4126 = vld [vmem:[#allocation2 + $0x220] sm:$0xff]
  %v4127 = vld [vmem:[#allocation2 + $0x228] sm:$0xff]
  %v4128 = vld [vmem:[#allocation2 + $0x230] sm:$0xff]
  %v4129 = vld [vmem:[#allocation2 + $0x238] sm:$0xff]
  %v4130 = vld [vmem:[#allocation2 + $0x240] sm:$0xff]
  %v4131 = vld [vmem:[%s7] sm:$0xff]
  %v4132 = vld [vmem:[%s7 + $0x8] sm:$0xff]
  %v4133 = vld [vmem:[%s7 + $0x10] sm:$0xff]
  %v4134 = vld [vmem:[%s7 + $0x18] sm:$0xff]
  %v4135 = vld [vmem:[%s7 + $0x20] sm:$0xff]
  %v4136 = vld [vmem:[%s7 + $0x28] sm:$0xff]
  %v4137 = vld [vmem:[%s7 + $0x30] sm:$0xff]
  %v4138 = vld [vmem:[%s7 + $0x38] sm:$0xff]
  %v4139 = vld [vmem:[%s7 + $0x40] sm:$0xff]
  %v4140 = vld [vmem:[%s7 + $0x48] sm:$0xff]
  %v4141 = vld [vmem:[%s7 + $0x50] sm:$0xff]
  %v4142 = vld [vmem:[%s7 + $0x58] sm:$0xff]
  %v4143 = vld [vmem:[%s7 + $0x60] sm:$0xff]
  %v4144 = vld [vmem:[%s7 + $0x68] sm:$0xff]
  %v4145 = vld [vmem:[%s7 + $0x70] sm:$0xff]
  %v4146 = vld [vmem:[%s7 + $0x78] sm:$0xff]
  %v4147 = vld [vmem:[#allocation2 + $0x248] sm:$0xff]
  %v4148 = vld [vmem:[#allocation2 + $0x250] sm:$0xff]
  %s4149 = scalar_lea.vmem %s7, 128
  %v4150 = vld [vmem:[%s4149] sm:$0xff]
  %v4151 = vld [vmem:[%s4149 + $0x8] sm:$0xff]
  %v4152 = vld [vmem:[%s4149 + $0x10] sm:$0xff]
  %v4153 = vld [vmem:[%s4149 + $0x18] sm:$0xff]
  %v4154 = vld [vmem:[%s4149 + $0x20] sm:$0xff]
  %v4155 = vld [vmem:[%s4149 + $0x28] sm:$0xff]
  %v4156 = vld [vmem:[%s4149 + $0x30] sm:$0xff]
  %v4157 = vld [vmem:[%s4149 + $0x38] sm:$0xff]
  %v4158 = vld [vmem:[%s4149 + $0x40] sm:$0xff]
  %v4159 = vld [vmem:[%s4149 + $0x48] sm:$0xff]
  %v4160 = vld [vmem:[%s4149 + $0x50] sm:$0xff]
  %v4161 = vld [vmem:[%s4149 + $0x58] sm:$0xff]
  %v4162 = vld [vmem:[%s4149 + $0x60] sm:$0xff]
  %v4163 = vld [vmem:[%s4149 + $0x68] sm:$0xff]
  %v4164 = vld [vmem:[%s4149 + $0x70] sm:$0xff]
  %v4165 = vld [vmem:[%s4149 + $0x78] sm:$0xff]
  %4166 = vmatpush.msra.mxu0 %v4165
  %4167 = vmatpush.msra.mxu0 %v4164
  %4168 = vmatpush.msra.mxu0 %v4163
  %4169 = vmatpush.msra.mxu0 %v4162
  %4170 = vmatpush.msra.mxu0 %v4161
  %4171 = vmatpush.msra.mxu0 %v4160
  %4172 = vmatpush.msra.mxu0 %v4159
  %4173 = vmatpush.msra.mxu0 %v4158
  %4174 = vmatpush.msra.mxu0 %v4157
  %4175 = vmatpush.msra.mxu0 %v4156
  %4176 = vmatpush.msra.mxu0 %v4155
  %4177 = vmatpush.msra.mxu0 %v4154
  %4178 = vmatpush.msra.mxu0 %v4153
  %4179 = vmatpush.msra.mxu0 %v4152
  %4180 = vmatpush.msra.mxu0 %v4151
  %4181 = vmatpush.msra.mxu0 %v4150
  %4182 = vmatmul.f32.gmra.mxu0 %v4061
  %v4183 = vpop.f32.mrf.mxu0
  %4184 = vmatmul.f32.gmra.mxu0 %v4062
  %v4185 = vpop.f32.mrf.mxu0
  %4186 = vmatmul.f32.gmra.mxu0 %v4063
  %v4187 = vpop.f32.mrf.mxu0
  %v4188 = vadd.f32 0.0, %v4187
  %4189 = vmatmul.f32.gmra.mxu0 %v4064
  %v4190 = vpop.f32.mrf.mxu0
  %v4191 = vadd.f32 0.0, %v4190
  %4192 = vmatmul.f32.gmra.mxu0 %v4065
  %v4193 = vpop.f32.mrf.mxu0
  %v4194 = vadd.f32 0.0, %v4193
  %4195 = vmatmul.f32.gmra.mxu0 %v4066
  %v4196 = vpop.f32.mrf.mxu0
  %v4197 = vadd.f32 0.0, %v4196
  %4198 = vmatmul.f32.gmra.mxu0 %v4067
  %v4199 = vpop.f32.mrf.mxu0
  %v4200 = vadd.f32 0.0, %v4199
  %4201 = vmatmul.f32.gmra.mxu0 %v4068
  %v4202 = vpop.f32.mrf.mxu0
  %v4203 = vadd.f32 0.0, %v4202
  %4204 = vmatmul.f32.gmra.mxu0 %v4069
  %v4205 = vpop.f32.mrf.mxu0
  %v4206 = vadd.f32 0.0, %v4205
  %4207 = vmatmul.f32.gmra.mxu0 %v4070
  %v4208 = vpop.f32.mrf.mxu0
  %v4209 = vadd.f32 0.0, %v4208
  %4210 = vmatmul.f32.gmra.mxu0 %v4071
  %v4211 = vpop.f32.mrf.mxu0
  %v4212 = vadd.f32 0.0, %v4211
  %4213 = vmatmul.f32.gmra.mxu0 %v4072
  %v4214 = vpop.f32.mrf.mxu0
  %v4215 = vadd.f32 0.0, %v4214
  %4216 = vmatmul.f32.gmra.mxu0 %v4073
  %v4217 = vpop.f32.mrf.mxu0
  %v4218 = vadd.f32 0.0, %v4217
  %4219 = vmatmul.f32.gmra.mxu0 %v4074
  %v4220 = vpop.f32.mrf.mxu0
  %v4221 = vadd.f32 0.0, %v4220
  %4222 = vmatmul.f32.gmra.mxu0 %v4075
  %v4223 = vpop.f32.mrf.mxu0
  %v4224 = vadd.f32 0.0, %v4223
  %4225 = vmatmul.f32.gmra.mxu0 %v4076
  %v4226 = vpop.f32.mrf.mxu0
  %v4227 = vadd.f32 0.0, %v4226
  %4228 = vmatmul.f32.gmra.mxu0 %v4077
  %v4229 = vpop.f32.mrf.mxu0
  %v4230 = vadd.f32 0.0, %v4229
  %4231 = vmatmul.f32.gmra.mxu0 %v4078
  %v4232 = vpop.f32.mrf.mxu0
  %v4233 = vadd.f32 0.0, %v4232
  %4234 = vmatmul.f32.gmra.mxu0 %v4079
  %v4235 = vpop.f32.mrf.mxu0
  %v4236 = vadd.f32 0.0, %v4235
  %4237 = vmatmul.f32.gmra.mxu0 %v4080
  %v4238 = vpop.f32.mrf.mxu0
  %v4239 = vadd.f32 0.0, %v4238
  %4240 = vmatmul.f32.gmra.mxu0 %v4081
  %v4241 = vpop.f32.mrf.mxu0
  %v4242 = vadd.f32 0.0, %v4241
  %4243 = vmatmul.f32.gmra.mxu0 %v4082
  %v4244 = vpop.f32.mrf.mxu0
  %v4245 = vadd.f32 0.0, %v4244
  %4246 = vmatmul.f32.gmra.mxu0 %v4083
  %v4247 = vpop.f32.mrf.mxu0
  %v4248 = vadd.f32 0.0, %v4247
  %4249 = vmatmul.f32.gmra.mxu0 %v4084
  %v4250 = vpop.f32.mrf.mxu0
  %v4251 = vadd.f32 0.0, %v4250
  %4252 = vmatmul.f32.gmra.mxu0 %v4085
  %v4253 = vpop.f32.mrf.mxu0
  %v4254 = vadd.f32 0.0, %v4253
  %4255 = vmatmul.f32.gmra.mxu0 %v4086
  %v4256 = vpop.f32.mrf.mxu0
  %v4257 = vadd.f32 0.0, %v4256
  %4258 = vmatmul.f32.gmra.mxu0 %v4087
  %v4259 = vpop.f32.mrf.mxu0
  %v4260 = vadd.f32 0.0, %v4259
  %4261 = vmatmul.f32.gmra.mxu0 %v4088
  %v4262 = vpop.f32.mrf.mxu0
  %v4263 = vadd.f32 0.0, %v4262
  %4264 = vmatmul.f32.gmra.mxu0 %v4089
  %v4265 = vpop.f32.mrf.mxu0
  %v4266 = vadd.f32 0.0, %v4265
  %4267 = vmatmul.f32.gmra.mxu0 %v4090
  %v4268 = vpop.f32.mrf.mxu0
  %v4269 = vadd.f32 0.0, %v4268
  %4270 = vmatmul.f32.gmra.mxu0 %v4091
  %v4271 = vpop.f32.mrf.mxu0
  %v4272 = vadd.f32 0.0, %v4271
  %4273 = vmatmul.f32.gmra.mxu0 %v4092
  %v4274 = vpop.f32.mrf.mxu0
  %v4275 = vadd.f32 0.0, %v4274
  %4276 = vmatmul.f32.gmra.mxu0 %v4093
  %v4277 = vpop.f32.mrf.mxu0
  %v4278 = vadd.f32 0.0, %v4277
  %4279 = vmatmul.f32.gmra.mxu0 %v4094
  %v4280 = vpop.f32.mrf.mxu0
  %v4281 = vadd.f32 0.0, %v4280
  %4282 = vmatmul.f32.gmra.mxu0 %v4095
  %v4283 = vpop.f32.mrf.mxu0
  %v4284 = vadd.f32 0.0, %v4283
  %4285 = vmatmul.f32.gmra.mxu0 %v4096
  %v4286 = vpop.f32.mrf.mxu0
  %v4287 = vadd.f32 0.0, %v4286
  %4288 = vmatmul.f32.gmra.mxu0 %v4097
  %v4289 = vpop.f32.mrf.mxu0
  %4290 = vmatmul.f32.gmra.mxu0 %v4098
  %v4291 = vpop.f32.mrf.mxu0
  %4292 = vmatmul.f32.gmra.mxu0 %v4099
  %v4293 = vpop.f32.mrf.mxu0
  %v4294 = vadd.f32 0.0, %v4293
  %4295 = vmatmul.f32.gmra.mxu0 %v4100
  %v4296 = vpop.f32.mrf.mxu0
  %v4297 = vadd.f32 0.0, %v4296
  %4298 = vmatmul.f32.gmra.mxu0 %v4101
  %v4299 = vpop.f32.mrf.mxu0
  %v4300 = vadd.f32 0.0, %v4299
  %4301 = vmatmul.f32.gmra.mxu0 %v4102
  %v4302 = vpop.f32.mrf.mxu0
  %v4303 = vadd.f32 0.0, %v4302
  %4304 = vmatmul.f32.gmra.mxu0 %v4103
  %v4305 = vpop.f32.mrf.mxu0
  %v4306 = vadd.f32 0.0, %v4305
  %4307 = vmatmul.f32.gmra.mxu0 %v4104
  %v4308 = vpop.f32.mrf.mxu0
  %v4309 = vadd.f32 0.0, %v4308
  %4310 = vmatmul.f32.gmra.mxu0 %v4105
  %v4311 = vpop.f32.mrf.mxu0
  %v4312 = vadd.f32 0.0, %v4311
  %4313 = vmatmul.f32.gmra.mxu0 %v4106
  %v4314 = vpop.f32.mrf.mxu0
  %v4315 = vadd.f32 0.0, %v4314
  %4316 = vmatmul.f32.gmra.mxu0 %v4107
  %v4317 = vpop.f32.mrf.mxu0
  %v4318 = vadd.f32 0.0, %v4317
  %4319 = vmatmul.f32.gmra.mxu0 %v4108
  %v4320 = vpop.f32.mrf.mxu0
  %v4321 = vadd.f32 0.0, %v4320
  %4322 = vmatmul.f32.gmra.mxu0 %v4109
  %v4323 = vpop.f32.mrf.mxu0
  %v4324 = vadd.f32 0.0, %v4323
  %4325 = vmatmul.f32.gmra.mxu0 %v4110
  %v4326 = vpop.f32.mrf.mxu0
  %v4327 = vadd.f32 0.0, %v4326
  %4328 = vmatmul.f32.gmra.mxu0 %v4111
  %v4329 = vpop.f32.mrf.mxu0
  %v4330 = vadd.f32 0.0, %v4329
  %4331 = vmatmul.f32.gmra.mxu0 %v4112
  %v4332 = vpop.f32.mrf.mxu0
  %v4333 = vadd.f32 0.0, %v4332
  %4334 = vmatmul.f32.gmra.mxu0 %v4113
  %v4335 = vpop.f32.mrf.mxu0
  %v4336 = vadd.f32 0.0, %v4335
  %4337 = vmatmul.f32.gmra.mxu0 %v4114
  %v4338 = vpop.f32.mrf.mxu0
  %v4339 = vadd.f32 0.0, %v4338
  %4340 = vmatmul.f32.gmra.mxu0 %v4115
  %v4341 = vpop.f32.mrf.mxu0
  %v4342 = vadd.f32 0.0, %v4341
  %4343 = vmatmul.f32.gmra.mxu0 %v4116
  %v4344 = vpop.f32.mrf.mxu0
  %v4345 = vadd.f32 0.0, %v4344
  %4346 = vmatmul.f32.gmra.mxu0 %v4117
  %v4347 = vpop.f32.mrf.mxu0
  %v4348 = vadd.f32 0.0, %v4347
  %4349 = vmatmul.f32.gmra.mxu0 %v4118
  %v4350 = vpop.f32.mrf.mxu0
  %v4351 = vadd.f32 0.0, %v4350
  %4352 = vmatmul.f32.gmra.mxu0 %v4119
  %v4353 = vpop.f32.mrf.mxu0
  %v4354 = vadd.f32 0.0, %v4353
  %4355 = vmatmul.f32.gmra.mxu0 %v4120
  %v4356 = vpop.f32.mrf.mxu0
  %v4357 = vadd.f32 0.0, %v4356
  %4358 = vmatmul.f32.gmra.mxu0 %v4121
  %v4359 = vpop.f32.mrf.mxu0
  %v4360 = vadd.f32 0.0, %v4359
  %4361 = vmatmul.f32.gmra.mxu0 %v4122
  %v4362 = vpop.f32.mrf.mxu0
  %v4363 = vadd.f32 0.0, %v4362
  %4364 = vmatmul.f32.gmra.mxu0 %v4123
  %v4365 = vpop.f32.mrf.mxu0
  %v4366 = vadd.f32 0.0, %v4365
  %4367 = vmatmul.f32.gmra.mxu0 %v4124
  %v4368 = vpop.f32.mrf.mxu0
  %v4369 = vadd.f32 0.0, %v4368
  %4370 = vmatmul.f32.gmra.mxu0 %v4125
  %v4371 = vpop.f32.mrf.mxu0
  %v4372 = vadd.f32 0.0, %v4371
  %4373 = vmatmul.f32.gmra.mxu0 %v4126
  %v4374 = vpop.f32.mrf.mxu0
  %v4375 = vadd.f32 0.0, %v4374
  %4376 = vmatmul.f32.gmra.mxu0 %v4127
  %v4377 = vpop.f32.mrf.mxu0
  %v4378 = vadd.f32 0.0, %v4377
  %4379 = vmatmul.f32.gmra.mxu0 %v4128
  %v4380 = vpop.f32.mrf.mxu0
  %v4381 = vadd.f32 0.0, %v4380
  %4382 = vmatmul.f32.gmra.mxu0 %v4129
  %v4383 = vpop.f32.mrf.mxu0
  %v4384 = vadd.f32 0.0, %v4383
  %4385 = vmatmul.f32.gmra.mxu0 %v4130
  %v4386 = vpop.f32.mrf.mxu0
  %v4387 = vadd.f32 0.0, %v4386
  %4388 = vmatmul.f32.gmra.mxu0 %v4147
  %v4389 = vpop.f32.mrf.mxu0
  %v4390 = vadd.f32 0.0, %v4389
  %4391 = vmatmul.f32.gmra.mxu0 %v4148
  %v4392 = vpop.f32.mrf.mxu0
  %v4393 = vadd.f32 0.0, %v4392
  %4394 = vdwg.mxu0
  %4395 = vmatpush.msra.mxu0 %v4146
  %4396 = vmatpush.msra.mxu0 %v4145
  %4397 = vmatpush.msra.mxu0 %v4144
  %4398 = vmatpush.msra.mxu0 %v4143
  %4399 = vmatpush.msra.mxu0 %v4142
  %4400 = vmatpush.msra.mxu0 %v4141
  %4401 = vmatpush.msra.mxu0 %v4140
  %4402 = vmatpush.msra.mxu0 %v4139
  %4403 = vmatpush.msra.mxu0 %v4138
  %4404 = vmatpush.msra.mxu0 %v4137
  %4405 = vmatpush.msra.mxu0 %v4136
  %4406 = vmatpush.msra.mxu0 %v4135
  %4407 = vmatpush.msra.mxu0 %v4134
  %4408 = vmatpush.msra.mxu0 %v4133
  %4409 = vmatpush.msra.mxu0 %v4132
  %4410 = vmatpush.msra.mxu0 %v4131
  %4411 = vmatmul.f32.gmra.mxu0 %v4059
  %v4412 = vpop.f32.mrf.mxu0
  %4413 = vmatmul.f32.gmra.mxu0 %v4060
  %v4414 = vpop.f32.mrf.mxu0
  %4415 = vmatmul.f32.gmra.mxu0 %v4061
  %v4416 = vpop.f32.mrf.mxu0
  %v4417 = vadd.f32 %v4188, %v4416
  %4418 = vmatmul.f32.gmra.mxu0 %v4062
  %v4419 = vpop.f32.mrf.mxu0
  %v4420 = vadd.f32 %v4191, %v4419
  %4421 = vmatmul.f32.gmra.mxu0 %v4063
  %v4422 = vpop.f32.mrf.mxu0
  %v4423 = vadd.f32 %v4194, %v4422
  %4424 = vmatmul.f32.gmra.mxu0 %v4064
  %v4425 = vpop.f32.mrf.mxu0
  %v4426 = vadd.f32 %v4197, %v4425
  %4427 = vmatmul.f32.gmra.mxu0 %v4065
  %v4428 = vpop.f32.mrf.mxu0
  %v4429 = vadd.f32 %v4200, %v4428
  %4430 = vmatmul.f32.gmra.mxu0 %v4066
  %v4431 = vpop.f32.mrf.mxu0
  %v4432 = vadd.f32 %v4203, %v4431
  %4433 = vmatmul.f32.gmra.mxu0 %v4067
  %v4434 = vpop.f32.mrf.mxu0
  %v4435 = vadd.f32 %v4206, %v4434
  %4436 = vmatmul.f32.gmra.mxu0 %v4068
  %v4437 = vpop.f32.mrf.mxu0
  %v4438 = vadd.f32 %v4209, %v4437
  %4439 = vmatmul.f32.gmra.mxu0 %v4069
  %v4440 = vpop.f32.mrf.mxu0
  %v4441 = vadd.f32 %v4212, %v4440
  %4442 = vmatmul.f32.gmra.mxu0 %v4070
  %v4443 = vpop.f32.mrf.mxu0
  %v4444 = vadd.f32 %v4215, %v4443
  %4445 = vmatmul.f32.gmra.mxu0 %v4071
  %v4446 = vpop.f32.mrf.mxu0
  %v4447 = vadd.f32 %v4218, %v4446
  %4448 = vmatmul.f32.gmra.mxu0 %v4072
  %v4449 = vpop.f32.mrf.mxu0
  %v4450 = vadd.f32 %v4221, %v4449
  %4451 = vmatmul.f32.gmra.mxu0 %v4073
  %v4452 = vpop.f32.mrf.mxu0
  %v4453 = vadd.f32 %v4224, %v4452
  %4454 = vmatmul.f32.gmra.mxu0 %v4074
  %v4455 = vpop.f32.mrf.mxu0
  %v4456 = vadd.f32 %v4227, %v4455
  %4457 = vmatmul.f32.gmra.mxu0 %v4075
  %v4458 = vpop.f32.mrf.mxu0
  %v4459 = vadd.f32 %v4230, %v4458
  %4460 = vmatmul.f32.gmra.mxu0 %v4076
  %v4461 = vpop.f32.mrf.mxu0
  %v4462 = vadd.f32 %v4233, %v4461
  %4463 = vmatmul.f32.gmra.mxu0 %v4077
  %v4464 = vpop.f32.mrf.mxu0
  %v4465 = vadd.f32 %v4236, %v4464
  %4466 = vmatmul.f32.gmra.mxu0 %v4078
  %v4467 = vpop.f32.mrf.mxu0
  %v4468 = vadd.f32 %v4239, %v4467
  %4469 = vmatmul.f32.gmra.mxu0 %v4079
  %v4470 = vpop.f32.mrf.mxu0
  %v4471 = vadd.f32 %v4242, %v4470
  %4472 = vmatmul.f32.gmra.mxu0 %v4080
  %v4473 = vpop.f32.mrf.mxu0
  %v4474 = vadd.f32 %v4245, %v4473
  %4475 = vmatmul.f32.gmra.mxu0 %v4081
  %v4476 = vpop.f32.mrf.mxu0
  %v4477 = vadd.f32 %v4248, %v4476
  %4478 = vmatmul.f32.gmra.mxu0 %v4082
  %v4479 = vpop.f32.mrf.mxu0
  %v4480 = vadd.f32 %v4251, %v4479
  %4481 = vmatmul.f32.gmra.mxu0 %v4083
  %v4482 = vpop.f32.mrf.mxu0
  %v4483 = vadd.f32 %v4254, %v4482
  %4484 = vmatmul.f32.gmra.mxu0 %v4084
  %v4485 = vpop.f32.mrf.mxu0
  %v4486 = vadd.f32 %v4257, %v4485
  %4487 = vmatmul.f32.gmra.mxu0 %v4085
  %v4488 = vpop.f32.mrf.mxu0
  %v4489 = vadd.f32 %v4260, %v4488
  %4490 = vmatmul.f32.gmra.mxu0 %v4086
  %v4491 = vpop.f32.mrf.mxu0
  %v4492 = vadd.f32 %v4263, %v4491
  %4493 = vmatmul.f32.gmra.mxu0 %v4087
  %v4494 = vpop.f32.mrf.mxu0
  %v4495 = vadd.f32 %v4266, %v4494
  %4496 = vmatmul.f32.gmra.mxu0 %v4088
  %v4497 = vpop.f32.mrf.mxu0
  %v4498 = vadd.f32 %v4269, %v4497
  %4499 = vmatmul.f32.gmra.mxu0 %v4089
  %v4500 = vpop.f32.mrf.mxu0
  %v4501 = vadd.f32 %v4272, %v4500
  %4502 = vmatmul.f32.gmra.mxu0 %v4090
  %v4503 = vpop.f32.mrf.mxu0
  %v4504 = vadd.f32 %v4275, %v4503
  %4505 = vmatmul.f32.gmra.mxu0 %v4091
  %v4506 = vpop.f32.mrf.mxu0
  %v4507 = vadd.f32 %v4278, %v4506
  %4508 = vmatmul.f32.gmra.mxu0 %v4092
  %v4509 = vpop.f32.mrf.mxu0
  %v4510 = vadd.f32 %v4281, %v4509
  %4511 = vmatmul.f32.gmra.mxu0 %v4093
  %v4512 = vpop.f32.mrf.mxu0
  %v4513 = vadd.f32 %v4284, %v4512
  %4514 = vmatmul.f32.gmra.mxu0 %v4094
  %v4515 = vpop.f32.mrf.mxu0
  %v4516 = vadd.f32 %v4287, %v4515
  %4517 = vmatmul.f32.gmra.mxu0 %v4095
  %v4518 = vpop.f32.mrf.mxu0
  %4519 = vmatmul.f32.gmra.mxu0 %v4096
  %v4520 = vpop.f32.mrf.mxu0
  %4521 = vmatmul.f32.gmra.mxu0 %v4097
  %v4522 = vpop.f32.mrf.mxu0
  %v4523 = vadd.f32 %v4294, %v4522
  %4524 = vmatmul.f32.gmra.mxu0 %v4098
  %v4525 = vpop.f32.mrf.mxu0
  %v4526 = vadd.f32 %v4297, %v4525
  %4527 = vmatmul.f32.gmra.mxu0 %v4099
  %v4528 = vpop.f32.mrf.mxu0
  %v4529 = vadd.f32 %v4300, %v4528
  %4530 = vmatmul.f32.gmra.mxu0 %v4100
  %v4531 = vpop.f32.mrf.mxu0
  %v4532 = vadd.f32 %v4303, %v4531
  %4533 = vmatmul.f32.gmra.mxu0 %v4101
  %v4534 = vpop.f32.mrf.mxu0
  %v4535 = vadd.f32 %v4306, %v4534
  %4536 = vmatmul.f32.gmra.mxu0 %v4102
  %v4537 = vpop.f32.mrf.mxu0
  %v4538 = vadd.f32 %v4309, %v4537
  %4539 = vmatmul.f32.gmra.mxu0 %v4103
  %v4540 = vpop.f32.mrf.mxu0
  %v4541 = vadd.f32 %v4312, %v4540
  %4542 = vmatmul.f32.gmra.mxu0 %v4104
  %v4543 = vpop.f32.mrf.mxu0
  %v4544 = vadd.f32 %v4315, %v4543
  %4545 = vmatmul.f32.gmra.mxu0 %v4105
  %v4546 = vpop.f32.mrf.mxu0
  %v4547 = vadd.f32 %v4318, %v4546
  %4548 = vmatmul.f32.gmra.mxu0 %v4106
  %v4549 = vpop.f32.mrf.mxu0
  %v4550 = vadd.f32 %v4321, %v4549
  %4551 = vmatmul.f32.gmra.mxu0 %v4107
  %v4552 = vpop.f32.mrf.mxu0
  %v4553 = vadd.f32 %v4324, %v4552
  %4554 = vmatmul.f32.gmra.mxu0 %v4108
  %v4555 = vpop.f32.mrf.mxu0
  %v4556 = vadd.f32 %v4327, %v4555
  %4557 = vmatmul.f32.gmra.mxu0 %v4109
  %v4558 = vpop.f32.mrf.mxu0
  %v4559 = vadd.f32 %v4330, %v4558
  %4560 = vmatmul.f32.gmra.mxu0 %v4110
  %v4561 = vpop.f32.mrf.mxu0
  %v4562 = vadd.f32 %v4333, %v4561
  %4563 = vmatmul.f32.gmra.mxu0 %v4111
  %v4564 = vpop.f32.mrf.mxu0
  %v4565 = vadd.f32 %v4336, %v4564
  %4566 = vmatmul.f32.gmra.mxu0 %v4112
  %v4567 = vpop.f32.mrf.mxu0
  %v4568 = vadd.f32 %v4339, %v4567
  %4569 = vmatmul.f32.gmra.mxu0 %v4113
  %v4570 = vpop.f32.mrf.mxu0
  %v4571 = vadd.f32 %v4342, %v4570
  %4572 = vmatmul.f32.gmra.mxu0 %v4114
  %v4573 = vpop.f32.mrf.mxu0
  %v4574 = vadd.f32 %v4345, %v4573
  %4575 = vmatmul.f32.gmra.mxu0 %v4115
  %v4576 = vpop.f32.mrf.mxu0
  %v4577 = vadd.f32 %v4348, %v4576
  %4578 = vmatmul.f32.gmra.mxu0 %v4116
  %v4579 = vpop.f32.mrf.mxu0
  %v4580 = vadd.f32 %v4351, %v4579
  %4581 = vmatmul.f32.gmra.mxu0 %v4117
  %v4582 = vpop.f32.mrf.mxu0
  %v4583 = vadd.f32 %v4354, %v4582
  %4584 = vmatmul.f32.gmra.mxu0 %v4118
  %v4585 = vpop.f32.mrf.mxu0
  %v4586 = vadd.f32 %v4357, %v4585
  %4587 = vmatmul.f32.gmra.mxu0 %v4119
  %v4588 = vpop.f32.mrf.mxu0
  %v4589 = vadd.f32 %v4360, %v4588
  %4590 = vmatmul.f32.gmra.mxu0 %v4120
  %v4591 = vpop.f32.mrf.mxu0
  %v4592 = vadd.f32 %v4363, %v4591
  %4593 = vmatmul.f32.gmra.mxu0 %v4121
  %v4594 = vpop.f32.mrf.mxu0
  %v4595 = vadd.f32 %v4366, %v4594
  %4596 = vmatmul.f32.gmra.mxu0 %v4122
  %v4597 = vpop.f32.mrf.mxu0
  %v4598 = vadd.f32 %v4369, %v4597
  %4599 = vmatmul.f32.gmra.mxu0 %v4123
  %v4600 = vpop.f32.mrf.mxu0
  %v4601 = vadd.f32 %v4372, %v4600
  %4602 = vmatmul.f32.gmra.mxu0 %v4124
  %v4603 = vpop.f32.mrf.mxu0
  %v4604 = vadd.f32 %v4375, %v4603
  %4605 = vmatmul.f32.gmra.mxu0 %v4125
  %v4606 = vpop.f32.mrf.mxu0
  %v4607 = vadd.f32 %v4378, %v4606
  %4608 = vmatmul.f32.gmra.mxu0 %v4126
  %v4609 = vpop.f32.mrf.mxu0
  %v4610 = vadd.f32 %v4381, %v4609
  %4611 = vmatmul.f32.gmra.mxu0 %v4127
  %v4612 = vpop.f32.mrf.mxu0
  %v4613 = vadd.f32 %v4384, %v4612
  %4614 = vmatmul.f32.gmra.mxu0 %v4128
  %v4615 = vpop.f32.mrf.mxu0
  %v4616 = vadd.f32 %v4387, %v4615
  %4617 = vmatmul.f32.gmra.mxu0 %v4129
  %v4618 = vpop.f32.mrf.mxu0
  %v4619 = vadd.f32 %v4390, %v4618
  %4620 = vmatmul.f32.gmra.mxu0 %v4130
  %v4621 = vpop.f32.mrf.mxu0
  %v4622 = vadd.f32 %v4393, %v4621
  %4623 = vdwg.mxu0
  %v4624 = vld [vmem:[#allocation2 + $0x28] sm:$0xff]
  %v4625 = vld [vmem:[#allocation2 + $0x30] sm:$0xff]
  %v4626 = vld [vmem:[#allocation2 + $0x38] sm:$0xff]
  %v4627 = vld [vmem:[#allocation2 + $0x40] sm:$0xff]
  %v4628 = vld [vmem:[#allocation2 + $0x48] sm:$0xff]
  %v4629 = vld [vmem:[#allocation2 + $0x50] sm:$0xff]
  %v4630 = vld [vmem:[#allocation2 + $0x58] sm:$0xff]
  %v4631 = vld [vmem:[#allocation2 + $0x60] sm:$0xff]
  %v4632 = vld [vmem:[#allocation2 + $0x68] sm:$0xff]
  %v4633 = vld [vmem:[#allocation2 + $0x70] sm:$0xff]
  %v4634 = vld [vmem:[#allocation2 + $0x78] sm:$0xff]
  %v4635 = vld [vmem:[#allocation2 + $0x80] sm:$0xff]
  %v4636 = vld [vmem:[#allocation2 + $0x88] sm:$0xff]
  %v4637 = vld [vmem:[#allocation2 + $0x90] sm:$0xff]
  %v4638 = vld [vmem:[#allocation2 + $0x98] sm:$0xff]
  %v4639 = vld [vmem:[#allocation2 + $0xa0] sm:$0xff]
  %v4640 = vld [vmem:[#allocation2 + $0xa8] sm:$0xff]
  %v4641 = vld [vmem:[#allocation2 + $0xb0] sm:$0xff]
  %v4642 = vld [vmem:[#allocation2 + $0xb8] sm:$0xff]
  %v4643 = vld [vmem:[#allocation2 + $0xc0] sm:$0xff]
  %v4644 = vld [vmem:[#allocation2 + $0xc8] sm:$0xff]
  %v4645 = vld [vmem:[#allocation2 + $0xd0] sm:$0xff]
  %v4646 = vld [vmem:[#allocation2 + $0xd8] sm:$0xff]
  %v4647 = vld [vmem:[#allocation2 + $0xe0] sm:$0xff]
  %v4648 = vld [vmem:[#allocation2 + $0xe8] sm:$0xff]
  %v4649 = vld [vmem:[#allocation2 + $0xf0] sm:$0xff]
  %v4650 = vld [vmem:[#allocation2 + $0xf8] sm:$0xff]
  %v4651 = vld [vmem:[#allocation2 + $0x100] sm:$0xff]
  %v4652 = vld [vmem:[#allocation2 + $0x108] sm:$0xff]
  %v4653 = vld [vmem:[#allocation2 + $0x110] sm:$0xff]
  %v4654 = vld [vmem:[#allocation2 + $0x118] sm:$0xff]
  %v4655 = vld [vmem:[#allocation2 + $0x120] sm:$0xff]
  %v4656 = vld [vmem:[#allocation2 + $0x128] sm:$0xff]
  %v4657 = vld [vmem:[#allocation2 + $0x130] sm:$0xff]
  %v4658 = vld [vmem:[#allocation2 + $0x138] sm:$0xff]
  %v4659 = vld [vmem:[#allocation2 + $0x140] sm:$0xff]
  %v4660 = vld [vmem:[#allocation2 + $0x148] sm:$0xff]
  %v4661 = vld [vmem:[#allocation2 + $0x150] sm:$0xff]
  %v4662 = vld [vmem:[#allocation2 + $0x158] sm:$0xff]
  %v4663 = vld [vmem:[#allocation2 + $0x160] sm:$0xff]
  %v4664 = vld [vmem:[#allocation2 + $0x168] sm:$0xff]
  %v4665 = vld [vmem:[#allocation2 + $0x170] sm:$0xff]
  %v4666 = vld [vmem:[#allocation2 + $0x178] sm:$0xff]
  %v4667 = vld [vmem:[#allocation2 + $0x180] sm:$0xff]
  %v4668 = vld [vmem:[#allocation2 + $0x188] sm:$0xff]
  %v4669 = vld [vmem:[#allocation2 + $0x190] sm:$0xff]
  %v4670 = vld [vmem:[#allocation2 + $0x198] sm:$0xff]
  %v4671 = vld [vmem:[#allocation2 + $0x1a0] sm:$0xff]
  %v4672 = vld [vmem:[#allocation2 + $0x1a8] sm:$0xff]
  %v4673 = vld [vmem:[#allocation2 + $0x1b0] sm:$0xff]
  %v4674 = vld [vmem:[#allocation2 + $0x1b8] sm:$0xff]
  %v4675 = vld [vmem:[#allocation2 + $0x1c0] sm:$0xff]
  %v4676 = vld [vmem:[#allocation2 + $0x1c8] sm:$0xff]
  %v4677 = vld [vmem:[#allocation2 + $0x1d0] sm:$0xff]
  %v4678 = vld [vmem:[#allocation2 + $0x1d8] sm:$0xff]
  %v4679 = vld [vmem:[#allocation2 + $0x1e0] sm:$0xff]
  %v4680 = vld [vmem:[#allocation2 + $0x1e8] sm:$0xff]
  %v4681 = vld [vmem:[#allocation2 + $0x1f0] sm:$0xff]
  %v4682 = vld [vmem:[#allocation2 + $0x1f8] sm:$0xff]
  %v4683 = vld [vmem:[#allocation2 + $0x200] sm:$0xff]
  %v4684 = vld [vmem:[#allocation2 + $0x208] sm:$0xff]
  %v4685 = vld [vmem:[#allocation2 + $0x210] sm:$0xff]
  %v4686 = vld [vmem:[#allocation2 + $0x218] sm:$0xff]
  %v4687 = vld [vmem:[#allocation2 + $0x220] sm:$0xff]
  %v4688 = vld [vmem:[#allocation2 + $0x228] sm:$0xff]
  %v4689 = vld [vmem:[#allocation2 + $0x230] sm:$0xff]
  %v4690 = vld [vmem:[#allocation2 + $0x238] sm:$0xff]
  %v4691 = vld [vmem:[#allocation2 + $0x240] sm:$0xff]
  %v4692 = vld [vmem:[#allocation2 + $0x248] sm:$0xff]
  %v4693 = vld [vmem:[#allocation2 + $0x250] sm:$0xff]
  %v4694 = vld [vmem:[#allocation2 + $0x258] sm:$0xff]
  %v4695 = vld [vmem:[#allocation2 + $0x260] sm:$0xff]
  %s4696 = scalar_lea.vmem %s7, 256
  %v4697 = vld [vmem:[%s4696] sm:$0xff]
  %v4698 = vld [vmem:[%s4696 + $0x8] sm:$0xff]
  %v4699 = vld [vmem:[%s4696 + $0x10] sm:$0xff]
  %v4700 = vld [vmem:[%s4696 + $0x18] sm:$0xff]
  %v4701 = vld [vmem:[%s4696 + $0x20] sm:$0xff]
  %v4702 = vld [vmem:[%s4696 + $0x28] sm:$0xff]
  %v4703 = vld [vmem:[%s4696 + $0x30] sm:$0xff]
  %v4704 = vld [vmem:[%s4696 + $0x38] sm:$0xff]
  %v4705 = vld [vmem:[%s4696 + $0x40] sm:$0xff]
  %v4706 = vld [vmem:[%s4696 + $0x48] sm:$0xff]
  %v4707 = vld [vmem:[%s4696 + $0x50] sm:$0xff]
  %v4708 = vld [vmem:[%s4696 + $0x58] sm:$0xff]
  %v4709 = vld [vmem:[%s4696 + $0x60] sm:$0xff]
  %v4710 = vld [vmem:[%s4696 + $0x68] sm:$0xff]
  %v4711 = vld [vmem:[%s4696 + $0x70] sm:$0xff]
  %v4712 = vld [vmem:[%s4696 + $0x78] sm:$0xff]
  %4713 = vmatpush.msra.mxu0 %v4712
  %4714 = vmatpush.msra.mxu0 %v4711
  %4715 = vmatpush.msra.mxu0 %v4710
  %4716 = vmatpush.msra.mxu0 %v4709
  %4717 = vmatpush.msra.mxu0 %v4708
  %4718 = vmatpush.msra.mxu0 %v4707
  %4719 = vmatpush.msra.mxu0 %v4706
  %4720 = vmatpush.msra.mxu0 %v4705
  %4721 = vmatpush.msra.mxu0 %v4704
  %4722 = vmatpush.msra.mxu0 %v4703
  %4723 = vmatpush.msra.mxu0 %v4702
  %4724 = vmatpush.msra.mxu0 %v4701
  %4725 = vmatpush.msra.mxu0 %v4700
  %4726 = vmatpush.msra.mxu0 %v4699
  %4727 = vmatpush.msra.mxu0 %v4698
  %4728 = vmatpush.msra.mxu0 %v4697
  %4729 = vmatmul.f32.gmra.mxu0 %v4624
  %v4730 = vpop.f32.mrf.mxu0
  %4731 = vmatmul.f32.gmra.mxu0 %v4625
  %v4732 = vpop.f32.mrf.mxu0
  %4733 = vmatmul.f32.gmra.mxu0 %v4626
  %v4734 = vpop.f32.mrf.mxu0
  %v4735 = vadd.f32 0.0, %v4734
  %4736 = vmatmul.f32.gmra.mxu0 %v4627
  %v4737 = vpop.f32.mrf.mxu0
  %v4738 = vadd.f32 0.0, %v4737
  %4739 = vmatmul.f32.gmra.mxu0 %v4628
  %v4740 = vpop.f32.mrf.mxu0
  %v4741 = vadd.f32 0.0, %v4740
  %4742 = vmatmul.f32.gmra.mxu0 %v4629
  %v4743 = vpop.f32.mrf.mxu0
  %v4744 = vadd.f32 0.0, %v4743
  %4745 = vmatmul.f32.gmra.mxu0 %v4630
  %v4746 = vpop.f32.mrf.mxu0
  %v4747 = vadd.f32 0.0, %v4746
  %4748 = vmatmul.f32.gmra.mxu0 %v4631
  %v4749 = vpop.f32.mrf.mxu0
  %v4750 = vadd.f32 0.0, %v4749
  %4751 = vmatmul.f32.gmra.mxu0 %v4632
  %v4752 = vpop.f32.mrf.mxu0
  %v4753 = vadd.f32 0.0, %v4752
  %4754 = vmatmul.f32.gmra.mxu0 %v4633
  %v4755 = vpop.f32.mrf.mxu0
  %v4756 = vadd.f32 0.0, %v4755
  %4757 = vmatmul.f32.gmra.mxu0 %v4634
  %v4758 = vpop.f32.mrf.mxu0
  %v4759 = vadd.f32 0.0, %v4758
  %4760 = vmatmul.f32.gmra.mxu0 %v4635
  %v4761 = vpop.f32.mrf.mxu0
  %v4762 = vadd.f32 0.0, %v4761
  %4763 = vmatmul.f32.gmra.mxu0 %v4636
  %v4764 = vpop.f32.mrf.mxu0
  %v4765 = vadd.f32 0.0, %v4764
  %4766 = vmatmul.f32.gmra.mxu0 %v4637
  %v4767 = vpop.f32.mrf.mxu0
  %v4768 = vadd.f32 0.0, %v4767
  %4769 = vmatmul.f32.gmra.mxu0 %v4638
  %v4770 = vpop.f32.mrf.mxu0
  %v4771 = vadd.f32 0.0, %v4770
  %4772 = vmatmul.f32.gmra.mxu0 %v4639
  %v4773 = vpop.f32.mrf.mxu0
  %v4774 = vadd.f32 0.0, %v4773
  %4775 = vmatmul.f32.gmra.mxu0 %v4640
  %v4776 = vpop.f32.mrf.mxu0
  %v4777 = vadd.f32 0.0, %v4776
  %4778 = vmatmul.f32.gmra.mxu0 %v4641
  %v4779 = vpop.f32.mrf.mxu0
  %v4780 = vadd.f32 0.0, %v4779
  %4781 = vmatmul.f32.gmra.mxu0 %v4642
  %v4782 = vpop.f32.mrf.mxu0
  %v4783 = vadd.f32 0.0, %v4782
  %4784 = vmatmul.f32.gmra.mxu0 %v4643
  %v4785 = vpop.f32.mrf.mxu0
  %v4786 = vadd.f32 0.0, %v4785
  %4787 = vmatmul.f32.gmra.mxu0 %v4644
  %v4788 = vpop.f32.mrf.mxu0
  %v4789 = vadd.f32 0.0, %v4788
  %4790 = vmatmul.f32.gmra.mxu0 %v4645
  %v4791 = vpop.f32.mrf.mxu0
  %v4792 = vadd.f32 0.0, %v4791
  %4793 = vmatmul.f32.gmra.mxu0 %v4646
  %v4794 = vpop.f32.mrf.mxu0
  %v4795 = vadd.f32 0.0, %v4794
  %4796 = vmatmul.f32.gmra.mxu0 %v4647
  %v4797 = vpop.f32.mrf.mxu0
  %v4798 = vadd.f32 0.0, %v4797
  %4799 = vmatmul.f32.gmra.mxu0 %v4648
  %v4800 = vpop.f32.mrf.mxu0
  %v4801 = vadd.f32 0.0, %v4800
  %4802 = vmatmul.f32.gmra.mxu0 %v4649
  %v4803 = vpop.f32.mrf.mxu0
  %v4804 = vadd.f32 0.0, %v4803
  %4805 = vmatmul.f32.gmra.mxu0 %v4650
  %v4806 = vpop.f32.mrf.mxu0
  %v4807 = vadd.f32 0.0, %v4806
  %4808 = vmatmul.f32.gmra.mxu0 %v4651
  %v4809 = vpop.f32.mrf.mxu0
  %v4810 = vadd.f32 0.0, %v4809
  %4811 = vmatmul.f32.gmra.mxu0 %v4652
  %v4812 = vpop.f32.mrf.mxu0
  %v4813 = vadd.f32 0.0, %v4812
  %4814 = vmatmul.f32.gmra.mxu0 %v4653
  %v4815 = vpop.f32.mrf.mxu0
  %v4816 = vadd.f32 0.0, %v4815
  %4817 = vmatmul.f32.gmra.mxu0 %v4654
  %v4818 = vpop.f32.mrf.mxu0
  %v4819 = vadd.f32 0.0, %v4818
  %4820 = vmatmul.f32.gmra.mxu0 %v4655
  %v4821 = vpop.f32.mrf.mxu0
  %v4822 = vadd.f32 0.0, %v4821
  %4823 = vmatmul.f32.gmra.mxu0 %v4656
  %v4824 = vpop.f32.mrf.mxu0
  %v4825 = vadd.f32 0.0, %v4824
  %4826 = vmatmul.f32.gmra.mxu0 %v4657
  %v4827 = vpop.f32.mrf.mxu0
  %v4828 = vadd.f32 0.0, %v4827
  %4829 = vmatmul.f32.gmra.mxu0 %v4658
  %v4830 = vpop.f32.mrf.mxu0
  %v4831 = vadd.f32 0.0, %v4830
  %4832 = vmatmul.f32.gmra.mxu0 %v4659
  %v4833 = vpop.f32.mrf.mxu0
  %v4834 = vadd.f32 0.0, %v4833
  %4835 = vmatmul.f32.gmra.mxu0 %v4660
  %v4836 = vpop.f32.mrf.mxu0
  %4837 = vmatmul.f32.gmra.mxu0 %v4661
  %v4838 = vpop.f32.mrf.mxu0
  %4839 = vmatmul.f32.gmra.mxu0 %v4662
  %v4840 = vpop.f32.mrf.mxu0
  %v4841 = vadd.f32 0.0, %v4840
  %4842 = vmatmul.f32.gmra.mxu0 %v4663
  %v4843 = vpop.f32.mrf.mxu0
  %v4844 = vadd.f32 0.0, %v4843
  %4845 = vmatmul.f32.gmra.mxu0 %v4664
  %v4846 = vpop.f32.mrf.mxu0
  %v4847 = vadd.f32 0.0, %v4846
  %4848 = vmatmul.f32.gmra.mxu0 %v4665
  %v4849 = vpop.f32.mrf.mxu0
  %v4850 = vadd.f32 0.0, %v4849
  %4851 = vmatmul.f32.gmra.mxu0 %v4666
  %v4852 = vpop.f32.mrf.mxu0
  %v4853 = vadd.f32 0.0, %v4852
  %4854 = vmatmul.f32.gmra.mxu0 %v4667
  %v4855 = vpop.f32.mrf.mxu0
  %v4856 = vadd.f32 0.0, %v4855
  %4857 = vmatmul.f32.gmra.mxu0 %v4668
  %v4858 = vpop.f32.mrf.mxu0
  %v4859 = vadd.f32 0.0, %v4858
  %4860 = vmatmul.f32.gmra.mxu0 %v4669
  %v4861 = vpop.f32.mrf.mxu0
  %v4862 = vadd.f32 0.0, %v4861
  %4863 = vmatmul.f32.gmra.mxu0 %v4670
  %v4864 = vpop.f32.mrf.mxu0
  %v4865 = vadd.f32 0.0, %v4864
  %4866 = vmatmul.f32.gmra.mxu0 %v4671
  %v4867 = vpop.f32.mrf.mxu0
  %v4868 = vadd.f32 0.0, %v4867
  %4869 = vmatmul.f32.gmra.mxu0 %v4672
  %v4870 = vpop.f32.mrf.mxu0
  %v4871 = vadd.f32 0.0, %v4870
  %4872 = vmatmul.f32.gmra.mxu0 %v4673
  %v4873 = vpop.f32.mrf.mxu0
  %v4874 = vadd.f32 0.0, %v4873
  %4875 = vmatmul.f32.gmra.mxu0 %v4674
  %v4876 = vpop.f32.mrf.mxu0
  %v4877 = vadd.f32 0.0, %v4876
  %4878 = vmatmul.f32.gmra.mxu0 %v4675
  %v4879 = vpop.f32.mrf.mxu0
  %v4880 = vadd.f32 0.0, %v4879
  %4881 = vmatmul.f32.gmra.mxu0 %v4676
  %v4882 = vpop.f32.mrf.mxu0
  %v4883 = vadd.f32 0.0, %v4882
  %4884 = vmatmul.f32.gmra.mxu0 %v4677
  %v4885 = vpop.f32.mrf.mxu0
  %v4886 = vadd.f32 0.0, %v4885
  %4887 = vmatmul.f32.gmra.mxu0 %v4678
  %v4888 = vpop.f32.mrf.mxu0
  %v4889 = vadd.f32 0.0, %v4888
  %4890 = vmatmul.f32.gmra.mxu0 %v4679
  %v4891 = vpop.f32.mrf.mxu0
  %v4892 = vadd.f32 0.0, %v4891
  %4893 = vmatmul.f32.gmra.mxu0 %v4680
  %v4894 = vpop.f32.mrf.mxu0
  %v4895 = vadd.f32 0.0, %v4894
  %4896 = vmatmul.f32.gmra.mxu0 %v4681
  %v4897 = vpop.f32.mrf.mxu0
  %v4898 = vadd.f32 0.0, %v4897
  %4899 = vmatmul.f32.gmra.mxu0 %v4682
  %v4900 = vpop.f32.mrf.mxu0
  %v4901 = vadd.f32 0.0, %v4900
  %4902 = vmatmul.f32.gmra.mxu0 %v4683
  %v4903 = vpop.f32.mrf.mxu0
  %v4904 = vadd.f32 0.0, %v4903
  %4905 = vmatmul.f32.gmra.mxu0 %v4684
  %v4906 = vpop.f32.mrf.mxu0
  %v4907 = vadd.f32 0.0, %v4906
  %4908 = vmatmul.f32.gmra.mxu0 %v4685
  %v4909 = vpop.f32.mrf.mxu0
  %v4910 = vadd.f32 0.0, %v4909
  %4911 = vmatmul.f32.gmra.mxu0 %v4686
  %v4912 = vpop.f32.mrf.mxu0
  %v4913 = vadd.f32 0.0, %v4912
  %4914 = vmatmul.f32.gmra.mxu0 %v4687
  %v4915 = vpop.f32.mrf.mxu0
  %v4916 = vadd.f32 0.0, %v4915
  %4917 = vmatmul.f32.gmra.mxu0 %v4688
  %v4918 = vpop.f32.mrf.mxu0
  %v4919 = vadd.f32 0.0, %v4918
  %4920 = vmatmul.f32.gmra.mxu0 %v4689
  %v4921 = vpop.f32.mrf.mxu0
  %v4922 = vadd.f32 0.0, %v4921
  %4923 = vmatmul.f32.gmra.mxu0 %v4690
  %v4924 = vpop.f32.mrf.mxu0
  %v4925 = vadd.f32 0.0, %v4924
  %4926 = vmatmul.f32.gmra.mxu0 %v4691
  %v4927 = vpop.f32.mrf.mxu0
  %v4928 = vadd.f32 0.0, %v4927
  %4929 = vmatmul.f32.gmra.mxu0 %v4692
  %v4930 = vpop.f32.mrf.mxu0
  %v4931 = vadd.f32 0.0, %v4930
  %4932 = vmatmul.f32.gmra.mxu0 %v4693
  %v4933 = vpop.f32.mrf.mxu0
  %v4934 = vadd.f32 0.0, %v4933
  %4935 = vmatmul.f32.gmra.mxu0 %v4694
  %v4936 = vpop.f32.mrf.mxu0
  %v4937 = vadd.f32 0.0, %v4936
  %4938 = vmatmul.f32.gmra.mxu0 %v4695
  %v4939 = vpop.f32.mrf.mxu0
  %v4940 = vadd.f32 0.0, %v4939
  %4941 = vdwg.mxu0
  %v4942 = vadd.f32 %v4417, %v4735
  %v4943 = vadd.f32 %v4420, %v4738
  %v4944 = vadd.f32 %v4423, %v4741
  %v4945 = vadd.f32 %v4426, %v4744
  %v4946 = vadd.f32 %v4429, %v4747
  %v4947 = vadd.f32 %v4432, %v4750
  %v4948 = vadd.f32 %v4435, %v4753
  %v4949 = vadd.f32 %v4438, %v4756
  %v4950 = vadd.f32 %v4441, %v4759
  %v4951 = vadd.f32 %v4444, %v4762
  %v4952 = vadd.f32 %v4447, %v4765
  %v4953 = vadd.f32 %v4450, %v4768
  %v4954 = vadd.f32 %v4453, %v4771
  %v4955 = vadd.f32 %v4456, %v4774
  %v4956 = vadd.f32 %v4459, %v4777
  %v4957 = vadd.f32 %v4462, %v4780
  %v4958 = vadd.f32 %v4465, %v4783
  %v4959 = vadd.f32 %v4468, %v4786
  %v4960 = vadd.f32 %v4471, %v4789
  %v4961 = vadd.f32 %v4474, %v4792
  %v4962 = vadd.f32 %v4477, %v4795
  %v4963 = vadd.f32 %v4480, %v4798
  %v4964 = vadd.f32 %v4483, %v4801
  %v4965 = vadd.f32 %v4486, %v4804
  %v4966 = vadd.f32 %v4489, %v4807
  %v4967 = vadd.f32 %v4492, %v4810
  %v4968 = vadd.f32 %v4495, %v4813
  %v4969 = vadd.f32 %v4498, %v4816
  %v4970 = vadd.f32 %v4501, %v4819
  %v4971 = vadd.f32 %v4504, %v4822
  %v4972 = vadd.f32 %v4507, %v4825
  %v4973 = vadd.f32 %v4510, %v4828
  %v4974 = vadd.f32 %v4513, %v4831
  %v4975 = vadd.f32 %v4516, %v4834
  %v4976 = vadd.f32 %v4523, %v4841
  %v4977 = vadd.f32 %v4526, %v4844
  %v4978 = vadd.f32 %v4529, %v4847
  %v4979 = vadd.f32 %v4532, %v4850
  %v4980 = vadd.f32 %v4535, %v4853
  %v4981 = vadd.f32 %v4538, %v4856
  %v4982 = vadd.f32 %v4541, %v4859
  %v4983 = vadd.f32 %v4544, %v4862
  %v4984 = vadd.f32 %v4547, %v4865
  %v4985 = vadd.f32 %v4550, %v4868
  %v4986 = vadd.f32 %v4553, %v4871
  %v4987 = vadd.f32 %v4556, %v4874
  %v4988 = vadd.f32 %v4559, %v4877
  %v4989 = vadd.f32 %v4562, %v4880
  %v4990 = vadd.f32 %v4565, %v4883
  %v4991 = vadd.f32 %v4568, %v4886
  %v4992 = vadd.f32 %v4571, %v4889
  %v4993 = vadd.f32 %v4574, %v4892
  %v4994 = vadd.f32 %v4577, %v4895
  %v4995 = vadd.f32 %v4580, %v4898
  %v4996 = vadd.f32 %v4583, %v4901
  %v4997 = vadd.f32 %v4586, %v4904
  %v4998 = vadd.f32 %v4589, %v4907
  %v4999 = vadd.f32 %v4592, %v4910
  %v5000 = vadd.f32 %v4595, %v4913
  %v5001 = vadd.f32 %v4598, %v4916
  %v5002 = vadd.f32 %v4601, %v4919
  %v5003 = vadd.f32 %v4604, %v4922
  %v5004 = vadd.f32 %v4607, %v4925
  %v5005 = vadd.f32 %v4610, %v4928
  %v5006 = vadd.f32 %v4613, %v4931
  %v5007 = vadd.f32 %v4616, %v4934
  %v5008 = vadd.f32 %v4619, %v4937
  %v5009 = vadd.f32 %v4622, %v4940
  %v5010 = vld [vmem:[%s8] sm:$0x1]
  %v5012 = vperm.slane %v5010, 0
  %v5014 = vadd.f32 %v4942, %v5012
  %v5015 = vadd.f32 %v4943, %v5012
  %v5016 = vadd.f32 %v4944, %v5012
  %v5017 = vadd.f32 %v4945, %v5012
  %v5018 = vadd.f32 %v4946, %v5012
  %v5019 = vadd.f32 %v4947, %v5012
  %v5020 = vadd.f32 %v4948, %v5012
  %v5021 = vadd.f32 %v4949, %v5012
  %v5022 = vadd.f32 %v4950, %v5012
  %v5023 = vadd.f32 %v4951, %v5012
  %v5024 = vadd.f32 %v4952, %v5012
  %v5025 = vadd.f32 %v4953, %v5012
  %v5026 = vadd.f32 %v4954, %v5012
  %v5027 = vadd.f32 %v4955, %v5012
  %v5028 = vadd.f32 %v4956, %v5012
  %v5029 = vadd.f32 %v4957, %v5012
  %v5030 = vadd.f32 %v4958, %v5012
  %v5031 = vadd.f32 %v4959, %v5012
  %v5032 = vadd.f32 %v4960, %v5012
  %v5033 = vadd.f32 %v4961, %v5012
  %v5034 = vadd.f32 %v4962, %v5012
  %v5035 = vadd.f32 %v4963, %v5012
  %v5036 = vadd.f32 %v4964, %v5012
  %v5037 = vadd.f32 %v4965, %v5012
  %v5038 = vadd.f32 %v4966, %v5012
  %v5039 = vadd.f32 %v4967, %v5012
  %v5040 = vadd.f32 %v4968, %v5012
  %v5041 = vadd.f32 %v4969, %v5012
  %v5042 = vadd.f32 %v4970, %v5012
  %v5043 = vadd.f32 %v4971, %v5012
  %v5044 = vadd.f32 %v4972, %v5012
  %v5045 = vadd.f32 %v4973, %v5012
  %v5046 = vadd.f32 %v4974, %v5012
  %v5047 = vadd.f32 %v4975, %v5012
  %v5048 = vadd.f32 %v4976, %v5012
  %v5049 = vadd.f32 %v4977, %v5012
  %v5050 = vadd.f32 %v4978, %v5012
  %v5051 = vadd.f32 %v4979, %v5012
  %v5052 = vadd.f32 %v4980, %v5012
  %v5053 = vadd.f32 %v4981, %v5012
  %v5054 = vadd.f32 %v4982, %v5012
  %v5055 = vadd.f32 %v4983, %v5012
  %v5056 = vadd.f32 %v4984, %v5012
  %v5057 = vadd.f32 %v4985, %v5012
  %v5058 = vadd.f32 %v4986, %v5012
  %v5059 = vadd.f32 %v4987, %v5012
  %v5060 = vadd.f32 %v4988, %v5012
  %v5061 = vadd.f32 %v4989, %v5012
  %v5062 = vadd.f32 %v4990, %v5012
  %v5063 = vadd.f32 %v4991, %v5012
  %v5064 = vadd.f32 %v4992, %v5012
  %v5065 = vadd.f32 %v4993, %v5012
  %v5066 = vadd.f32 %v4994, %v5012
  %v5067 = vadd.f32 %v4995, %v5012
  %v5068 = vadd.f32 %v4996, %v5012
  %v5069 = vadd.f32 %v4997, %v5012
  %v5070 = vadd.f32 %v4998, %v5012
  %v5071 = vadd.f32 %v4999, %v5012
  %v5072 = vadd.f32 %v5000, %v5012
  %v5073 = vadd.f32 %v5001, %v5012
  %v5074 = vadd.f32 %v5002, %v5012
  %v5075 = vadd.f32 %v5003, %v5012
  %v5076 = vadd.f32 %v5004, %v5012
  %v5077 = vadd.f32 %v5005, %v5012
  %v5078 = vadd.f32 %v5006, %v5012
  %v5079 = vadd.f32 %v5007, %v5012
  %v5080 = vadd.f32 %v5008, %v5012
  %v5081 = vadd.f32 %v5009, %v5012
  %v5082 = vmax.f32 %v5014, 0.0
  %v5083 = vmax.f32 %v5015, 0.0
  %v5084 = vmax.f32 %v5016, 0.0
  %v5085 = vmax.f32 %v5017, 0.0
  %v5086 = vmax.f32 %v5018, 0.0
  %v5087 = vmax.f32 %v5019, 0.0
  %v5088 = vmax.f32 %v5020, 0.0
  %v5089 = vmax.f32 %v5021, 0.0
  %v5090 = vmax.f32 %v5022, 0.0
  %v5091 = vmax.f32 %v5023, 0.0
  %v5092 = vmax.f32 %v5024, 0.0
  %v5093 = vmax.f32 %v5025, 0.0
  %v5094 = vmax.f32 %v5026, 0.0
  %v5095 = vmax.f32 %v5027, 0.0
  %v5096 = vmax.f32 %v5028, 0.0
  %v5097 = vmax.f32 %v5029, 0.0
  %v5098 = vmax.f32 %v5030, 0.0
  %v5099 = vmax.f32 %v5031, 0.0
  %v5100 = vmax.f32 %v5032, 0.0
  %v5101 = vmax.f32 %v5033, 0.0
  %v5102 = vmax.f32 %v5034, 0.0
  %v5103 = vmax.f32 %v5035, 0.0
  %v5104 = vmax.f32 %v5036, 0.0
  %v5105 = vmax.f32 %v5037, 0.0
  %v5106 = vmax.f32 %v5038, 0.0
  %v5107 = vmax.f32 %v5039, 0.0
  %v5108 = vmax.f32 %v5040, 0.0
  %v5109 = vmax.f32 %v5041, 0.0
  %v5110 = vmax.f32 %v5042, 0.0
  %v5111 = vmax.f32 %v5043, 0.0
  %v5112 = vmax.f32 %v5044, 0.0
  %v5113 = vmax.f32 %v5045, 0.0
  %v5114 = vmax.f32 %v5046, 0.0
  %v5115 = vmax.f32 %v5047, 0.0
  %v5116 = vmax.f32 %v5048, 0.0
  %v5117 = vmax.f32 %v5049, 0.0
  %v5118 = vmax.f32 %v5050, 0.0
  %v5119 = vmax.f32 %v5051, 0.0
  %v5120 = vmax.f32 %v5052, 0.0
  %v5121 = vmax.f32 %v5053, 0.0
  %v5122 = vmax.f32 %v5054, 0.0
  %v5123 = vmax.f32 %v5055, 0.0
  %v5124 = vmax.f32 %v5056, 0.0
  %v5125 = vmax.f32 %v5057, 0.0
  %v5126 = vmax.f32 %v5058, 0.0
  %v5127 = vmax.f32 %v5059, 0.0
  %v5128 = vmax.f32 %v5060, 0.0
  %v5129 = vmax.f32 %v5061, 0.0
  %v5130 = vmax.f32 %v5062, 0.0
  %v5131 = vmax.f32 %v5063, 0.0
  %v5132 = vmax.f32 %v5064, 0.0
  %v5133 = vmax.f32 %v5065, 0.0
  %v5134 = vmax.f32 %v5066, 0.0
  %v5135 = vmax.f32 %v5067, 0.0
  %v5136 = vmax.f32 %v5068, 0.0
  %v5137 = vmax.f32 %v5069, 0.0
  %v5138 = vmax.f32 %v5070, 0.0
  %v5139 = vmax.f32 %v5071, 0.0
  %v5140 = vmax.f32 %v5072, 0.0
  %v5141 = vmax.f32 %v5073, 0.0
  %v5142 = vmax.f32 %v5074, 0.0
  %v5143 = vmax.f32 %v5075, 0.0
  %v5144 = vmax.f32 %v5076, 0.0
  %v5145 = vmax.f32 %v5077, 0.0
  %v5146 = vmax.f32 %v5078, 0.0
  %v5147 = vmax.f32 %v5079, 0.0
  %v5148 = vmax.f32 %v5080, 0.0
  %v5149 = vmax.f32 %v5081, 0.0
  %v5150 = vmax.f32 %v5082, %v5084
  %v5151 = vmax.f32 %v5083, %v5085
  %v5152 = vmax.f32 %v5084, %v5086
  %v5153 = vmax.f32 %v5085, %v5087
  %v5154 = vmax.f32 %v5086, %v5088
  %v5155 = vmax.f32 %v5087, %v5089
  %v5156 = vmax.f32 %v5088, %v5090
  %v5157 = vmax.f32 %v5089, %v5091
  %v5158 = vmax.f32 %v5090, %v5092
  %v5159 = vmax.f32 %v5091, %v5093
  %v5160 = vmax.f32 %v5092, %v5094
  %v5161 = vmax.f32 %v5093, %v5095
  %v5162 = vmax.f32 %v5094, %v5096
  %v5163 = vmax.f32 %v5095, %v5097
  %v5164 = vmax.f32 %v5096, %v5098
  %v5165 = vmax.f32 %v5097, %v5099
  %v5166 = vmax.f32 %v5098, %v5100
  %v5167 = vmax.f32 %v5099, %v5101
  %v5168 = vmax.f32 %v5100, %v5102
  %v5169 = vmax.f32 %v5101, %v5103
  %v5170 = vmax.f32 %v5102, %v5104
  %v5171 = vmax.f32 %v5103, %v5105
  %v5172 = vmax.f32 %v5104, %v5106
  %v5173 = vmax.f32 %v5105, %v5107
  %v5174 = vmax.f32 %v5106, %v5108
  %v5175 = vmax.f32 %v5107, %v5109
  %v5176 = vmax.f32 %v5108, %v5110
  %v5177 = vmax.f32 %v5109, %v5111
  %v5178 = vmax.f32 %v5110, %v5112
  %v5179 = vmax.f32 %v5111, %v5113
  %v5180 = vmax.f32 %v5112, %v5114
  %v5181 = vmax.f32 %v5113, %v5115
  %5182 = vst.msk [vmem:[%s9] sm:$0xff] %vm771, %v5150
  %5183 = vst.msk [vmem:[%s9 + $0x8] sm:$0xff] %vm771, %v5151
  %5184 = vst.msk [vmem:[%s9 + $0x10] sm:$0xff] %vm771, %v5152
  %5185 = vst.msk [vmem:[%s9 + $0x18] sm:$0xff] %vm771, %v5153
  %5186 = vst.msk [vmem:[%s9 + $0x20] sm:$0xff] %vm771, %v5154
  %5187 = vst.msk [vmem:[%s9 + $0x28] sm:$0xff] %vm771, %v5155
  %5188 = vst.msk [vmem:[%s9 + $0x30] sm:$0xff] %vm771, %v5156
  %5189 = vst.msk [vmem:[%s9 + $0x38] sm:$0xff] %vm771, %v5157
  %5190 = vst.msk [vmem:[%s9 + $0x40] sm:$0xff] %vm771, %v5158
  %5191 = vst.msk [vmem:[%s9 + $0x48] sm:$0xff] %vm771, %v5159
  %5192 = vst.msk [vmem:[%s9 + $0x50] sm:$0xff] %vm771, %v5160
  %5193 = vst.msk [vmem:[%s9 + $0x58] sm:$0xff] %vm771, %v5161
  %5194 = vst.msk [vmem:[%s9 + $0x60] sm:$0xff] %vm771, %v5162
  %5195 = vst.msk [vmem:[%s9 + $0x68] sm:$0xff] %vm771, %v5163
  %5196 = vst.msk [vmem:[%s9 + $0x70] sm:$0xff] %vm771, %v5164
  %5197 = vst.msk [vmem:[%s9 + $0x78] sm:$0xff] %vm771, %v5165
  %5198 = vst.msk [vmem:[%s9 + $0x80] sm:$0xff] %vm771, %v5166
  %5199 = vst.msk [vmem:[%s9 + $0x88] sm:$0xff] %vm771, %v5167
  %5200 = vst.msk [vmem:[%s9 + $0x90] sm:$0xff] %vm771, %v5168
  %5201 = vst.msk [vmem:[%s9 + $0x98] sm:$0xff] %vm771, %v5169
  %5202 = vst.msk [vmem:[%s9 + $0xa0] sm:$0xff] %vm771, %v5170
  %5203 = vst.msk [vmem:[%s9 + $0xa8] sm:$0xff] %vm771, %v5171
  %5204 = vst.msk [vmem:[%s9 + $0xb0] sm:$0xff] %vm771, %v5172
  %5205 = vst.msk [vmem:[%s9 + $0xb8] sm:$0xff] %vm771, %v5173
  %5206 = vst.msk [vmem:[%s9 + $0xc0] sm:$0xff] %vm771, %v5174
  %5207 = vst.msk [vmem:[%s9 + $0xc8] sm:$0xff] %vm771, %v5175
  %5208 = vst.msk [vmem:[%s9 + $0xd0] sm:$0xff] %vm771, %v5176
  %5209 = vst.msk [vmem:[%s9 + $0xd8] sm:$0xff] %vm771, %v5177
  %5210 = vst.msk [vmem:[%s9 + $0xe0] sm:$0xff] %vm771, %v5178
  %5211 = vst.msk [vmem:[%s9 + $0xe8] sm:$0xff] %vm771, %v5179
  %5212 = vst.msk [vmem:[%s9 + $0xf0] sm:$0xff] %vm771, %v5180
  %5213 = vst.msk [vmem:[%s9 + $0xf8] sm:$0xff] %vm771, %v5181
  %v5214 = vmax.f32 %v5116, %v5118
  %v5215 = vmax.f32 %v5117, %v5119
  %v5216 = vmax.f32 %v5118, %v5120
  %v5217 = vmax.f32 %v5119, %v5121
  %v5218 = vmax.f32 %v5120, %v5122
  %v5219 = vmax.f32 %v5121, %v5123
  %v5220 = vmax.f32 %v5122, %v5124
  %v5221 = vmax.f32 %v5123, %v5125
  %v5222 = vmax.f32 %v5124, %v5126
  %v5223 = vmax.f32 %v5125, %v5127
  %v5224 = vmax.f32 %v5126, %v5128
  %v5225 = vmax.f32 %v5127, %v5129
  %v5226 = vmax.f32 %v5128, %v5130
  %v5227 = vmax.f32 %v5129, %v5131
  %v5228 = vmax.f32 %v5130, %v5132
  %v5229 = vmax.f32 %v5131, %v5133
  %v5230 = vmax.f32 %v5132, %v5134
  %v5231 = vmax.f32 %v5133, %v5135
  %v5232 = vmax.f32 %v5134, %v5136
  %v5233 = vmax.f32 %v5135, %v5137
  %v5234 = vmax.f32 %v5136, %v5138
  %v5235 = vmax.f32 %v5137, %v5139
  %v5236 = vmax.f32 %v5138, %v5140
  %v5237 = vmax.f32 %v5139, %v5141
  %v5238 = vmax.f32 %v5140, %v5142
  %v5239 = vmax.f32 %v5141, %v5143
  %v5240 = vmax.f32 %v5142, %v5144
  %v5241 = vmax.f32 %v5143, %v5145
  %v5242 = vmax.f32 %v5144, %v5146
  %v5243 = vmax.f32 %v5145, %v5147
  %v5244 = vmax.f32 %v5146, %v5148
  %v5245 = vmax.f32 %v5147, %v5149
  %5246 = vst.msk [vmem:[%s9 + $0x100] sm:$0xff] %vm771, %v5214
  %5247 = vst.msk [vmem:[%s9 + $0x108] sm:$0xff] %vm771, %v5215
  %5248 = vst.msk [vmem:[%s9 + $0x110] sm:$0xff] %vm771, %v5216
  %5249 = vst.msk [vmem:[%s9 + $0x118] sm:$0xff] %vm771, %v5217
  %5250 = vst.msk [vmem:[%s9 + $0x120] sm:$0xff] %vm771, %v5218
  %5251 = vst.msk [vmem:[%s9 + $0x128] sm:$0xff] %vm771, %v5219
  %5252 = vst.msk [vmem:[%s9 + $0x130] sm:$0xff] %vm771, %v5220
  %5253 = vst.msk [vmem:[%s9 + $0x138] sm:$0xff] %vm771, %v5221
  %5254 = vst.msk [vmem:[%s9 + $0x140] sm:$0xff] %vm771, %v5222
  %5255 = vst.msk [vmem:[%s9 + $0x148] sm:$0xff] %vm771, %v5223
  %5256 = vst.msk [vmem:[%s9 + $0x150] sm:$0xff] %vm771, %v5224
  %5257 = vst.msk [vmem:[%s9 + $0x158] sm:$0xff] %vm771, %v5225
  %5258 = vst.msk [vmem:[%s9 + $0x160] sm:$0xff] %vm771, %v5226
  %5259 = vst.msk [vmem:[%s9 + $0x168] sm:$0xff] %vm771, %v5227
  %5260 = vst.msk [vmem:[%s9 + $0x170] sm:$0xff] %vm771, %v5228
  %5261 = vst.msk [vmem:[%s9 + $0x178] sm:$0xff] %vm771, %v5229
  %5262 = vst.msk [vmem:[%s9 + $0x180] sm:$0xff] %vm771, %v5230
  %5263 = vst.msk [vmem:[%s9 + $0x188] sm:$0xff] %vm771, %v5231
  %5264 = vst.msk [vmem:[%s9 + $0x190] sm:$0xff] %vm771, %v5232
  %5265 = vst.msk [vmem:[%s9 + $0x198] sm:$0xff] %vm771, %v5233
  %5266 = vst.msk [vmem:[%s9 + $0x1a0] sm:$0xff] %vm771, %v5234
  %5267 = vst.msk [vmem:[%s9 + $0x1a8] sm:$0xff] %vm771, %v5235
  %5268 = vst.msk [vmem:[%s9 + $0x1b0] sm:$0xff] %vm771, %v5236
  %5269 = vst.msk [vmem:[%s9 + $0x1b8] sm:$0xff] %vm771, %v5237
  %5270 = vst.msk [vmem:[%s9 + $0x1c0] sm:$0xff] %vm771, %v5238
  %5271 = vst.msk [vmem:[%s9 + $0x1c8] sm:$0xff] %vm771, %v5239
  %5272 = vst.msk [vmem:[%s9 + $0x1d0] sm:$0xff] %vm771, %v5240
  %5273 = vst.msk [vmem:[%s9 + $0x1d8] sm:$0xff] %vm771, %v5241
  %5274 = vst.msk [vmem:[%s9 + $0x1e0] sm:$0xff] %vm771, %v5242
  %5275 = vst.msk [vmem:[%s9 + $0x1e8] sm:$0xff] %vm771, %v5243
  %5276 = vst.msk [vmem:[%s9 + $0x1f0] sm:$0xff] %vm771, %v5244
  %5277 = vst.msk [vmem:[%s9 + $0x1f8] sm:$0xff] %vm771, %v5245
  // Predicated region
  $region38: #{cnn_lstm_forward.2} parent=0 // pred_check
    _
  $region39: #{cnn_lstm_forward.2} parent=0 // pred_check_branch
    %5279 = sbr.rel (0) target = $region41
  $region40: #{cnn_lstm_forward.2} parent=0 // pred_region
    _
  $region41: #{cnn_lstm_forward.2} parent=0 // pred_fallthru
    _
  // Predicated region
  $region42: #{cnn_lstm_forward.2} parent=0 // pred_check
    _
  $region43: #{cnn_lstm_forward.2} parent=0 // pred_check_branch
    %5281 = sbr.rel (0) target = $region45
  $region44: #{cnn_lstm_forward.2} parent=0 // pred_region
    _
  $region45: #{cnn_lstm_forward.2} parent=0 // pred_fallthru
    _

</llo_original>
